<compile_context>
chip_gen: v6e
topology: v6e:2x2x1
jax: 0.10.0
libtpu: 0.0.40
codegen_flags: <defaults>
</compile_context>

<pallas_src>
import functools

import jax
import jax.numpy as jnp
from jax import lax
from jax.experimental import pallas as pl
from jax.experimental.pallas import tpu as pltpu


# ---------------------------------------------------------------------------
# Fused kernel: [concat + pad + conv3x3 + BN + ReLU] x 2, one pallas_call
# ---------------------------------------------------------------------------
def _up_doubleconv_kernel(x2_ref, x1_ref, w1_ref, s1_ref, b1_ref,
                          w2t_ref, s2_ref, b2_ref, o_ref,
                          xs_ref, hs_ref):
    # x2_ref : (1, H, W, C2)     bf16  skip connection (full image, resident per n)
    # x1_ref : (1, H, W, C1)     bf16  upsampled + padded deep features
    # w1_ref : (9, Cin, Cmid)    bf16  conv1 taps, k = 3*dy + dx
    # s1/b1  : (1, Cmid)         f32   folded BN1 scale / bias
    # w2t_ref: (9, Cout, Cmid)   bf16  conv2 taps (already transposed), k = 3*dy + dx
    # s2/b2  : (Cout, 1)         f32   folded BN2 scale / bias
    # o_ref  : (1, Cout, Ht*W)   f32/bf16  lane-dense NCHW-flat output row strip
    # xs_ref : (Ht+4, W+2, Cin)  bf16  zero-padded concat(x2, x1) strip (+2-row halo)
    # hs_ref : (Ht+2, W+2, Cmid) bf16  zero-padded mid activation strip (+1-row halo)
    _, H, W, C2 = x2_ref.shape
    C1 = x1_ref.shape[3]
    Cin = C2 + C1
    Cmid = w1_ref.shape[2]
    Cout = o_ref.shape[1]
    Ht = o_ref.shape[2] // W
    R = pl.num_programs(1)
    r = pl.program_id(1)

    row0 = r * Ht
    if Ht % 8 == 0:
        row0 = pl.multiple_of(row0, 8)

    f32 = jnp.float32
    bf = xs_ref.dtype

    # --- zero-pad the left/right border columns (tiny slabs, every tile: the
    #     tile is fully self-contained, so both grid axes can be 'parallel') ---
    xs_ref[:, 0:1, :] = jnp.zeros((Ht + 4, 1, Cin), bf)
    xs_ref[:, W + 1:W + 2, :] = jnp.zeros((Ht + 4, 1, Cin), bf)
    hs_ref[:, 0:1, :] = jnp.zeros((Ht + 2, 1, Cmid), bf)
    hs_ref[:, W + 1:W + 2, :] = jnp.zeros((Ht + 2, 1, Cmid), bf)

    # --- gather the x strip (image rows row0-2 .. row0+Ht+1) + channel concat --
    xs_ref[2:Ht + 2, 1:W + 1, 0:C2] = x2_ref[0, pl.ds(row0, Ht), :, :]
    xs_ref[2:Ht + 2, 1:W + 1, C2:Cin] = x1_ref[0, pl.ds(row0, Ht), :, :]

    @pl.when(r > 0)
    def _copy_top_halo():
        xs_ref[0:2, 1:W + 1, 0:C2] = x2_ref[0, pl.ds(row0 - 2, 2), :, :]
        xs_ref[0:2, 1:W + 1, C2:Cin] = x1_ref[0, pl.ds(row0 - 2, 2), :, :]

    @pl.when(r == 0)
    def _zero_top_halo():
        xs_ref[0:2, :, :] = jnp.zeros((2, W + 2, Cin), bf)

    @pl.when(r < R - 1)
    def _copy_bottom_halo():
        xs_ref[Ht + 2:Ht + 4, 1:W + 1, 0:C2] = x2_ref[0, pl.ds(row0 + Ht, 2), :, :]
        xs_ref[Ht + 2:Ht + 4, 1:W + 1, C2:Cin] = x1_ref[0, pl.ds(row0 + Ht, 2), :, :]

    @pl.when(r == R - 1)
    def _zero_bottom_halo():
        xs_ref[Ht + 2:Ht + 4, :, :] = jnp.zeros((2, W + 2, Cin), bf)

    # --- stage 1: conv3x3 + BN1 + ReLU over the (Ht+2)-row h strip ------------
    # 9 accumulating MXU matmuls on shifted views; no im2col patch scratch.
    M1 = (Ht + 2) * W
    acc1 = jnp.zeros((M1, Cmid), f32)
    for k in range(9):
        dy, dx = divmod(k, 3)
        v = xs_ref[dy:dy + Ht + 2, dx:dx + W, :].reshape(M1, Cin)
        acc1 = acc1 + jnp.dot(v, w1_ref[k], preferred_element_type=f32)
    h = jnp.maximum(acc1 * s1_ref[...] + b1_ref[...], 0.0)
    hs_ref[:, 1:W + 1, :] = h.astype(bf).reshape(Ht + 2, W, Cmid)

    # out-of-image h rows are zero padding, not ReLU(BN(conv(0)))
    @pl.when(r == 0)
    def _zero_h_top():
        hs_ref[0:1, :, :] = jnp.zeros((1, W + 2, Cmid), bf)

    @pl.when(r == R - 1)
    def _zero_h_bottom():
        hs_ref[Ht + 1:Ht + 2, :, :] = jnp.zeros((1, W + 2, Cmid), bf)

    # --- stage 2: conv3x3 + BN2 + ReLU, accumulated as y^T = W2^T @ patch^T ---
    # accumulator is (Cout, Ht*W): lane-dense and already NCHW-flattened.
    M2 = Ht * W
    acc2 = jnp.zeros((Cout, M2), f32)
    for k in range(9):
        dy, dx = divmod(k, 3)
        v = hs_ref[dy:dy + Ht, dx:dx + W, :].reshape(M2, Cmid)
        acc2 = acc2 + lax.dot_general(
            w2t_ref[k], v,
            dimension_numbers=(((1,), (1,)), ((), ())),
            preferred_element_type=f32)
    y = jnp.maximum(acc2 * s2_ref[...] + b2_ref[...], 0.0)
    o_ref[0] = y.astype(o_ref.dtype)


# ---------------------------------------------------------------------------
# Helpers: tile picking + (8,128)-padding-aware VMEM accounting
# ---------------------------------------------------------------------------
def _pick_row_tile(H, W):
    """Largest useful divisor of H keeping the output block lane-dense."""
    best, best_key = H, None
    for ht in range(2, H + 1):
        if H % ht:
            continue
        m = ht * W
        if (m % 128) and ht != H:
            continue                      # keep output stores unmasked / lane-dense
        if m < 1024:
            key = (1, 1024 - m)           # too small: underutilizes the MXU
        elif m > 4096:
            key = (2, m - 4096)           # too big: bloats acc / VMEM
        else:
            key = (0, -m)                 # in range: prefer larger
        if best_key is None or key < best_key:
            best_key, best = key, ht
    return best


def _tile_bytes(shape, dtype):
    """On-chip bytes for one buffer, accounting for (sublane, lane) tile padding."""
    itemsize = jnp.dtype(dtype).itemsize
    sub = 8 * max(1, 4 // itemsize)       # 8 sublanes (f32) / 16 (bf16) per tile
    dims = (1, 1) + tuple(int(d) for d in shape)
    lead = 1
    for d in dims[:-2]:
        lead *= d
    s2 = -(-dims[-2] // sub) * sub
    s1 = -(-dims[-1] // 128) * 128
    return lead * s2 * s1 * itemsize


# ---------------------------------------------------------------------------
# Wrapper around the pallas_call
# ---------------------------------------------------------------------------
def up_double_conv(x2_nhwc, x1_nhwc,
                   w1_oihw, g1, be1, m1, v1,
                   w2_oihw, g2, be2, m2, v2,
                   eps=1e-5, row_tile=None, out_dtype=jnp.float32):
    """DoubleConv over concat([x2, x1]) with BN folded (eval) — one fused kernel.

    Returns the result NCHW-flattened: (N, Cout, H*W).
    """
    N, H, W, C2 = x2_nhwc.shape
    C1 = x1_nhwc.shape[3]
    Cin = C2 + C1
    Cmid, Cout = w1_oihw.shape[0], w2_oihw.shape[0]
    assert w1_oihw.shape[1] == Cin and w2_oihw.shape[1] == Cmid

    Ht = row_tile if row_tile is not None else _pick_row_tile(H, W)
    assert H % Ht == 0, (H, Ht)
    assert Ht == H or ((Ht * W) % 128 == 0 and Ht >= 2), \
        "row tile must keep output blocks lane-dense and allow the 2-row halo"
    R = H // Ht

    # fold BatchNorm (inference / running stats) into per-channel scale + bias
    inv1 = 1.0 / jnp.sqrt(v1.astype(jnp.float32) + eps)
    s1 = (g1 * inv1).reshape(1, Cmid).astype(jnp.float32)
    b1 = (be1 - m1 * g1 * inv1).reshape(1, Cmid).astype(jnp.float32)
    inv2 = 1.0 / jnp.sqrt(v2.astype(jnp.float32) + eps)
    s2 = (g2 * inv2).reshape(Cout, 1).astype(jnp.float32)
    b2 = (be2 - m2 * g2 * inv2).reshape(Cout, 1).astype(jnp.float32)

    # per-tap weight matrices (k = 3*dy + dx), bf16 MXU operands
    w1 = jnp.transpose(w1_oihw, (2, 3, 1, 0)).reshape(9, Cin, Cmid).astype(jnp.bfloat16)
    w2t = jnp.transpose(w2_oihw, (2, 3, 0, 1)).reshape(9, Cout, Cmid).astype(jnp.bfloat16)

    x2b = x2_nhwc.astype(jnp.bfloat16)
    x1b = x1_nhwc.astype(jnp.bfloat16)

    out_itemsize = jnp.dtype(out_dtype).itemsize
    flops = 2 * 9 * N * R * ((Ht + 2) * W * Cin * Cmid + Ht * W * Cmid * Cout)
    bytes_accessed = ((x2b.size + x1b.size + w1.size + w2t.size) * 2
                      + (s1.size + b1.size + s2.size + b2.size) * 4
                      + N * Cout * H * W * out_itemsize)
    cost = pl.CostEstimate(flops=flops, transcendentals=0,
                           bytes_accessed=bytes_accessed)

    # VMEM budget with (sublane, lane) padding, capped from the actual chip.
    blk = (_tile_bytes((1, H, W, C2), jnp.bfloat16)
           + _tile_bytes((1, H, W, C1), jnp.bfloat16)
           + _tile_bytes((9, Cin, Cmid), jnp.bfloat16)
           + _tile_bytes((9, Cout, Cmid), jnp.bfloat16)
           + 2 * _tile_bytes((1, Cmid), jnp.float32)
           + 2 * _tile_bytes((Cout, 1), jnp.float32)
           + _tile_bytes((1, Cout, Ht * W), out_dtype))
    scratch = (_tile_bytes((Ht + 4, W + 2, Cin), jnp.bfloat16)
               + _tile_bytes((Ht + 2, W + 2, Cmid), jnp.bfloat16))
    need = 2 * blk + scratch               # pipelined blocks are double-buffered
    try:
        cap = int(pltpu.get_tpu_info().vmem_capacity_bytes)
    except Exception:
        cap = 64 * 1024 * 1024
    usable = (cap * 7) // 8
    vmem_limit = int(min(max(2 * need, 32 * 1024 * 1024), usable))

    grid_spec = pltpu.PrefetchScalarGridSpec(
        num_scalar_prefetch=0,
        grid=(N, R),
        in_specs=[
            pl.BlockSpec((1, H, W, C2), lambda n, r: (n, 0, 0, 0)),   # resident per n
            pl.BlockSpec((1, H, W, C1), lambda n, r: (n, 0, 0, 0)),
            pl.BlockSpec((9, Cin, Cmid), lambda n, r: (0, 0, 0)),
            pl.BlockSpec((1, Cmid), lambda n, r: (0, 0)),
            pl.BlockSpec((1, Cmid), lambda n, r: (0, 0)),
            pl.BlockSpec((9, Cout, Cmid), lambda n, r: (0, 0, 0)),
            pl.BlockSpec((Cout, 1), lambda n, r: (0, 0)),
            pl.BlockSpec((Cout, 1), lambda n, r: (0, 0)),
        ],
        out_specs=pl.BlockSpec((1, Cout, Ht * W), lambda n, r: (n, 0, r)),
        scratch_shapes=[
            pltpu.VMEM((Ht + 4, W + 2, Cin), jnp.bfloat16),   # padded concat strip
            pltpu.VMEM((Ht + 2, W + 2, Cmid), jnp.bfloat16),  # padded mid-activation strip
        ],
    )

    return pl.pallas_call(
        _up_doubleconv_kernel,
        out_shape=jax.ShapeDtypeStruct((N, Cout, H * W), out_dtype),
        grid_spec=grid_spec,
        compiler_params=pltpu.CompilerParams(
            dimension_semantics=("parallel", "parallel"),   # strip-local -> 2-TC friendly
            vmem_limit_bytes=vmem_limit,
        ),
        cost_estimate=cost,
    )(x2b, x1b, w1, s1, b1, w2t, s2, b2)


# ---------------------------------------------------------------------------
# Glue: gather-free bilinear x2 upsample (align_corners=True) — plain JAX
# ---------------------------------------------------------------------------
def _interp_matrix(n_in, n_out):
    if n_in == 1:
        return jnp.ones((n_out, 1), jnp.float32)
    src = jnp.arange(n_out, dtype=jnp.float32) * ((n_in - 1) / (n_out - 1))
    i0 = jnp.clip(jnp.floor(src).astype(jnp.int32), 0, n_in - 1)
    i1 = jnp.clip(i0 + 1, 0, n_in - 1)
    f = src - i0.astype(jnp.float32)
    return (jax.nn.one_hot(i0, n_in, dtype=jnp.float32) * (1.0 - f)[:, None]
            + jax.nn.one_hot(i1, n_in, dtype=jnp.float32) * f[:, None])


def bilinear_up2_align_corners(x):
    """x: NHWC -> 2x bilinear upsample (align_corners=True) via interpolation matmuls."""
    _, H, W, _ = x.shape
    ah = _interp_matrix(H, 2 * H)
    aw = _interp_matrix(W, 2 * W)
    y = jnp.einsum("oh,nhwc->nowc", ah, x)
    return jnp.einsum("pw,nowc->nopc", aw, y)


# ---------------------------------------------------------------------------
# Up module (bilinear=True branch)
# ---------------------------------------------------------------------------
def init_up_params(key, in_channels, out_channels):
    mid = in_channels // 2
    k1, k2, k3, k4, k5, k6 = jax.random.split(key, 6)

    def conv_w(k, co, ci):
        bound = 1.0 / jnp.sqrt(float(ci * 9))
        return jax.random.uniform(k, (co, ci, 3, 3), jnp.float32, -bound, bound)

    return {
        # DoubleConv(in_channels, out_channels, mid_channels=in_channels // 2)
        "w1": conv_w(k1, mid, in_channels),
        "g1": jax.random.uniform(k2, (mid,), jnp.float32, 0.5, 1.5),
        "b1": jax.random.uniform(k3, (mid,), jnp.float32, -0.5, 0.5),
        "m1": jnp.zeros((mid,), jnp.float32),
        "v1": jnp.ones((mid,), jnp.float32),
        "w2": conv_w(k4, out_channels, mid),
        "g2": jax.random.uniform(k5, (out_channels,), jnp.float32, 0.5, 1.5),
        "b2": jax.random.uniform(k6, (out_channels,), jnp.float32, -0.5, 0.5),
        "m2": jnp.zeros((out_channels,), jnp.float32),
        "v2": jnp.ones((out_channels,), jnp.float32),
    }


def up_forward(params, x1_nchw, x2_nchw, row_tile=None, out_dtype=jnp.float32):
    # NCHW (PyTorch convention) -> NHWC (kernel layout)
    x1 = jnp.transpose(x1_nchw, (0, 2, 3, 1))
    x2 = jnp.transpose(x2_nchw, (0, 2, 3, 1))

    # nn.Upsample(scale_factor=2, mode='bilinear', align_corners=True)
    x1 = bilinear_up2_align_corners(x1)

    # F.pad(x1, [diffX//2, diffX - diffX//2, diffY//2, diffY - diffY//2])
    diffY = x2.shape[1] - x1.shape[1]
    diffX = x2.shape[2] - x1.shape[2]
    x1 = jnp.pad(
        x1,
        ((0, 0),
         (diffY // 2, diffY - diffY // 2),
         (diffX // 2, diffX - diffX // 2),
         (0, 0)),
    )

    # fused [concat -> conv3x3 -> BN -> ReLU -> conv3x3 -> BN -> ReLU]
    y = up_double_conv(
        x2, x1,
        params["w1"], params["g1"], params["b1"], params["m1"], params["v1"],
        params["w2"], params["g2"], params["b2"], params["m2"], params["v2"],
        row_tile=row_tile, out_dtype=out_dtype)

    N, H, W, _ = x2.shape
    Cout = params["w2"].shape[0]
    return y.reshape(N, Cout, H, W)           # kernel output is already NCHW-flat


# ---------------------------------------------------------------------------
# Pure-JAX reference (f32) for correctness checking
# ---------------------------------------------------------------------------
def up_forward_reference(params, x1_nchw, x2_nchw, eps=1e-5):
    x1 = jnp.transpose(x1_nchw, (0, 2, 3, 1))
    x2 = jnp.transpose(x2_nchw, (0, 2, 3, 1))
    x1 = bilinear_up2_align_corners(x1)
    dY = x2.shape[1] - x1.shape[1]
    dX = x2.shape[2] - x1.shape[2]
    x1 = jnp.pad(x1, ((0, 0), (dY // 2, dY - dY // 2), (dX // 2, dX - dX // 2), (0, 0)))
    x = jnp.concatenate([x2, x1], axis=-1)

    def conv_bn_relu(x, w_oihw, g, b, m, v):
        w = jnp.transpose(w_oihw, (2, 3, 1, 0))  # HWIO
        y = lax.conv_general_dilated(x, w, (1, 1), "SAME",
                                     dimension_numbers=("NHWC", "HWIO", "NHWC"))
        y = (y - m) * (g / jnp.sqrt(v + eps)) + b
        return jnp.maximum(y, 0.0)

    h = conv_bn_relu(x, params["w1"], params["g1"], params["b1"], params["m1"], params["v1"])
    y = conv_bn_relu(h, params["w2"], params["g2"], params["b2"], params["m2"], params["v2"])
    return jnp.transpose(y, (0, 3, 1, 2))


if __name__ == "__main__":
    key = jax.random.PRNGKey(0)
    kp, kx1, kx2 = jax.random.split(key, 3)

    # Up(in_channels=8, out_channels=4, bilinear=True)
    in_channels, out_channels = 8, 4
    N, H2, W2 = 2, 16, 16

    # x1: deeper features (half channels, half spatial); x2: skip connection
    x1 = jax.random.normal(kx1, (N, in_channels // 2, H2 // 2, W2 // 2), jnp.float32)
    x2 = jax.random.normal(kx2, (N, in_channels // 2, H2, W2), jnp.float32)

    params = init_up_params(kp, in_channels, out_channels)

    ref = up_forward_reference(params, x1, x2)
    tol = 5e-2 * (1.0 + float(jnp.max(jnp.abs(ref))))   # bf16 matmul operands

    # default tile (single strip) and an explicit 2-strip tiling that exercises
    # the halo copy / halo zero paths of the kernel.
    for rt in (None, 8):
        fwd = jax.jit(functools.partial(up_forward, row_tile=rt))
        out = jax.block_until_ready(fwd(params, x1, x2))
        assert out.shape == (N, out_channels, H2, W2), out.shape
        assert bool(jnp.all(jnp.isfinite(out)))
        err = float(jnp.max(jnp.abs(out - ref)))
        assert err <= tol, (rt, err, tol)

    print("KERNEL_OK")
</pallas_src>

<mosaic_0001>
module attributes {stable_mosaic.version = 11 : i64} {
  func.func @_up_doubleconv_kernel(%arg0: i32, %arg1: i32, %arg2: memref<1x16x16x4xbf16, #tpu.memory_space<vmem>>, %arg3: memref<1x16x16x4xbf16, #tpu.memory_space<vmem>>, %arg4: memref<9x8x4xbf16, #tpu.memory_space<vmem>>, %arg5: memref<1x4xf32, #tpu.memory_space<vmem>>, %arg6: memref<1x4xf32, #tpu.memory_space<vmem>>, %arg7: memref<9x4x4xbf16, #tpu.memory_space<vmem>>, %arg8: memref<4x1xf32, #tpu.memory_space<vmem>>, %arg9: memref<4x1xf32, #tpu.memory_space<vmem>>, %arg10: memref<1x4x256xf32, #tpu.memory_space<vmem>>, %arg11: memref<20x18x8xbf16, #tpu.memory_space<vmem>>, %arg12: memref<18x18x4xbf16, #tpu.memory_space<vmem>>) attributes {dimension_semantics = [#tpu.dimension_semantics<parallel>, #tpu.dimension_semantics<parallel>], iteration_bounds = array<i64: 2, 1>, scalar_prefetch = 0 : i64, scratch_operands = 2 : i64, tpu.core_type = #tpu.core_type<tc>, window_params = [{transform_indices = @transform_0, window_bounds = array<i64: 1, 16, 16, 4>}, {transform_indices = @transform_1, window_bounds = array<i64: 1, 16, 16, 4>}, {pipeline_mode = #tpu.pipeline_mode<synchronous>, transform_indices = @transform_2, window_bounds = array<i64: 9, 8, 4>}, {pipeline_mode = #tpu.pipeline_mode<synchronous>, transform_indices = @transform_3, window_bounds = array<i64: 1, 4>}, {pipeline_mode = #tpu.pipeline_mode<synchronous>, transform_indices = @transform_4, window_bounds = array<i64: 1, 4>}, {pipeline_mode = #tpu.pipeline_mode<synchronous>, transform_indices = @transform_5, window_bounds = array<i64: 9, 4, 4>}, {pipeline_mode = #tpu.pipeline_mode<synchronous>, transform_indices = @transform_6, window_bounds = array<i64: 4, 1>}, {pipeline_mode = #tpu.pipeline_mode<synchronous>, transform_indices = @transform_7, window_bounds = array<i64: 4, 1>}, {transform_indices = @transform_8, window_bounds = array<i64: 1, 4, 256>}]} {
    %c16_i32 = arith.constant 16 : i32
    %0 = arith.muli %arg1, %c16_i32 : i32
    %1 = tpu.assume_multiple %0, 8 : i32
    %cst = arith.constant 0.000000e+00 : bf16
    %2 = vector.broadcast %cst : bf16 to vector<20x1x8xbf16>
    %c0 = arith.constant 0 : index
    %c0_0 = arith.constant 0 : index
    %c0_1 = arith.constant 0 : index
    %3 = vector.load %arg11[%c0, %c0_0, %c0_1] : memref<20x18x8xbf16, #tpu.memory_space<vmem>>, vector<20x1x8xbf16>
    tpu.vector_store %arg11[%c0, %c0_0, %c0_1], %2 {strides = array<i32>} : memref<20x18x8xbf16, #tpu.memory_space<vmem>>, vector<20x1x8xbf16>,
    %cst_2 = arith.constant 0.000000e+00 : bf16
    %4 = vector.broadcast %cst_2 : bf16 to vector<20x1x8xbf16>
    %c0_3 = arith.constant 0 : index
    %c17 = arith.constant 17 : index
    %c0_4 = arith.constant 0 : index
    %5 = vector.load %arg11[%c0_3, %c17, %c0_4] : memref<20x18x8xbf16, #tpu.memory_space<vmem>>, vector<20x1x8xbf16>
    tpu.vector_store %arg11[%c0_3, %c17, %c0_4], %4 {strides = array<i32>} : memref<20x18x8xbf16, #tpu.memory_space<vmem>>, vector<20x1x8xbf16>,
    %cst_5 = arith.constant 0.000000e+00 : bf16
    %6 = vector.broadcast %cst_5 : bf16 to vector<18x1x4xbf16>
    %c0_6 = arith.constant 0 : index
    %c0_7 = arith.constant 0 : index
    %c0_8 = arith.constant 0 : index
    %7 = vector.load %arg12[%c0_6, %c0_7, %c0_8] : memref<18x18x4xbf16, #tpu.memory_space<vmem>>, vector<18x1x4xbf16>
    tpu.vector_store %arg12[%c0_6, %c0_7, %c0_8], %6 {strides = array<i32>} : memref<18x18x4xbf16, #tpu.memory_space<vmem>>, vector<18x1x4xbf16>,
    %cst_9 = arith.constant 0.000000e+00 : bf16
    %8 = vector.broadcast %cst_9 : bf16 to vector<18x1x4xbf16>
    %c0_10 = arith.constant 0 : index
    %c17_11 = arith.constant 17 : index
    %c0_12 = arith.constant 0 : index
    %9 = vector.load %arg12[%c0_10, %c17_11, %c0_12] : memref<18x18x4xbf16, #tpu.memory_space<vmem>>, vector<18x1x4xbf16>
    tpu.vector_store %arg12[%c0_10, %c17_11, %c0_12], %8 {strides = array<i32>} : memref<18x18x4xbf16, #tpu.memory_space<vmem>>, vector<18x1x4xbf16>,
    %c0_13 = arith.constant 0 : index
    %10 = arith.index_cast %1 : i32 to index
    %c0_14 = arith.constant 0 : index
    %c0_15 = arith.constant 0 : index
    %11 = vector.load %arg2[%c0_13, %10, %c0_14, %c0_15] : memref<1x16x16x4xbf16, #tpu.memory_space<vmem>>, vector<1x16x16x4xbf16>
    %12 = vector.shape_cast %11 : vector<1x16x16x4xbf16> to vector<16x16x4xbf16>
    %c2 = arith.constant 2 : index
    %c1 = arith.constant 1 : index
    %c0_16 = arith.constant 0 : index
    %13 = vector.load %arg11[%c2, %c1, %c0_16] : memref<20x18x8xbf16, #tpu.memory_space<vmem>>, vector<16x16x4xbf16>
    tpu.vector_store %arg11[%c2, %c1, %c0_16], %12 {strides = array<i32>} : memref<20x18x8xbf16, #tpu.memory_space<vmem>>, vector<16x16x4xbf16>,
    %c0_17 = arith.constant 0 : index
    %14 = arith.index_cast %1 : i32 to index
    %c0_18 = arith.constant 0 : index
    %c0_19 = arith.constant 0 : index
    %15 = vector.load %arg3[%c0_17, %14, %c0_18, %c0_19] : memref<1x16x16x4xbf16, #tpu.memory_space<vmem>>, vector<1x16x16x4xbf16>
    %16 = vector.shape_cast %15 : vector<1x16x16x4xbf16> to vector<16x16x4xbf16>
    %c2_20 = arith.constant 2 : index
    %c1_21 = arith.constant 1 : index
    %c4 = arith.constant 4 : index
    %17 = vector.load %arg11[%c2_20, %c1_21, %c4] : memref<20x18x8xbf16, #tpu.memory_space<vmem>>, vector<16x16x4xbf16>
    tpu.vector_store %arg11[%c2_20, %c1_21, %c4], %16 {strides = array<i32>} : memref<20x18x8xbf16, #tpu.memory_space<vmem>>, vector<16x16x4xbf16>,
    %c0_i32 = arith.constant 0 : i32
    %18 = arith.cmpi sgt, %arg1, %c0_i32 : i32
    %19 = arith.extui %18 : i1 to i32
    %c0_i32_22 = arith.constant 0 : i32
    %20 = arith.cmpi ne, %19, %c0_i32_22 : i32
    scf.if %20 {
      %c2_i32 = arith.constant 2 : i32
      %168 = arith.subi %1, %c2_i32 : i32
      %c0_172 = arith.constant 0 : index
      %169 = arith.index_cast %168 : i32 to index
      %c0_173 = arith.constant 0 : index
      %c0_174 = arith.constant 0 : index
      %170 = vector.load %arg2[%c0_172, %169, %c0_173, %c0_174] : memref<1x16x16x4xbf16, #tpu.memory_space<vmem>>, vector<1x2x16x4xbf16>
      %171 = vector.shape_cast %170 : vector<1x2x16x4xbf16> to vector<2x16x4xbf16>
      %c0_175 = arith.constant 0 : index
      %c1_176 = arith.constant 1 : index
      %c0_177 = arith.constant 0 : index
      %172 = vector.load %arg11[%c0_175, %c1_176, %c0_177] : memref<20x18x8xbf16, #tpu.memory_space<vmem>>, vector<2x16x4xbf16>
      tpu.vector_store %arg11[%c0_175, %c1_176, %c0_177], %171 {strides = array<i32>} : memref<20x18x8xbf16, #tpu.memory_space<vmem>>, vector<2x16x4xbf16>,
      %c2_i32_178 = arith.constant 2 : i32
      %173 = arith.subi %1, %c2_i32_178 : i32
      %c0_179 = arith.constant 0 : index
      %174 = arith.index_cast %173 : i32 to index
      %c0_180 = arith.constant 0 : index
      %c0_181 = arith.constant 0 : index
      %175 = vector.load %arg3[%c0_179, %174, %c0_180, %c0_181] : memref<1x16x16x4xbf16, #tpu.memory_space<vmem>>, vector<1x2x16x4xbf16>
      %176 = vector.shape_cast %175 : vector<1x2x16x4xbf16> to vector<2x16x4xbf16>
      %c0_182 = arith.constant 0 : index
      %c1_183 = arith.constant 1 : index
      %c4_184 = arith.constant 4 : index
      %177 = vector.load %arg11[%c0_182, %c1_183, %c4_184] : memref<20x18x8xbf16, #tpu.memory_space<vmem>>, vector<2x16x4xbf16>
      tpu.vector_store %arg11[%c0_182, %c1_183, %c4_184], %176 {strides = array<i32>} : memref<20x18x8xbf16, #tpu.memory_space<vmem>>, vector<2x16x4xbf16>,
    } else {
    }
    %c0_i32_23 = arith.constant 0 : i32
    %21 = arith.cmpi eq, %arg1, %c0_i32_23 : i32
    %22 = arith.extui %21 : i1 to i32
    %c0_i32_24 = arith.constant 0 : i32
    %23 = arith.cmpi ne, %22, %c0_i32_24 : i32
    scf.if %23 {
      %cst_172 = arith.constant 0.000000e+00 : bf16
      %168 = vector.broadcast %cst_172 : bf16 to vector<2x18x8xbf16>
      %c0_173 = arith.constant 0 : index
      %c0_174 = arith.constant 0 : index
      %c0_175 = arith.constant 0 : index
      %169 = vector.load %arg11[%c0_173, %c0_174, %c0_175] : memref<20x18x8xbf16, #tpu.memory_space<vmem>>, vector<2x18x8xbf16>
      tpu.vector_store %arg11[%c0_173, %c0_174, %c0_175], %168 {strides = array<i32>} : memref<20x18x8xbf16, #tpu.memory_space<vmem>>, vector<2x18x8xbf16>,
    } else {
    }
    %c0_i32_25 = arith.constant 0 : i32
    %24 = arith.cmpi slt, %arg1, %c0_i32_25 : i32
    %25 = arith.extui %24 : i1 to i32
    %c0_i32_26 = arith.constant 0 : i32
    %26 = arith.cmpi ne, %25, %c0_i32_26 : i32
    scf.if %26 {
      %c16_i32_172 = arith.constant 16 : i32
      %168 = arith.addi %1, %c16_i32_172 : i32
      %c0_173 = arith.constant 0 : index
      %169 = arith.index_cast %168 : i32 to index
      %c0_174 = arith.constant 0 : index
      %c0_175 = arith.constant 0 : index
      %170 = vector.load %arg2[%c0_173, %169, %c0_174, %c0_175] : memref<1x16x16x4xbf16, #tpu.memory_space<vmem>>, vector<1x2x16x4xbf16>
      %171 = vector.shape_cast %170 : vector<1x2x16x4xbf16> to vector<2x16x4xbf16>
      %c18 = arith.constant 18 : index
      %c1_176 = arith.constant 1 : index
      %c0_177 = arith.constant 0 : index
      %172 = vector.load %arg11[%c18, %c1_176, %c0_177] : memref<20x18x8xbf16, #tpu.memory_space<vmem>>, vector<2x16x4xbf16>
      tpu.vector_store %arg11[%c18, %c1_176, %c0_177], %171 {strides = array<i32>} : memref<20x18x8xbf16, #tpu.memory_space<vmem>>, vector<2x16x4xbf16>,
      %c16_i32_178 = arith.constant 16 : i32
      %173 = arith.addi %1, %c16_i32_178 : i32
      %c0_179 = arith.constant 0 : index
      %174 = arith.index_cast %173 : i32 to index
      %c0_180 = arith.constant 0 : index
      %c0_181 = arith.constant 0 : index
      %175 = vector.load %arg3[%c0_179, %174, %c0_180, %c0_181] : memref<1x16x16x4xbf16, #tpu.memory_space<vmem>>, vector<1x2x16x4xbf16>
      %176 = vector.shape_cast %175 : vector<1x2x16x4xbf16> to vector<2x16x4xbf16>
      %c18_182 = arith.constant 18 : index
      %c1_183 = arith.constant 1 : index
      %c4_184 = arith.constant 4 : index
      %177 = vector.load %arg11[%c18_182, %c1_183, %c4_184] : memref<20x18x8xbf16, #tpu.memory_space<vmem>>, vector<2x16x4xbf16>
      tpu.vector_store %arg11[%c18_182, %c1_183, %c4_184], %176 {strides = array<i32>} : memref<20x18x8xbf16, #tpu.memory_space<vmem>>, vector<2x16x4xbf16>,
    } else {
    }
    %c0_i32_27 = arith.constant 0 : i32
    %27 = arith.cmpi eq, %arg1, %c0_i32_27 : i32
    %28 = arith.extui %27 : i1 to i32
    %c0_i32_28 = arith.constant 0 : i32
    %29 = arith.cmpi ne, %28, %c0_i32_28 : i32
    scf.if %29 {
      %cst_172 = arith.constant 0.000000e+00 : bf16
      %168 = vector.broadcast %cst_172 : bf16 to vector<2x18x8xbf16>
      %c18 = arith.constant 18 : index
      %c0_173 = arith.constant 0 : index
      %c0_174 = arith.constant 0 : index
      %169 = vector.load %arg11[%c18, %c0_173, %c0_174] : memref<20x18x8xbf16, #tpu.memory_space<vmem>>, vector<2x18x8xbf16>
      tpu.vector_store %arg11[%c18, %c0_173, %c0_174], %168 {strides = array<i32>} : memref<20x18x8xbf16, #tpu.memory_space<vmem>>, vector<2x18x8xbf16>,
    } else {
    }
    %cst_29 = arith.constant 0.000000e+00 : f32
    %30 = vector.broadcast %cst_29 : f32 to vector<288x4xf32>
    %c0_30 = arith.constant 0 : index
    %c0_31 = arith.constant 0 : index
    %c0_32 = arith.constant 0 : index
    %31 = vector.load %arg11[%c0_30, %c0_31, %c0_32] : memref<20x18x8xbf16, #tpu.memory_space<vmem>>, vector<18x16x8xbf16>
    %32 = vector.shape_cast %31 : vector<18x16x8xbf16> to vector<288x8xbf16>
    %c0_33 = arith.constant 0 : index
    %c0_34 = arith.constant 0 : index
    %c0_35 = arith.constant 0 : index
    %33 = vector.load %arg4[%c0_33, %c0_34, %c0_35] : memref<9x8x4xbf16, #tpu.memory_space<vmem>>, vector<1x8x4xbf16>
    %34 = vector.shape_cast %33 : vector<1x8x4xbf16> to vector<8x4xbf16>
    %cst_36 = arith.constant dense<0.000000e+00> : vector<288x4xf32>
    %35 = tpu.matmul %32, %34, %cst_36 {dimension_numbers = #tpu.dot_dimension_numbers<[1], [0], [0], [1], [0, 0, 1, 1], [], []>} : vector<288x8xbf16>, vector<8x4xbf16>, vector<288x4xf32> -> vector<288x4xf32>
    %36 = arith.addf %30, %35 : vector<288x4xf32>
    %c0_37 = arith.constant 0 : index
    %c1_38 = arith.constant 1 : index
    %c0_39 = arith.constant 0 : index
    %37 = vector.load %arg11[%c0_37, %c1_38, %c0_39] : memref<20x18x8xbf16, #tpu.memory_space<vmem>>, vector<18x16x8xbf16>
    %38 = vector.shape_cast %37 : vector<18x16x8xbf16> to vector<288x8xbf16>
    %c1_40 = arith.constant 1 : index
    %c0_41 = arith.constant 0 : index
    %c0_42 = arith.constant 0 : index
    %39 = vector.load %arg4[%c1_40, %c0_41, %c0_42] : memref<9x8x4xbf16, #tpu.memory_space<vmem>>, vector<1x8x4xbf16>
    %40 = vector.shape_cast %39 : vector<1x8x4xbf16> to vector<8x4xbf16>
    %cst_43 = arith.constant dense<0.000000e+00> : vector<288x4xf32>
    %41 = tpu.matmul %38, %40, %cst_43 {dimension_numbers = #tpu.dot_dimension_numbers<[1], [0], [0], [1], [0, 0, 1, 1], [], []>} : vector<288x8xbf16>, vector<8x4xbf16>, vector<288x4xf32> -> vector<288x4xf32>
    %42 = arith.addf %36, %41 : vector<288x4xf32>
    %c0_44 = arith.constant 0 : index
    %c2_45 = arith.constant 2 : index
    %c0_46 = arith.constant 0 : index
    %43 = vector.load %arg11[%c0_44, %c2_45, %c0_46] : memref<20x18x8xbf16, #tpu.memory_space<vmem>>, vector<18x16x8xbf16>
    %44 = vector.shape_cast %43 : vector<18x16x8xbf16> to vector<288x8xbf16>
    %c2_47 = arith.constant 2 : index
    %c0_48 = arith.constant 0 : index
    %c0_49 = arith.constant 0 : index
    %45 = vector.load %arg4[%c2_47, %c0_48, %c0_49] : memref<9x8x4xbf16, #tpu.memory_space<vmem>>, vector<1x8x4xbf16>
    %46 = vector.shape_cast %45 : vector<1x8x4xbf16> to vector<8x4xbf16>
    %cst_50 = arith.constant dense<0.000000e+00> : vector<288x4xf32>
    %47 = tpu.matmul %44, %46, %cst_50 {dimension_numbers = #tpu.dot_dimension_numbers<[1], [0], [0], [1], [0, 0, 1, 1], [], []>} : vector<288x8xbf16>, vector<8x4xbf16>, vector<288x4xf32> -> vector<288x4xf32>
    %48 = arith.addf %42, %47 : vector<288x4xf32>
    %c1_51 = arith.constant 1 : index
    %c0_52 = arith.constant 0 : index
    %c0_53 = arith.constant 0 : index
    %49 = vector.load %arg11[%c1_51, %c0_52, %c0_53] : memref<20x18x8xbf16, #tpu.memory_space<vmem>>, vector<18x16x8xbf16>
    %50 = vector.shape_cast %49 : vector<18x16x8xbf16> to vector<288x8xbf16>
    %c3 = arith.constant 3 : index
    %c0_54 = arith.constant 0 : index
    %c0_55 = arith.constant 0 : index
    %51 = vector.load %arg4[%c3, %c0_54, %c0_55] : memref<9x8x4xbf16, #tpu.memory_space<vmem>>, vector<1x8x4xbf16>
    %52 = vector.shape_cast %51 : vector<1x8x4xbf16> to vector<8x4xbf16>
    %cst_56 = arith.constant dense<0.000000e+00> : vector<288x4xf32>
    %53 = tpu.matmul %50, %52, %cst_56 {dimension_numbers = #tpu.dot_dimension_numbers<[1], [0], [0], [1], [0, 0, 1, 1], [], []>} : vector<288x8xbf16>, vector<8x4xbf16>, vector<288x4xf32> -> vector<288x4xf32>
    %54 = arith.addf %48, %53 : vector<288x4xf32>
    %c1_57 = arith.constant 1 : index
    %c1_58 = arith.constant 1 : index
    %c0_59 = arith.constant 0 : index
    %55 = vector.load %arg11[%c1_57, %c1_58, %c0_59] : memref<20x18x8xbf16, #tpu.memory_space<vmem>>, vector<18x16x8xbf16>
    %56 = vector.shape_cast %55 : vector<18x16x8xbf16> to vector<288x8xbf16>
    %c4_60 = arith.constant 4 : index
    %c0_61 = arith.constant 0 : index
    %c0_62 = arith.constant 0 : index
    %57 = vector.load %arg4[%c4_60, %c0_61, %c0_62] : memref<9x8x4xbf16, #tpu.memory_space<vmem>>, vector<1x8x4xbf16>
    %58 = vector.shape_cast %57 : vector<1x8x4xbf16> to vector<8x4xbf16>
    %cst_63 = arith.constant dense<0.000000e+00> : vector<288x4xf32>
    %59 = tpu.matmul %56, %58, %cst_63 {dimension_numbers = #tpu.dot_dimension_numbers<[1], [0], [0], [1], [0, 0, 1, 1], [], []>} : vector<288x8xbf16>, vector<8x4xbf16>, vector<288x4xf32> -> vector<288x4xf32>
    %60 = arith.addf %54, %59 : vector<288x4xf32>
    %c1_64 = arith.constant 1 : index
    %c2_65 = arith.constant 2 : index
    %c0_66 = arith.constant 0 : index
    %61 = vector.load %arg11[%c1_64, %c2_65, %c0_66] : memref<20x18x8xbf16, #tpu.memory_space<vmem>>, vector<18x16x8xbf16>
    %62 = vector.shape_cast %61 : vector<18x16x8xbf16> to vector<288x8xbf16>
    %c5 = arith.constant 5 : index
    %c0_67 = arith.constant 0 : index
    %c0_68 = arith.constant 0 : index
    %63 = vector.load %arg4[%c5, %c0_67, %c0_68] : memref<9x8x4xbf16, #tpu.memory_space<vmem>>, vector<1x8x4xbf16>
    %64 = vector.shape_cast %63 : vector<1x8x4xbf16> to vector<8x4xbf16>
    %cst_69 = arith.constant dense<0.000000e+00> : vector<288x4xf32>
    %65 = tpu.matmul %62, %64, %cst_69 {dimension_numbers = #tpu.dot_dimension_numbers<[1], [0], [0], [1], [0, 0, 1, 1], [], []>} : vector<288x8xbf16>, vector<8x4xbf16>, vector<288x4xf32> -> vector<288x4xf32>
    %66 = arith.addf %60, %65 : vector<288x4xf32>
    %c2_70 = arith.constant 2 : index
    %c0_71 = arith.constant 0 : index
    %c0_72 = arith.constant 0 : index
    %67 = vector.load %arg11[%c2_70, %c0_71, %c0_72] : memref<20x18x8xbf16, #tpu.memory_space<vmem>>, vector<18x16x8xbf16>
    %68 = vector.shape_cast %67 : vector<18x16x8xbf16> to vector<288x8xbf16>
    %c6 = arith.constant 6 : index
    %c0_73 = arith.constant 0 : index
    %c0_74 = arith.constant 0 : index
    %69 = vector.load %arg4[%c6, %c0_73, %c0_74] : memref<9x8x4xbf16, #tpu.memory_space<vmem>>, vector<1x8x4xbf16>
    %70 = vector.shape_cast %69 : vector<1x8x4xbf16> to vector<8x4xbf16>
    %cst_75 = arith.constant dense<0.000000e+00> : vector<288x4xf32>
    %71 = tpu.matmul %68, %70, %cst_75 {dimension_numbers = #tpu.dot_dimension_numbers<[1], [0], [0], [1], [0, 0, 1, 1], [], []>} : vector<288x8xbf16>, vector<8x4xbf16>, vector<288x4xf32> -> vector<288x4xf32>
    %72 = arith.addf %66, %71 : vector<288x4xf32>
    %c2_76 = arith.constant 2 : index
    %c1_77 = arith.constant 1 : index
    %c0_78 = arith.constant 0 : index
    %73 = vector.load %arg11[%c2_76, %c1_77, %c0_78] : memref<20x18x8xbf16, #tpu.memory_space<vmem>>, vector<18x16x8xbf16>
    %74 = vector.shape_cast %73 : vector<18x16x8xbf16> to vector<288x8xbf16>
    %c7 = arith.constant 7 : index
    %c0_79 = arith.constant 0 : index
    %c0_80 = arith.constant 0 : index
    %75 = vector.load %arg4[%c7, %c0_79, %c0_80] : memref<9x8x4xbf16, #tpu.memory_space<vmem>>, vector<1x8x4xbf16>
    %76 = vector.shape_cast %75 : vector<1x8x4xbf16> to vector<8x4xbf16>
    %cst_81 = arith.constant dense<0.000000e+00> : vector<288x4xf32>
    %77 = tpu.matmul %74, %76, %cst_81 {dimension_numbers = #tpu.dot_dimension_numbers<[1], [0], [0], [1], [0, 0, 1, 1], [], []>} : vector<288x8xbf16>, vector<8x4xbf16>, vector<288x4xf32> -> vector<288x4xf32>
    %78 = arith.addf %72, %77 : vector<288x4xf32>
    %c2_82 = arith.constant 2 : index
    %c2_83 = arith.constant 2 : index
    %c0_84 = arith.constant 0 : index
    %79 = vector.load %arg11[%c2_82, %c2_83, %c0_84] : memref<20x18x8xbf16, #tpu.memory_space<vmem>>, vector<18x16x8xbf16>
    %80 = vector.shape_cast %79 : vector<18x16x8xbf16> to vector<288x8xbf16>
    %c8 = arith.constant 8 : index
    %c0_85 = arith.constant 0 : index
    %c0_86 = arith.constant 0 : index
    %81 = vector.load %arg4[%c8, %c0_85, %c0_86] : memref<9x8x4xbf16, #tpu.memory_space<vmem>>, vector<1x8x4xbf16>
    %82 = vector.shape_cast %81 : vector<1x8x4xbf16> to vector<8x4xbf16>
    %cst_87 = arith.constant dense<0.000000e+00> : vector<288x4xf32>
    %83 = tpu.matmul %80, %82, %cst_87 {dimension_numbers = #tpu.dot_dimension_numbers<[1], [0], [0], [1], [0, 0, 1, 1], [], []>} : vector<288x8xbf16>, vector<8x4xbf16>, vector<288x4xf32> -> vector<288x4xf32>
    %84 = arith.addf %78, %83 : vector<288x4xf32>
    %c0_88 = arith.constant 0 : index
    %c0_89 = arith.constant 0 : index
    %85 = vector.load %arg5[%c0_88, %c0_89] : memref<1x4xf32, #tpu.memory_space<vmem>>, vector<1x4xf32>
    %86 = vector.broadcast %85 : vector<1x4xf32> to vector<288x4xf32>
    %87 = arith.mulf %84, %86 : vector<288x4xf32>
    %c0_90 = arith.constant 0 : index
    %c0_91 = arith.constant 0 : index
    %88 = vector.load %arg6[%c0_90, %c0_91] : memref<1x4xf32, #tpu.memory_space<vmem>>, vector<1x4xf32>
    %89 = vector.broadcast %88 : vector<1x4xf32> to vector<288x4xf32>
    %90 = arith.addf %87, %89 : vector<288x4xf32>
    %cst_92 = arith.constant 0.000000e+00 : f32
    %91 = vector.broadcast %cst_92 : f32 to vector<288x4xf32>
    %92 = arith.maximumf %90, %91 : vector<288x4xf32>
    %93 = arith.truncf %92 : vector<288x4xf32> to vector<288x4xbf16>
    %94 = vector.shape_cast %93 : vector<288x4xbf16> to vector<18x16x4xbf16>
    %c0_93 = arith.constant 0 : index
    %c1_94 = arith.constant 1 : index
    %c0_95 = arith.constant 0 : index
    %95 = vector.load %arg12[%c0_93, %c1_94, %c0_95] : memref<18x18x4xbf16, #tpu.memory_space<vmem>>, vector<18x16x4xbf16>
    tpu.vector_store %arg12[%c0_93, %c1_94, %c0_95], %94 {strides = array<i32>} : memref<18x18x4xbf16, #tpu.memory_space<vmem>>, vector<18x16x4xbf16>,
    %c0_i32_96 = arith.constant 0 : i32
    %96 = arith.cmpi eq, %arg1, %c0_i32_96 : i32
    %97 = arith.extui %96 : i1 to i32
    %c0_i32_97 = arith.constant 0 : i32
    %98 = arith.cmpi ne, %97, %c0_i32_97 : i32
    scf.if %98 {
      %cst_172 = arith.constant 0.000000e+00 : bf16
      %168 = vector.broadcast %cst_172 : bf16 to vector<1x18x4xbf16>
      %c0_173 = arith.constant 0 : index
      %c0_174 = arith.constant 0 : index
      %c0_175 = arith.constant 0 : index
      %169 = vector.load %arg12[%c0_173, %c0_174, %c0_175] : memref<18x18x4xbf16, #tpu.memory_space<vmem>>, vector<1x18x4xbf16>
      tpu.vector_store %arg12[%c0_173, %c0_174, %c0_175], %168 {strides = array<i32>} : memref<18x18x4xbf16, #tpu.memory_space<vmem>>, vector<1x18x4xbf16>,
    } else {
    }
    %c0_i32_98 = arith.constant 0 : i32
    %99 = arith.cmpi eq, %arg1, %c0_i32_98 : i32
    %100 = arith.extui %99 : i1 to i32
    %c0_i32_99 = arith.constant 0 : i32
    %101 = arith.cmpi ne, %100, %c0_i32_99 : i32
    scf.if %101 {
      %cst_172 = arith.constant 0.000000e+00 : bf16
      %168 = vector.broadcast %cst_172 : bf16 to vector<1x18x4xbf16>
      %c17_173 = arith.constant 17 : index
      %c0_174 = arith.constant 0 : index
      %c0_175 = arith.constant 0 : index
      %169 = vector.load %arg12[%c17_173, %c0_174, %c0_175] : memref<18x18x4xbf16, #tpu.memory_space<vmem>>, vector<1x18x4xbf16>
      tpu.vector_store %arg12[%c17_173, %c0_174, %c0_175], %168 {strides = array<i32>} : memref<18x18x4xbf16, #tpu.memory_space<vmem>>, vector<1x18x4xbf16>,
    } else {
    }
    %cst_100 = arith.constant 0.000000e+00 : f32
    %102 = vector.broadcast %cst_100 : f32 to vector<4x256xf32>
    %c0_101 = arith.constant 0 : index
    %c0_102 = arith.constant 0 : index
    %c0_103 = arith.constant 0 : index
    %103 = vector.load %arg12[%c0_101, %c0_102, %c0_103] : memref<18x18x4xbf16, #tpu.memory_space<vmem>>, vector<16x16x4xbf16>
    %104 = vector.shape_cast %103 : vector<16x16x4xbf16> to vector<256x4xbf16>
    %c0_104 = arith.constant 0 : index
    %c0_105 = arith.constant 0 : index
    %c0_106 = arith.constant 0 : index
    %105 = vector.load %arg7[%c0_104, %c0_105, %c0_106] : memref<9x4x4xbf16, #tpu.memory_space<vmem>>, vector<1x4x4xbf16>
    %106 = vector.shape_cast %105 : vector<1x4x4xbf16> to vector<4x4xbf16>
    %cst_107 = arith.constant dense<0.000000e+00> : vector<4x256xf32>
    %107 = tpu.matmul %106, %104, %cst_107 {dimension_numbers = #tpu.dot_dimension_numbers<[1], [1], [0], [0], [0, 0, 1, 0], [], []>} : vector<4x4xbf16>, vector<256x4xbf16>, vector<4x256xf32> -> vector<4x256xf32>
    %108 = arith.addf %102, %107 : vector<4x256xf32>
    %c0_108 = arith.constant 0 : index
    %c1_109 = arith.constant 1 : index
    %c0_110 = arith.constant 0 : index
    %109 = vector.load %arg12[%c0_108, %c1_109, %c0_110] : memref<18x18x4xbf16, #tpu.memory_space<vmem>>, vector<16x16x4xbf16>
    %110 = vector.shape_cast %109 : vector<16x16x4xbf16> to vector<256x4xbf16>
    %c1_111 = arith.constant 1 : index
    %c0_112 = arith.constant 0 : index
    %c0_113 = arith.constant 0 : index
    %111 = vector.load %arg7[%c1_111, %c0_112, %c0_113] : memref<9x4x4xbf16, #tpu.memory_space<vmem>>, vector<1x4x4xbf16>
    %112 = vector.shape_cast %111 : vector<1x4x4xbf16> to vector<4x4xbf16>
    %cst_114 = arith.constant dense<0.000000e+00> : vector<4x256xf32>
    %113 = tpu.matmul %112, %110, %cst_114 {dimension_numbers = #tpu.dot_dimension_numbers<[1], [1], [0], [0], [0, 0, 1, 0], [], []>} : vector<4x4xbf16>, vector<256x4xbf16>, vector<4x256xf32> -> vector<4x256xf32>
    %114 = arith.addf %108, %113 : vector<4x256xf32>
    %c0_115 = arith.constant 0 : index
    %c2_116 = arith.constant 2 : index
    %c0_117 = arith.constant 0 : index
    %115 = vector.load %arg12[%c0_115, %c2_116, %c0_117] : memref<18x18x4xbf16, #tpu.memory_space<vmem>>, vector<16x16x4xbf16>
    %116 = vector.shape_cast %115 : vector<16x16x4xbf16> to vector<256x4xbf16>
    %c2_118 = arith.constant 2 : index
    %c0_119 = arith.constant 0 : index
    %c0_120 = arith.constant 0 : index
    %117 = vector.load %arg7[%c2_118, %c0_119, %c0_120] : memref<9x4x4xbf16, #tpu.memory_space<vmem>>, vector<1x4x4xbf16>
    %118 = vector.shape_cast %117 : vector<1x4x4xbf16> to vector<4x4xbf16>
    %cst_121 = arith.constant dense<0.000000e+00> : vector<4x256xf32>
    %119 = tpu.matmul %118, %116, %cst_121 {dimension_numbers = #tpu.dot_dimension_numbers<[1], [1], [0], [0], [0, 0, 1, 0], [], []>} : vector<4x4xbf16>, vector<256x4xbf16>, vector<4x256xf32> -> vector<4x256xf32>
    %120 = arith.addf %114, %119 : vector<4x256xf32>
    %c1_122 = arith.constant 1 : index
    %c0_123 = arith.constant 0 : index
    %c0_124 = arith.constant 0 : index
    %121 = vector.load %arg12[%c1_122, %c0_123, %c0_124] : memref<18x18x4xbf16, #tpu.memory_space<vmem>>, vector<16x16x4xbf16>
    %122 = vector.shape_cast %121 : vector<16x16x4xbf16> to vector<256x4xbf16>
    %c3_125 = arith.constant 3 : index
    %c0_126 = arith.constant 0 : index
    %c0_127 = arith.constant 0 : index
    %123 = vector.load %arg7[%c3_125, %c0_126, %c0_127] : memref<9x4x4xbf16, #tpu.memory_space<vmem>>, vector<1x4x4xbf16>
    %124 = vector.shape_cast %123 : vector<1x4x4xbf16> to vector<4x4xbf16>
    %cst_128 = arith.constant dense<0.000000e+00> : vector<4x256xf32>
    %125 = tpu.matmul %124, %122, %cst_128 {dimension_numbers = #tpu.dot_dimension_numbers<[1], [1], [0], [0], [0, 0, 1, 0], [], []>} : vector<4x4xbf16>, vector<256x4xbf16>, vector<4x256xf32> -> vector<4x256xf32>
    %126 = arith.addf %120, %125 : vector<4x256xf32>
    %c1_129 = arith.constant 1 : index
    %c1_130 = arith.constant 1 : index
    %c0_131 = arith.constant 0 : index
    %127 = vector.load %arg12[%c1_129, %c1_130, %c0_131] : memref<18x18x4xbf16, #tpu.memory_space<vmem>>, vector<16x16x4xbf16>
    %128 = vector.shape_cast %127 : vector<16x16x4xbf16> to vector<256x4xbf16>
    %c4_132 = arith.constant 4 : index
    %c0_133 = arith.constant 0 : index
    %c0_134 = arith.constant 0 : index
    %129 = vector.load %arg7[%c4_132, %c0_133, %c0_134] : memref<9x4x4xbf16, #tpu.memory_space<vmem>>, vector<1x4x4xbf16>
    %130 = vector.shape_cast %129 : vector<1x4x4xbf16> to vector<4x4xbf16>
    %cst_135 = arith.constant dense<0.000000e+00> : vector<4x256xf32>
    %131 = tpu.matmul %130, %128, %cst_135 {dimension_numbers = #tpu.dot_dimension_numbers<[1], [1], [0], [0], [0, 0, 1, 0], [], []>} : vector<4x4xbf16>, vector<256x4xbf16>, vector<4x256xf32> -> vector<4x256xf32>
    %132 = arith.addf %126, %131 : vector<4x256xf32>
    %c1_136 = arith.constant 1 : index
    %c2_137 = arith.constant 2 : index
    %c0_138 = arith.constant 0 : index
    %133 = vector.load %arg12[%c1_136, %c2_137, %c0_138] : memref<18x18x4xbf16, #tpu.memory_space<vmem>>, vector<16x16x4xbf16>
    %134 = vector.shape_cast %133 : vector<16x16x4xbf16> to vector<256x4xbf16>
    %c5_139 = arith.constant 5 : index
    %c0_140 = arith.constant 0 : index
    %c0_141 = arith.constant 0 : index
    %135 = vector.load %arg7[%c5_139, %c0_140, %c0_141] : memref<9x4x4xbf16, #tpu.memory_space<vmem>>, vector<1x4x4xbf16>
    %136 = vector.shape_cast %135 : vector<1x4x4xbf16> to vector<4x4xbf16>
    %cst_142 = arith.constant dense<0.000000e+00> : vector<4x256xf32>
    %137 = tpu.matmul %136, %134, %cst_142 {dimension_numbers = #tpu.dot_dimension_numbers<[1], [1], [0], [0], [0, 0, 1, 0], [], []>} : vector<4x4xbf16>, vector<256x4xbf16>, vector<4x256xf32> -> vector<4x256xf32>
    %138 = arith.addf %132, %137 : vector<4x256xf32>
    %c2_143 = arith.constant 2 : index
    %c0_144 = arith.constant 0 : index
    %c0_145 = arith.constant 0 : index
    %139 = vector.load %arg12[%c2_143, %c0_144, %c0_145] : memref<18x18x4xbf16, #tpu.memory_space<vmem>>, vector<16x16x4xbf16>
    %140 = vector.shape_cast %139 : vector<16x16x4xbf16> to vector<256x4xbf16>
    %c6_146 = arith.constant 6 : index
    %c0_147 = arith.constant 0 : index
    %c0_148 = arith.constant 0 : index
    %141 = vector.load %arg7[%c6_146, %c0_147, %c0_148] : memref<9x4x4xbf16, #tpu.memory_space<vmem>>, vector<1x4x4xbf16>
    %142 = vector.shape_cast %141 : vector<1x4x4xbf16> to vector<4x4xbf16>
    %cst_149 = arith.constant dense<0.000000e+00> : vector<4x256xf32>
    %143 = tpu.matmul %142, %140, %cst_149 {dimension_numbers = #tpu.dot_dimension_numbers<[1], [1], [0], [0], [0, 0, 1, 0], [], []>} : vector<4x4xbf16>, vector<256x4xbf16>, vector<4x256xf32> -> vector<4x256xf32>
    %144 = arith.addf %138, %143 : vector<4x256xf32>
    %c2_150 = arith.constant 2 : index
    %c1_151 = arith.constant 1 : index
    %c0_152 = arith.constant 0 : index
    %145 = vector.load %arg12[%c2_150, %c1_151, %c0_152] : memref<18x18x4xbf16, #tpu.memory_space<vmem>>, vector<16x16x4xbf16>
    %146 = vector.shape_cast %145 : vector<16x16x4xbf16> to vector<256x4xbf16>
    %c7_153 = arith.constant 7 : index
    %c0_154 = arith.constant 0 : index
    %c0_155 = arith.constant 0 : index
    %147 = vector.load %arg7[%c7_153, %c0_154, %c0_155] : memref<9x4x4xbf16, #tpu.memory_space<vmem>>, vector<1x4x4xbf16>
    %148 = vector.shape_cast %147 : vector<1x4x4xbf16> to vector<4x4xbf16>
    %cst_156 = arith.constant dense<0.000000e+00> : vector<4x256xf32>
    %149 = tpu.matmul %148, %146, %cst_156 {dimension_numbers = #tpu.dot_dimension_numbers<[1], [1], [0], [0], [0, 0, 1, 0], [], []>} : vector<4x4xbf16>, vector<256x4xbf16>, vector<4x256xf32> -> vector<4x256xf32>
    %150 = arith.addf %144, %149 : vector<4x256xf32>
    %c2_157 = arith.constant 2 : index
    %c2_158 = arith.constant 2 : index
    %c0_159 = arith.constant 0 : index
    %151 = vector.load %arg12[%c2_157, %c2_158, %c0_159] : memref<18x18x4xbf16, #tpu.memory_space<vmem>>, vector<16x16x4xbf16>
    %152 = vector.shape_cast %151 : vector<16x16x4xbf16> to vector<256x4xbf16>
    %c8_160 = arith.constant 8 : index
    %c0_161 = arith.constant 0 : index
    %c0_162 = arith.constant 0 : index
    %153 = vector.load %arg7[%c8_160, %c0_161, %c0_162] : memref<9x4x4xbf16, #tpu.memory_space<vmem>>, vector<1x4x4xbf16>
    %154 = vector.shape_cast %153 : vector<1x4x4xbf16> to vector<4x4xbf16>
    %cst_163 = arith.constant dense<0.000000e+00> : vector<4x256xf32>
    %155 = tpu.matmul %154, %152, %cst_163 {dimension_numbers = #tpu.dot_dimension_numbers<[1], [1], [0], [0], [0, 0, 1, 0], [], []>} : vector<4x4xbf16>, vector<256x4xbf16>, vector<4x256xf32> -> vector<4x256xf32>
    %156 = arith.addf %150, %155 : vector<4x256xf32>
    %c0_164 = arith.constant 0 : index
    %c0_165 = arith.constant 0 : index
    %157 = vector.load %arg8[%c0_164, %c0_165] : memref<4x1xf32, #tpu.memory_space<vmem>>, vector<4x1xf32>
    %158 = vector.broadcast %157 : vector<4x1xf32> to vector<4x256xf32>
    %159 = arith.mulf %156, %158 : vector<4x256xf32>
    %c0_166 = arith.constant 0 : index
    %c0_167 = arith.constant 0 : index
    %160 = vector.load %arg9[%c0_166, %c0_167] : memref<4x1xf32, #tpu.memory_space<vmem>>, vector<4x1xf32>
    %161 = vector.broadcast %160 : vector<4x1xf32> to vector<4x256xf32>
    %162 = arith.addf %159, %161 : vector<4x256xf32>
    %cst_168 = arith.constant 0.000000e+00 : f32
    %163 = vector.broadcast %cst_168 : f32 to vector<4x256xf32>
    %164 = arith.maximumf %162, %163 : vector<4x256xf32>
    %c0_169 = arith.constant 0 : index
    %c0_170 = arith.constant 0 : index
    %c0_171 = arith.constant 0 : index
    %165 = vector.load %arg10[%c0_169, %c0_170, %c0_171] : memref<1x4x256xf32, #tpu.memory_space<vmem>>, vector<1x4x256xf32>
    %166 = vector.shape_cast %165 : vector<1x4x256xf32> to vector<4x256xf32>
    %167 = vector.shape_cast %164 : vector<4x256xf32> to vector<1x4x256xf32>
    tpu.vector_store %arg10[%c0_169, %c0_170, %c0_171], %167 {strides = array<i32>} : memref<1x4x256xf32, #tpu.memory_space<vmem>>, vector<1x4x256xf32>,
    return
  }
  func.func @transform_0(%arg0: i32, %arg1: i32) -> (i32, i32, i32, i32) {
    %c0_i32 = arith.constant 0 : i32
    %c0_i32_0 = arith.constant 0 : i32
    %c0_i32_1 = arith.constant 0 : i32
    %c0_i32_2 = arith.constant 0 : i32
    return %arg0, %c0_i32, %c0_i32_0, %c0_i32_1 : i32, i32, i32, i32
  }
  func.func @transform_1(%arg0: i32, %arg1: i32) -> (i32, i32, i32, i32) {
    %c0_i32 = arith.constant 0 : i32
    %c0_i32_0 = arith.constant 0 : i32
    %c0_i32_1 = arith.constant 0 : i32
    %c0_i32_2 = arith.constant 0 : i32
    return %arg0, %c0_i32, %c0_i32_0, %c0_i32_1 : i32, i32, i32, i32
  }
  func.func @transform_2(%arg0: i32, %arg1: i32) -> (i32, i32, i32) {
    %c0_i32 = arith.constant 0 : i32
    %c0_i32_0 = arith.constant 0 : i32
    %c0_i32_1 = arith.constant 0 : i32
    %c0_i32_2 = arith.constant 0 : i32
    return %c0_i32, %c0_i32_0, %c0_i32_1 : i32, i32, i32
  }
  func.func @transform_3(%arg0: i32, %arg1: i32) -> (i32, i32) {
    %c0_i32 = arith.constant 0 : i32
    %c0_i32_0 = arith.constant 0 : i32
    %c0_i32_1 = arith.constant 0 : i32
    return %c0_i32, %c0_i32_0 : i32, i32
  }
  func.func @transform_4(%arg0: i32, %arg1: i32) -> (i32, i32) {
    %c0_i32 = arith.constant 0 : i32
    %c0_i32_0 = arith.constant 0 : i32
    %c0_i32_1 = arith.constant 0 : i32
    return %c0_i32, %c0_i32_0 : i32, i32
  }
  func.func @transform_5(%arg0: i32, %arg1: i32) -> (i32, i32, i32) {
    %c0_i32 = arith.constant 0 : i32
    %c0_i32_0 = arith.constant 0 : i32
    %c0_i32_1 = arith.constant 0 : i32
    %c0_i32_2 = arith.constant 0 : i32
    return %c0_i32, %c0_i32_0, %c0_i32_1 : i32, i32, i32
  }
  func.func @transform_6(%arg0: i32, %arg1: i32) -> (i32, i32) {
    %c0_i32 = arith.constant 0 : i32
    %c0_i32_0 = arith.constant 0 : i32
    %c0_i32_1 = arith.constant 0 : i32
    return %c0_i32, %c0_i32_0 : i32, i32
  }
  func.func @transform_7(%arg0: i32, %arg1: i32) -> (i32, i32) {
    %c0_i32 = arith.constant 0 : i32
    %c0_i32_0 = arith.constant 0 : i32
    %c0_i32_1 = arith.constant 0 : i32
    return %c0_i32, %c0_i32_0 : i32, i32
  }
  func.func @transform_8(%arg0: i32, %arg1: i32) -> (i32, i32, i32) {
    %c0_i32 = arith.constant 0 : i32
    %c0_i32_0 = arith.constant 0 : i32
    return %arg0, %c0_i32, %arg1 : i32, i32, i32
  }
}

</mosaic_0001>

<llo_original>
// kernel: up_forward.1
$region0: #{up_forward.1}
  #allocation0 [shape = 'u32[]', space=smem, size = 0x4, offset = 0x4, fixed_abs, tag = 'smem constant byte address 0x4 - core index']
  #allocation1 [shape = 'u32[144,128]{1,0:T(1,128)}', space=vmem, size = 0x12000, scoped, tag = 'internal scratch']
  #allocation2 [shape = 'bf16[20,18,8]{2,1,0:T(8,128)(2,1)}', space=vmem, size = 0x1e000, scoped, tag = 'scratch operand']
  #allocation3 [shape = 'bf16[18,18,4]{2,1,0:T(8,128)(2,1)}', space=vmem, size = 0x1b000, scoped, tag = 'scratch operand']
  %s0 = inlined_call_operand.vmem [shape: bf16[2,16,16,4], index: 0, kind: input, shape index: {}]
  %s1 = inlined_call_operand.vmem [shape: bf16[2,16,16,4], index: 1, kind: input, shape index: {}]
  %s2 = inlined_call_operand.vmem [shape: bf16[9,8,4], index: 2, kind: input, shape index: {}]
  %s3 = inlined_call_operand.vmem [shape: f32[1,4], index: 3, kind: input, shape index: {}]
  %s4 = inlined_call_operand.vmem [shape: f32[1,4], index: 4, kind: input, shape index: {}]
  %s5 = inlined_call_operand.vmem [shape: bf16[9,4,4], index: 5, kind: input, shape index: {}]
  %s6 = inlined_call_operand.vmem [shape: f32[4,1], index: 6, kind: input, shape index: {}]
  %s7 = inlined_call_operand.vmem [shape: f32[4,1], index: 7, kind: input, shape index: {}]
  %s8 = inlined_call_operand.vmem [shape: f32[2,4,256], index: 8, kind: output, shape index: {}]
  %s9 = sld [smem:[#allocation0]]
  $region85: #{up_forward.1} parent=0
    _
  %s11 = ssub.s32 1, %s9
  %s12 = scalar_select 0, %s11, %s9
  loop: start=0, step=1, limit=4
  $region2: #{up_forward.1} parent=0 // loop_pre_header
    _
  $region3: #{up_forward.1} parent=0 // loop_header
    %s14 = sphi 0, %s18
    %p15 = scmp.ge.s32.totalorder %s14, 4
    %s21 = sphi 0, %s33
    %s22 = sphi 0, %s29
    %s23 = sphi 0, %s21
    %s24 = sphi 0, %s22
    %s25 = sphi 0, %s23
    %s26 = sphi 0, %s24
    %s36 = sphi 0, %s38
    %s39 = sphi 0, %s36
    %s40 = sphi 0, %s39
    %s56 = sphi 0, %s40
    %s62 = sphi 0, %s64
    %s65 = sphi 0, %s62
    %s66 = sphi 0, %s65
    %s82 = sphi 0, %s66
    %s86 = sphi 0, %s86
    %s88 = sphi 0, %s86
    %s89 = sphi 0, %s88
    %s103 = sphi 0, %s89
    %s107 = sphi 0, %s107
    %s109 = sphi 0, %s107
    %s110 = sphi 0, %s109
    %s124 = sphi 0, %s110
    %s128 = sphi 0, %s128
    %s130 = sphi 0, %s128
    %s131 = sphi 0, %s130
    %s145 = sphi 0, %s131
    %s149 = sphi 0, %s149
    %s151 = sphi 0, %s149
    %s152 = sphi 0, %s151
    %s166 = sphi 0, %s152
    %s170 = sphi 0, %s170
    %s172 = sphi 0, %s170
    %s173 = sphi 0, %s172
    %s187 = sphi 0, %s173
    %s191 = sphi 0, %s191
    %s193 = sphi 0, %s191
    %s194 = sphi 0, %s193
    %s208 = sphi 0, %s194
    %s216 = sphi 0, %s218
    %s219 = sphi 0, %s216
    %s220 = sphi 0, %s219
    %s236 = sphi 0, %s220
  $region4: #{up_forward.1} parent=0 // loop_header_branch
    %17 = sbr.rel (%p15) target = $region8
  $region5: #{up_forward.1} parent=0 // loop_body
    %s19 = ssub.s32 %s14, 1
    %s20 = ssub.s32 %s14, 2
    %s27 = sadd.s32 1, %s22
    %p28 = scmp.ge.s32.totalorder %s27, 1
    %s29 = scalar_select %p28, 0, %s27
    %s30 = sadd.s32 1, %s21
    %s31 = scalar_select %p28, %s30, %s21
    %p32 = scmp.ge.s32.totalorder %s31, 2
    %s33 = scalar_select %p32, 0, %s31
    %s34 = ssub.s32 %s21, %s33
    %p35 = scmp.eq.s32.totalorder %s34, 0
    %s37 = sadd.s32 %s36, 1
    %s38 = scalar_select %p35, %s36, %s37
    %p41 = pneg %p35
    %p42 = scmp.eq.s32.totalorder %s14, 1
    %p43 = por %p41, %p42
    %p44 = scmp.ne.s32.totalorder %s36, %s39
    %p45 = scmp.eq.s32.totalorder %s14, 0
    %p46 = por %p44, %p45
    %p47 = scmp.ne.s32.totalorder %s36, %s39
    %p48 = scmp.eq.s32.totalorder %s19, 1
    %p49 = por %p47, %p48
    %p50 = scmp.ne.s32.totalorder %s39, %s40
    %p51 = scmp.eq.s32.totalorder %s19, 0
    %p52 = por %p50, %p51
    %p53 = scmp.ne.s32.totalorder %s39, %s40
    %p54 = scmp.eq.s32.totalorder %s20, 1
    %p55 = por %p53, %p54
    %p57 = scmp.ne.s32.totalorder %s40, %s56
    %p58 = scmp.eq.s32.totalorder %s20, 0
    %p59 = por %p57, %p58
    %s60 = ssub.s32 %s21, %s33
    %p61 = scmp.eq.s32.totalorder %s60, 0
    %s63 = sadd.s32 %s62, 1
    %s64 = scalar_select %p61, %s62, %s63
    %p67 = pneg %p61
    %p68 = scmp.eq.s32.totalorder %s14, 1
    %p69 = por %p67, %p68
    %p70 = scmp.ne.s32.totalorder %s62, %s65
    %p71 = scmp.eq.s32.totalorder %s14, 0
    %p72 = por %p70, %p71
    %p73 = scmp.ne.s32.totalorder %s62, %s65
    %p74 = scmp.eq.s32.totalorder %s19, 1
    %p75 = por %p73, %p74
    %p76 = scmp.ne.s32.totalorder %s65, %s66
    %p77 = scmp.eq.s32.totalorder %s19, 0
    %p78 = por %p76, %p77
    %p79 = scmp.ne.s32.totalorder %s65, %s66
    %p80 = scmp.eq.s32.totalorder %s20, 1
    %p81 = por %p79, %p80
    %p83 = scmp.ne.s32.totalorder %s66, %s82
    %p84 = scmp.eq.s32.totalorder %s20, 0
    %p85 = por %p83, %p84
    %s87 = sadd.s32 %s86, 1
    %p90 = scmp.eq.s32.totalorder %s14, 1
    %p91 = scmp.ne.s32.totalorder %s86, %s88
    %p92 = scmp.eq.s32.totalorder %s14, 0
    %p93 = por %p91, %p92
    %p94 = scmp.ne.s32.totalorder %s86, %s88
    %p95 = scmp.eq.s32.totalorder %s19, 1
    %p96 = por %p94, %p95
    %p97 = scmp.ne.s32.totalorder %s88, %s89
    %p98 = scmp.eq.s32.totalorder %s19, 0
    %p99 = por %p97, %p98
    %p100 = scmp.ne.s32.totalorder %s88, %s89
    %p101 = scmp.eq.s32.totalorder %s20, 1
    %p102 = por %p100, %p101
    %p104 = scmp.ne.s32.totalorder %s89, %s103
    %p105 = scmp.eq.s32.totalorder %s20, 0
    %p106 = por %p104, %p105
    %s108 = sadd.s32 %s107, 1
    %p111 = scmp.eq.s32.totalorder %s14, 1
    %p112 = scmp.ne.s32.totalorder %s107, %s109
    %p113 = scmp.eq.s32.totalorder %s14, 0
    %p114 = por %p112, %p113
    %p115 = scmp.ne.s32.totalorder %s107, %s109
    %p116 = scmp.eq.s32.totalorder %s19, 1
    %p117 = por %p115, %p116
    %p118 = scmp.ne.s32.totalorder %s109, %s110
    %p119 = scmp.eq.s32.totalorder %s19, 0
    %p120 = por %p118, %p119
    %p121 = scmp.ne.s32.totalorder %s109, %s110
    %p122 = scmp.eq.s32.totalorder %s20, 1
    %p123 = por %p121, %p122
    %p125 = scmp.ne.s32.totalorder %s110, %s124
    %p126 = scmp.eq.s32.totalorder %s20, 0
    %p127 = por %p125, %p126
    %s129 = sadd.s32 %s128, 1
    %p132 = scmp.eq.s32.totalorder %s14, 1
    %p133 = scmp.ne.s32.totalorder %s128, %s130
    %p134 = scmp.eq.s32.totalorder %s14, 0
    %p135 = por %p133, %p134
    %p136 = scmp.ne.s32.totalorder %s128, %s130
    %p137 = scmp.eq.s32.totalorder %s19, 1
    %p138 = por %p136, %p137
    %p139 = scmp.ne.s32.totalorder %s130, %s131
    %p140 = scmp.eq.s32.totalorder %s19, 0
    %p141 = por %p139, %p140
    %p142 = scmp.ne.s32.totalorder %s130, %s131
    %p143 = scmp.eq.s32.totalorder %s20, 1
    %p144 = por %p142, %p143
    %p146 = scmp.ne.s32.totalorder %s131, %s145
    %p147 = scmp.eq.s32.totalorder %s20, 0
    %p148 = por %p146, %p147
    %s150 = sadd.s32 %s149, 1
    %p153 = scmp.eq.s32.totalorder %s14, 1
    %p154 = scmp.ne.s32.totalorder %s149, %s151
    %p155 = scmp.eq.s32.totalorder %s14, 0
    %p156 = por %p154, %p155
    %p157 = scmp.ne.s32.totalorder %s149, %s151
    %p158 = scmp.eq.s32.totalorder %s19, 1
    %p159 = por %p157, %p158
    %p160 = scmp.ne.s32.totalorder %s151, %s152
    %p161 = scmp.eq.s32.totalorder %s19, 0
    %p162 = por %p160, %p161
    %p163 = scmp.ne.s32.totalorder %s151, %s152
    %p164 = scmp.eq.s32.totalorder %s20, 1
    %p165 = por %p163, %p164
    %p167 = scmp.ne.s32.totalorder %s152, %s166
    %p168 = scmp.eq.s32.totalorder %s20, 0
    %p169 = por %p167, %p168
    %s171 = sadd.s32 %s170, 1
    %p174 = scmp.eq.s32.totalorder %s14, 1
    %p175 = scmp.ne.s32.totalorder %s170, %s172
    %p176 = scmp.eq.s32.totalorder %s14, 0
    %p177 = por %p175, %p176
    %p178 = scmp.ne.s32.totalorder %s170, %s172
    %p179 = scmp.eq.s32.totalorder %s19, 1
    %p180 = por %p178, %p179
    %p181 = scmp.ne.s32.totalorder %s172, %s173
    %p182 = scmp.eq.s32.totalorder %s19, 0
    %p183 = por %p181, %p182
    %p184 = scmp.ne.s32.totalorder %s172, %s173
    %p185 = scmp.eq.s32.totalorder %s20, 1
    %p186 = por %p184, %p185
    %p188 = scmp.ne.s32.totalorder %s173, %s187
    %p189 = scmp.eq.s32.totalorder %s20, 0
    %p190 = por %p188, %p189
    %s192 = sadd.s32 %s191, 1
    %p195 = scmp.eq.s32.totalorder %s14, 1
    %p196 = scmp.ne.s32.totalorder %s191, %s193
    %p197 = scmp.eq.s32.totalorder %s14, 0
    %p198 = por %p196, %p197
    %p199 = scmp.ne.s32.totalorder %s191, %s193
    %p200 = scmp.eq.s32.totalorder %s19, 1
    %p201 = por %p199, %p200
    %p202 = scmp.ne.s32.totalorder %s193, %s194
    %p203 = scmp.eq.s32.totalorder %s19, 0
    %p204 = por %p202, %p203
    %p205 = scmp.ne.s32.totalorder %s193, %s194
    %p206 = scmp.eq.s32.totalorder %s20, 1
    %p207 = por %p205, %p206
    %p209 = scmp.ne.s32.totalorder %s194, %s208
    %p210 = scmp.eq.s32.totalorder %s20, 0
    %p211 = por %p209, %p210
    %s212 = ssub.s32 %s21, %s33
    %s213 = ssub.s32 %s22, %s29
    %s214 = sor.u32 %s212, %s213
    %p215 = scmp.eq.s32.totalorder %s214, 0
    %s217 = sadd.s32 %s216, 1
    %s218 = scalar_select %p215, %s216, %s217
    %p221 = pneg %p215
    %p222 = scmp.eq.s32.totalorder %s14, 1
    %p223 = por %p221, %p222
    %p224 = scmp.ne.s32.totalorder %s216, %s219
    %p225 = scmp.eq.s32.totalorder %s14, 0
    %p226 = por %p224, %p225
    %p227 = scmp.ne.s32.totalorder %s216, %s219
    %p228 = scmp.eq.s32.totalorder %s19, 1
    %p229 = por %p227, %p228
    %p230 = scmp.ne.s32.totalorder %s219, %s220
    %p231 = scmp.eq.s32.totalorder %s19, 0
    %p232 = por %p230, %p231
    %p233 = scmp.ne.s32.totalorder %s219, %s220
    %p234 = scmp.eq.s32.totalorder %s20, 1
    %p235 = por %p233, %p234
    %p237 = scmp.ne.s32.totalorder %s220, %s236
    %p238 = scmp.eq.s32.totalorder %s20, 0
    %p239 = por %p237, %p238
    %p240 = scmp.le.s32.totalorder 1, %s14
    %p241 = scmp.lt.s32.totalorder %s14, 3
    %p242 = pnand %p240, %p241
    %p243 = pneg %p242
    // Predicated region
    $region9: #{up_forward.1} parent=5 // pred_check
      _
    $region10: #{up_forward.1} parent=5 // pred_check_branch
      %245 = sbr.rel (%p242) target = $region12
    $region11: #{up_forward.1} parent=5 // pred_region
      %s246 = ssub.s32 %s14, 1
      // Predicated region
      $region13: #{up_forward.1} parent=11 // pred_check
        %p247 = pneg %p99
      $region14: #{up_forward.1} parent=11 // pred_check_branch
        %249 = sbr.rel (%p247) target = $region16
      $region15: #{up_forward.1} parent=11 // pred_region
        _
      $region16: #{up_forward.1} parent=11 // pred_fallthru
        _
      // Predicated region
      $region17: #{up_forward.1} parent=11 // pred_check
        %p250 = pneg %p120
      $region18: #{up_forward.1} parent=11 // pred_check_branch
        %252 = sbr.rel (%p250) target = $region20
      $region19: #{up_forward.1} parent=11 // pred_region
        _
      $region20: #{up_forward.1} parent=11 // pred_fallthru
        _
      // Predicated region
      $region21: #{up_forward.1} parent=11 // pred_check
        %p253 = pneg %p141
      $region22: #{up_forward.1} parent=11 // pred_check_branch
        %255 = sbr.rel (%p253) target = $region24
      $region23: #{up_forward.1} parent=11 // pred_region
        _
      $region24: #{up_forward.1} parent=11 // pred_fallthru
        _
      // Predicated region
      $region25: #{up_forward.1} parent=11 // pred_check
        %p256 = pneg %p162
      $region26: #{up_forward.1} parent=11 // pred_check_branch
        %258 = sbr.rel (%p256) target = $region28
      $region27: #{up_forward.1} parent=11 // pred_region
        _
      $region28: #{up_forward.1} parent=11 // pred_fallthru
        _
      // Predicated region
      $region29: #{up_forward.1} parent=11 // pred_check
        %p259 = pneg %p183
      $region30: #{up_forward.1} parent=11 // pred_check_branch
        %261 = sbr.rel (%p259) target = $region32
      $region31: #{up_forward.1} parent=11 // pred_region
        _
      $region32: #{up_forward.1} parent=11 // pred_fallthru
        _
      // Predicated region
      $region33: #{up_forward.1} parent=11 // pred_check
        %p262 = pneg %p204
      $region34: #{up_forward.1} parent=11 // pred_check_branch
        %264 = sbr.rel (%p262) target = $region36
      $region35: #{up_forward.1} parent=11 // pred_region
        _
      $region36: #{up_forward.1} parent=11 // pred_fallthru
        _
    $region12: #{up_forward.1} parent=5 // pred_fallthru
      _
    %p265 = scmp.lt.s32.totalorder %s14, 2
    // Predicated region
    $region37: #{up_forward.1} parent=5 // pred_check
      %p266 = pneg %p265
    $region38: #{up_forward.1} parent=5 // pred_check_branch
      %268 = sbr.rel (%p266) target = $region40
    $region39: #{up_forward.1} parent=5 // pred_region
      // Predicated region
      $region41: #{up_forward.1} parent=39 // pred_check
        %p269 = pneg %p46
      $region42: #{up_forward.1} parent=39 // pred_check_branch
        %271 = sbr.rel (%p269) target = $region44
      $region43: #{up_forward.1} parent=39 // pred_region
        %p272 = scmp.lt.s32.totalorder %s21, 1
        %s273 = scalar_select %p272, %s21, 1
        %s274 = smul.addr %s273, 32
        %s275 = smul.addr %s274, 4
        %s276 = scalar_lea.vmem %s0, %s275
      $region44: #{up_forward.1} parent=39 // pred_fallthru
        _
      // Predicated region
      $region45: #{up_forward.1} parent=39 // pred_check
        %p277 = pneg %p72
      $region46: #{up_forward.1} parent=39 // pred_check_branch
        %279 = sbr.rel (%p277) target = $region48
      $region47: #{up_forward.1} parent=39 // pred_region
        %p280 = scmp.lt.s32.totalorder %s21, 1
        %s281 = scalar_select %p280, %s21, 1
        %s282 = smul.addr %s281, 32
        %s283 = smul.addr %s282, 4
        %s284 = scalar_lea.vmem %s1, %s283
      $region48: #{up_forward.1} parent=39 // pred_fallthru
        _
    $region40: #{up_forward.1} parent=5 // pred_fallthru
      _
    %p285 = scmp.le.s32.totalorder 1, %s14
    %p286 = scmp.lt.s32.totalorder %s14, 3
    %p287 = pnand %p285, %p286
    %p288 = pneg %p287
    // Predicated region
    $region49: #{up_forward.1} parent=5 // pred_check
      _
    $region50: #{up_forward.1} parent=5 // pred_check_branch
      %290 = sbr.rel (%p287) target = $region52
    $region51: #{up_forward.1} parent=5 // pred_region
      %s291 = ssub.s32 %s14, 1
      %p292 = scmp.lt.s32.totalorder %s23, 1
      %s293 = scalar_select %p292, %s23, 1
      %s294 = smul.addr %s293, 32
      %s295 = smul.addr %s294, 4
      %s296 = scalar_lea.vmem %s0, %s295
      %p297 = pneg %p52
      %p298 = pneg %p49
      %p299 = scmp.lt.s32.totalorder %s23, 1
      %s300 = scalar_select %p299, %s23, 1
      %s301 = smul.addr %s300, 32
      %s302 = smul.addr %s301, 4
      %s303 = scalar_lea.vmem %s1, %s302
      %p304 = pneg %p78
      %p305 = pneg %p75
      %p306 = pneg %p99
      %p307 = pneg %p96
      %p308 = pneg %p120
      %p309 = pneg %p117
      %p310 = pneg %p141
      %p311 = pneg %p138
      %p312 = pneg %p162
      %p313 = pneg %p159
      %p314 = pneg %p183
      %p315 = pneg %p180
      %p316 = pneg %p204
      %p317 = pneg %p201
      %p318 = pneg %p232
      %p319 = pneg %p229
      %s320 = smul.u32 2, %s24
      %p321 = scmp.lt.s32.totalorder %s23, 1
      %s322 = scalar_select %p321, %s23, 1
      %p323 = scmp.lt.s32.totalorder %s320, 1
      %s324 = scalar_select %p323, %s320, 1
      %s325 = smul.addr %s322, 2
      %s326 = sadd.s32 %s324, %s325
      %s327 = smul.addr %s326, 4
      %s328 = scalar_lea.vmem %s8, %s327
      %p329 = scmp.lt.s32.totalorder %s23, 1
      %s330 = scalar_select %p329, %s23, 1
      %s331 = smul.addr %s330, 32
      %s332 = smul.addr %s331, 4
      %s333 = scalar_lea.vmem %s0, %s332
      %p334 = scmp.lt.s32.totalorder %s23, 1
      %s335 = scalar_select %p334, %s23, 1
      %s336 = smul.addr %s335, 32
      %s337 = smul.addr %s336, 4
      %s338 = scalar_lea.vmem %s1, %s337
      %s339 = smul.u32 2, %s24
      %p340 = scmp.lt.s32.totalorder %s23, 1
      %s341 = scalar_select %p340, %s23, 1
      %p342 = scmp.lt.s32.totalorder %s339, 1
      %s343 = scalar_select %p342, %s339, 1
      %s344 = smul.addr %s341, 2
      %s345 = sadd.s32 %s343, %s344
      %s346 = smul.addr %s345, 4
      %s347 = scalar_lea.vmem %s8, %s346
      %s348 = smul.u32 2, %s24
      %s350 = smul.u32 %s24, 16
      %vm351 = vcmask 57344
      %vm352 = vsmask.f32 256
      %vm353 = vmand %vm351, %vm352
      %v354 = vld [vmem:[#allocation2] sm:$0x1]
      %v355 = vsel %vm353, 0, %v354
      %356 = vst [vmem:[#allocation2] sm:$0x1] %v355
      %v357 = vld [vmem:[#allocation2 + $0xc] sm:$0x1]
      %v358 = vsel %vm353, 0, %v357
      %359 = vst [vmem:[#allocation2 + $0xc] sm:$0x1] %v358
      %v360 = vld [vmem:[#allocation2 + $0x18] sm:$0x1]
      %v361 = vsel %vm353, 0, %v360
      %362 = vst [vmem:[#allocation2 + $0x18] sm:$0x1] %v361
      %v363 = vld [vmem:[#allocation2 + $0x24] sm:$0x1]
      %v364 = vsel %vm353, 0, %v363
      %365 = vst [vmem:[#allocation2 + $0x24] sm:$0x1] %v364
      %v366 = vld [vmem:[#allocation2 + $0x30] sm:$0x1]
      %v367 = vsel %vm353, 0, %v366
      %368 = vst [vmem:[#allocation2 + $0x30] sm:$0x1] %v367
      %v369 = vld [vmem:[#allocation2 + $0x3c] sm:$0x1]
      %v370 = vsel %vm353, 0, %v369
      %371 = vst [vmem:[#allocation2 + $0x3c] sm:$0x1] %v370
      %v372 = vld [vmem:[#allocation2 + $0x48] sm:$0x1]
      %v373 = vsel %vm353, 0, %v372
      %374 = vst [vmem:[#allocation2 + $0x48] sm:$0x1] %v373
      %v375 = vld [vmem:[#allocation2 + $0x54] sm:$0x1]
      %v376 = vsel %vm353, 0, %v375
      %377 = vst [vmem:[#allocation2 + $0x54] sm:$0x1] %v376
      %v378 = vld [vmem:[#allocation2 + $0x60] sm:$0x1]
      %v379 = vsel %vm353, 0, %v378
      %380 = vst [vmem:[#allocation2 + $0x60] sm:$0x1] %v379
      %v381 = vld [vmem:[#allocation2 + $0x6c] sm:$0x1]
      %v382 = vsel %vm353, 0, %v381
      %383 = vst [vmem:[#allocation2 + $0x6c] sm:$0x1] %v382
      %v384 = vld [vmem:[#allocation2 + $0x78] sm:$0x1]
      %v385 = vsel %vm353, 0, %v384
      %386 = vst [vmem:[#allocation2 + $0x78] sm:$0x1] %v385
      %v387 = vld [vmem:[#allocation2 + $0x84] sm:$0x1]
      %v388 = vsel %vm353, 0, %v387
      %389 = vst [vmem:[#allocation2 + $0x84] sm:$0x1] %v388
      %v390 = vld [vmem:[#allocation2 + $0x90] sm:$0x1]
      %v391 = vsel %vm353, 0, %v390
      %392 = vst [vmem:[#allocation2 + $0x90] sm:$0x1] %v391
      %v393 = vld [vmem:[#allocation2 + $0x9c] sm:$0x1]
      %v394 = vsel %vm353, 0, %v393
      %395 = vst [vmem:[#allocation2 + $0x9c] sm:$0x1] %v394
      %v396 = vld [vmem:[#allocation2 + $0xa8] sm:$0x1]
      %v397 = vsel %vm353, 0, %v396
      %398 = vst [vmem:[#allocation2 + $0xa8] sm:$0x1] %v397
      %v399 = vld [vmem:[#allocation2 + $0xb4] sm:$0x1]
      %v400 = vsel %vm353, 0, %v399
      %401 = vst [vmem:[#allocation2 + $0xb4] sm:$0x1] %v400
      %v402 = vld [vmem:[#allocation2 + $0xc0] sm:$0x1]
      %v403 = vsel %vm353, 0, %v402
      %404 = vst [vmem:[#allocation2 + $0xc0] sm:$0x1] %v403
      %v405 = vld [vmem:[#allocation2 + $0xcc] sm:$0x1]
      %v406 = vsel %vm353, 0, %v405
      %407 = vst [vmem:[#allocation2 + $0xcc] sm:$0x1] %v406
      %v408 = vld [vmem:[#allocation2 + $0xd8] sm:$0x1]
      %v409 = vsel %vm353, 0, %v408
      %410 = vst [vmem:[#allocation2 + $0xd8] sm:$0x1] %v409
      %v411 = vld [vmem:[#allocation2 + $0xe4] sm:$0x1]
      %v412 = vsel %vm353, 0, %v411
      %413 = vst [vmem:[#allocation2 + $0xe4] sm:$0x1] %v412
      %vm414 = vsmask.f32 7938
      %vm415 = vmand %vm351, %vm414
      %v416 = vld [vmem:[#allocation2 + $0x8] sm:$0x1]
      %v417 = vsel %vm415, 0, %v416
      %418 = vst [vmem:[#allocation2 + $0x8] sm:$0x1] %v417
      %v419 = vld [vmem:[#allocation2 + $0x14] sm:$0x1]
      %v420 = vsel %vm415, 0, %v419
      %421 = vst [vmem:[#allocation2 + $0x14] sm:$0x1] %v420
      %v422 = vld [vmem:[#allocation2 + $0x20] sm:$0x1]
      %v423 = vsel %vm415, 0, %v422
      %424 = vst [vmem:[#allocation2 + $0x20] sm:$0x1] %v423
      %v425 = vld [vmem:[#allocation2 + $0x2c] sm:$0x1]
      %v426 = vsel %vm415, 0, %v425
      %427 = vst [vmem:[#allocation2 + $0x2c] sm:$0x1] %v426
      %v428 = vld [vmem:[#allocation2 + $0x38] sm:$0x1]
      %v429 = vsel %vm415, 0, %v428
      %430 = vst [vmem:[#allocation2 + $0x38] sm:$0x1] %v429
      %v431 = vld [vmem:[#allocation2 + $0x44] sm:$0x1]
      %v432 = vsel %vm415, 0, %v431
      %433 = vst [vmem:[#allocation2 + $0x44] sm:$0x1] %v432
      %v434 = vld [vmem:[#allocation2 + $0x50] sm:$0x1]
      %v435 = vsel %vm415, 0, %v434
      %436 = vst [vmem:[#allocation2 + $0x50] sm:$0x1] %v435
      %v437 = vld [vmem:[#allocation2 + $0x5c] sm:$0x1]
      %v438 = vsel %vm415, 0, %v437
      %439 = vst [vmem:[#allocation2 + $0x5c] sm:$0x1] %v438
      %v440 = vld [vmem:[#allocation2 + $0x68] sm:$0x1]
      %v441 = vsel %vm415, 0, %v440
      %442 = vst [vmem:[#allocation2 + $0x68] sm:$0x1] %v441
      %v443 = vld [vmem:[#allocation2 + $0x74] sm:$0x1]
      %v444 = vsel %vm415, 0, %v443
      %445 = vst [vmem:[#allocation2 + $0x74] sm:$0x1] %v444
      %v446 = vld [vmem:[#allocation2 + $0x80] sm:$0x1]
      %v447 = vsel %vm415, 0, %v446
      %448 = vst [vmem:[#allocation2 + $0x80] sm:$0x1] %v447
      %v449 = vld [vmem:[#allocation2 + $0x8c] sm:$0x1]
      %v450 = vsel %vm415, 0, %v449
      %451 = vst [vmem:[#allocation2 + $0x8c] sm:$0x1] %v450
      %v452 = vld [vmem:[#allocation2 + $0x98] sm:$0x1]
      %v453 = vsel %vm415, 0, %v452
      %454 = vst [vmem:[#allocation2 + $0x98] sm:$0x1] %v453
      %v455 = vld [vmem:[#allocation2 + $0xa4] sm:$0x1]
      %v456 = vsel %vm415, 0, %v455
      %457 = vst [vmem:[#allocation2 + $0xa4] sm:$0x1] %v456
      %v458 = vld [vmem:[#allocation2 + $0xb0] sm:$0x1]
      %v459 = vsel %vm415, 0, %v458
      %460 = vst [vmem:[#allocation2 + $0xb0] sm:$0x1] %v459
      %v461 = vld [vmem:[#allocation2 + $0xbc] sm:$0x1]
      %v462 = vsel %vm415, 0, %v461
      %463 = vst [vmem:[#allocation2 + $0xbc] sm:$0x1] %v462
      %v464 = vld [vmem:[#allocation2 + $0xc8] sm:$0x1]
      %v465 = vsel %vm415, 0, %v464
      %466 = vst [vmem:[#allocation2 + $0xc8] sm:$0x1] %v465
      %v467 = vld [vmem:[#allocation2 + $0xd4] sm:$0x1]
      %v468 = vsel %vm415, 0, %v467
      %469 = vst [vmem:[#allocation2 + $0xd4] sm:$0x1] %v468
      %v470 = vld [vmem:[#allocation2 + $0xe0] sm:$0x1]
      %v471 = vsel %vm415, 0, %v470
      %472 = vst [vmem:[#allocation2 + $0xe0] sm:$0x1] %v471
      %v473 = vld [vmem:[#allocation2 + $0xec] sm:$0x1]
      %v474 = vsel %vm415, 0, %v473
      %475 = vst [vmem:[#allocation2 + $0xec] sm:$0x1] %v474
      %vm476 = vcmask 24576
      %vm477 = vmand %vm476, %vm352
      %v478 = vld [vmem:[#allocation3] sm:$0x1]
      %v479 = vsel %vm477, 0, %v478
      %480 = vst [vmem:[#allocation3] sm:$0x1] %v479
      %v481 = vld [vmem:[#allocation3 + $0xc] sm:$0x1]
      %v482 = vsel %vm477, 0, %v481
      %483 = vst [vmem:[#allocation3 + $0xc] sm:$0x1] %v482
      %v484 = vld [vmem:[#allocation3 + $0x18] sm:$0x1]
      %v485 = vsel %vm477, 0, %v484
      %486 = vst [vmem:[#allocation3 + $0x18] sm:$0x1] %v485
      %v487 = vld [vmem:[#allocation3 + $0x24] sm:$0x1]
      %v488 = vsel %vm477, 0, %v487
      %489 = vst [vmem:[#allocation3 + $0x24] sm:$0x1] %v488
      %v490 = vld [vmem:[#allocation3 + $0x30] sm:$0x1]
      %v491 = vsel %vm477, 0, %v490
      %492 = vst [vmem:[#allocation3 + $0x30] sm:$0x1] %v491
      %v493 = vld [vmem:[#allocation3 + $0x3c] sm:$0x1]
      %v494 = vsel %vm477, 0, %v493
      %495 = vst [vmem:[#allocation3 + $0x3c] sm:$0x1] %v494
      %v496 = vld [vmem:[#allocation3 + $0x48] sm:$0x1]
      %v497 = vsel %vm477, 0, %v496
      %498 = vst [vmem:[#allocation3 + $0x48] sm:$0x1] %v497
      %v499 = vld [vmem:[#allocation3 + $0x54] sm:$0x1]
      %v500 = vsel %vm477, 0, %v499
      %501 = vst [vmem:[#allocation3 + $0x54] sm:$0x1] %v500
      %v502 = vld [vmem:[#allocation3 + $0x60] sm:$0x1]
      %v503 = vsel %vm477, 0, %v502
      %504 = vst [vmem:[#allocation3 + $0x60] sm:$0x1] %v503
      %v505 = vld [vmem:[#allocation3 + $0x6c] sm:$0x1]
      %v506 = vsel %vm477, 0, %v505
      %507 = vst [vmem:[#allocation3 + $0x6c] sm:$0x1] %v506
      %v508 = vld [vmem:[#allocation3 + $0x78] sm:$0x1]
      %v509 = vsel %vm477, 0, %v508
      %510 = vst [vmem:[#allocation3 + $0x78] sm:$0x1] %v509
      %v511 = vld [vmem:[#allocation3 + $0x84] sm:$0x1]
      %v512 = vsel %vm477, 0, %v511
      %513 = vst [vmem:[#allocation3 + $0x84] sm:$0x1] %v512
      %v514 = vld [vmem:[#allocation3 + $0x90] sm:$0x1]
      %v515 = vsel %vm477, 0, %v514
      %516 = vst [vmem:[#allocation3 + $0x90] sm:$0x1] %v515
      %v517 = vld [vmem:[#allocation3 + $0x9c] sm:$0x1]
      %v518 = vsel %vm477, 0, %v517
      %519 = vst [vmem:[#allocation3 + $0x9c] sm:$0x1] %v518
      %v520 = vld [vmem:[#allocation3 + $0xa8] sm:$0x1]
      %v521 = vsel %vm477, 0, %v520
      %522 = vst [vmem:[#allocation3 + $0xa8] sm:$0x1] %v521
      %v523 = vld [vmem:[#allocation3 + $0xb4] sm:$0x1]
      %v524 = vsel %vm477, 0, %v523
      %525 = vst [vmem:[#allocation3 + $0xb4] sm:$0x1] %v524
      %v526 = vld [vmem:[#allocation3 + $0xc0] sm:$0x1]
      %v527 = vsel %vm477, 0, %v526
      %528 = vst [vmem:[#allocation3 + $0xc0] sm:$0x1] %v527
      %v529 = vld [vmem:[#allocation3 + $0xcc] sm:$0x1]
      %v530 = vsel %vm477, 0, %v529
      %531 = vst [vmem:[#allocation3 + $0xcc] sm:$0x1] %v530
      %vm532 = vmand %vm476, %vm414
      %v533 = vld [vmem:[#allocation3 + $0x8] sm:$0x1]
      %v534 = vsel %vm532, 0, %v533
      %535 = vst [vmem:[#allocation3 + $0x8] sm:$0x1] %v534
      %v536 = vld [vmem:[#allocation3 + $0x14] sm:$0x1]
      %v537 = vsel %vm532, 0, %v536
      %538 = vst [vmem:[#allocation3 + $0x14] sm:$0x1] %v537
      %v539 = vld [vmem:[#allocation3 + $0x20] sm:$0x1]
      %v540 = vsel %vm532, 0, %v539
      %541 = vst [vmem:[#allocation3 + $0x20] sm:$0x1] %v540
      %v542 = vld [vmem:[#allocation3 + $0x2c] sm:$0x1]
      %v543 = vsel %vm532, 0, %v542
      %544 = vst [vmem:[#allocation3 + $0x2c] sm:$0x1] %v543
      %v545 = vld [vmem:[#allocation3 + $0x38] sm:$0x1]
      %v546 = vsel %vm532, 0, %v545
      %547 = vst [vmem:[#allocation3 + $0x38] sm:$0x1] %v546
      %v548 = vld [vmem:[#allocation3 + $0x44] sm:$0x1]
      %v549 = vsel %vm532, 0, %v548
      %550 = vst [vmem:[#allocation3 + $0x44] sm:$0x1] %v549
      %v551 = vld [vmem:[#allocation3 + $0x50] sm:$0x1]
      %v552 = vsel %vm532, 0, %v551
      %553 = vst [vmem:[#allocation3 + $0x50] sm:$0x1] %v552
      %v554 = vld [vmem:[#allocation3 + $0x5c] sm:$0x1]
      %v555 = vsel %vm532, 0, %v554
      %556 = vst [vmem:[#allocation3 + $0x5c] sm:$0x1] %v555
      %v557 = vld [vmem:[#allocation3 + $0x68] sm:$0x1]
      %v558 = vsel %vm532, 0, %v557
      %559 = vst [vmem:[#allocation3 + $0x68] sm:$0x1] %v558
      %v560 = vld [vmem:[#allocation3 + $0x74] sm:$0x1]
      %v561 = vsel %vm532, 0, %v560
      %562 = vst [vmem:[#allocation3 + $0x74] sm:$0x1] %v561
      %v563 = vld [vmem:[#allocation3 + $0x80] sm:$0x1]
      %v564 = vsel %vm532, 0, %v563
      %565 = vst [vmem:[#allocation3 + $0x80] sm:$0x1] %v564
      %v566 = vld [vmem:[#allocation3 + $0x8c] sm:$0x1]
      %v567 = vsel %vm532, 0, %v566
      %568 = vst [vmem:[#allocation3 + $0x8c] sm:$0x1] %v567
      %v569 = vld [vmem:[#allocation3 + $0x98] sm:$0x1]
      %v570 = vsel %vm532, 0, %v569
      %571 = vst [vmem:[#allocation3 + $0x98] sm:$0x1] %v570
      %v572 = vld [vmem:[#allocation3 + $0xa4] sm:$0x1]
      %v573 = vsel %vm532, 0, %v572
      %574 = vst [vmem:[#allocation3 + $0xa4] sm:$0x1] %v573
      %v575 = vld [vmem:[#allocation3 + $0xb0] sm:$0x1]
      %v576 = vsel %vm532, 0, %v575
      %577 = vst [vmem:[#allocation3 + $0xb0] sm:$0x1] %v576
      %v578 = vld [vmem:[#allocation3 + $0xbc] sm:$0x1]
      %v579 = vsel %vm532, 0, %v578
      %580 = vst [vmem:[#allocation3 + $0xbc] sm:$0x1] %v579
      %v581 = vld [vmem:[#allocation3 + $0xc8] sm:$0x1]
      %v582 = vsel %vm532, 0, %v581
      %583 = vst [vmem:[#allocation3 + $0xc8] sm:$0x1] %v582
      %v584 = vld [vmem:[#allocation3 + $0xd4] sm:$0x1]
      %v585 = vsel %vm532, 0, %v584
      %586 = vst [vmem:[#allocation3 + $0xd4] sm:$0x1] %v585
      %s587 = smul.u32 %s350, 2
      %s588 = smul.addr %s587, 4
      %s589 = scalar_lea.vmem %s333, %s588
      %v590 = vld [vmem:[%s589] sm:$0xf]
      %v591 = vld [vmem:[%s589 + $0x4] sm:$0xf]
      %v592 = vld [vmem:[%s589 + $0x8] sm:$0xf]
      %v593 = vld [vmem:[%s589 + $0xc] sm:$0xf]
      %v594 = vld [vmem:[%s589 + $0x10] sm:$0xf]
      %v595 = vld [vmem:[%s589 + $0x14] sm:$0xf]
      %v596 = vld [vmem:[%s589 + $0x18] sm:$0xf]
      %v597 = vld [vmem:[%s589 + $0x1c] sm:$0xf]
      %v598 = vld [vmem:[%s589 + $0x20] sm:$0xf]
      %v599 = vld [vmem:[%s589 + $0x24] sm:$0xf]
      %v600 = vld [vmem:[%s589 + $0x28] sm:$0xf]
      %v601 = vld [vmem:[%s589 + $0x2c] sm:$0xf]
      %v602 = vld [vmem:[%s589 + $0x30] sm:$0xf]
      %v603 = vld [vmem:[%s589 + $0x34] sm:$0xf]
      %v604 = vld [vmem:[%s589 + $0x38] sm:$0xf]
      %v605 = vld [vmem:[%s589 + $0x3c] sm:$0xf]
      %v606 = vld [vmem:[%s589 + $0x40] sm:$0xf]
      %v607 = vld [vmem:[%s589 + $0x44] sm:$0xf]
      %v608 = vld [vmem:[%s589 + $0x48] sm:$0xf]
      %v609 = vld [vmem:[%s589 + $0x4c] sm:$0xf]
      %v610 = vld [vmem:[%s589 + $0x50] sm:$0xf]
      %v611 = vld [vmem:[%s589 + $0x54] sm:$0xf]
      %v612 = vld [vmem:[%s589 + $0x58] sm:$0xf]
      %v613 = vld [vmem:[%s589 + $0x5c] sm:$0xf]
      %v614 = vld [vmem:[%s589 + $0x60] sm:$0xf]
      %v615 = vld [vmem:[%s589 + $0x64] sm:$0xf]
      %v616 = vld [vmem:[%s589 + $0x68] sm:$0xf]
      %v617 = vld [vmem:[%s589 + $0x6c] sm:$0xf]
      %v618 = vld [vmem:[%s589 + $0x70] sm:$0xf]
      %v619 = vld [vmem:[%s589 + $0x74] sm:$0xf]
      %v620 = vld [vmem:[%s589 + $0x78] sm:$0xf]
      %v621 = vld [vmem:[%s589 + $0x7c] sm:$0xf]
      %vm622 = vsmask.f32 4368
      %vm623 = vmor %vm352, %vm622
      %v625 = vshrl.u32 %v590, 16
      %v627 = vrot.slane %v625, 7
      %v628 = vshll.u32 %v590, 16
      %v630 = vor.u32 %v627, %v628
      %v631 = vrot.slane %v627, 4
      %v633 = vshrl.u32 %v591, 16
      %v635 = vrot.slane %v633, 7
      %v636 = vshll.u32 %v591, 16
      %v638 = vor.u32 %v635, %v636
      %v639 = vsel %vm623, %v631, %v638
      %v640 = vrot.slane %v635, 4
      %v642 = vshrl.u32 %v592, 16
      %v644 = vrot.slane %v642, 7
      %v645 = vshll.u32 %v592, 16
      %v647 = vor.u32 %v644, %v645
      %v648 = vrot.slane %v644, 4
      %v650 = vshrl.u32 %v593, 16
      %v652 = vrot.slane %v650, 7
      %v653 = vshll.u32 %v593, 16
      %v655 = vor.u32 %v652, %v653
      %v656 = vsel %vm623, %v648, %v655
      %v657 = vrot.slane %v652, 4
      %v659 = vshrl.u32 %v594, 16
      %v661 = vrot.slane %v659, 7
      %v662 = vshll.u32 %v594, 16
      %v664 = vor.u32 %v661, %v662
      %v665 = vrot.slane %v661, 4
      %v667 = vshrl.u32 %v595, 16
      %v669 = vrot.slane %v667, 7
      %v670 = vshll.u32 %v595, 16
      %v672 = vor.u32 %v669, %v670
      %v673 = vsel %vm623, %v665, %v672
      %v674 = vrot.slane %v669, 4
      %v676 = vshrl.u32 %v596, 16
      %v678 = vrot.slane %v676, 7
      %v679 = vshll.u32 %v596, 16
      %v681 = vor.u32 %v678, %v679
      %v682 = vrot.slane %v678, 4
      %v684 = vshrl.u32 %v597, 16
      %v686 = vrot.slane %v684, 7
      %v687 = vshll.u32 %v597, 16
      %v689 = vor.u32 %v686, %v687
      %v690 = vsel %vm623, %v682, %v689
      %v691 = vrot.slane %v686, 4
      %v693 = vshrl.u32 %v598, 16
      %v695 = vrot.slane %v693, 7
      %v696 = vshll.u32 %v598, 16
      %v698 = vor.u32 %v695, %v696
      %v699 = vrot.slane %v695, 4
      %v701 = vshrl.u32 %v599, 16
      %v703 = vrot.slane %v701, 7
      %v704 = vshll.u32 %v599, 16
      %v706 = vor.u32 %v703, %v704
      %v707 = vsel %vm623, %v699, %v706
      %v708 = vrot.slane %v703, 4
      %v710 = vshrl.u32 %v600, 16
      %v712 = vrot.slane %v710, 7
      %v713 = vshll.u32 %v600, 16
      %v715 = vor.u32 %v712, %v713
      %v716 = vrot.slane %v712, 4
      %v718 = vshrl.u32 %v601, 16
      %v720 = vrot.slane %v718, 7
      %v721 = vshll.u32 %v601, 16
      %v723 = vor.u32 %v720, %v721
      %v724 = vsel %vm623, %v716, %v723
      %v725 = vrot.slane %v720, 4
      %v727 = vshrl.u32 %v602, 16
      %v729 = vrot.slane %v727, 7
      %v730 = vshll.u32 %v602, 16
      %v732 = vor.u32 %v729, %v730
      %v733 = vrot.slane %v729, 4
      %v735 = vshrl.u32 %v603, 16
      %v737 = vrot.slane %v735, 7
      %v738 = vshll.u32 %v603, 16
      %v740 = vor.u32 %v737, %v738
      %v741 = vsel %vm623, %v733, %v740
      %v742 = vrot.slane %v737, 4
      %v744 = vshrl.u32 %v604, 16
      %v746 = vrot.slane %v744, 7
      %v747 = vshll.u32 %v604, 16
      %v749 = vor.u32 %v746, %v747
      %v750 = vrot.slane %v746, 4
      %v752 = vshrl.u32 %v605, 16
      %v754 = vrot.slane %v752, 7
      %v755 = vshll.u32 %v605, 16
      %v757 = vor.u32 %v754, %v755
      %v758 = vsel %vm623, %v750, %v757
      %v759 = vrot.slane %v754, 4
      %v761 = vshrl.u32 %v606, 16
      %v763 = vrot.slane %v761, 7
      %v764 = vshll.u32 %v606, 16
      %v766 = vor.u32 %v763, %v764
      %v767 = vrot.slane %v763, 4
      %v769 = vshrl.u32 %v607, 16
      %v771 = vrot.slane %v769, 7
      %v772 = vshll.u32 %v607, 16
      %v774 = vor.u32 %v771, %v772
      %v775 = vsel %vm623, %v767, %v774
      %v776 = vrot.slane %v771, 4
      %v778 = vshrl.u32 %v608, 16
      %v780 = vrot.slane %v778, 7
      %v781 = vshll.u32 %v608, 16
      %v783 = vor.u32 %v780, %v781
      %v784 = vrot.slane %v780, 4
      %v786 = vshrl.u32 %v609, 16
      %v788 = vrot.slane %v786, 7
      %v789 = vshll.u32 %v609, 16
      %v791 = vor.u32 %v788, %v789
      %v792 = vsel %vm623, %v784, %v791
      %v793 = vrot.slane %v788, 4
      %v795 = vshrl.u32 %v610, 16
      %v797 = vrot.slane %v795, 7
      %v798 = vshll.u32 %v610, 16
      %v800 = vor.u32 %v797, %v798
      %v801 = vrot.slane %v797, 4
      %v803 = vshrl.u32 %v611, 16
      %v805 = vrot.slane %v803, 7
      %v806 = vshll.u32 %v611, 16
      %v808 = vor.u32 %v805, %v806
      %v809 = vsel %vm623, %v801, %v808
      %v810 = vrot.slane %v805, 4
      %v812 = vshrl.u32 %v612, 16
      %v814 = vrot.slane %v812, 7
      %v815 = vshll.u32 %v612, 16
      %v817 = vor.u32 %v814, %v815
      %v818 = vrot.slane %v814, 4
      %v820 = vshrl.u32 %v613, 16
      %v822 = vrot.slane %v820, 7
      %v823 = vshll.u32 %v613, 16
      %v825 = vor.u32 %v822, %v823
      %v826 = vsel %vm623, %v818, %v825
      %v827 = vrot.slane %v822, 4
      %v829 = vshrl.u32 %v614, 16
      %v831 = vrot.slane %v829, 7
      %v832 = vshll.u32 %v614, 16
      %v834 = vor.u32 %v831, %v832
      %v835 = vrot.slane %v831, 4
      %v837 = vshrl.u32 %v615, 16
      %v839 = vrot.slane %v837, 7
      %v840 = vshll.u32 %v615, 16
      %v842 = vor.u32 %v839, %v840
      %v843 = vsel %vm623, %v835, %v842
      %v844 = vrot.slane %v839, 4
      %v846 = vshrl.u32 %v616, 16
      %v848 = vrot.slane %v846, 7
      %v849 = vshll.u32 %v616, 16
      %v851 = vor.u32 %v848, %v849
      %v852 = vrot.slane %v848, 4
      %v854 = vshrl.u32 %v617, 16
      %v856 = vrot.slane %v854, 7
      %v857 = vshll.u32 %v617, 16
      %v859 = vor.u32 %v856, %v857
      %v860 = vsel %vm623, %v852, %v859
      %v861 = vrot.slane %v856, 4
      %v863 = vshrl.u32 %v618, 16
      %v865 = vrot.slane %v863, 7
      %v866 = vshll.u32 %v618, 16
      %v868 = vor.u32 %v865, %v866
      %v869 = vrot.slane %v865, 4
      %v871 = vshrl.u32 %v619, 16
      %v873 = vrot.slane %v871, 7
      %v874 = vshll.u32 %v619, 16
      %v876 = vor.u32 %v873, %v874
      %v877 = vsel %vm623, %v869, %v876
      %v878 = vrot.slane %v873, 4
      %v880 = vshrl.u32 %v620, 16
      %v882 = vrot.slane %v880, 7
      %v883 = vshll.u32 %v620, 16
      %v885 = vor.u32 %v882, %v883
      %v886 = vrot.slane %v882, 4
      %v888 = vshrl.u32 %v621, 16
      %v890 = vrot.slane %v888, 7
      %v891 = vshll.u32 %v621, 16
      %v893 = vor.u32 %v890, %v891
      %v894 = vsel %vm623, %v886, %v893
      %v895 = vrot.slane %v890, 4
      %s944 = scalar_lea.vmem [#allocation2], 24
      %vm945 = vcmask 27648
      %vm946 = vmand %vm945, %vm414
      %v947 = vld [vmem:[%s944] sm:$0xf]
      %v948 = vsel %vm946, %v630, %v947
      %949 = vst [vmem:[%s944] sm:$0xf] %v948
      %vm950 = vcmask 27648
      %951 = vst.msk [vmem:[%s944 + $0x4] sm:$0xf] %vm950, %v639
      %v952 = vld [vmem:[%s944 + $0x8] sm:$0x1]
      %v953 = vsel %vm477, %v640, %v952
      %954 = vst [vmem:[%s944 + $0x8] sm:$0x1] %v953
      %v955 = vld [vmem:[%s944 + $0xc] sm:$0xf]
      %v956 = vsel %vm946, %v647, %v955
      %957 = vst [vmem:[%s944 + $0xc] sm:$0xf] %v956
      %958 = vst.msk [vmem:[%s944 + $0x10] sm:$0xf] %vm950, %v656
      %v959 = vld [vmem:[%s944 + $0x14] sm:$0x1]
      %v960 = vsel %vm477, %v657, %v959
      %961 = vst [vmem:[%s944 + $0x14] sm:$0x1] %v960
      %v962 = vld [vmem:[%s944 + $0x18] sm:$0xf]
      %v963 = vsel %vm946, %v664, %v962
      %964 = vst [vmem:[%s944 + $0x18] sm:$0xf] %v963
      %965 = vst.msk [vmem:[%s944 + $0x1c] sm:$0xf] %vm950, %v673
      %v966 = vld [vmem:[%s944 + $0x20] sm:$0x1]
      %v967 = vsel %vm477, %v674, %v966
      %968 = vst [vmem:[%s944 + $0x20] sm:$0x1] %v967
      %v969 = vld [vmem:[%s944 + $0x24] sm:$0xf]
      %v970 = vsel %vm946, %v681, %v969
      %971 = vst [vmem:[%s944 + $0x24] sm:$0xf] %v970
      %972 = vst.msk [vmem:[%s944 + $0x28] sm:$0xf] %vm950, %v690
      %v973 = vld [vmem:[%s944 + $0x2c] sm:$0x1]
      %v974 = vsel %vm477, %v691, %v973
      %975 = vst [vmem:[%s944 + $0x2c] sm:$0x1] %v974
      %v976 = vld [vmem:[%s944 + $0x30] sm:$0xf]
      %v977 = vsel %vm946, %v698, %v976
      %978 = vst [vmem:[%s944 + $0x30] sm:$0xf] %v977
      %979 = vst.msk [vmem:[%s944 + $0x34] sm:$0xf] %vm950, %v707
      %v980 = vld [vmem:[%s944 + $0x38] sm:$0x1]
      %v981 = vsel %vm477, %v708, %v980
      %982 = vst [vmem:[%s944 + $0x38] sm:$0x1] %v981
      %v983 = vld [vmem:[%s944 + $0x3c] sm:$0xf]
      %v984 = vsel %vm946, %v715, %v983
      %985 = vst [vmem:[%s944 + $0x3c] sm:$0xf] %v984
      %986 = vst.msk [vmem:[%s944 + $0x40] sm:$0xf] %vm950, %v724
      %v987 = vld [vmem:[%s944 + $0x44] sm:$0x1]
      %v988 = vsel %vm477, %v725, %v987
      %989 = vst [vmem:[%s944 + $0x44] sm:$0x1] %v988
      %v990 = vld [vmem:[%s944 + $0x48] sm:$0xf]
      %v991 = vsel %vm946, %v732, %v990
      %992 = vst [vmem:[%s944 + $0x48] sm:$0xf] %v991
      %993 = vst.msk [vmem:[%s944 + $0x4c] sm:$0xf] %vm950, %v741
      %v994 = vld [vmem:[%s944 + $0x50] sm:$0x1]
      %v995 = vsel %vm477, %v742, %v994
      %996 = vst [vmem:[%s944 + $0x50] sm:$0x1] %v995
      %v997 = vld [vmem:[%s944 + $0x54] sm:$0xf]
      %v998 = vsel %vm946, %v749, %v997
      %999 = vst [vmem:[%s944 + $0x54] sm:$0xf] %v998
      %1000 = vst.msk [vmem:[%s944 + $0x58] sm:$0xf] %vm950, %v758
      %v1001 = vld [vmem:[%s944 + $0x5c] sm:$0x1]
      %v1002 = vsel %vm477, %v759, %v1001
      %1003 = vst [vmem:[%s944 + $0x5c] sm:$0x1] %v1002
      %v1004 = vld [vmem:[%s944 + $0x60] sm:$0xf]
      %v1005 = vsel %vm946, %v766, %v1004
      %1006 = vst [vmem:[%s944 + $0x60] sm:$0xf] %v1005
      %1007 = vst.msk [vmem:[%s944 + $0x64] sm:$0xf] %vm950, %v775
      %v1008 = vld [vmem:[%s944 + $0x68] sm:$0x1]
      %v1009 = vsel %vm477, %v776, %v1008
      %1010 = vst [vmem:[%s944 + $0x68] sm:$0x1] %v1009
      %v1011 = vld [vmem:[%s944 + $0x6c] sm:$0xf]
      %v1012 = vsel %vm946, %v783, %v1011
      %1013 = vst [vmem:[%s944 + $0x6c] sm:$0xf] %v1012
      %1014 = vst.msk [vmem:[%s944 + $0x70] sm:$0xf] %vm950, %v792
      %v1015 = vld [vmem:[%s944 + $0x74] sm:$0x1]
      %v1016 = vsel %vm477, %v793, %v1015
      %1017 = vst [vmem:[%s944 + $0x74] sm:$0x1] %v1016
      %v1018 = vld [vmem:[%s944 + $0x78] sm:$0xf]
      %v1019 = vsel %vm946, %v800, %v1018
      %1020 = vst [vmem:[%s944 + $0x78] sm:$0xf] %v1019
      %1021 = vst.msk [vmem:[%s944 + $0x7c] sm:$0xf] %vm950, %v809
      %v1022 = vld [vmem:[%s944 + $0x80] sm:$0x1]
      %v1023 = vsel %vm477, %v810, %v1022
      %1024 = vst [vmem:[%s944 + $0x80] sm:$0x1] %v1023
      %v1025 = vld [vmem:[%s944 + $0x84] sm:$0xf]
      %v1026 = vsel %vm946, %v817, %v1025
      %1027 = vst [vmem:[%s944 + $0x84] sm:$0xf] %v1026
      %1028 = vst.msk [vmem:[%s944 + $0x88] sm:$0xf] %vm950, %v826
      %v1029 = vld [vmem:[%s944 + $0x8c] sm:$0x1]
      %v1030 = vsel %vm477, %v827, %v1029
      %1031 = vst [vmem:[%s944 + $0x8c] sm:$0x1] %v1030
      %v1032 = vld [vmem:[%s944 + $0x90] sm:$0xf]
      %v1033 = vsel %vm946, %v834, %v1032
      %1034 = vst [vmem:[%s944 + $0x90] sm:$0xf] %v1033
      %1035 = vst.msk [vmem:[%s944 + $0x94] sm:$0xf] %vm950, %v843
      %v1036 = vld [vmem:[%s944 + $0x98] sm:$0x1]
      %v1037 = vsel %vm477, %v844, %v1036
      %1038 = vst [vmem:[%s944 + $0x98] sm:$0x1] %v1037
      %v1039 = vld [vmem:[%s944 + $0x9c] sm:$0xf]
      %v1040 = vsel %vm946, %v851, %v1039
      %1041 = vst [vmem:[%s944 + $0x9c] sm:$0xf] %v1040
      %1042 = vst.msk [vmem:[%s944 + $0xa0] sm:$0xf] %vm950, %v860
      %v1043 = vld [vmem:[%s944 + $0xa4] sm:$0x1]
      %v1044 = vsel %vm477, %v861, %v1043
      %1045 = vst [vmem:[%s944 + $0xa4] sm:$0x1] %v1044
      %v1046 = vld [vmem:[%s944 + $0xa8] sm:$0xf]
      %v1047 = vsel %vm946, %v868, %v1046
      %1048 = vst [vmem:[%s944 + $0xa8] sm:$0xf] %v1047
      %1049 = vst.msk [vmem:[%s944 + $0xac] sm:$0xf] %vm950, %v877
      %v1050 = vld [vmem:[%s944 + $0xb0] sm:$0x1]
      %v1051 = vsel %vm477, %v878, %v1050
      %1052 = vst [vmem:[%s944 + $0xb0] sm:$0x1] %v1051
      %v1053 = vld [vmem:[%s944 + $0xb4] sm:$0xf]
      %v1054 = vsel %vm946, %v885, %v1053
      %1055 = vst [vmem:[%s944 + $0xb4] sm:$0xf] %v1054
      %1056 = vst.msk [vmem:[%s944 + $0xb8] sm:$0xf] %vm950, %v894
      %v1057 = vld [vmem:[%s944 + $0xbc] sm:$0x1]
      %v1058 = vsel %vm477, %v895, %v1057
      %1059 = vst [vmem:[%s944 + $0xbc] sm:$0x1] %v1058
      %s1060 = smul.addr %s587, 4
      %s1061 = scalar_lea.vmem %s338, %s1060
      %v1062 = vld [vmem:[%s1061] sm:$0xf]
      %v1063 = vld [vmem:[%s1061 + $0x4] sm:$0xf]
      %v1064 = vld [vmem:[%s1061 + $0x8] sm:$0xf]
      %v1065 = vld [vmem:[%s1061 + $0xc] sm:$0xf]
      %v1066 = vld [vmem:[%s1061 + $0x10] sm:$0xf]
      %v1067 = vld [vmem:[%s1061 + $0x14] sm:$0xf]
      %v1068 = vld [vmem:[%s1061 + $0x18] sm:$0xf]
      %v1069 = vld [vmem:[%s1061 + $0x1c] sm:$0xf]
      %v1070 = vld [vmem:[%s1061 + $0x20] sm:$0xf]
      %v1071 = vld [vmem:[%s1061 + $0x24] sm:$0xf]
      %v1072 = vld [vmem:[%s1061 + $0x28] sm:$0xf]
      %v1073 = vld [vmem:[%s1061 + $0x2c] sm:$0xf]
      %v1074 = vld [vmem:[%s1061 + $0x30] sm:$0xf]
      %v1075 = vld [vmem:[%s1061 + $0x34] sm:$0xf]
      %v1076 = vld [vmem:[%s1061 + $0x38] sm:$0xf]
      %v1077 = vld [vmem:[%s1061 + $0x3c] sm:$0xf]
      %v1078 = vld [vmem:[%s1061 + $0x40] sm:$0xf]
      %v1079 = vld [vmem:[%s1061 + $0x44] sm:$0xf]
      %v1080 = vld [vmem:[%s1061 + $0x48] sm:$0xf]
      %v1081 = vld [vmem:[%s1061 + $0x4c] sm:$0xf]
      %v1082 = vld [vmem:[%s1061 + $0x50] sm:$0xf]
      %v1083 = vld [vmem:[%s1061 + $0x54] sm:$0xf]
      %v1084 = vld [vmem:[%s1061 + $0x58] sm:$0xf]
      %v1085 = vld [vmem:[%s1061 + $0x5c] sm:$0xf]
      %v1086 = vld [vmem:[%s1061 + $0x60] sm:$0xf]
      %v1087 = vld [vmem:[%s1061 + $0x64] sm:$0xf]
      %v1088 = vld [vmem:[%s1061 + $0x68] sm:$0xf]
      %v1089 = vld [vmem:[%s1061 + $0x6c] sm:$0xf]
      %v1090 = vld [vmem:[%s1061 + $0x70] sm:$0xf]
      %v1091 = vld [vmem:[%s1061 + $0x74] sm:$0xf]
      %v1092 = vld [vmem:[%s1061 + $0x78] sm:$0xf]
      %v1093 = vld [vmem:[%s1061 + $0x7c] sm:$0xf]
      %v1095 = vshrl.u32 %v1062, 16
      %v1097 = vrot.slane %v1095, 7
      %v1098 = vshll.u32 %v1062, 16
      %v1100 = vor.u32 %v1097, %v1098
      %v1101 = vrot.slane %v1097, 4
      %v1103 = vshrl.u32 %v1063, 16
      %v1105 = vrot.slane %v1103, 7
      %v1106 = vshll.u32 %v1063, 16
      %v1108 = vor.u32 %v1105, %v1106
      %v1109 = vsel %vm623, %v1101, %v1108
      %v1110 = vrot.slane %v1105, 4
      %v1112 = vshrl.u32 %v1064, 16
      %v1114 = vrot.slane %v1112, 7
      %v1115 = vshll.u32 %v1064, 16
      %v1117 = vor.u32 %v1114, %v1115
      %v1118 = vrot.slane %v1114, 4
      %v1120 = vshrl.u32 %v1065, 16
      %v1122 = vrot.slane %v1120, 7
      %v1123 = vshll.u32 %v1065, 16
      %v1125 = vor.u32 %v1122, %v1123
      %v1126 = vsel %vm623, %v1118, %v1125
      %v1127 = vrot.slane %v1122, 4
      %v1129 = vshrl.u32 %v1066, 16
      %v1131 = vrot.slane %v1129, 7
      %v1132 = vshll.u32 %v1066, 16
      %v1134 = vor.u32 %v1131, %v1132
      %v1135 = vrot.slane %v1131, 4
      %v1137 = vshrl.u32 %v1067, 16
      %v1139 = vrot.slane %v1137, 7
      %v1140 = vshll.u32 %v1067, 16
      %v1142 = vor.u32 %v1139, %v1140
      %v1143 = vsel %vm623, %v1135, %v1142
      %v1144 = vrot.slane %v1139, 4
      %v1146 = vshrl.u32 %v1068, 16
      %v1148 = vrot.slane %v1146, 7
      %v1149 = vshll.u32 %v1068, 16
      %v1151 = vor.u32 %v1148, %v1149
      %v1152 = vrot.slane %v1148, 4
      %v1154 = vshrl.u32 %v1069, 16
      %v1156 = vrot.slane %v1154, 7
      %v1157 = vshll.u32 %v1069, 16
      %v1159 = vor.u32 %v1156, %v1157
      %v1160 = vsel %vm623, %v1152, %v1159
      %v1161 = vrot.slane %v1156, 4
      %v1163 = vshrl.u32 %v1070, 16
      %v1165 = vrot.slane %v1163, 7
      %v1166 = vshll.u32 %v1070, 16
      %v1168 = vor.u32 %v1165, %v1166
      %v1169 = vrot.slane %v1165, 4
      %v1171 = vshrl.u32 %v1071, 16
      %v1173 = vrot.slane %v1171, 7
      %v1174 = vshll.u32 %v1071, 16
      %v1176 = vor.u32 %v1173, %v1174
      %v1177 = vsel %vm623, %v1169, %v1176
      %v1178 = vrot.slane %v1173, 4
      %v1180 = vshrl.u32 %v1072, 16
      %v1182 = vrot.slane %v1180, 7
      %v1183 = vshll.u32 %v1072, 16
      %v1185 = vor.u32 %v1182, %v1183
      %v1186 = vrot.slane %v1182, 4
      %v1188 = vshrl.u32 %v1073, 16
      %v1190 = vrot.slane %v1188, 7
      %v1191 = vshll.u32 %v1073, 16
      %v1193 = vor.u32 %v1190, %v1191
      %v1194 = vsel %vm623, %v1186, %v1193
      %v1195 = vrot.slane %v1190, 4
      %v1197 = vshrl.u32 %v1074, 16
      %v1199 = vrot.slane %v1197, 7
      %v1200 = vshll.u32 %v1074, 16
      %v1202 = vor.u32 %v1199, %v1200
      %v1203 = vrot.slane %v1199, 4
      %v1205 = vshrl.u32 %v1075, 16
      %v1207 = vrot.slane %v1205, 7
      %v1208 = vshll.u32 %v1075, 16
      %v1210 = vor.u32 %v1207, %v1208
      %v1211 = vsel %vm623, %v1203, %v1210
      %v1212 = vrot.slane %v1207, 4
      %v1214 = vshrl.u32 %v1076, 16
      %v1216 = vrot.slane %v1214, 7
      %v1217 = vshll.u32 %v1076, 16
      %v1219 = vor.u32 %v1216, %v1217
      %v1220 = vrot.slane %v1216, 4
      %v1222 = vshrl.u32 %v1077, 16
      %v1224 = vrot.slane %v1222, 7
      %v1225 = vshll.u32 %v1077, 16
      %v1227 = vor.u32 %v1224, %v1225
      %v1228 = vsel %vm623, %v1220, %v1227
      %v1229 = vrot.slane %v1224, 4
      %v1231 = vshrl.u32 %v1078, 16
      %v1233 = vrot.slane %v1231, 7
      %v1234 = vshll.u32 %v1078, 16
      %v1236 = vor.u32 %v1233, %v1234
      %v1237 = vrot.slane %v1233, 4
      %v1239 = vshrl.u32 %v1079, 16
      %v1241 = vrot.slane %v1239, 7
      %v1242 = vshll.u32 %v1079, 16
      %v1244 = vor.u32 %v1241, %v1242
      %v1245 = vsel %vm623, %v1237, %v1244
      %v1246 = vrot.slane %v1241, 4
      %v1248 = vshrl.u32 %v1080, 16
      %v1250 = vrot.slane %v1248, 7
      %v1251 = vshll.u32 %v1080, 16
      %v1253 = vor.u32 %v1250, %v1251
      %v1254 = vrot.slane %v1250, 4
      %v1256 = vshrl.u32 %v1081, 16
      %v1258 = vrot.slane %v1256, 7
      %v1259 = vshll.u32 %v1081, 16
      %v1261 = vor.u32 %v1258, %v1259
      %v1262 = vsel %vm623, %v1254, %v1261
      %v1263 = vrot.slane %v1258, 4
      %v1265 = vshrl.u32 %v1082, 16
      %v1267 = vrot.slane %v1265, 7
      %v1268 = vshll.u32 %v1082, 16
      %v1270 = vor.u32 %v1267, %v1268
      %v1271 = vrot.slane %v1267, 4
      %v1273 = vshrl.u32 %v1083, 16
      %v1275 = vrot.slane %v1273, 7
      %v1276 = vshll.u32 %v1083, 16
      %v1278 = vor.u32 %v1275, %v1276
      %v1279 = vsel %vm623, %v1271, %v1278
      %v1280 = vrot.slane %v1275, 4
      %v1282 = vshrl.u32 %v1084, 16
      %v1284 = vrot.slane %v1282, 7
      %v1285 = vshll.u32 %v1084, 16
      %v1287 = vor.u32 %v1284, %v1285
      %v1288 = vrot.slane %v1284, 4
      %v1290 = vshrl.u32 %v1085, 16
      %v1292 = vrot.slane %v1290, 7
      %v1293 = vshll.u32 %v1085, 16
      %v1295 = vor.u32 %v1292, %v1293
      %v1296 = vsel %vm623, %v1288, %v1295
      %v1297 = vrot.slane %v1292, 4
      %v1299 = vshrl.u32 %v1086, 16
      %v1301 = vrot.slane %v1299, 7
      %v1302 = vshll.u32 %v1086, 16
      %v1304 = vor.u32 %v1301, %v1302
      %v1305 = vrot.slane %v1301, 4
      %v1307 = vshrl.u32 %v1087, 16
      %v1309 = vrot.slane %v1307, 7
      %v1310 = vshll.u32 %v1087, 16
      %v1312 = vor.u32 %v1309, %v1310
      %v1313 = vsel %vm623, %v1305, %v1312
      %v1314 = vrot.slane %v1309, 4
      %v1316 = vshrl.u32 %v1088, 16
      %v1318 = vrot.slane %v1316, 7
      %v1319 = vshll.u32 %v1088, 16
      %v1321 = vor.u32 %v1318, %v1319
      %v1322 = vrot.slane %v1318, 4
      %v1324 = vshrl.u32 %v1089, 16
      %v1326 = vrot.slane %v1324, 7
      %v1327 = vshll.u32 %v1089, 16
      %v1329 = vor.u32 %v1326, %v1327
      %v1330 = vsel %vm623, %v1322, %v1329
      %v1331 = vrot.slane %v1326, 4
      %v1333 = vshrl.u32 %v1090, 16
      %v1335 = vrot.slane %v1333, 7
      %v1336 = vshll.u32 %v1090, 16
      %v1338 = vor.u32 %v1335, %v1336
      %v1339 = vrot.slane %v1335, 4
      %v1341 = vshrl.u32 %v1091, 16
      %v1343 = vrot.slane %v1341, 7
      %v1344 = vshll.u32 %v1091, 16
      %v1346 = vor.u32 %v1343, %v1344
      %v1347 = vsel %vm623, %v1339, %v1346
      %v1348 = vrot.slane %v1343, 4
      %v1350 = vshrl.u32 %v1092, 16
      %v1352 = vrot.slane %v1350, 7
      %v1353 = vshll.u32 %v1092, 16
      %v1355 = vor.u32 %v1352, %v1353
      %v1356 = vrot.slane %v1352, 4
      %v1358 = vshrl.u32 %v1093, 16
      %v1360 = vrot.slane %v1358, 7
      %v1361 = vshll.u32 %v1093, 16
      %v1363 = vor.u32 %v1360, %v1361
      %v1364 = vsel %vm623, %v1356, %v1363
      %v1365 = vrot.slane %v1360, 4
      %1366 = vrot.lane.b32.xlu0 %v1100, 4
      %v1367 = vpop.permute.xlu0 %1366
      %1368 = vrot.lane.b32.xlu0 %v1109, 4
      %v1369 = vpop.permute.xlu0 %1368
      %1370 = vrot.lane.b32.xlu0 %v1110, 4
      %v1371 = vpop.permute.xlu0 %1370
      %1372 = vrot.lane.b32.xlu0 %v1117, 4
      %v1373 = vpop.permute.xlu0 %1372
      %1374 = vrot.lane.b32.xlu0 %v1126, 4
      %v1375 = vpop.permute.xlu0 %1374
      %1376 = vrot.lane.b32.xlu0 %v1127, 4
      %v1377 = vpop.permute.xlu0 %1376
      %1378 = vrot.lane.b32.xlu0 %v1134, 4
      %v1379 = vpop.permute.xlu0 %1378
      %1380 = vrot.lane.b32.xlu0 %v1143, 4
      %v1381 = vpop.permute.xlu0 %1380
      %1382 = vrot.lane.b32.xlu0 %v1144, 4
      %v1383 = vpop.permute.xlu0 %1382
      %1384 = vrot.lane.b32.xlu0 %v1151, 4
      %v1385 = vpop.permute.xlu0 %1384
      %1386 = vrot.lane.b32.xlu0 %v1160, 4
      %v1387 = vpop.permute.xlu0 %1386
      %1388 = vrot.lane.b32.xlu0 %v1161, 4
      %v1389 = vpop.permute.xlu0 %1388
      %1390 = vrot.lane.b32.xlu0 %v1168, 4
      %v1391 = vpop.permute.xlu0 %1390
      %1392 = vrot.lane.b32.xlu0 %v1177, 4
      %v1393 = vpop.permute.xlu0 %1392
      %1394 = vrot.lane.b32.xlu0 %v1178, 4
      %v1395 = vpop.permute.xlu0 %1394
      %1396 = vrot.lane.b32.xlu0 %v1185, 4
      %v1397 = vpop.permute.xlu0 %1396
      %1398 = vrot.lane.b32.xlu0 %v1194, 4
      %v1399 = vpop.permute.xlu0 %1398
      %1400 = vrot.lane.b32.xlu0 %v1195, 4
      %v1401 = vpop.permute.xlu0 %1400
      %1402 = vrot.lane.b32.xlu0 %v1202, 4
      %v1403 = vpop.permute.xlu0 %1402
      %1404 = vrot.lane.b32.xlu0 %v1211, 4
      %v1405 = vpop.permute.xlu0 %1404
      %1406 = vrot.lane.b32.xlu0 %v1212, 4
      %v1407 = vpop.permute.xlu0 %1406
      %1408 = vrot.lane.b32.xlu0 %v1219, 4
      %v1409 = vpop.permute.xlu0 %1408
      %1410 = vrot.lane.b32.xlu0 %v1228, 4
      %v1411 = vpop.permute.xlu0 %1410
      %1412 = vrot.lane.b32.xlu0 %v1229, 4
      %v1413 = vpop.permute.xlu0 %1412
      %1414 = vrot.lane.b32.xlu0 %v1236, 4
      %v1415 = vpop.permute.xlu0 %1414
      %1416 = vrot.lane.b32.xlu0 %v1245, 4
      %v1417 = vpop.permute.xlu0 %1416
      %1418 = vrot.lane.b32.xlu0 %v1246, 4
      %v1419 = vpop.permute.xlu0 %1418
      %1420 = vrot.lane.b32.xlu0 %v1253, 4
      %v1421 = vpop.permute.xlu0 %1420
      %1422 = vrot.lane.b32.xlu0 %v1262, 4
      %v1423 = vpop.permute.xlu0 %1422
      %1424 = vrot.lane.b32.xlu0 %v1263, 4
      %v1425 = vpop.permute.xlu0 %1424
      %1426 = vrot.lane.b32.xlu0 %v1270, 4
      %v1427 = vpop.permute.xlu0 %1426
      %1428 = vrot.lane.b32.xlu0 %v1279, 4
      %v1429 = vpop.permute.xlu0 %1428
      %1430 = vrot.lane.b32.xlu0 %v1280, 4
      %v1431 = vpop.permute.xlu0 %1430
      %1432 = vrot.lane.b32.xlu0 %v1287, 4
      %v1433 = vpop.permute.xlu0 %1432
      %1434 = vrot.lane.b32.xlu0 %v1296, 4
      %v1435 = vpop.permute.xlu0 %1434
      %1436 = vrot.lane.b32.xlu0 %v1297, 4
      %v1437 = vpop.permute.xlu0 %1436
      %1438 = vrot.lane.b32.xlu0 %v1304, 4
      %v1439 = vpop.permute.xlu0 %1438
      %1440 = vrot.lane.b32.xlu0 %v1313, 4
      %v1441 = vpop.permute.xlu0 %1440
      %1442 = vrot.lane.b32.xlu0 %v1314, 4
      %v1443 = vpop.permute.xlu0 %1442
      %1444 = vrot.lane.b32.xlu0 %v1321, 4
      %v1445 = vpop.permute.xlu0 %1444
      %1446 = vrot.lane.b32.xlu0 %v1330, 4
      %v1447 = vpop.permute.xlu0 %1446
      %1448 = vrot.lane.b32.xlu0 %v1331, 4
      %v1449 = vpop.permute.xlu0 %1448
      %1450 = vrot.lane.b32.xlu0 %v1338, 4
      %v1451 = vpop.permute.xlu0 %1450
      %1452 = vrot.lane.b32.xlu0 %v1347, 4
      %v1453 = vpop.permute.xlu0 %1452
      %1454 = vrot.lane.b32.xlu0 %v1348, 4
      %v1455 = vpop.permute.xlu0 %1454
      %1456 = vrot.lane.b32.xlu0 %v1355, 4
      %v1457 = vpop.permute.xlu0 %1456
      %1458 = vrot.lane.b32.xlu0 %v1364, 4
      %v1459 = vpop.permute.xlu0 %1458
      %1460 = vrot.lane.b32.xlu0 %v1365, 4
      %v1461 = vpop.permute.xlu0 %1460
      %vm1510 = vcmask 60448
      %vm1511 = vmand %vm1510, %vm414
      %v1512 = vld [vmem:[%s944] sm:$0xf]
      %v1513 = vsel %vm1511, %v1367, %v1512
      %1514 = vst [vmem:[%s944] sm:$0xf] %v1513
      %vm1515 = vcmask 60448
      %1516 = vst.msk [vmem:[%s944 + $0x4] sm:$0xf] %vm1515, %v1369
      %vm1517 = vcmask 57376
      %vm1518 = vmand %vm1517, %vm352
      %v1519 = vld [vmem:[%s944 + $0x8] sm:$0x1]
      %v1520 = vsel %vm1518, %v1371, %v1519
      %1521 = vst [vmem:[%s944 + $0x8] sm:$0x1] %v1520
      %v1522 = vld [vmem:[%s944 + $0xc] sm:$0xf]
      %v1523 = vsel %vm1511, %v1373, %v1522
      %1524 = vst [vmem:[%s944 + $0xc] sm:$0xf] %v1523
      %1525 = vst.msk [vmem:[%s944 + $0x10] sm:$0xf] %vm1515, %v1375
      %v1526 = vld [vmem:[%s944 + $0x14] sm:$0x1]
      %v1527 = vsel %vm1518, %v1377, %v1526
      %1528 = vst [vmem:[%s944 + $0x14] sm:$0x1] %v1527
      %v1529 = vld [vmem:[%s944 + $0x18] sm:$0xf]
      %v1530 = vsel %vm1511, %v1379, %v1529
      %1531 = vst [vmem:[%s944 + $0x18] sm:$0xf] %v1530
      %1532 = vst.msk [vmem:[%s944 + $0x1c] sm:$0xf] %vm1515, %v1381
      %v1533 = vld [vmem:[%s944 + $0x20] sm:$0x1]
      %v1534 = vsel %vm1518, %v1383, %v1533
      %1535 = vst [vmem:[%s944 + $0x20] sm:$0x1] %v1534
      %v1536 = vld [vmem:[%s944 + $0x24] sm:$0xf]
      %v1537 = vsel %vm1511, %v1385, %v1536
      %1538 = vst [vmem:[%s944 + $0x24] sm:$0xf] %v1537
      %1539 = vst.msk [vmem:[%s944 + $0x28] sm:$0xf] %vm1515, %v1387
      %v1540 = vld [vmem:[%s944 + $0x2c] sm:$0x1]
      %v1541 = vsel %vm1518, %v1389, %v1540
      %1542 = vst [vmem:[%s944 + $0x2c] sm:$0x1] %v1541
      %v1543 = vld [vmem:[%s944 + $0x30] sm:$0xf]
      %v1544 = vsel %vm1511, %v1391, %v1543
      %1545 = vst [vmem:[%s944 + $0x30] sm:$0xf] %v1544
      %1546 = vst.msk [vmem:[%s944 + $0x34] sm:$0xf] %vm1515, %v1393
      %v1547 = vld [vmem:[%s944 + $0x38] sm:$0x1]
      %v1548 = vsel %vm1518, %v1395, %v1547
      %1549 = vst [vmem:[%s944 + $0x38] sm:$0x1] %v1548
      %v1550 = vld [vmem:[%s944 + $0x3c] sm:$0xf]
      %v1551 = vsel %vm1511, %v1397, %v1550
      %1552 = vst [vmem:[%s944 + $0x3c] sm:$0xf] %v1551
      %1553 = vst.msk [vmem:[%s944 + $0x40] sm:$0xf] %vm1515, %v1399
      %v1554 = vld [vmem:[%s944 + $0x44] sm:$0x1]
      %v1555 = vsel %vm1518, %v1401, %v1554
      %1556 = vst [vmem:[%s944 + $0x44] sm:$0x1] %v1555
      %v1557 = vld [vmem:[%s944 + $0x48] sm:$0xf]
      %v1558 = vsel %vm1511, %v1403, %v1557
      %1559 = vst [vmem:[%s944 + $0x48] sm:$0xf] %v1558
      %1560 = vst.msk [vmem:[%s944 + $0x4c] sm:$0xf] %vm1515, %v1405
      %v1561 = vld [vmem:[%s944 + $0x50] sm:$0x1]
      %v1562 = vsel %vm1518, %v1407, %v1561
      %1563 = vst [vmem:[%s944 + $0x50] sm:$0x1] %v1562
      %v1564 = vld [vmem:[%s944 + $0x54] sm:$0xf]
      %v1565 = vsel %vm1511, %v1409, %v1564
      %1566 = vst [vmem:[%s944 + $0x54] sm:$0xf] %v1565
      %1567 = vst.msk [vmem:[%s944 + $0x58] sm:$0xf] %vm1515, %v1411
      %v1568 = vld [vmem:[%s944 + $0x5c] sm:$0x1]
      %v1569 = vsel %vm1518, %v1413, %v1568
      %1570 = vst [vmem:[%s944 + $0x5c] sm:$0x1] %v1569
      %v1571 = vld [vmem:[%s944 + $0x60] sm:$0xf]
      %v1572 = vsel %vm1511, %v1415, %v1571
      %1573 = vst [vmem:[%s944 + $0x60] sm:$0xf] %v1572
      %1574 = vst.msk [vmem:[%s944 + $0x64] sm:$0xf] %vm1515, %v1417
      %v1575 = vld [vmem:[%s944 + $0x68] sm:$0x1]
      %v1576 = vsel %vm1518, %v1419, %v1575
      %1577 = vst [vmem:[%s944 + $0x68] sm:$0x1] %v1576
      %v1578 = vld [vmem:[%s944 + $0x6c] sm:$0xf]
      %v1579 = vsel %vm1511, %v1421, %v1578
      %1580 = vst [vmem:[%s944 + $0x6c] sm:$0xf] %v1579
      %1581 = vst.msk [vmem:[%s944 + $0x70] sm:$0xf] %vm1515, %v1423
      %v1582 = vld [vmem:[%s944 + $0x74] sm:$0x1]
      %v1583 = vsel %vm1518, %v1425, %v1582
      %1584 = vst [vmem:[%s944 + $0x74] sm:$0x1] %v1583
      %v1585 = vld [vmem:[%s944 + $0x78] sm:$0xf]
      %v1586 = vsel %vm1511, %v1427, %v1585
      %1587 = vst [vmem:[%s944 + $0x78] sm:$0xf] %v1586
      %1588 = vst.msk [vmem:[%s944 + $0x7c] sm:$0xf] %vm1515, %v1429
      %v1589 = vld [vmem:[%s944 + $0x80] sm:$0x1]
      %v1590 = vsel %vm1518, %v1431, %v1589
      %1591 = vst [vmem:[%s944 + $0x80] sm:$0x1] %v1590
      %v1592 = vld [vmem:[%s944 + $0x84] sm:$0xf]
      %v1593 = vsel %vm1511, %v1433, %v1592
      %1594 = vst [vmem:[%s944 + $0x84] sm:$0xf] %v1593
      %1595 = vst.msk [vmem:[%s944 + $0x88] sm:$0xf] %vm1515, %v1435
      %v1596 = vld [vmem:[%s944 + $0x8c] sm:$0x1]
      %v1597 = vsel %vm1518, %v1437, %v1596
      %1598 = vst [vmem:[%s944 + $0x8c] sm:$0x1] %v1597
      %v1599 = vld [vmem:[%s944 + $0x90] sm:$0xf]
      %v1600 = vsel %vm1511, %v1439, %v1599
      %1601 = vst [vmem:[%s944 + $0x90] sm:$0xf] %v1600
      %1602 = vst.msk [vmem:[%s944 + $0x94] sm:$0xf] %vm1515, %v1441
      %v1603 = vld [vmem:[%s944 + $0x98] sm:$0x1]
      %v1604 = vsel %vm1518, %v1443, %v1603
      %1605 = vst [vmem:[%s944 + $0x98] sm:$0x1] %v1604
      %v1606 = vld [vmem:[%s944 + $0x9c] sm:$0xf]
      %v1607 = vsel %vm1511, %v1445, %v1606
      %1608 = vst [vmem:[%s944 + $0x9c] sm:$0xf] %v1607
      %1609 = vst.msk [vmem:[%s944 + $0xa0] sm:$0xf] %vm1515, %v1447
      %v1610 = vld [vmem:[%s944 + $0xa4] sm:$0x1]
      %v1611 = vsel %vm1518, %v1449, %v1610
      %1612 = vst [vmem:[%s944 + $0xa4] sm:$0x1] %v1611
      %v1613 = vld [vmem:[%s944 + $0xa8] sm:$0xf]
      %v1614 = vsel %vm1511, %v1451, %v1613
      %1615 = vst [vmem:[%s944 + $0xa8] sm:$0xf] %v1614
      %1616 = vst.msk [vmem:[%s944 + $0xac] sm:$0xf] %vm1515, %v1453
      %v1617 = vld [vmem:[%s944 + $0xb0] sm:$0x1]
      %v1618 = vsel %vm1518, %v1455, %v1617
      %1619 = vst [vmem:[%s944 + $0xb0] sm:$0x1] %v1618
      %v1620 = vld [vmem:[%s944 + $0xb4] sm:$0xf]
      %v1621 = vsel %vm1511, %v1457, %v1620
      %1622 = vst [vmem:[%s944 + $0xb4] sm:$0xf] %v1621
      %1623 = vst.msk [vmem:[%s944 + $0xb8] sm:$0xf] %vm1515, %v1459
      %v1624 = vld [vmem:[%s944 + $0xbc] sm:$0x1]
      %v1625 = vsel %vm1518, %v1461, %v1624
      %1626 = vst [vmem:[%s944 + $0xbc] sm:$0x1] %v1625
      %p1627 = scmp.gt.s32.totalorder %s24, 0
      // Predicated region
      $region53: #{up_forward.1} parent=51 // pred_check
        %p1628 = pneg %p1627
      $region54: #{up_forward.1} parent=51 // pred_check_branch
        %1630 = sbr.rel (%p1628) target = $region56
      $region55: #{up_forward.1} parent=51 // pred_region
        %s1631 = ssub.s32 %s350, 2
        %s1632 = smul.u32 %s1631, 2
        %s1633 = smul.addr %s1632, 4
        %s1634 = scalar_lea.vmem %s333, %s1633
        %v1635 = vld [vmem:[%s1634] sm:$0xf]
        %v1636 = vld [vmem:[%s1634 + $0x4] sm:$0xf]
        %v1637 = vld [vmem:[%s1634 + $0x8] sm:$0xf]
        %v1638 = vld [vmem:[%s1634 + $0xc] sm:$0xf]
        %v1640 = vshrl.u32 %v1635, 16
        %v1642 = vrot.slane %v1640, 7
        %v1643 = vshll.u32 %v1635, 16
        %v1645 = vor.u32 %v1642, %v1643
        %v1646 = vrot.slane %v1642, 4
        %v1648 = vshrl.u32 %v1636, 16
        %v1650 = vrot.slane %v1648, 7
        %v1651 = vshll.u32 %v1636, 16
        %v1653 = vor.u32 %v1650, %v1651
        %v1654 = vsel %vm623, %v1646, %v1653
        %v1655 = vrot.slane %v1650, 4
        %v1657 = vshrl.u32 %v1637, 16
        %v1659 = vrot.slane %v1657, 7
        %v1660 = vshll.u32 %v1637, 16
        %v1662 = vor.u32 %v1659, %v1660
        %v1663 = vrot.slane %v1659, 4
        %v1665 = vshrl.u32 %v1638, 16
        %v1667 = vrot.slane %v1665, 7
        %v1668 = vshll.u32 %v1638, 16
        %v1670 = vor.u32 %v1667, %v1668
        %v1671 = vsel %vm623, %v1663, %v1670
        %v1672 = vrot.slane %v1667, 4
        %v1679 = vld [vmem:[#allocation2] sm:$0xf]
        %v1680 = vsel %vm946, %v1645, %v1679
        %1681 = vst [vmem:[#allocation2] sm:$0xf] %v1680
        %1682 = vst.msk [vmem:[#allocation2 + $0x4] sm:$0xf] %vm950, %v1654
        %v1683 = vld [vmem:[#allocation2 + $0x8] sm:$0x1]
        %v1684 = vsel %vm477, %v1655, %v1683
        %1685 = vst [vmem:[#allocation2 + $0x8] sm:$0x1] %v1684
        %v1686 = vld [vmem:[#allocation2 + $0xc] sm:$0xf]
        %v1687 = vsel %vm946, %v1662, %v1686
        %1688 = vst [vmem:[#allocation2 + $0xc] sm:$0xf] %v1687
        %1689 = vst.msk [vmem:[#allocation2 + $0x10] sm:$0xf] %vm950, %v1671
        %v1690 = vld [vmem:[#allocation2 + $0x14] sm:$0x1]
        %v1691 = vsel %vm477, %v1672, %v1690
        %1692 = vst [vmem:[#allocation2 + $0x14] sm:$0x1] %v1691
        %s1693 = smul.addr %s1632, 4
        %s1694 = scalar_lea.vmem %s338, %s1693
        %v1695 = vld [vmem:[%s1694] sm:$0xf]
        %v1696 = vld [vmem:[%s1694 + $0x4] sm:$0xf]
        %v1697 = vld [vmem:[%s1694 + $0x8] sm:$0xf]
        %v1698 = vld [vmem:[%s1694 + $0xc] sm:$0xf]
        %v1700 = vshrl.u32 %v1695, 16
        %v1702 = vrot.slane %v1700, 7
        %v1703 = vshll.u32 %v1695, 16
        %v1705 = vor.u32 %v1702, %v1703
        %v1706 = vrot.slane %v1702, 4
        %v1708 = vshrl.u32 %v1696, 16
        %v1710 = vrot.slane %v1708, 7
        %v1711 = vshll.u32 %v1696, 16
        %v1713 = vor.u32 %v1710, %v1711
        %v1714 = vsel %vm623, %v1706, %v1713
        %v1715 = vrot.slane %v1710, 4
        %v1717 = vshrl.u32 %v1697, 16
        %v1719 = vrot.slane %v1717, 7
        %v1720 = vshll.u32 %v1697, 16
        %v1722 = vor.u32 %v1719, %v1720
        %v1723 = vrot.slane %v1719, 4
        %v1725 = vshrl.u32 %v1698, 16
        %v1727 = vrot.slane %v1725, 7
        %v1728 = vshll.u32 %v1698, 16
        %v1730 = vor.u32 %v1727, %v1728
        %v1731 = vsel %vm623, %v1723, %v1730
        %v1732 = vrot.slane %v1727, 4
        %1733 = vrot.lane.b32.xlu0 %v1705, 4
        %v1734 = vpop.permute.xlu0 %1733
        %1735 = vrot.lane.b32.xlu0 %v1714, 4
        %v1736 = vpop.permute.xlu0 %1735
        %1737 = vrot.lane.b32.xlu0 %v1715, 4
        %v1738 = vpop.permute.xlu0 %1737
        %1739 = vrot.lane.b32.xlu0 %v1722, 4
        %v1740 = vpop.permute.xlu0 %1739
        %1741 = vrot.lane.b32.xlu0 %v1731, 4
        %v1742 = vpop.permute.xlu0 %1741
        %1743 = vrot.lane.b32.xlu0 %v1732, 4
        %v1744 = vpop.permute.xlu0 %1743
        %v1751 = vld [vmem:[#allocation2] sm:$0xf]
        %v1752 = vsel %vm1511, %v1734, %v1751
        %1753 = vst [vmem:[#allocation2] sm:$0xf] %v1752
        %1754 = vst.msk [vmem:[#allocation2 + $0x4] sm:$0xf] %vm1515, %v1736
        %v1755 = vld [vmem:[#allocation2 + $0x8] sm:$0x1]
        %v1756 = vsel %vm1518, %v1738, %v1755
        %1757 = vst [vmem:[#allocation2 + $0x8] sm:$0x1] %v1756
        %v1758 = vld [vmem:[#allocation2 + $0xc] sm:$0xf]
        %v1759 = vsel %vm1511, %v1740, %v1758
        %1760 = vst [vmem:[#allocation2 + $0xc] sm:$0xf] %v1759
        %1761 = vst.msk [vmem:[#allocation2 + $0x10] sm:$0xf] %vm1515, %v1742
        %v1762 = vld [vmem:[#allocation2 + $0x14] sm:$0x1]
        %v1763 = vsel %vm1518, %v1744, %v1762
        %1764 = vst [vmem:[#allocation2 + $0x14] sm:$0x1] %v1763
      $region56: #{up_forward.1} parent=51 // pred_fallthru
        _
      %p1765 = scmp.eq.s32.totalorder %s24, 0
      // Predicated region
      $region57: #{up_forward.1} parent=51 // pred_check
        %p1766 = pneg %p1765
      $region58: #{up_forward.1} parent=51 // pred_check_branch
        %1768 = sbr.rel (%p1766) target = $region60
      $region59: #{up_forward.1} parent=51 // pred_region
        %vm1769 = vcmask 60416
        %1770 = vst.msk [vmem:[#allocation2] sm:$0xf] %vm1769, 0
        %1771 = vst.msk [vmem:[#allocation2 + $0x4] sm:$0xf] %vm1769, 0
        %vm1772 = vcmask 57344
        %1773 = vst.msk [vmem:[#allocation2 + $0x8] sm:$0x1] %vm1772, 0
        %1774 = vst.msk [vmem:[#allocation2 + $0xc] sm:$0xf] %vm1769, 0
        %1775 = vst.msk [vmem:[#allocation2 + $0x10] sm:$0xf] %vm1769, 0
        %1776 = vst.msk [vmem:[#allocation2 + $0x14] sm:$0x1] %vm1772, 0
      $region60: #{up_forward.1} parent=51 // pred_fallthru
        _
      %p1777 = scmp.lt.s32.totalorder %s24, 0
      // Predicated region
      $region61: #{up_forward.1} parent=51 // pred_check
        %p1778 = pneg %p1777
      $region62: #{up_forward.1} parent=51 // pred_check_branch
        %1780 = sbr.rel (%p1778) target = $region64
      $region63: #{up_forward.1} parent=51 // pred_region
        %s1781 = sadd.s32 %s350, 16
        %s1782 = smul.u32 %s1781, 2
        %s1783 = smul.addr %s1782, 4
        %s1784 = scalar_lea.vmem %s333, %s1783
        %v1785 = vld [vmem:[%s1784] sm:$0xf]
        %v1786 = vld [vmem:[%s1784 + $0x4] sm:$0xf]
        %v1787 = vld [vmem:[%s1784 + $0x8] sm:$0xf]
        %v1788 = vld [vmem:[%s1784 + $0xc] sm:$0xf]
        %v1790 = vshrl.u32 %v1785, 16
        %v1792 = vrot.slane %v1790, 7
        %v1793 = vshll.u32 %v1785, 16
        %v1795 = vor.u32 %v1792, %v1793
        %v1796 = vrot.slane %v1792, 4
        %v1798 = vshrl.u32 %v1786, 16
        %v1800 = vrot.slane %v1798, 7
        %v1801 = vshll.u32 %v1786, 16
        %v1803 = vor.u32 %v1800, %v1801
        %v1804 = vsel %vm623, %v1796, %v1803
        %v1805 = vrot.slane %v1800, 4
        %v1807 = vshrl.u32 %v1787, 16
        %v1809 = vrot.slane %v1807, 7
        %v1810 = vshll.u32 %v1787, 16
        %v1812 = vor.u32 %v1809, %v1810
        %v1813 = vrot.slane %v1809, 4
        %v1815 = vshrl.u32 %v1788, 16
        %v1817 = vrot.slane %v1815, 7
        %v1818 = vshll.u32 %v1788, 16
        %v1820 = vor.u32 %v1817, %v1818
        %v1821 = vsel %vm623, %v1813, %v1820
        %v1822 = vrot.slane %v1817, 4
        %s1829 = scalar_lea.vmem [#allocation2], 216
        %v1830 = vld [vmem:[%s1829] sm:$0xf]
        %v1831 = vsel %vm946, %v1795, %v1830
        %1832 = vst [vmem:[%s1829] sm:$0xf] %v1831
        %1833 = vst.msk [vmem:[%s1829 + $0x4] sm:$0xf] %vm950, %v1804
        %v1834 = vld [vmem:[%s1829 + $0x8] sm:$0x1]
        %v1835 = vsel %vm477, %v1805, %v1834
        %1836 = vst [vmem:[%s1829 + $0x8] sm:$0x1] %v1835
        %v1837 = vld [vmem:[%s1829 + $0xc] sm:$0xf]
        %v1838 = vsel %vm946, %v1812, %v1837
        %1839 = vst [vmem:[%s1829 + $0xc] sm:$0xf] %v1838
        %1840 = vst.msk [vmem:[%s1829 + $0x10] sm:$0xf] %vm950, %v1821
        %v1841 = vld [vmem:[%s1829 + $0x14] sm:$0x1]
        %v1842 = vsel %vm477, %v1822, %v1841
        %1843 = vst [vmem:[%s1829 + $0x14] sm:$0x1] %v1842
        %s1844 = smul.addr %s1782, 4
        %s1845 = scalar_lea.vmem %s338, %s1844
        %v1846 = vld [vmem:[%s1845] sm:$0xf]
        %v1847 = vld [vmem:[%s1845 + $0x4] sm:$0xf]
        %v1848 = vld [vmem:[%s1845 + $0x8] sm:$0xf]
        %v1849 = vld [vmem:[%s1845 + $0xc] sm:$0xf]
        %v1851 = vshrl.u32 %v1846, 16
        %v1853 = vrot.slane %v1851, 7
        %v1854 = vshll.u32 %v1846, 16
        %v1856 = vor.u32 %v1853, %v1854
        %v1857 = vrot.slane %v1853, 4
        %v1859 = vshrl.u32 %v1847, 16
        %v1861 = vrot.slane %v1859, 7
        %v1862 = vshll.u32 %v1847, 16
        %v1864 = vor.u32 %v1861, %v1862
        %v1865 = vsel %vm623, %v1857, %v1864
        %v1866 = vrot.slane %v1861, 4
        %v1868 = vshrl.u32 %v1848, 16
        %v1870 = vrot.slane %v1868, 7
        %v1871 = vshll.u32 %v1848, 16
        %v1873 = vor.u32 %v1870, %v1871
        %v1874 = vrot.slane %v1870, 4
        %v1876 = vshrl.u32 %v1849, 16
        %v1878 = vrot.slane %v1876, 7
        %v1879 = vshll.u32 %v1849, 16
        %v1881 = vor.u32 %v1878, %v1879
        %v1882 = vsel %vm623, %v1874, %v1881
        %v1883 = vrot.slane %v1878, 4
        %1884 = vrot.lane.b32.xlu0 %v1856, 4
        %v1885 = vpop.permute.xlu0 %1884
        %1886 = vrot.lane.b32.xlu0 %v1865, 4
        %v1887 = vpop.permute.xlu0 %1886
        %1888 = vrot.lane.b32.xlu0 %v1866, 4
        %v1889 = vpop.permute.xlu0 %1888
        %1890 = vrot.lane.b32.xlu0 %v1873, 4
        %v1891 = vpop.permute.xlu0 %1890
        %1892 = vrot.lane.b32.xlu0 %v1882, 4
        %v1893 = vpop.permute.xlu0 %1892
        %1894 = vrot.lane.b32.xlu0 %v1883, 4
        %v1895 = vpop.permute.xlu0 %1894
        %v1902 = vld [vmem:[%s1829] sm:$0xf]
        %v1903 = vsel %vm1511, %v1885, %v1902
        %1904 = vst [vmem:[%s1829] sm:$0xf] %v1903
        %1905 = vst.msk [vmem:[%s1829 + $0x4] sm:$0xf] %vm1515, %v1887
        %v1906 = vld [vmem:[%s1829 + $0x8] sm:$0x1]
        %v1907 = vsel %vm1518, %v1889, %v1906
        %1908 = vst [vmem:[%s1829 + $0x8] sm:$0x1] %v1907
        %v1909 = vld [vmem:[%s1829 + $0xc] sm:$0xf]
        %v1910 = vsel %vm1511, %v1891, %v1909
        %1911 = vst [vmem:[%s1829 + $0xc] sm:$0xf] %v1910
        %1912 = vst.msk [vmem:[%s1829 + $0x10] sm:$0xf] %vm1515, %v1893
        %v1913 = vld [vmem:[%s1829 + $0x14] sm:$0x1]
        %v1914 = vsel %vm1518, %v1895, %v1913
        %1915 = vst [vmem:[%s1829 + $0x14] sm:$0x1] %v1914
      $region64: #{up_forward.1} parent=51 // pred_fallthru
        _
      // Predicated region
      $region65: #{up_forward.1} parent=51 // pred_check
        %p1916 = pneg %p1765
      $region66: #{up_forward.1} parent=51 // pred_check_branch
        %1918 = sbr.rel (%p1916) target = $region68
      $region67: #{up_forward.1} parent=51 // pred_region
        %s1919 = scalar_lea.vmem [#allocation2], 216
        %vm1920 = vcmask 60416
        %1921 = vst.msk [vmem:[%s1919] sm:$0xf] %vm1920, 0
        %1922 = vst.msk [vmem:[%s1919 + $0x4] sm:$0xf] %vm1920, 0
        %vm1923 = vcmask 57344
        %1924 = vst.msk [vmem:[%s1919 + $0x8] sm:$0x1] %vm1923, 0
        %1925 = vst.msk [vmem:[%s1919 + $0xc] sm:$0xf] %vm1920, 0
        %1926 = vst.msk [vmem:[%s1919 + $0x10] sm:$0xf] %vm1920, 0
        %1927 = vst.msk [vmem:[%s1919 + $0x14] sm:$0x1] %vm1923, 0
      $region68: #{up_forward.1} parent=51 // pred_fallthru
        _
      %v1928 = vld [vmem:[#allocation2] sm:$0xf]
      %v1929 = vld [vmem:[#allocation2 + $0x4] sm:$0xf]
      %v1930 = vld [vmem:[#allocation2 + $0xc] sm:$0xf]
      %v1931 = vld [vmem:[#allocation2 + $0x10] sm:$0xf]
      %v1932 = vld [vmem:[#allocation2 + $0x18] sm:$0xf]
      %v1933 = vld [vmem:[#allocation2 + $0x1c] sm:$0xf]
      %v1934 = vld [vmem:[#allocation2 + $0x24] sm:$0xf]
      %v1935 = vld [vmem:[#allocation2 + $0x28] sm:$0xf]
      %v1936 = vld [vmem:[#allocation2 + $0x30] sm:$0xf]
      %v1937 = vld [vmem:[#allocation2 + $0x34] sm:$0xf]
      %v1938 = vld [vmem:[#allocation2 + $0x3c] sm:$0xf]
      %v1939 = vld [vmem:[#allocation2 + $0x40] sm:$0xf]
      %v1940 = vld [vmem:[#allocation2 + $0x48] sm:$0xf]
      %v1941 = vld [vmem:[#allocation2 + $0x4c] sm:$0xf]
      %v1942 = vld [vmem:[#allocation2 + $0x54] sm:$0xf]
      %v1943 = vld [vmem:[#allocation2 + $0x58] sm:$0xf]
      %v1944 = vld [vmem:[#allocation2 + $0x60] sm:$0xf]
      %v1945 = vld [vmem:[#allocation2 + $0x64] sm:$0xf]
      %v1946 = vld [vmem:[#allocation2 + $0x6c] sm:$0xf]
      %v1947 = vld [vmem:[#allocation2 + $0x70] sm:$0xf]
      %v1948 = vld [vmem:[#allocation2 + $0x78] sm:$0xf]
      %v1949 = vld [vmem:[#allocation2 + $0x7c] sm:$0xf]
      %v1950 = vld [vmem:[#allocation2 + $0x84] sm:$0xf]
      %v1951 = vld [vmem:[#allocation2 + $0x88] sm:$0xf]
      %v1952 = vld [vmem:[#allocation2 + $0x90] sm:$0xf]
      %v1953 = vld [vmem:[#allocation2 + $0x94] sm:$0xf]
      %v1954 = vld [vmem:[#allocation2 + $0x9c] sm:$0xf]
      %v1955 = vld [vmem:[#allocation2 + $0xa0] sm:$0xf]
      %v1956 = vld [vmem:[#allocation2 + $0xa8] sm:$0xf]
      %v1957 = vld [vmem:[#allocation2 + $0xac] sm:$0xf]
      %v1958 = vld [vmem:[#allocation2 + $0xb4] sm:$0xf]
      %v1959 = vld [vmem:[#allocation2 + $0xb8] sm:$0xf]
      %v1960 = vld [vmem:[#allocation2 + $0xc0] sm:$0xf]
      %v1961 = vld [vmem:[#allocation2 + $0xc4] sm:$0xf]
      %v1962 = vld [vmem:[#allocation2 + $0xcc] sm:$0xf]
      %v1963 = vld [vmem:[#allocation2 + $0xd0] sm:$0xf]
      %v1964 = vld [vmem:[%s2] sm:$0xf]
      %v1965 = vld [vmem:[#allocation2 + $0x8] sm:$0x1]
      %v1966 = vld [vmem:[#allocation2 + $0x14] sm:$0x1]
      %v1967 = vld [vmem:[#allocation2 + $0x20] sm:$0x1]
      %v1968 = vld [vmem:[#allocation2 + $0x2c] sm:$0x1]
      %v1969 = vld [vmem:[#allocation2 + $0x38] sm:$0x1]
      %v1970 = vld [vmem:[#allocation2 + $0x44] sm:$0x1]
      %v1971 = vld [vmem:[#allocation2 + $0x50] sm:$0x1]
      %v1972 = vld [vmem:[#allocation2 + $0x5c] sm:$0x1]
      %v1973 = vld [vmem:[#allocation2 + $0x68] sm:$0x1]
      %v1974 = vld [vmem:[#allocation2 + $0x74] sm:$0x1]
      %v1975 = vld [vmem:[#allocation2 + $0x80] sm:$0x1]
      %v1976 = vld [vmem:[#allocation2 + $0x8c] sm:$0x1]
      %v1977 = vld [vmem:[#allocation2 + $0x98] sm:$0x1]
      %v1978 = vld [vmem:[#allocation2 + $0xa4] sm:$0x1]
      %v1979 = vld [vmem:[#allocation2 + $0xb0] sm:$0x1]
      %v1980 = vld [vmem:[#allocation2 + $0xbc] sm:$0x1]
      %v1981 = vld [vmem:[#allocation2 + $0xc8] sm:$0x1]
      %v1982 = vld [vmem:[#allocation2 + $0xd4] sm:$0x1]
      %vm1983 = vsmask.f32 3328
      %vm1984 = vsmask.f32 7440
      %vm1985 = vmor %vm1983, %vm1984
      %v1987 = vshrl.u32 %v1928, 16
      %v1989 = vrot.slane %v1987, 4
      %v1990 = vshll.u32 %v1928, 16
      %v1992 = vrot.slane %v1990, 5
      %v1993 = vor.u32 %v1989, %v1992
      %v1994 = vrot.slane %v1993, 4
      %v1996 = vshll.u32 %v1929, 16
      %v1998 = vrot.slane %v1996, 5
      %v1999 = vsel %vm1985, %v1994, %v1998
      %v2000 = vshrl.u32 %v1929, 16
      %v2002 = vrot.slane %v2000, 4
      %v2003 = vor.u32 %v2002, %v1998
      %v2004 = vrot.slane %v2003, 4
      %v2006 = vshll.u32 %v1965, 16
      %v2008 = vrot.slane %v2006, 5
      %v2009 = vsel %vm1985, %v2004, %v2008
      %v2011 = vshrl.u32 %v1930, 16
      %v2013 = vrot.slane %v2011, 4
      %v2014 = vshll.u32 %v1930, 16
      %v2016 = vrot.slane %v2014, 5
      %v2017 = vor.u32 %v2013, %v2016
      %v2018 = vrot.slane %v2017, 4
      %v2020 = vshll.u32 %v1931, 16
      %v2022 = vrot.slane %v2020, 5
      %v2023 = vsel %vm1985, %v2018, %v2022
      %v2024 = vshrl.u32 %v1931, 16
      %v2026 = vrot.slane %v2024, 4
      %v2027 = vor.u32 %v2026, %v2022
      %v2028 = vrot.slane %v2027, 4
      %v2030 = vshll.u32 %v1966, 16
      %v2032 = vrot.slane %v2030, 5
      %v2033 = vsel %vm1985, %v2028, %v2032
      %v2035 = vshrl.u32 %v1932, 16
      %v2037 = vrot.slane %v2035, 4
      %v2038 = vshll.u32 %v1932, 16
      %v2040 = vrot.slane %v2038, 5
      %v2041 = vor.u32 %v2037, %v2040
      %v2042 = vrot.slane %v2041, 4
      %v2044 = vshll.u32 %v1933, 16
      %v2046 = vrot.slane %v2044, 5
      %v2047 = vsel %vm1985, %v2042, %v2046
      %v2048 = vshrl.u32 %v1933, 16
      %v2050 = vrot.slane %v2048, 4
      %v2051 = vor.u32 %v2050, %v2046
      %v2052 = vrot.slane %v2051, 4
      %v2054 = vshll.u32 %v1967, 16
      %v2056 = vrot.slane %v2054, 5
      %v2057 = vsel %vm1985, %v2052, %v2056
      %v2059 = vshrl.u32 %v1934, 16
      %v2061 = vrot.slane %v2059, 4
      %v2062 = vshll.u32 %v1934, 16
      %v2064 = vrot.slane %v2062, 5
      %v2065 = vor.u32 %v2061, %v2064
      %v2066 = vrot.slane %v2065, 4
      %v2068 = vshll.u32 %v1935, 16
      %v2070 = vrot.slane %v2068, 5
      %v2071 = vsel %vm1985, %v2066, %v2070
      %v2072 = vshrl.u32 %v1935, 16
      %v2074 = vrot.slane %v2072, 4
      %v2075 = vor.u32 %v2074, %v2070
      %v2076 = vrot.slane %v2075, 4
      %v2078 = vshll.u32 %v1968, 16
      %v2080 = vrot.slane %v2078, 5
      %v2081 = vsel %vm1985, %v2076, %v2080
      %v2083 = vshrl.u32 %v1936, 16
      %v2085 = vrot.slane %v2083, 4
      %v2086 = vshll.u32 %v1936, 16
      %v2088 = vrot.slane %v2086, 5
      %v2089 = vor.u32 %v2085, %v2088
      %v2090 = vrot.slane %v2089, 4
      %v2092 = vshll.u32 %v1937, 16
      %v2094 = vrot.slane %v2092, 5
      %v2095 = vsel %vm1985, %v2090, %v2094
      %v2096 = vshrl.u32 %v1937, 16
      %v2098 = vrot.slane %v2096, 4
      %v2099 = vor.u32 %v2098, %v2094
      %v2100 = vrot.slane %v2099, 4
      %v2102 = vshll.u32 %v1969, 16
      %v2104 = vrot.slane %v2102, 5
      %v2105 = vsel %vm1985, %v2100, %v2104
      %v2107 = vshrl.u32 %v1938, 16
      %v2109 = vrot.slane %v2107, 4
      %v2110 = vshll.u32 %v1938, 16
      %v2112 = vrot.slane %v2110, 5
      %v2113 = vor.u32 %v2109, %v2112
      %v2114 = vrot.slane %v2113, 4
      %v2116 = vshll.u32 %v1939, 16
      %v2118 = vrot.slane %v2116, 5
      %v2119 = vsel %vm1985, %v2114, %v2118
      %v2120 = vshrl.u32 %v1939, 16
      %v2122 = vrot.slane %v2120, 4
      %v2123 = vor.u32 %v2122, %v2118
      %v2124 = vrot.slane %v2123, 4
      %v2126 = vshll.u32 %v1970, 16
      %v2128 = vrot.slane %v2126, 5
      %v2129 = vsel %vm1985, %v2124, %v2128
      %v2131 = vshrl.u32 %v1940, 16
      %v2133 = vrot.slane %v2131, 4
      %v2134 = vshll.u32 %v1940, 16
      %v2136 = vrot.slane %v2134, 5
      %v2137 = vor.u32 %v2133, %v2136
      %v2138 = vrot.slane %v2137, 4
      %v2140 = vshll.u32 %v1941, 16
      %v2142 = vrot.slane %v2140, 5
      %v2143 = vsel %vm1985, %v2138, %v2142
      %v2144 = vshrl.u32 %v1941, 16
      %v2146 = vrot.slane %v2144, 4
      %v2147 = vor.u32 %v2146, %v2142
      %v2148 = vrot.slane %v2147, 4
      %v2150 = vshll.u32 %v1971, 16
      %v2152 = vrot.slane %v2150, 5
      %v2153 = vsel %vm1985, %v2148, %v2152
      %v2155 = vshrl.u32 %v1942, 16
      %v2157 = vrot.slane %v2155, 4
      %v2158 = vshll.u32 %v1942, 16
      %v2160 = vrot.slane %v2158, 5
      %v2161 = vor.u32 %v2157, %v2160
      %v2162 = vrot.slane %v2161, 4
      %v2164 = vshll.u32 %v1943, 16
      %v2166 = vrot.slane %v2164, 5
      %v2167 = vsel %vm1985, %v2162, %v2166
      %v2168 = vshrl.u32 %v1943, 16
      %v2170 = vrot.slane %v2168, 4
      %v2171 = vor.u32 %v2170, %v2166
      %v2172 = vrot.slane %v2171, 4
      %v2174 = vshll.u32 %v1972, 16
      %v2176 = vrot.slane %v2174, 5
      %v2177 = vsel %vm1985, %v2172, %v2176
      %v2179 = vshrl.u32 %v1944, 16
      %v2181 = vrot.slane %v2179, 4
      %v2182 = vshll.u32 %v1944, 16
      %v2184 = vrot.slane %v2182, 5
      %v2185 = vor.u32 %v2181, %v2184
      %v2186 = vrot.slane %v2185, 4
      %v2188 = vshll.u32 %v1945, 16
      %v2190 = vrot.slane %v2188, 5
      %v2191 = vsel %vm1985, %v2186, %v2190
      %v2192 = vshrl.u32 %v1945, 16
      %v2194 = vrot.slane %v2192, 4
      %v2195 = vor.u32 %v2194, %v2190
      %v2196 = vrot.slane %v2195, 4
      %v2198 = vshll.u32 %v1973, 16
      %v2200 = vrot.slane %v2198, 5
      %v2201 = vsel %vm1985, %v2196, %v2200
      %v2203 = vshrl.u32 %v1946, 16
      %v2205 = vrot.slane %v2203, 4
      %v2206 = vshll.u32 %v1946, 16
      %v2208 = vrot.slane %v2206, 5
      %v2209 = vor.u32 %v2205, %v2208
      %v2210 = vrot.slane %v2209, 4
      %v2212 = vshll.u32 %v1947, 16
      %v2214 = vrot.slane %v2212, 5
      %v2215 = vsel %vm1985, %v2210, %v2214
      %v2216 = vshrl.u32 %v1947, 16
      %v2218 = vrot.slane %v2216, 4
      %v2219 = vor.u32 %v2218, %v2214
      %v2220 = vrot.slane %v2219, 4
      %v2222 = vshll.u32 %v1974, 16
      %v2224 = vrot.slane %v2222, 5
      %v2225 = vsel %vm1985, %v2220, %v2224
      %v2227 = vshrl.u32 %v1948, 16
      %v2229 = vrot.slane %v2227, 4
      %v2230 = vshll.u32 %v1948, 16
      %v2232 = vrot.slane %v2230, 5
      %v2233 = vor.u32 %v2229, %v2232
      %v2234 = vrot.slane %v2233, 4
      %v2236 = vshll.u32 %v1949, 16
      %v2238 = vrot.slane %v2236, 5
      %v2239 = vsel %vm1985, %v2234, %v2238
      %v2240 = vshrl.u32 %v1949, 16
      %v2242 = vrot.slane %v2240, 4
      %v2243 = vor.u32 %v2242, %v2238
      %v2244 = vrot.slane %v2243, 4
      %v2246 = vshll.u32 %v1975, 16
      %v2248 = vrot.slane %v2246, 5
      %v2249 = vsel %vm1985, %v2244, %v2248
      %v2251 = vshrl.u32 %v1950, 16
      %v2253 = vrot.slane %v2251, 4
      %v2254 = vshll.u32 %v1950, 16
      %v2256 = vrot.slane %v2254, 5
      %v2257 = vor.u32 %v2253, %v2256
      %v2258 = vrot.slane %v2257, 4
      %v2260 = vshll.u32 %v1951, 16
      %v2262 = vrot.slane %v2260, 5
      %v2263 = vsel %vm1985, %v2258, %v2262
      %v2264 = vshrl.u32 %v1951, 16
      %v2266 = vrot.slane %v2264, 4
      %v2267 = vor.u32 %v2266, %v2262
      %v2268 = vrot.slane %v2267, 4
      %v2270 = vshll.u32 %v1976, 16
      %v2272 = vrot.slane %v2270, 5
      %v2273 = vsel %vm1985, %v2268, %v2272
      %v2275 = vshrl.u32 %v1952, 16
      %v2277 = vrot.slane %v2275, 4
      %v2278 = vshll.u32 %v1952, 16
      %v2280 = vrot.slane %v2278, 5
      %v2281 = vor.u32 %v2277, %v2280
      %v2282 = vrot.slane %v2281, 4
      %v2284 = vshll.u32 %v1953, 16
      %v2286 = vrot.slane %v2284, 5
      %v2287 = vsel %vm1985, %v2282, %v2286
      %v2288 = vshrl.u32 %v1953, 16
      %v2290 = vrot.slane %v2288, 4
      %v2291 = vor.u32 %v2290, %v2286
      %v2292 = vrot.slane %v2291, 4
      %v2294 = vshll.u32 %v1977, 16
      %v2296 = vrot.slane %v2294, 5
      %v2297 = vsel %vm1985, %v2292, %v2296
      %v2299 = vshrl.u32 %v1954, 16
      %v2301 = vrot.slane %v2299, 4
      %v2302 = vshll.u32 %v1954, 16
      %v2304 = vrot.slane %v2302, 5
      %v2305 = vor.u32 %v2301, %v2304
      %v2306 = vrot.slane %v2305, 4
      %v2308 = vshll.u32 %v1955, 16
      %v2310 = vrot.slane %v2308, 5
      %v2311 = vsel %vm1985, %v2306, %v2310
      %v2312 = vshrl.u32 %v1955, 16
      %v2314 = vrot.slane %v2312, 4
      %v2315 = vor.u32 %v2314, %v2310
      %v2316 = vrot.slane %v2315, 4
      %v2318 = vshll.u32 %v1978, 16
      %v2320 = vrot.slane %v2318, 5
      %v2321 = vsel %vm1985, %v2316, %v2320
      %v2323 = vshrl.u32 %v1956, 16
      %v2325 = vrot.slane %v2323, 4
      %v2326 = vshll.u32 %v1956, 16
      %v2328 = vrot.slane %v2326, 5
      %v2329 = vor.u32 %v2325, %v2328
      %v2330 = vrot.slane %v2329, 4
      %v2332 = vshll.u32 %v1957, 16
      %v2334 = vrot.slane %v2332, 5
      %v2335 = vsel %vm1985, %v2330, %v2334
      %v2336 = vshrl.u32 %v1957, 16
      %v2338 = vrot.slane %v2336, 4
      %v2339 = vor.u32 %v2338, %v2334
      %v2340 = vrot.slane %v2339, 4
      %v2342 = vshll.u32 %v1979, 16
      %v2344 = vrot.slane %v2342, 5
      %v2345 = vsel %vm1985, %v2340, %v2344
      %v2347 = vshrl.u32 %v1958, 16
      %v2349 = vrot.slane %v2347, 4
      %v2350 = vshll.u32 %v1958, 16
      %v2352 = vrot.slane %v2350, 5
      %v2353 = vor.u32 %v2349, %v2352
      %v2354 = vrot.slane %v2353, 4
      %v2356 = vshll.u32 %v1959, 16
      %v2358 = vrot.slane %v2356, 5
      %v2359 = vsel %vm1985, %v2354, %v2358
      %v2360 = vshrl.u32 %v1959, 16
      %v2362 = vrot.slane %v2360, 4
      %v2363 = vor.u32 %v2362, %v2358
      %v2364 = vrot.slane %v2363, 4
      %v2366 = vshll.u32 %v1980, 16
      %v2368 = vrot.slane %v2366, 5
      %v2369 = vsel %vm1985, %v2364, %v2368
      %v2371 = vshrl.u32 %v1960, 16
      %v2373 = vrot.slane %v2371, 4
      %v2374 = vshll.u32 %v1960, 16
      %v2376 = vrot.slane %v2374, 5
      %v2377 = vor.u32 %v2373, %v2376
      %v2378 = vrot.slane %v2377, 4
      %v2380 = vshll.u32 %v1961, 16
      %v2382 = vrot.slane %v2380, 5
      %v2383 = vsel %vm1985, %v2378, %v2382
      %v2384 = vshrl.u32 %v1961, 16
      %v2386 = vrot.slane %v2384, 4
      %v2387 = vor.u32 %v2386, %v2382
      %v2388 = vrot.slane %v2387, 4
      %v2390 = vshll.u32 %v1981, 16
      %v2392 = vrot.slane %v2390, 5
      %v2393 = vsel %vm1985, %v2388, %v2392
      %v2395 = vshrl.u32 %v1962, 16
      %v2397 = vrot.slane %v2395, 4
      %v2398 = vshll.u32 %v1962, 16
      %v2400 = vrot.slane %v2398, 5
      %v2401 = vor.u32 %v2397, %v2400
      %v2402 = vrot.slane %v2401, 4
      %v2404 = vshll.u32 %v1963, 16
      %v2406 = vrot.slane %v2404, 5
      %v2407 = vsel %vm1985, %v2402, %v2406
      %v2408 = vshrl.u32 %v1963, 16
      %v2410 = vrot.slane %v2408, 4
      %v2411 = vor.u32 %v2410, %v2406
      %v2412 = vrot.slane %v2411, 4
      %v2414 = vshll.u32 %v1982, 16
      %v2416 = vrot.slane %v2414, 5
      %v2417 = vsel %vm1985, %v2412, %v2416
      %s2418 = scalar_lea.vmem %s2, 4
      %v2419 = vld [vmem:[%s2418] sm:$0xf]
      %v2420 = vunpack.c.l.b16 %v1999
      %v2421 = vunpack.c.l.b16 %v2009
      %v2422 = vunpack.c.l.b16 %v2023
      %v2423 = vunpack.c.l.b16 %v2033
      %v2424 = vunpack.c.l.b16 %v2047
      %v2425 = vunpack.c.l.b16 %v2057
      %v2426 = vunpack.c.l.b16 %v2071
      %v2427 = vunpack.c.l.b16 %v2081
      %v2428 = vunpack.c.l.b16 %v2095
      %v2429 = vunpack.c.l.b16 %v2105
      %v2430 = vunpack.c.l.b16 %v2119
      %v2431 = vunpack.c.l.b16 %v2129
      %v2432 = vunpack.c.l.b16 %v2143
      %v2433 = vunpack.c.l.b16 %v2153
      %v2434 = vunpack.c.l.b16 %v2167
      %v2435 = vunpack.c.l.b16 %v2177
      %v2436 = vunpack.c.l.b16 %v2191
      %v2437 = vunpack.c.l.b16 %v2201
      %v2438 = vunpack.c.l.b16 %v2215
      %v2439 = vunpack.c.l.b16 %v2225
      %v2440 = vunpack.c.l.b16 %v2239
      %v2441 = vunpack.c.l.b16 %v2249
      %v2442 = vunpack.c.l.b16 %v2263
      %v2443 = vunpack.c.l.b16 %v2273
      %v2444 = vunpack.c.l.b16 %v2287
      %v2445 = vunpack.c.l.b16 %v2297
      %v2446 = vunpack.c.l.b16 %v2311
      %v2447 = vunpack.c.l.b16 %v2321
      %v2448 = vunpack.c.l.b16 %v2335
      %v2449 = vunpack.c.l.b16 %v2345
      %v2450 = vunpack.c.l.b16 %v2359
      %v2451 = vunpack.c.l.b16 %v2369
      %v2452 = vunpack.c.l.b16 %v2383
      %v2453 = vunpack.c.l.b16 %v2393
      %v2454 = vunpack.c.l.b16 %v2407
      %v2455 = vunpack.c.l.b16 %v2417
      %v2456 = vpack.c.b16 %v2421, %v2420
      %v2457 = vpack.c.b16 %v2423, %v2422
      %v2458 = vpack.c.b16 %v2425, %v2424
      %v2459 = vpack.c.b16 %v2427, %v2426
      %v2460 = vpack.c.b16 %v2429, %v2428
      %v2461 = vpack.c.b16 %v2431, %v2430
      %v2462 = vpack.c.b16 %v2433, %v2432
      %v2463 = vpack.c.b16 %v2435, %v2434
      %v2464 = vpack.c.b16 %v2437, %v2436
      %v2465 = vpack.c.b16 %v2439, %v2438
      %v2466 = vpack.c.b16 %v2441, %v2440
      %v2467 = vpack.c.b16 %v2443, %v2442
      %v2468 = vpack.c.b16 %v2445, %v2444
      %v2469 = vpack.c.b16 %v2447, %v2446
      %v2470 = vpack.c.b16 %v2449, %v2448
      %v2471 = vpack.c.b16 %v2451, %v2450
      %v2472 = vpack.c.b16 %v2453, %v2452
      %v2473 = vpack.c.b16 %v2455, %v2454
      %vm2474 = vcmask 64512
      %v2476 = vsel %vm2474, %v2456, 0
      %v2479 = vsel %vm2474, %v2457, 0
      %v2482 = vsel %vm2474, %v2458, 0
      %v2485 = vsel %vm2474, %v2459, 0
      %v2488 = vsel %vm2474, %v2460, 0
      %v2491 = vsel %vm2474, %v2461, 0
      %v2494 = vsel %vm2474, %v2462, 0
      %v2497 = vsel %vm2474, %v2463, 0
      %v2500 = vsel %vm2474, %v2464, 0
      %v2503 = vsel %vm2474, %v2465, 0
      %v2506 = vsel %vm2474, %v2466, 0
      %v2509 = vsel %vm2474, %v2467, 0
      %v2512 = vsel %vm2474, %v2468, 0
      %v2515 = vsel %vm2474, %v2469, 0
      %v2518 = vsel %vm2474, %v2470, 0
      %v2521 = vsel %vm2474, %v2471, 0
      %v2524 = vsel %vm2474, %v2472, 0
      %v2527 = vsel %vm2474, %v2473, 0
      %vm2529 = vcmask 1043456
      %v2531 = vsel %vm2529, %v2419, 0
      %2533 = vmatprep.subr.bf16.mxu0 0
      %2534 = vmatpush1.bf16.msra.mxu0 0
      %2535 = vmatprep.subr.bf16.mxu0 0
      %2536 = vmatpush1.bf16.msra.mxu0 0
      %2537 = vmatprep.subr.bf16.mxu0 0
      %2538 = vmatpush1.bf16.msra.mxu0 0
      %2539 = vmatprep.subr.bf16.mxu0 0
      %2540 = vmatpush1.bf16.msra.mxu0 0
      %2541 = vmatprep.subr.bf16.mxu0 0
      %2542 = vmatpush1.bf16.msra.mxu0 0
      %2543 = vmatprep.subr.bf16.mxu0 0
      %2544 = vmatpush1.bf16.msra.mxu0 0
      %2545 = vmatprep.subr.bf16.mxu0 0
      %2546 = vmatpush1.bf16.msra.mxu0 0
      %2547 = vmatprep.subr.bf16.mxu0 0
      %2548 = vmatpush1.bf16.msra.mxu0 %v2531
      %2549 = vmatprep.subr.bf16.mxu0 0
      %2550 = vmatpush2.bf16.msra.mxu0 0
      %2551 = vmatprep.subr.bf16.mxu0 0
      %2552 = vmatpush2.bf16.msra.mxu0 0
      %2553 = vmatprep.subr.bf16.mxu0 0
      %2554 = vmatpush2.bf16.msra.mxu0 0
      %2555 = vmatprep.subr.bf16.mxu0 0
      %2556 = vmatpush2.bf16.msra.mxu0 0
      %2557 = vmatprep.subr.bf16.mxu0 0
      %2558 = vmatpush2.bf16.msra.mxu0 0
      %2559 = vmatprep.subr.bf16.mxu0 0
      %2560 = vmatpush2.bf16.msra.mxu0 0
      %2561 = vmatprep.subr.bf16.mxu0 0
      %2562 = vmatpush2.bf16.msra.mxu0 0
      %2563 = vmatprep.subr.bf16.mxu0 0
      %2564 = vmatpush2.bf16.msra.mxu0 0
      %2565 = vmatprep.mubr.bf16.mxu0 0
      %2566 = vmatmul.mubr.bf16.gmra.mxu0 %v2476
      %v2567 = vpop.f32.mrf.mxu0
      %v2568 = vadd.f32 0.0, %v2567
      %v2569 = vpop.f32.mrf.mxu0
      %v2570 = vpop.f32.mrf.mxu0
      %v2571 = vadd.f32 0.0, %v2570
      %v2572 = vpop.f32.mrf.mxu0
      %2573 = vmatprep.mubr.bf16.mxu0 0
      %2574 = vmatmul.mubr.bf16.gmra.mxu0 %v2479
      %v2575 = vpop.f32.mrf.mxu0
      %v2576 = vadd.f32 0.0, %v2575
      %v2577 = vpop.f32.mrf.mxu0
      %v2578 = vpop.f32.mrf.mxu0
      %v2579 = vadd.f32 0.0, %v2578
      %v2580 = vpop.f32.mrf.mxu0
      %2581 = vmatprep.mubr.bf16.mxu0 0
      %2582 = vmatmul.mubr.bf16.gmra.mxu0 %v2482
      %v2583 = vpop.f32.mrf.mxu0
      %v2584 = vadd.f32 0.0, %v2583
      %v2585 = vpop.f32.mrf.mxu0
      %v2586 = vpop.f32.mrf.mxu0
      %v2587 = vadd.f32 0.0, %v2586
      %v2588 = vpop.f32.mrf.mxu0
      %2589 = vmatprep.mubr.bf16.mxu0 0
      %2590 = vmatmul.mubr.bf16.gmra.mxu0 %v2485
      %v2591 = vpop.f32.mrf.mxu0
      %v2592 = vadd.f32 0.0, %v2591
      %v2593 = vpop.f32.mrf.mxu0
      %v2594 = vpop.f32.mrf.mxu0
      %v2595 = vadd.f32 0.0, %v2594
      %v2596 = vpop.f32.mrf.mxu0
      %2597 = vmatprep.mubr.bf16.mxu0 0
      %2598 = vmatmul.mubr.bf16.gmra.mxu0 %v2488
      %v2599 = vpop.f32.mrf.mxu0
      %v2600 = vadd.f32 0.0, %v2599
      %v2601 = vpop.f32.mrf.mxu0
      %v2602 = vpop.f32.mrf.mxu0
      %v2603 = vadd.f32 0.0, %v2602
      %v2604 = vpop.f32.mrf.mxu0
      %2605 = vmatprep.mubr.bf16.mxu0 0
      %2606 = vmatmul.mubr.bf16.gmra.mxu0 %v2491
      %v2607 = vpop.f32.mrf.mxu0
      %v2608 = vadd.f32 0.0, %v2607
      %v2609 = vpop.f32.mrf.mxu0
      %v2610 = vpop.f32.mrf.mxu0
      %v2611 = vadd.f32 0.0, %v2610
      %v2612 = vpop.f32.mrf.mxu0
      %2613 = vmatprep.mubr.bf16.mxu0 0
      %2614 = vmatmul.mubr.bf16.gmra.mxu0 %v2494
      %v2615 = vpop.f32.mrf.mxu0
      %v2616 = vadd.f32 0.0, %v2615
      %v2617 = vpop.f32.mrf.mxu0
      %v2618 = vpop.f32.mrf.mxu0
      %v2619 = vadd.f32 0.0, %v2618
      %v2620 = vpop.f32.mrf.mxu0
      %2621 = vmatprep.mubr.bf16.mxu0 0
      %2622 = vmatmul.mubr.bf16.gmra.mxu0 %v2497
      %v2623 = vpop.f32.mrf.mxu0
      %v2624 = vadd.f32 0.0, %v2623
      %v2625 = vpop.f32.mrf.mxu0
      %v2626 = vpop.f32.mrf.mxu0
      %v2627 = vadd.f32 0.0, %v2626
      %v2628 = vpop.f32.mrf.mxu0
      %2629 = vmatprep.mubr.bf16.mxu0 0
      %2630 = vmatmul.mubr.bf16.gmra.mxu0 %v2500
      %v2631 = vpop.f32.mrf.mxu0
      %v2632 = vadd.f32 0.0, %v2631
      %v2633 = vpop.f32.mrf.mxu0
      %v2634 = vpop.f32.mrf.mxu0
      %v2635 = vadd.f32 0.0, %v2634
      %v2636 = vpop.f32.mrf.mxu0
      %2637 = vmatprep.mubr.bf16.mxu0 0
      %2638 = vmatmul.mubr.bf16.gmra.mxu0 %v2503
      %v2639 = vpop.f32.mrf.mxu0
      %v2640 = vadd.f32 0.0, %v2639
      %v2641 = vpop.f32.mrf.mxu0
      %v2642 = vpop.f32.mrf.mxu0
      %v2643 = vadd.f32 0.0, %v2642
      %v2644 = vpop.f32.mrf.mxu0
      %2645 = vmatprep.mubr.bf16.mxu0 0
      %2646 = vmatmul.mubr.bf16.gmra.mxu0 %v2506
      %v2647 = vpop.f32.mrf.mxu0
      %v2648 = vadd.f32 0.0, %v2647
      %v2649 = vpop.f32.mrf.mxu0
      %v2650 = vpop.f32.mrf.mxu0
      %v2651 = vadd.f32 0.0, %v2650
      %v2652 = vpop.f32.mrf.mxu0
      %2653 = vmatprep.mubr.bf16.mxu0 0
      %2654 = vmatmul.mubr.bf16.gmra.mxu0 %v2509
      %v2655 = vpop.f32.mrf.mxu0
      %v2656 = vadd.f32 0.0, %v2655
      %v2657 = vpop.f32.mrf.mxu0
      %v2658 = vpop.f32.mrf.mxu0
      %v2659 = vadd.f32 0.0, %v2658
      %v2660 = vpop.f32.mrf.mxu0
      %2661 = vmatprep.mubr.bf16.mxu0 0
      %2662 = vmatmul.mubr.bf16.gmra.mxu0 %v2512
      %v2663 = vpop.f32.mrf.mxu0
      %v2664 = vadd.f32 0.0, %v2663
      %v2665 = vpop.f32.mrf.mxu0
      %v2666 = vpop.f32.mrf.mxu0
      %v2667 = vadd.f32 0.0, %v2666
      %v2668 = vpop.f32.mrf.mxu0
      %2669 = vmatprep.mubr.bf16.mxu0 0
      %2670 = vmatmul.mubr.bf16.gmra.mxu0 %v2515
      %v2671 = vpop.f32.mrf.mxu0
      %v2672 = vadd.f32 0.0, %v2671
      %v2673 = vpop.f32.mrf.mxu0
      %v2674 = vpop.f32.mrf.mxu0
      %v2675 = vadd.f32 0.0, %v2674
      %v2676 = vpop.f32.mrf.mxu0
      %2677 = vmatprep.mubr.bf16.mxu0 0
      %2678 = vmatmul.mubr.bf16.gmra.mxu0 %v2518
      %v2679 = vpop.f32.mrf.mxu0
      %v2680 = vadd.f32 0.0, %v2679
      %v2681 = vpop.f32.mrf.mxu0
      %v2682 = vpop.f32.mrf.mxu0
      %v2683 = vadd.f32 0.0, %v2682
      %v2684 = vpop.f32.mrf.mxu0
      %2685 = vmatprep.mubr.bf16.mxu0 0
      %2686 = vmatmul.mubr.bf16.gmra.mxu0 %v2521
      %v2687 = vpop.f32.mrf.mxu0
      %v2688 = vadd.f32 0.0, %v2687
      %v2689 = vpop.f32.mrf.mxu0
      %v2690 = vpop.f32.mrf.mxu0
      %v2691 = vadd.f32 0.0, %v2690
      %v2692 = vpop.f32.mrf.mxu0
      %2693 = vmatprep.mubr.bf16.mxu0 0
      %2694 = vmatmul.mubr.bf16.gmra.mxu0 %v2524
      %v2695 = vpop.f32.mrf.mxu0
      %v2696 = vadd.f32 0.0, %v2695
      %v2697 = vpop.f32.mrf.mxu0
      %v2698 = vpop.f32.mrf.mxu0
      %v2699 = vadd.f32 0.0, %v2698
      %v2700 = vpop.f32.mrf.mxu0
      %2701 = vmatprep.mubr.bf16.mxu0 0
      %2702 = vmatmul.mubr.bf16.gmra.mxu0 %v2527
      %v2703 = vpop.f32.mrf.mxu0
      %v2704 = vadd.f32 0.0, %v2703
      %v2705 = vpop.f32.mrf.mxu0
      %v2706 = vpop.f32.mrf.mxu0
      %v2707 = vadd.f32 0.0, %v2706
      %v2708 = vpop.f32.mrf.mxu0
      %2709 = vdwg.mxu0
      %v2746 = vunpack.c.l.b16 %v1928
      %v2747 = vunpack.c.l.b16 %v1929
      %v2748 = vunpack.c.l.b16 %v1930
      %v2749 = vunpack.c.l.b16 %v1931
      %v2750 = vunpack.c.l.b16 %v1932
      %v2751 = vunpack.c.l.b16 %v1933
      %v2752 = vunpack.c.l.b16 %v1934
      %v2753 = vunpack.c.l.b16 %v1935
      %v2754 = vunpack.c.l.b16 %v1936
      %v2755 = vunpack.c.l.b16 %v1937
      %v2756 = vunpack.c.l.b16 %v1938
      %v2757 = vunpack.c.l.b16 %v1939
      %v2758 = vunpack.c.l.b16 %v1940
      %v2759 = vunpack.c.l.b16 %v1941
      %v2760 = vunpack.c.l.b16 %v1942
      %v2761 = vunpack.c.l.b16 %v1943
      %v2762 = vunpack.c.l.b16 %v1944
      %v2763 = vunpack.c.l.b16 %v1945
      %v2764 = vunpack.c.l.b16 %v1946
      %v2765 = vunpack.c.l.b16 %v1947
      %v2766 = vunpack.c.l.b16 %v1948
      %v2767 = vunpack.c.l.b16 %v1949
      %v2768 = vunpack.c.l.b16 %v1950
      %v2769 = vunpack.c.l.b16 %v1951
      %v2770 = vunpack.c.l.b16 %v1952
      %v2771 = vunpack.c.l.b16 %v1953
      %v2772 = vunpack.c.l.b16 %v1954
      %v2773 = vunpack.c.l.b16 %v1955
      %v2774 = vunpack.c.l.b16 %v1956
      %v2775 = vunpack.c.l.b16 %v1957
      %v2776 = vunpack.c.l.b16 %v1958
      %v2777 = vunpack.c.l.b16 %v1959
      %v2778 = vunpack.c.l.b16 %v1960
      %v2779 = vunpack.c.l.b16 %v1961
      %v2780 = vunpack.c.l.b16 %v1962
      %v2781 = vunpack.c.l.b16 %v1963
      %v2782 = vpack.c.b16 %v2747, %v2746
      %v2783 = vpack.c.b16 %v2749, %v2748
      %v2784 = vpack.c.b16 %v2751, %v2750
      %v2785 = vpack.c.b16 %v2753, %v2752
      %v2786 = vpack.c.b16 %v2755, %v2754
      %v2787 = vpack.c.b16 %v2757, %v2756
      %v2788 = vpack.c.b16 %v2759, %v2758
      %v2789 = vpack.c.b16 %v2761, %v2760
      %v2790 = vpack.c.b16 %v2763, %v2762
      %v2791 = vpack.c.b16 %v2765, %v2764
      %v2792 = vpack.c.b16 %v2767, %v2766
      %v2793 = vpack.c.b16 %v2769, %v2768
      %v2794 = vpack.c.b16 %v2771, %v2770
      %v2795 = vpack.c.b16 %v2773, %v2772
      %v2796 = vpack.c.b16 %v2775, %v2774
      %v2797 = vpack.c.b16 %v2777, %v2776
      %v2798 = vpack.c.b16 %v2779, %v2778
      %v2799 = vpack.c.b16 %v2781, %v2780
      %v2801 = vsel %vm2474, %v2782, 0
      %v2804 = vsel %vm2474, %v2783, 0
      %v2807 = vsel %vm2474, %v2784, 0
      %v2810 = vsel %vm2474, %v2785, 0
      %v2813 = vsel %vm2474, %v2786, 0
      %v2816 = vsel %vm2474, %v2787, 0
      %v2819 = vsel %vm2474, %v2788, 0
      %v2822 = vsel %vm2474, %v2789, 0
      %v2825 = vsel %vm2474, %v2790, 0
      %v2828 = vsel %vm2474, %v2791, 0
      %v2831 = vsel %vm2474, %v2792, 0
      %v2834 = vsel %vm2474, %v2793, 0
      %v2837 = vsel %vm2474, %v2794, 0
      %v2840 = vsel %vm2474, %v2795, 0
      %v2843 = vsel %vm2474, %v2796, 0
      %v2846 = vsel %vm2474, %v2797, 0
      %v2849 = vsel %vm2474, %v2798, 0
      %v2852 = vsel %vm2474, %v2799, 0
      %v2855 = vsel %vm2529, %v1964, 0
      %2857 = vmatprep.subr.bf16.mxu0 0
      %2858 = vmatpush1.bf16.msra.mxu0 0
      %2859 = vmatprep.subr.bf16.mxu0 0
      %2860 = vmatpush1.bf16.msra.mxu0 0
      %2861 = vmatprep.subr.bf16.mxu0 0
      %2862 = vmatpush1.bf16.msra.mxu0 0
      %2863 = vmatprep.subr.bf16.mxu0 0
      %2864 = vmatpush1.bf16.msra.mxu0 0
      %2865 = vmatprep.subr.bf16.mxu0 0
      %2866 = vmatpush1.bf16.msra.mxu0 0
      %2867 = vmatprep.subr.bf16.mxu0 0
      %2868 = vmatpush1.bf16.msra.mxu0 0
      %2869 = vmatprep.subr.bf16.mxu0 0
      %2870 = vmatpush1.bf16.msra.mxu0 0
      %2871 = vmatprep.subr.bf16.mxu0 0
      %2872 = vmatpush1.bf16.msra.mxu0 %v2855
      %2873 = vmatprep.subr.bf16.mxu0 0
      %2874 = vmatpush2.bf16.msra.mxu0 0
      %2875 = vmatprep.subr.bf16.mxu0 0
      %2876 = vmatpush2.bf16.msra.mxu0 0
      %2877 = vmatprep.subr.bf16.mxu0 0
      %2878 = vmatpush2.bf16.msra.mxu0 0
      %2879 = vmatprep.subr.bf16.mxu0 0
      %2880 = vmatpush2.bf16.msra.mxu0 0
      %2881 = vmatprep.subr.bf16.mxu0 0
      %2882 = vmatpush2.bf16.msra.mxu0 0
      %2883 = vmatprep.subr.bf16.mxu0 0
      %2884 = vmatpush2.bf16.msra.mxu0 0
      %2885 = vmatprep.subr.bf16.mxu0 0
      %2886 = vmatpush2.bf16.msra.mxu0 0
      %2887 = vmatprep.subr.bf16.mxu0 0
      %2888 = vmatpush2.bf16.msra.mxu0 0
      %2889 = vmatprep.mubr.bf16.mxu0 0
      %2890 = vmatmul.mubr.bf16.gmra.mxu0 %v2801
      %v2891 = vpop.f32.mrf.mxu0
      %v2892 = vadd.f32 %v2568, %v2891
      %v2893 = vpop.f32.mrf.mxu0
      %v2894 = vpop.f32.mrf.mxu0
      %v2895 = vadd.f32 %v2571, %v2894
      %v2896 = vpop.f32.mrf.mxu0
      %2897 = vmatprep.mubr.bf16.mxu0 0
      %2898 = vmatmul.mubr.bf16.gmra.mxu0 %v2804
      %v2899 = vpop.f32.mrf.mxu0
      %v2900 = vadd.f32 %v2576, %v2899
      %v2901 = vpop.f32.mrf.mxu0
      %v2902 = vpop.f32.mrf.mxu0
      %v2903 = vadd.f32 %v2579, %v2902
      %v2904 = vpop.f32.mrf.mxu0
      %2905 = vmatprep.mubr.bf16.mxu0 0
      %2906 = vmatmul.mubr.bf16.gmra.mxu0 %v2807
      %v2907 = vpop.f32.mrf.mxu0
      %v2908 = vadd.f32 %v2584, %v2907
      %v2909 = vpop.f32.mrf.mxu0
      %v2910 = vpop.f32.mrf.mxu0
      %v2911 = vadd.f32 %v2587, %v2910
      %v2912 = vpop.f32.mrf.mxu0
      %2913 = vmatprep.mubr.bf16.mxu0 0
      %2914 = vmatmul.mubr.bf16.gmra.mxu0 %v2810
      %v2915 = vpop.f32.mrf.mxu0
      %v2916 = vadd.f32 %v2592, %v2915
      %v2917 = vpop.f32.mrf.mxu0
      %v2918 = vpop.f32.mrf.mxu0
      %v2919 = vadd.f32 %v2595, %v2918
      %v2920 = vpop.f32.mrf.mxu0
      %2921 = vmatprep.mubr.bf16.mxu0 0
      %2922 = vmatmul.mubr.bf16.gmra.mxu0 %v2813
      %v2923 = vpop.f32.mrf.mxu0
      %v2924 = vadd.f32 %v2600, %v2923
      %v2925 = vpop.f32.mrf.mxu0
      %v2926 = vpop.f32.mrf.mxu0
      %v2927 = vadd.f32 %v2603, %v2926
      %v2928 = vpop.f32.mrf.mxu0
      %2929 = vmatprep.mubr.bf16.mxu0 0
      %2930 = vmatmul.mubr.bf16.gmra.mxu0 %v2816
      %v2931 = vpop.f32.mrf.mxu0
      %v2932 = vadd.f32 %v2608, %v2931
      %v2933 = vpop.f32.mrf.mxu0
      %v2934 = vpop.f32.mrf.mxu0
      %v2935 = vadd.f32 %v2611, %v2934
      %v2936 = vpop.f32.mrf.mxu0
      %2937 = vmatprep.mubr.bf16.mxu0 0
      %2938 = vmatmul.mubr.bf16.gmra.mxu0 %v2819
      %v2939 = vpop.f32.mrf.mxu0
      %v2940 = vadd.f32 %v2616, %v2939
      %v2941 = vpop.f32.mrf.mxu0
      %v2942 = vpop.f32.mrf.mxu0
      %v2943 = vadd.f32 %v2619, %v2942
      %v2944 = vpop.f32.mrf.mxu0
      %2945 = vmatprep.mubr.bf16.mxu0 0
      %2946 = vmatmul.mubr.bf16.gmra.mxu0 %v2822
      %v2947 = vpop.f32.mrf.mxu0
      %v2948 = vadd.f32 %v2624, %v2947
      %v2949 = vpop.f32.mrf.mxu0
      %v2950 = vpop.f32.mrf.mxu0
      %v2951 = vadd.f32 %v2627, %v2950
      %v2952 = vpop.f32.mrf.mxu0
      %2953 = vmatprep.mubr.bf16.mxu0 0
      %2954 = vmatmul.mubr.bf16.gmra.mxu0 %v2825
      %v2955 = vpop.f32.mrf.mxu0
      %v2956 = vadd.f32 %v2632, %v2955
      %v2957 = vpop.f32.mrf.mxu0
      %v2958 = vpop.f32.mrf.mxu0
      %v2959 = vadd.f32 %v2635, %v2958
      %v2960 = vpop.f32.mrf.mxu0
      %2961 = vmatprep.mubr.bf16.mxu0 0
      %2962 = vmatmul.mubr.bf16.gmra.mxu0 %v2828
      %v2963 = vpop.f32.mrf.mxu0
      %v2964 = vadd.f32 %v2640, %v2963
      %v2965 = vpop.f32.mrf.mxu0
      %v2966 = vpop.f32.mrf.mxu0
      %v2967 = vadd.f32 %v2643, %v2966
      %v2968 = vpop.f32.mrf.mxu0
      %2969 = vmatprep.mubr.bf16.mxu0 0
      %2970 = vmatmul.mubr.bf16.gmra.mxu0 %v2831
      %v2971 = vpop.f32.mrf.mxu0
      %v2972 = vadd.f32 %v2648, %v2971
      %v2973 = vpop.f32.mrf.mxu0
      %v2974 = vpop.f32.mrf.mxu0
      %v2975 = vadd.f32 %v2651, %v2974
      %v2976 = vpop.f32.mrf.mxu0
      %2977 = vmatprep.mubr.bf16.mxu0 0
      %2978 = vmatmul.mubr.bf16.gmra.mxu0 %v2834
      %v2979 = vpop.f32.mrf.mxu0
      %v2980 = vadd.f32 %v2656, %v2979
      %v2981 = vpop.f32.mrf.mxu0
      %v2982 = vpop.f32.mrf.mxu0
      %v2983 = vadd.f32 %v2659, %v2982
      %v2984 = vpop.f32.mrf.mxu0
      %2985 = vmatprep.mubr.bf16.mxu0 0
      %2986 = vmatmul.mubr.bf16.gmra.mxu0 %v2837
      %v2987 = vpop.f32.mrf.mxu0
      %v2988 = vadd.f32 %v2664, %v2987
      %v2989 = vpop.f32.mrf.mxu0
      %v2990 = vpop.f32.mrf.mxu0
      %v2991 = vadd.f32 %v2667, %v2990
      %v2992 = vpop.f32.mrf.mxu0
      %2993 = vmatprep.mubr.bf16.mxu0 0
      %2994 = vmatmul.mubr.bf16.gmra.mxu0 %v2840
      %v2995 = vpop.f32.mrf.mxu0
      %v2996 = vadd.f32 %v2672, %v2995
      %v2997 = vpop.f32.mrf.mxu0
      %v2998 = vpop.f32.mrf.mxu0
      %v2999 = vadd.f32 %v2675, %v2998
      %v3000 = vpop.f32.mrf.mxu0
      %3001 = vmatprep.mubr.bf16.mxu0 0
      %3002 = vmatmul.mubr.bf16.gmra.mxu0 %v2843
      %v3003 = vpop.f32.mrf.mxu0
      %v3004 = vadd.f32 %v2680, %v3003
      %v3005 = vpop.f32.mrf.mxu0
      %v3006 = vpop.f32.mrf.mxu0
      %v3007 = vadd.f32 %v2683, %v3006
      %v3008 = vpop.f32.mrf.mxu0
      %3009 = vmatprep.mubr.bf16.mxu0 0
      %3010 = vmatmul.mubr.bf16.gmra.mxu0 %v2846
      %v3011 = vpop.f32.mrf.mxu0
      %v3012 = vadd.f32 %v2688, %v3011
      %v3013 = vpop.f32.mrf.mxu0
      %v3014 = vpop.f32.mrf.mxu0
      %v3015 = vadd.f32 %v2691, %v3014
      %v3016 = vpop.f32.mrf.mxu0
      %3017 = vmatprep.mubr.bf16.mxu0 0
      %3018 = vmatmul.mubr.bf16.gmra.mxu0 %v2849
      %v3019 = vpop.f32.mrf.mxu0
      %v3020 = vadd.f32 %v2696, %v3019
      %v3021 = vpop.f32.mrf.mxu0
      %v3022 = vpop.f32.mrf.mxu0
      %v3023 = vadd.f32 %v2699, %v3022
      %v3024 = vpop.f32.mrf.mxu0
      %3025 = vmatprep.mubr.bf16.mxu0 0
      %3026 = vmatmul.mubr.bf16.gmra.mxu0 %v2852
      %v3027 = vpop.f32.mrf.mxu0
      %v3028 = vadd.f32 %v2704, %v3027
      %v3029 = vpop.f32.mrf.mxu0
      %v3030 = vpop.f32.mrf.mxu0
      %v3031 = vadd.f32 %v2707, %v3030
      %v3032 = vpop.f32.mrf.mxu0
      %3033 = vdwg.mxu0
      %v3034 = vld [vmem:[#allocation2] sm:$0xe]
      %v3035 = vld [vmem:[#allocation2 + $0xc] sm:$0xe]
      %v3036 = vld [vmem:[#allocation2 + $0x18] sm:$0xe]
      %v3037 = vld [vmem:[#allocation2 + $0x24] sm:$0xe]
      %v3038 = vld [vmem:[#allocation2 + $0x30] sm:$0xe]
      %v3039 = vld [vmem:[#allocation2 + $0x3c] sm:$0xe]
      %v3040 = vld [vmem:[#allocation2 + $0x48] sm:$0xe]
      %v3041 = vld [vmem:[#allocation2 + $0x54] sm:$0xe]
      %v3042 = vld [vmem:[#allocation2 + $0x60] sm:$0xe]
      %v3043 = vld [vmem:[#allocation2 + $0x6c] sm:$0xe]
      %v3044 = vld [vmem:[#allocation2 + $0x78] sm:$0xe]
      %v3045 = vld [vmem:[#allocation2 + $0x84] sm:$0xe]
      %v3046 = vld [vmem:[#allocation2 + $0x90] sm:$0xe]
      %v3047 = vld [vmem:[#allocation2 + $0x9c] sm:$0xe]
      %v3048 = vld [vmem:[#allocation2 + $0xa8] sm:$0xe]
      %v3049 = vld [vmem:[#allocation2 + $0xb4] sm:$0xe]
      %v3050 = vld [vmem:[#allocation2 + $0xc0] sm:$0xe]
      %v3051 = vld [vmem:[#allocation2 + $0xcc] sm:$0xe]
      %vm3088 = vcmask 1042432
      %vm3089 = vcmask 1046532
      %vm3090 = vmor %vm3088, %vm3089
      %v3091 = vrot.slane %v3034, 5
      %v3092 = vrot.slane %v3091, 4
      %v3093 = vrot.slane %v1929, 5
      %v3094 = vsel %vm3090, %v3092, %v3093
      %v3095 = vrot.slane %v3093, 4
      %v3096 = vrot.slane %v1965, 5
      %v3097 = vsel %vm3090, %v3095, %v3096
      %v3098 = vrot.slane %v3035, 5
      %v3099 = vrot.slane %v3098, 4
      %v3100 = vrot.slane %v1931, 5
      %v3101 = vsel %vm3090, %v3099, %v3100
      %v3102 = vrot.slane %v3100, 4
      %v3103 = vrot.slane %v1966, 5
      %v3104 = vsel %vm3090, %v3102, %v3103
      %v3105 = vrot.slane %v3036, 5
      %v3106 = vrot.slane %v3105, 4
      %v3107 = vrot.slane %v1933, 5
      %v3108 = vsel %vm3090, %v3106, %v3107
      %v3109 = vrot.slane %v3107, 4
      %v3110 = vrot.slane %v1967, 5
      %v3111 = vsel %vm3090, %v3109, %v3110
      %v3112 = vrot.slane %v3037, 5
      %v3113 = vrot.slane %v3112, 4
      %v3114 = vrot.slane %v1935, 5
      %v3115 = vsel %vm3090, %v3113, %v3114
      %v3116 = vrot.slane %v3114, 4
      %v3117 = vrot.slane %v1968, 5
      %v3118 = vsel %vm3090, %v3116, %v3117
      %v3119 = vrot.slane %v3038, 5
      %v3120 = vrot.slane %v3119, 4
      %v3121 = vrot.slane %v1937, 5
      %v3122 = vsel %vm3090, %v3120, %v3121
      %v3123 = vrot.slane %v3121, 4
      %v3124 = vrot.slane %v1969, 5
      %v3125 = vsel %vm3090, %v3123, %v3124
      %v3126 = vrot.slane %v3039, 5
      %v3127 = vrot.slane %v3126, 4
      %v3128 = vrot.slane %v1939, 5
      %v3129 = vsel %vm3090, %v3127, %v3128
      %v3130 = vrot.slane %v3128, 4
      %v3131 = vrot.slane %v1970, 5
      %v3132 = vsel %vm3090, %v3130, %v3131
      %v3133 = vrot.slane %v3040, 5
      %v3134 = vrot.slane %v3133, 4
      %v3135 = vrot.slane %v1941, 5
      %v3136 = vsel %vm3090, %v3134, %v3135
      %v3137 = vrot.slane %v3135, 4
      %v3138 = vrot.slane %v1971, 5
      %v3139 = vsel %vm3090, %v3137, %v3138
      %v3140 = vrot.slane %v3041, 5
      %v3141 = vrot.slane %v3140, 4
      %v3142 = vrot.slane %v1943, 5
      %v3143 = vsel %vm3090, %v3141, %v3142
      %v3144 = vrot.slane %v3142, 4
      %v3145 = vrot.slane %v1972, 5
      %v3146 = vsel %vm3090, %v3144, %v3145
      %v3147 = vrot.slane %v3042, 5
      %v3148 = vrot.slane %v3147, 4
      %v3149 = vrot.slane %v1945, 5
      %v3150 = vsel %vm3090, %v3148, %v3149
      %v3151 = vrot.slane %v3149, 4
      %v3152 = vrot.slane %v1973, 5
      %v3153 = vsel %vm3090, %v3151, %v3152
      %v3154 = vrot.slane %v3043, 5
      %v3155 = vrot.slane %v3154, 4
      %v3156 = vrot.slane %v1947, 5
      %v3157 = vsel %vm3090, %v3155, %v3156
      %v3158 = vrot.slane %v3156, 4
      %v3159 = vrot.slane %v1974, 5
      %v3160 = vsel %vm3090, %v3158, %v3159
      %v3161 = vrot.slane %v3044, 5
      %v3162 = vrot.slane %v3161, 4
      %v3163 = vrot.slane %v1949, 5
      %v3164 = vsel %vm3090, %v3162, %v3163
      %v3165 = vrot.slane %v3163, 4
      %v3166 = vrot.slane %v1975, 5
      %v3167 = vsel %vm3090, %v3165, %v3166
      %v3168 = vrot.slane %v3045, 5
      %v3169 = vrot.slane %v3168, 4
      %v3170 = vrot.slane %v1951, 5
      %v3171 = vsel %vm3090, %v3169, %v3170
      %v3172 = vrot.slane %v3170, 4
      %v3173 = vrot.slane %v1976, 5
      %v3174 = vsel %vm3090, %v3172, %v3173
      %v3175 = vrot.slane %v3046, 5
      %v3176 = vrot.slane %v3175, 4
      %v3177 = vrot.slane %v1953, 5
      %v3178 = vsel %vm3090, %v3176, %v3177
      %v3179 = vrot.slane %v3177, 4
      %v3180 = vrot.slane %v1977, 5
      %v3181 = vsel %vm3090, %v3179, %v3180
      %v3182 = vrot.slane %v3047, 5
      %v3183 = vrot.slane %v3182, 4
      %v3184 = vrot.slane %v1955, 5
      %v3185 = vsel %vm3090, %v3183, %v3184
      %v3186 = vrot.slane %v3184, 4
      %v3187 = vrot.slane %v1978, 5
      %v3188 = vsel %vm3090, %v3186, %v3187
      %v3189 = vrot.slane %v3048, 5
      %v3190 = vrot.slane %v3189, 4
      %v3191 = vrot.slane %v1957, 5
      %v3192 = vsel %vm3090, %v3190, %v3191
      %v3193 = vrot.slane %v3191, 4
      %v3194 = vrot.slane %v1979, 5
      %v3195 = vsel %vm3090, %v3193, %v3194
      %v3196 = vrot.slane %v3049, 5
      %v3197 = vrot.slane %v3196, 4
      %v3198 = vrot.slane %v1959, 5
      %v3199 = vsel %vm3090, %v3197, %v3198
      %v3200 = vrot.slane %v3198, 4
      %v3201 = vrot.slane %v1980, 5
      %v3202 = vsel %vm3090, %v3200, %v3201
      %v3203 = vrot.slane %v3050, 5
      %v3204 = vrot.slane %v3203, 4
      %v3205 = vrot.slane %v1961, 5
      %v3206 = vsel %vm3090, %v3204, %v3205
      %v3207 = vrot.slane %v3205, 4
      %v3208 = vrot.slane %v1981, 5
      %v3209 = vsel %vm3090, %v3207, %v3208
      %v3210 = vrot.slane %v3051, 5
      %v3211 = vrot.slane %v3210, 4
      %v3212 = vrot.slane %v1963, 5
      %v3213 = vsel %vm3090, %v3211, %v3212
      %v3214 = vrot.slane %v3212, 4
      %v3215 = vrot.slane %v1982, 5
      %v3216 = vsel %vm3090, %v3214, %v3215
      %s3217 = scalar_lea.vmem %s2, 8
      %v3218 = vld [vmem:[%s3217] sm:$0xf]
      %v3219 = vunpack.c.l.b16 %v3094
      %v3220 = vunpack.c.l.b16 %v3097
      %v3221 = vunpack.c.l.b16 %v3101
      %v3222 = vunpack.c.l.b16 %v3104
      %v3223 = vunpack.c.l.b16 %v3108
      %v3224 = vunpack.c.l.b16 %v3111
      %v3225 = vunpack.c.l.b16 %v3115
      %v3226 = vunpack.c.l.b16 %v3118
      %v3227 = vunpack.c.l.b16 %v3122
      %v3228 = vunpack.c.l.b16 %v3125
      %v3229 = vunpack.c.l.b16 %v3129
      %v3230 = vunpack.c.l.b16 %v3132
      %v3231 = vunpack.c.l.b16 %v3136
      %v3232 = vunpack.c.l.b16 %v3139
      %v3233 = vunpack.c.l.b16 %v3143
      %v3234 = vunpack.c.l.b16 %v3146
      %v3235 = vunpack.c.l.b16 %v3150
      %v3236 = vunpack.c.l.b16 %v3153
      %v3237 = vunpack.c.l.b16 %v3157
      %v3238 = vunpack.c.l.b16 %v3160
      %v3239 = vunpack.c.l.b16 %v3164
      %v3240 = vunpack.c.l.b16 %v3167
      %v3241 = vunpack.c.l.b16 %v3171
      %v3242 = vunpack.c.l.b16 %v3174
      %v3243 = vunpack.c.l.b16 %v3178
      %v3244 = vunpack.c.l.b16 %v3181
      %v3245 = vunpack.c.l.b16 %v3185
      %v3246 = vunpack.c.l.b16 %v3188
      %v3247 = vunpack.c.l.b16 %v3192
      %v3248 = vunpack.c.l.b16 %v3195
      %v3249 = vunpack.c.l.b16 %v3199
      %v3250 = vunpack.c.l.b16 %v3202
      %v3251 = vunpack.c.l.b16 %v3206
      %v3252 = vunpack.c.l.b16 %v3209
      %v3253 = vunpack.c.l.b16 %v3213
      %v3254 = vunpack.c.l.b16 %v3216
      %v3255 = vpack.c.b16 %v3220, %v3219
      %v3256 = vpack.c.b16 %v3222, %v3221
      %v3257 = vpack.c.b16 %v3224, %v3223
      %v3258 = vpack.c.b16 %v3226, %v3225
      %v3259 = vpack.c.b16 %v3228, %v3227
      %v3260 = vpack.c.b16 %v3230, %v3229
      %v3261 = vpack.c.b16 %v3232, %v3231
      %v3262 = vpack.c.b16 %v3234, %v3233
      %v3263 = vpack.c.b16 %v3236, %v3235
      %v3264 = vpack.c.b16 %v3238, %v3237
      %v3265 = vpack.c.b16 %v3240, %v3239
      %v3266 = vpack.c.b16 %v3242, %v3241
      %v3267 = vpack.c.b16 %v3244, %v3243
      %v3268 = vpack.c.b16 %v3246, %v3245
      %v3269 = vpack.c.b16 %v3248, %v3247
      %v3270 = vpack.c.b16 %v3250, %v3249
      %v3271 = vpack.c.b16 %v3252, %v3251
      %v3272 = vpack.c.b16 %v3254, %v3253
      %v3274 = vsel %vm2474, %v3255, 0
      %v3277 = vsel %vm2474, %v3256, 0
      %v3280 = vsel %vm2474, %v3257, 0
      %v3283 = vsel %vm2474, %v3258, 0
      %v3286 = vsel %vm2474, %v3259, 0
      %v3289 = vsel %vm2474, %v3260, 0
      %v3292 = vsel %vm2474, %v3261, 0
      %v3295 = vsel %vm2474, %v3262, 0
      %v3298 = vsel %vm2474, %v3263, 0
      %v3301 = vsel %vm2474, %v3264, 0
      %v3304 = vsel %vm2474, %v3265, 0
      %v3307 = vsel %vm2474, %v3266, 0
      %v3310 = vsel %vm2474, %v3267, 0
      %v3313 = vsel %vm2474, %v3268, 0
      %v3316 = vsel %vm2474, %v3269, 0
      %v3319 = vsel %vm2474, %v3270, 0
      %v3322 = vsel %vm2474, %v3271, 0
      %v3325 = vsel %vm2474, %v3272, 0
      %v3328 = vsel %vm2529, %v3218, 0
      %3330 = vmatprep.subr.bf16.mxu0 0
      %3331 = vmatpush1.bf16.msra.mxu0 0
      %3332 = vmatprep.subr.bf16.mxu0 0
      %3333 = vmatpush1.bf16.msra.mxu0 0
      %3334 = vmatprep.subr.bf16.mxu0 0
      %3335 = vmatpush1.bf16.msra.mxu0 0
      %3336 = vmatprep.subr.bf16.mxu0 0
      %3337 = vmatpush1.bf16.msra.mxu0 0
      %3338 = vmatprep.subr.bf16.mxu0 0
      %3339 = vmatpush1.bf16.msra.mxu0 0
      %3340 = vmatprep.subr.bf16.mxu0 0
      %3341 = vmatpush1.bf16.msra.mxu0 0
      %3342 = vmatprep.subr.bf16.mxu0 0
      %3343 = vmatpush1.bf16.msra.mxu0 0
      %3344 = vmatprep.subr.bf16.mxu0 0
      %3345 = vmatpush1.bf16.msra.mxu0 %v3328
      %3346 = vmatprep.subr.bf16.mxu0 0
      %3347 = vmatpush2.bf16.msra.mxu0 0
      %3348 = vmatprep.subr.bf16.mxu0 0
      %3349 = vmatpush2.bf16.msra.mxu0 0
      %3350 = vmatprep.subr.bf16.mxu0 0
      %3351 = vmatpush2.bf16.msra.mxu0 0
      %3352 = vmatprep.subr.bf16.mxu0 0
      %3353 = vmatpush2.bf16.msra.mxu0 0
      %3354 = vmatprep.subr.bf16.mxu0 0
      %3355 = vmatpush2.bf16.msra.mxu0 0
      %3356 = vmatprep.subr.bf16.mxu0 0
      %3357 = vmatpush2.bf16.msra.mxu0 0
      %3358 = vmatprep.subr.bf16.mxu0 0
      %3359 = vmatpush2.bf16.msra.mxu0 0
      %3360 = vmatprep.subr.bf16.mxu0 0
      %3361 = vmatpush2.bf16.msra.mxu0 0
      %3362 = vmatprep.mubr.bf16.mxu0 0
      %3363 = vmatmul.mubr.bf16.gmra.mxu0 %v3274
      %v3364 = vpop.f32.mrf.mxu0
      %v3365 = vadd.f32 0.0, %v3364
      %v3366 = vpop.f32.mrf.mxu0
      %v3367 = vpop.f32.mrf.mxu0
      %v3368 = vadd.f32 0.0, %v3367
      %v3369 = vpop.f32.mrf.mxu0
      %3370 = vmatprep.mubr.bf16.mxu0 0
      %3371 = vmatmul.mubr.bf16.gmra.mxu0 %v3277
      %v3372 = vpop.f32.mrf.mxu0
      %v3373 = vadd.f32 0.0, %v3372
      %v3374 = vpop.f32.mrf.mxu0
      %v3375 = vpop.f32.mrf.mxu0
      %v3376 = vadd.f32 0.0, %v3375
      %v3377 = vpop.f32.mrf.mxu0
      %3378 = vmatprep.mubr.bf16.mxu0 0
      %3379 = vmatmul.mubr.bf16.gmra.mxu0 %v3280
      %v3380 = vpop.f32.mrf.mxu0
      %v3381 = vadd.f32 0.0, %v3380
      %v3382 = vpop.f32.mrf.mxu0
      %v3383 = vpop.f32.mrf.mxu0
      %v3384 = vadd.f32 0.0, %v3383
      %v3385 = vpop.f32.mrf.mxu0
      %3386 = vmatprep.mubr.bf16.mxu0 0
      %3387 = vmatmul.mubr.bf16.gmra.mxu0 %v3283
      %v3388 = vpop.f32.mrf.mxu0
      %v3389 = vadd.f32 0.0, %v3388
      %v3390 = vpop.f32.mrf.mxu0
      %v3391 = vpop.f32.mrf.mxu0
      %v3392 = vadd.f32 0.0, %v3391
      %v3393 = vpop.f32.mrf.mxu0
      %3394 = vmatprep.mubr.bf16.mxu0 0
      %3395 = vmatmul.mubr.bf16.gmra.mxu0 %v3286
      %v3396 = vpop.f32.mrf.mxu0
      %v3397 = vadd.f32 0.0, %v3396
      %v3398 = vpop.f32.mrf.mxu0
      %v3399 = vpop.f32.mrf.mxu0
      %v3400 = vadd.f32 0.0, %v3399
      %v3401 = vpop.f32.mrf.mxu0
      %3402 = vmatprep.mubr.bf16.mxu0 0
      %3403 = vmatmul.mubr.bf16.gmra.mxu0 %v3289
      %v3404 = vpop.f32.mrf.mxu0
      %v3405 = vadd.f32 0.0, %v3404
      %v3406 = vpop.f32.mrf.mxu0
      %v3407 = vpop.f32.mrf.mxu0
      %v3408 = vadd.f32 0.0, %v3407
      %v3409 = vpop.f32.mrf.mxu0
      %3410 = vmatprep.mubr.bf16.mxu0 0
      %3411 = vmatmul.mubr.bf16.gmra.mxu0 %v3292
      %v3412 = vpop.f32.mrf.mxu0
      %v3413 = vadd.f32 0.0, %v3412
      %v3414 = vpop.f32.mrf.mxu0
      %v3415 = vpop.f32.mrf.mxu0
      %v3416 = vadd.f32 0.0, %v3415
      %v3417 = vpop.f32.mrf.mxu0
      %3418 = vmatprep.mubr.bf16.mxu0 0
      %3419 = vmatmul.mubr.bf16.gmra.mxu0 %v3295
      %v3420 = vpop.f32.mrf.mxu0
      %v3421 = vadd.f32 0.0, %v3420
      %v3422 = vpop.f32.mrf.mxu0
      %v3423 = vpop.f32.mrf.mxu0
      %v3424 = vadd.f32 0.0, %v3423
      %v3425 = vpop.f32.mrf.mxu0
      %3426 = vmatprep.mubr.bf16.mxu0 0
      %3427 = vmatmul.mubr.bf16.gmra.mxu0 %v3298
      %v3428 = vpop.f32.mrf.mxu0
      %v3429 = vadd.f32 0.0, %v3428
      %v3430 = vpop.f32.mrf.mxu0
      %v3431 = vpop.f32.mrf.mxu0
      %v3432 = vadd.f32 0.0, %v3431
      %v3433 = vpop.f32.mrf.mxu0
      %3434 = vmatprep.mubr.bf16.mxu0 0
      %3435 = vmatmul.mubr.bf16.gmra.mxu0 %v3301
      %v3436 = vpop.f32.mrf.mxu0
      %v3437 = vadd.f32 0.0, %v3436
      %v3438 = vpop.f32.mrf.mxu0
      %v3439 = vpop.f32.mrf.mxu0
      %v3440 = vadd.f32 0.0, %v3439
      %v3441 = vpop.f32.mrf.mxu0
      %3442 = vmatprep.mubr.bf16.mxu0 0
      %3443 = vmatmul.mubr.bf16.gmra.mxu0 %v3304
      %v3444 = vpop.f32.mrf.mxu0
      %v3445 = vadd.f32 0.0, %v3444
      %v3446 = vpop.f32.mrf.mxu0
      %v3447 = vpop.f32.mrf.mxu0
      %v3448 = vadd.f32 0.0, %v3447
      %v3449 = vpop.f32.mrf.mxu0
      %3450 = vmatprep.mubr.bf16.mxu0 0
      %3451 = vmatmul.mubr.bf16.gmra.mxu0 %v3307
      %v3452 = vpop.f32.mrf.mxu0
      %v3453 = vadd.f32 0.0, %v3452
      %v3454 = vpop.f32.mrf.mxu0
      %v3455 = vpop.f32.mrf.mxu0
      %v3456 = vadd.f32 0.0, %v3455
      %v3457 = vpop.f32.mrf.mxu0
      %3458 = vmatprep.mubr.bf16.mxu0 0
      %3459 = vmatmul.mubr.bf16.gmra.mxu0 %v3310
      %v3460 = vpop.f32.mrf.mxu0
      %v3461 = vadd.f32 0.0, %v3460
      %v3462 = vpop.f32.mrf.mxu0
      %v3463 = vpop.f32.mrf.mxu0
      %v3464 = vadd.f32 0.0, %v3463
      %v3465 = vpop.f32.mrf.mxu0
      %3466 = vmatprep.mubr.bf16.mxu0 0
      %3467 = vmatmul.mubr.bf16.gmra.mxu0 %v3313
      %v3468 = vpop.f32.mrf.mxu0
      %v3469 = vadd.f32 0.0, %v3468
      %v3470 = vpop.f32.mrf.mxu0
      %v3471 = vpop.f32.mrf.mxu0
      %v3472 = vadd.f32 0.0, %v3471
      %v3473 = vpop.f32.mrf.mxu0
      %3474 = vmatprep.mubr.bf16.mxu0 0
      %3475 = vmatmul.mubr.bf16.gmra.mxu0 %v3316
      %v3476 = vpop.f32.mrf.mxu0
      %v3477 = vadd.f32 0.0, %v3476
      %v3478 = vpop.f32.mrf.mxu0
      %v3479 = vpop.f32.mrf.mxu0
      %v3480 = vadd.f32 0.0, %v3479
      %v3481 = vpop.f32.mrf.mxu0
      %3482 = vmatprep.mubr.bf16.mxu0 0
      %3483 = vmatmul.mubr.bf16.gmra.mxu0 %v3319
      %v3484 = vpop.f32.mrf.mxu0
      %v3485 = vadd.f32 0.0, %v3484
      %v3486 = vpop.f32.mrf.mxu0
      %v3487 = vpop.f32.mrf.mxu0
      %v3488 = vadd.f32 0.0, %v3487
      %v3489 = vpop.f32.mrf.mxu0
      %3490 = vmatprep.mubr.bf16.mxu0 0
      %3491 = vmatmul.mubr.bf16.gmra.mxu0 %v3322
      %v3492 = vpop.f32.mrf.mxu0
      %v3493 = vadd.f32 0.0, %v3492
      %v3494 = vpop.f32.mrf.mxu0
      %v3495 = vpop.f32.mrf.mxu0
      %v3496 = vadd.f32 0.0, %v3495
      %v3497 = vpop.f32.mrf.mxu0
      %3498 = vmatprep.mubr.bf16.mxu0 0
      %3499 = vmatmul.mubr.bf16.gmra.mxu0 %v3325
      %v3500 = vpop.f32.mrf.mxu0
      %v3501 = vadd.f32 0.0, %v3500
      %v3502 = vpop.f32.mrf.mxu0
      %v3503 = vpop.f32.mrf.mxu0
      %v3504 = vadd.f32 0.0, %v3503
      %v3505 = vpop.f32.mrf.mxu0
      %3506 = vdwg.mxu0
      %v3507 = vadd.f32 %v2892, %v3365
      %v3508 = vadd.f32 %v2895, %v3368
      %v3509 = vadd.f32 %v2900, %v3373
      %v3510 = vadd.f32 %v2903, %v3376
      %v3511 = vadd.f32 %v2908, %v3381
      %v3512 = vadd.f32 %v2911, %v3384
      %v3513 = vadd.f32 %v2916, %v3389
      %v3514 = vadd.f32 %v2919, %v3392
      %v3515 = vadd.f32 %v2924, %v3397
      %v3516 = vadd.f32 %v2927, %v3400
      %v3517 = vadd.f32 %v2932, %v3405
      %v3518 = vadd.f32 %v2935, %v3408
      %v3519 = vadd.f32 %v2940, %v3413
      %v3520 = vadd.f32 %v2943, %v3416
      %v3521 = vadd.f32 %v2948, %v3421
      %v3522 = vadd.f32 %v2951, %v3424
      %v3523 = vadd.f32 %v2956, %v3429
      %v3524 = vadd.f32 %v2959, %v3432
      %v3525 = vadd.f32 %v2964, %v3437
      %v3526 = vadd.f32 %v2967, %v3440
      %v3527 = vadd.f32 %v2972, %v3445
      %v3528 = vadd.f32 %v2975, %v3448
      %v3529 = vadd.f32 %v2980, %v3453
      %v3530 = vadd.f32 %v2983, %v3456
      %v3531 = vadd.f32 %v2988, %v3461
      %v3532 = vadd.f32 %v2991, %v3464
      %v3533 = vadd.f32 %v2996, %v3469
      %v3534 = vadd.f32 %v2999, %v3472
      %v3535 = vadd.f32 %v3004, %v3477
      %v3536 = vadd.f32 %v3007, %v3480
      %v3537 = vadd.f32 %v3012, %v3485
      %v3538 = vadd.f32 %v3015, %v3488
      %v3539 = vadd.f32 %v3020, %v3493
      %v3540 = vadd.f32 %v3023, %v3496
      %v3541 = vadd.f32 %v3028, %v3501
      %v3542 = vadd.f32 %v3031, %v3504
      %s3543 = scalar_lea.vmem [#allocation2], 12
      %v3544 = vld [vmem:[%s3543] sm:$0xf]
      %v3545 = vld [vmem:[%s3543 + $0x4] sm:$0xf]
      %v3546 = vld [vmem:[%s3543 + $0xc] sm:$0xf]
      %v3547 = vld [vmem:[%s3543 + $0x10] sm:$0xf]
      %v3548 = vld [vmem:[%s3543 + $0x18] sm:$0xf]
      %v3549 = vld [vmem:[%s3543 + $0x1c] sm:$0xf]
      %v3550 = vld [vmem:[%s3543 + $0x24] sm:$0xf]
      %v3551 = vld [vmem:[%s3543 + $0x28] sm:$0xf]
      %v3552 = vld [vmem:[%s3543 + $0x30] sm:$0xf]
      %v3553 = vld [vmem:[%s3543 + $0x34] sm:$0xf]
      %v3554 = vld [vmem:[%s3543 + $0x3c] sm:$0xf]
      %v3555 = vld [vmem:[%s3543 + $0x40] sm:$0xf]
      %v3556 = vld [vmem:[%s3543 + $0x48] sm:$0xf]
      %v3557 = vld [vmem:[%s3543 + $0x4c] sm:$0xf]
      %v3558 = vld [vmem:[%s3543 + $0x54] sm:$0xf]
      %v3559 = vld [vmem:[%s3543 + $0x58] sm:$0xf]
      %v3560 = vld [vmem:[%s3543 + $0x60] sm:$0xf]
      %v3561 = vld [vmem:[%s3543 + $0x64] sm:$0xf]
      %v3562 = vld [vmem:[%s3543 + $0x6c] sm:$0xf]
      %v3563 = vld [vmem:[%s3543 + $0x70] sm:$0xf]
      %v3564 = vld [vmem:[%s3543 + $0x78] sm:$0xf]
      %v3565 = vld [vmem:[%s3543 + $0x7c] sm:$0xf]
      %v3566 = vld [vmem:[%s3543 + $0x84] sm:$0xf]
      %v3567 = vld [vmem:[%s3543 + $0x88] sm:$0xf]
      %v3568 = vld [vmem:[%s3543 + $0x90] sm:$0xf]
      %v3569 = vld [vmem:[%s3543 + $0x94] sm:$0xf]
      %v3570 = vld [vmem:[%s3543 + $0x9c] sm:$0xf]
      %v3571 = vld [vmem:[%s3543 + $0xa0] sm:$0xf]
      %v3572 = vld [vmem:[%s3543 + $0xa8] sm:$0xf]
      %v3573 = vld [vmem:[%s3543 + $0xac] sm:$0xf]
      %v3574 = vld [vmem:[%s3543 + $0xb4] sm:$0xf]
      %v3575 = vld [vmem:[%s3543 + $0xb8] sm:$0xf]
      %v3576 = vld [vmem:[%s3543 + $0xc0] sm:$0xf]
      %v3577 = vld [vmem:[%s3543 + $0xc4] sm:$0xf]
      %v3578 = vld [vmem:[%s3543 + $0xcc] sm:$0xf]
      %v3579 = vld [vmem:[%s3543 + $0xd0] sm:$0xf]
      %s3580 = scalar_lea.vmem %s2, 12
      %v3581 = vld [vmem:[%s3580] sm:$0xf]
      %v3618 = vunpack.c.l.b16 %v3544
      %v3619 = vunpack.c.l.b16 %v3545
      %v3620 = vunpack.c.l.b16 %v3546
      %v3621 = vunpack.c.l.b16 %v3547
      %v3622 = vunpack.c.l.b16 %v3548
      %v3623 = vunpack.c.l.b16 %v3549
      %v3624 = vunpack.c.l.b16 %v3550
      %v3625 = vunpack.c.l.b16 %v3551
      %v3626 = vunpack.c.l.b16 %v3552
      %v3627 = vunpack.c.l.b16 %v3553
      %v3628 = vunpack.c.l.b16 %v3554
      %v3629 = vunpack.c.l.b16 %v3555
      %v3630 = vunpack.c.l.b16 %v3556
      %v3631 = vunpack.c.l.b16 %v3557
      %v3632 = vunpack.c.l.b16 %v3558
      %v3633 = vunpack.c.l.b16 %v3559
      %v3634 = vunpack.c.l.b16 %v3560
      %v3635 = vunpack.c.l.b16 %v3561
      %v3636 = vunpack.c.l.b16 %v3562
      %v3637 = vunpack.c.l.b16 %v3563
      %v3638 = vunpack.c.l.b16 %v3564
      %v3639 = vunpack.c.l.b16 %v3565
      %v3640 = vunpack.c.l.b16 %v3566
      %v3641 = vunpack.c.l.b16 %v3567
      %v3642 = vunpack.c.l.b16 %v3568
      %v3643 = vunpack.c.l.b16 %v3569
      %v3644 = vunpack.c.l.b16 %v3570
      %v3645 = vunpack.c.l.b16 %v3571
      %v3646 = vunpack.c.l.b16 %v3572
      %v3647 = vunpack.c.l.b16 %v3573
      %v3648 = vunpack.c.l.b16 %v3574
      %v3649 = vunpack.c.l.b16 %v3575
      %v3650 = vunpack.c.l.b16 %v3576
      %v3651 = vunpack.c.l.b16 %v3577
      %v3652 = vunpack.c.l.b16 %v3578
      %v3653 = vunpack.c.l.b16 %v3579
      %v3654 = vpack.c.b16 %v3619, %v3618
      %v3655 = vpack.c.b16 %v3621, %v3620
      %v3656 = vpack.c.b16 %v3623, %v3622
      %v3657 = vpack.c.b16 %v3625, %v3624
      %v3658 = vpack.c.b16 %v3627, %v3626
      %v3659 = vpack.c.b16 %v3629, %v3628
      %v3660 = vpack.c.b16 %v3631, %v3630
      %v3661 = vpack.c.b16 %v3633, %v3632
      %v3662 = vpack.c.b16 %v3635, %v3634
      %v3663 = vpack.c.b16 %v3637, %v3636
      %v3664 = vpack.c.b16 %v3639, %v3638
      %v3665 = vpack.c.b16 %v3641, %v3640
      %v3666 = vpack.c.b16 %v3643, %v3642
      %v3667 = vpack.c.b16 %v3645, %v3644
      %v3668 = vpack.c.b16 %v3647, %v3646
      %v3669 = vpack.c.b16 %v3649, %v3648
      %v3670 = vpack.c.b16 %v3651, %v3650
      %v3671 = vpack.c.b16 %v3653, %v3652
      %v3673 = vsel %vm2474, %v3654, 0
      %v3676 = vsel %vm2474, %v3655, 0
      %v3679 = vsel %vm2474, %v3656, 0
      %v3682 = vsel %vm2474, %v3657, 0
      %v3685 = vsel %vm2474, %v3658, 0
      %v3688 = vsel %vm2474, %v3659, 0
      %v3691 = vsel %vm2474, %v3660, 0
      %v3694 = vsel %vm2474, %v3661, 0
      %v3697 = vsel %vm2474, %v3662, 0
      %v3700 = vsel %vm2474, %v3663, 0
      %v3703 = vsel %vm2474, %v3664, 0
      %v3706 = vsel %vm2474, %v3665, 0
      %v3709 = vsel %vm2474, %v3666, 0
      %v3712 = vsel %vm2474, %v3667, 0
      %v3715 = vsel %vm2474, %v3668, 0
      %v3718 = vsel %vm2474, %v3669, 0
      %v3721 = vsel %vm2474, %v3670, 0
      %v3724 = vsel %vm2474, %v3671, 0
      %v3727 = vsel %vm2529, %v3581, 0
      %3729 = vmatprep.subr.bf16.mxu0 0
      %3730 = vmatpush1.bf16.msra.mxu0 0
      %3731 = vmatprep.subr.bf16.mxu0 0
      %3732 = vmatpush1.bf16.msra.mxu0 0
      %3733 = vmatprep.subr.bf16.mxu0 0
      %3734 = vmatpush1.bf16.msra.mxu0 0
      %3735 = vmatprep.subr.bf16.mxu0 0
      %3736 = vmatpush1.bf16.msra.mxu0 0
      %3737 = vmatprep.subr.bf16.mxu0 0
      %3738 = vmatpush1.bf16.msra.mxu0 0
      %3739 = vmatprep.subr.bf16.mxu0 0
      %3740 = vmatpush1.bf16.msra.mxu0 0
      %3741 = vmatprep.subr.bf16.mxu0 0
      %3742 = vmatpush1.bf16.msra.mxu0 0
      %3743 = vmatprep.subr.bf16.mxu0 0
      %3744 = vmatpush1.bf16.msra.mxu0 %v3727
      %3745 = vmatprep.subr.bf16.mxu0 0
      %3746 = vmatpush2.bf16.msra.mxu0 0
      %3747 = vmatprep.subr.bf16.mxu0 0
      %3748 = vmatpush2.bf16.msra.mxu0 0
      %3749 = vmatprep.subr.bf16.mxu0 0
      %3750 = vmatpush2.bf16.msra.mxu0 0
      %3751 = vmatprep.subr.bf16.mxu0 0
      %3752 = vmatpush2.bf16.msra.mxu0 0
      %3753 = vmatprep.subr.bf16.mxu0 0
      %3754 = vmatpush2.bf16.msra.mxu0 0
      %3755 = vmatprep.subr.bf16.mxu0 0
      %3756 = vmatpush2.bf16.msra.mxu0 0
      %3757 = vmatprep.subr.bf16.mxu0 0
      %3758 = vmatpush2.bf16.msra.mxu0 0
      %3759 = vmatprep.subr.bf16.mxu0 0
      %3760 = vmatpush2.bf16.msra.mxu0 0
      %3761 = vmatprep.mubr.bf16.mxu0 0
      %3762 = vmatmul.mubr.bf16.gmra.mxu0 %v3673
      %v3763 = vpop.f32.mrf.mxu0
      %v3764 = vadd.f32 0.0, %v3763
      %v3765 = vpop.f32.mrf.mxu0
      %v3766 = vpop.f32.mrf.mxu0
      %v3767 = vadd.f32 0.0, %v3766
      %v3768 = vpop.f32.mrf.mxu0
      %3769 = vmatprep.mubr.bf16.mxu0 0
      %3770 = vmatmul.mubr.bf16.gmra.mxu0 %v3676
      %v3771 = vpop.f32.mrf.mxu0
      %v3772 = vadd.f32 0.0, %v3771
      %v3773 = vpop.f32.mrf.mxu0
      %v3774 = vpop.f32.mrf.mxu0
      %v3775 = vadd.f32 0.0, %v3774
      %v3776 = vpop.f32.mrf.mxu0
      %3777 = vmatprep.mubr.bf16.mxu0 0
      %3778 = vmatmul.mubr.bf16.gmra.mxu0 %v3679
      %v3779 = vpop.f32.mrf.mxu0
      %v3780 = vadd.f32 0.0, %v3779
      %v3781 = vpop.f32.mrf.mxu0
      %v3782 = vpop.f32.mrf.mxu0
      %v3783 = vadd.f32 0.0, %v3782
      %v3784 = vpop.f32.mrf.mxu0
      %3785 = vmatprep.mubr.bf16.mxu0 0
      %3786 = vmatmul.mubr.bf16.gmra.mxu0 %v3682
      %v3787 = vpop.f32.mrf.mxu0
      %v3788 = vadd.f32 0.0, %v3787
      %v3789 = vpop.f32.mrf.mxu0
      %v3790 = vpop.f32.mrf.mxu0
      %v3791 = vadd.f32 0.0, %v3790
      %v3792 = vpop.f32.mrf.mxu0
      %3793 = vmatprep.mubr.bf16.mxu0 0
      %3794 = vmatmul.mubr.bf16.gmra.mxu0 %v3685
      %v3795 = vpop.f32.mrf.mxu0
      %v3796 = vadd.f32 0.0, %v3795
      %v3797 = vpop.f32.mrf.mxu0
      %v3798 = vpop.f32.mrf.mxu0
      %v3799 = vadd.f32 0.0, %v3798
      %v3800 = vpop.f32.mrf.mxu0
      %3801 = vmatprep.mubr.bf16.mxu0 0
      %3802 = vmatmul.mubr.bf16.gmra.mxu0 %v3688
      %v3803 = vpop.f32.mrf.mxu0
      %v3804 = vadd.f32 0.0, %v3803
      %v3805 = vpop.f32.mrf.mxu0
      %v3806 = vpop.f32.mrf.mxu0
      %v3807 = vadd.f32 0.0, %v3806
      %v3808 = vpop.f32.mrf.mxu0
      %3809 = vmatprep.mubr.bf16.mxu0 0
      %3810 = vmatmul.mubr.bf16.gmra.mxu0 %v3691
      %v3811 = vpop.f32.mrf.mxu0
      %v3812 = vadd.f32 0.0, %v3811
      %v3813 = vpop.f32.mrf.mxu0
      %v3814 = vpop.f32.mrf.mxu0
      %v3815 = vadd.f32 0.0, %v3814
      %v3816 = vpop.f32.mrf.mxu0
      %3817 = vmatprep.mubr.bf16.mxu0 0
      %3818 = vmatmul.mubr.bf16.gmra.mxu0 %v3694
      %v3819 = vpop.f32.mrf.mxu0
      %v3820 = vadd.f32 0.0, %v3819
      %v3821 = vpop.f32.mrf.mxu0
      %v3822 = vpop.f32.mrf.mxu0
      %v3823 = vadd.f32 0.0, %v3822
      %v3824 = vpop.f32.mrf.mxu0
      %3825 = vmatprep.mubr.bf16.mxu0 0
      %3826 = vmatmul.mubr.bf16.gmra.mxu0 %v3697
      %v3827 = vpop.f32.mrf.mxu0
      %v3828 = vadd.f32 0.0, %v3827
      %v3829 = vpop.f32.mrf.mxu0
      %v3830 = vpop.f32.mrf.mxu0
      %v3831 = vadd.f32 0.0, %v3830
      %v3832 = vpop.f32.mrf.mxu0
      %3833 = vmatprep.mubr.bf16.mxu0 0
      %3834 = vmatmul.mubr.bf16.gmra.mxu0 %v3700
      %v3835 = vpop.f32.mrf.mxu0
      %v3836 = vadd.f32 0.0, %v3835
      %v3837 = vpop.f32.mrf.mxu0
      %v3838 = vpop.f32.mrf.mxu0
      %v3839 = vadd.f32 0.0, %v3838
      %v3840 = vpop.f32.mrf.mxu0
      %3841 = vmatprep.mubr.bf16.mxu0 0
      %3842 = vmatmul.mubr.bf16.gmra.mxu0 %v3703
      %v3843 = vpop.f32.mrf.mxu0
      %v3844 = vadd.f32 0.0, %v3843
      %v3845 = vpop.f32.mrf.mxu0
      %v3846 = vpop.f32.mrf.mxu0
      %v3847 = vadd.f32 0.0, %v3846
      %v3848 = vpop.f32.mrf.mxu0
      %3849 = vmatprep.mubr.bf16.mxu0 0
      %3850 = vmatmul.mubr.bf16.gmra.mxu0 %v3706
      %v3851 = vpop.f32.mrf.mxu0
      %v3852 = vadd.f32 0.0, %v3851
      %v3853 = vpop.f32.mrf.mxu0
      %v3854 = vpop.f32.mrf.mxu0
      %v3855 = vadd.f32 0.0, %v3854
      %v3856 = vpop.f32.mrf.mxu0
      %3857 = vmatprep.mubr.bf16.mxu0 0
      %3858 = vmatmul.mubr.bf16.gmra.mxu0 %v3709
      %v3859 = vpop.f32.mrf.mxu0
      %v3860 = vadd.f32 0.0, %v3859
      %v3861 = vpop.f32.mrf.mxu0
      %v3862 = vpop.f32.mrf.mxu0
      %v3863 = vadd.f32 0.0, %v3862
      %v3864 = vpop.f32.mrf.mxu0
      %3865 = vmatprep.mubr.bf16.mxu0 0
      %3866 = vmatmul.mubr.bf16.gmra.mxu0 %v3712
      %v3867 = vpop.f32.mrf.mxu0
      %v3868 = vadd.f32 0.0, %v3867
      %v3869 = vpop.f32.mrf.mxu0
      %v3870 = vpop.f32.mrf.mxu0
      %v3871 = vadd.f32 0.0, %v3870
      %v3872 = vpop.f32.mrf.mxu0
      %3873 = vmatprep.mubr.bf16.mxu0 0
      %3874 = vmatmul.mubr.bf16.gmra.mxu0 %v3715
      %v3875 = vpop.f32.mrf.mxu0
      %v3876 = vadd.f32 0.0, %v3875
      %v3877 = vpop.f32.mrf.mxu0
      %v3878 = vpop.f32.mrf.mxu0
      %v3879 = vadd.f32 0.0, %v3878
      %v3880 = vpop.f32.mrf.mxu0
      %3881 = vmatprep.mubr.bf16.mxu0 0
      %3882 = vmatmul.mubr.bf16.gmra.mxu0 %v3718
      %v3883 = vpop.f32.mrf.mxu0
      %v3884 = vadd.f32 0.0, %v3883
      %v3885 = vpop.f32.mrf.mxu0
      %v3886 = vpop.f32.mrf.mxu0
      %v3887 = vadd.f32 0.0, %v3886
      %v3888 = vpop.f32.mrf.mxu0
      %3889 = vmatprep.mubr.bf16.mxu0 0
      %3890 = vmatmul.mubr.bf16.gmra.mxu0 %v3721
      %v3891 = vpop.f32.mrf.mxu0
      %v3892 = vadd.f32 0.0, %v3891
      %v3893 = vpop.f32.mrf.mxu0
      %v3894 = vpop.f32.mrf.mxu0
      %v3895 = vadd.f32 0.0, %v3894
      %v3896 = vpop.f32.mrf.mxu0
      %3897 = vmatprep.mubr.bf16.mxu0 0
      %3898 = vmatmul.mubr.bf16.gmra.mxu0 %v3724
      %v3899 = vpop.f32.mrf.mxu0
      %v3900 = vadd.f32 0.0, %v3899
      %v3901 = vpop.f32.mrf.mxu0
      %v3902 = vpop.f32.mrf.mxu0
      %v3903 = vadd.f32 0.0, %v3902
      %v3904 = vpop.f32.mrf.mxu0
      %3905 = vdwg.mxu0
      %v3906 = vadd.f32 %v3507, %v3764
      %v3907 = vadd.f32 %v3508, %v3767
      %v3908 = vadd.f32 %v3509, %v3772
      %v3909 = vadd.f32 %v3510, %v3775
      %v3910 = vadd.f32 %v3511, %v3780
      %v3911 = vadd.f32 %v3512, %v3783
      %v3912 = vadd.f32 %v3513, %v3788
      %v3913 = vadd.f32 %v3514, %v3791
      %v3914 = vadd.f32 %v3515, %v3796
      %v3915 = vadd.f32 %v3516, %v3799
      %v3916 = vadd.f32 %v3517, %v3804
      %v3917 = vadd.f32 %v3518, %v3807
      %v3918 = vadd.f32 %v3519, %v3812
      %v3919 = vadd.f32 %v3520, %v3815
      %v3920 = vadd.f32 %v3521, %v3820
      %v3921 = vadd.f32 %v3522, %v3823
      %v3922 = vadd.f32 %v3523, %v3828
      %v3923 = vadd.f32 %v3524, %v3831
      %v3924 = vadd.f32 %v3525, %v3836
      %v3925 = vadd.f32 %v3526, %v3839
      %v3926 = vadd.f32 %v3527, %v3844
      %v3927 = vadd.f32 %v3528, %v3847
      %v3928 = vadd.f32 %v3529, %v3852
      %v3929 = vadd.f32 %v3530, %v3855
      %v3930 = vadd.f32 %v3531, %v3860
      %v3931 = vadd.f32 %v3532, %v3863
      %v3932 = vadd.f32 %v3533, %v3868
      %v3933 = vadd.f32 %v3534, %v3871
      %v3934 = vadd.f32 %v3535, %v3876
      %v3935 = vadd.f32 %v3536, %v3879
      %v3936 = vadd.f32 %v3537, %v3884
      %v3937 = vadd.f32 %v3538, %v3887
      %v3938 = vadd.f32 %v3539, %v3892
      %v3939 = vadd.f32 %v3540, %v3895
      %v3940 = vadd.f32 %v3541, %v3900
      %v3941 = vadd.f32 %v3542, %v3903
      %v3942 = vld [vmem:[%s3543] sm:$0xf]
      %v3943 = vld [vmem:[%s3543 + $0x4] sm:$0xf]
      %v3944 = vld [vmem:[%s3543 + $0x8] sm:$0x1]
      %v3945 = vld [vmem:[%s3543 + $0xc] sm:$0xf]
      %v3946 = vld [vmem:[%s3543 + $0x10] sm:$0xf]
      %v3947 = vld [vmem:[%s3543 + $0x14] sm:$0x1]
      %v3948 = vld [vmem:[%s3543 + $0x18] sm:$0xf]
      %v3949 = vld [vmem:[%s3543 + $0x1c] sm:$0xf]
      %v3950 = vld [vmem:[%s3543 + $0x20] sm:$0x1]
      %v3951 = vld [vmem:[%s3543 + $0x24] sm:$0xf]
      %v3952 = vld [vmem:[%s3543 + $0x28] sm:$0xf]
      %v3953 = vld [vmem:[%s3543 + $0x2c] sm:$0x1]
      %v3954 = vld [vmem:[%s3543 + $0x30] sm:$0xf]
      %v3955 = vld [vmem:[%s3543 + $0x34] sm:$0xf]
      %v3956 = vld [vmem:[%s3543 + $0x38] sm:$0x1]
      %v3957 = vld [vmem:[%s3543 + $0x3c] sm:$0xf]
      %v3958 = vld [vmem:[%s3543 + $0x40] sm:$0xf]
      %v3959 = vld [vmem:[%s3543 + $0x44] sm:$0x1]
      %v3960 = vld [vmem:[%s3543 + $0x48] sm:$0xf]
      %v3961 = vld [vmem:[%s3543 + $0x4c] sm:$0xf]
      %v3962 = vld [vmem:[%s3543 + $0x50] sm:$0x1]
      %v3963 = vld [vmem:[%s3543 + $0x54] sm:$0xf]
      %v3964 = vld [vmem:[%s3543 + $0x58] sm:$0xf]
      %v3965 = vld [vmem:[%s3543 + $0x5c] sm:$0x1]
      %v3966 = vld [vmem:[%s3543 + $0x60] sm:$0xf]
      %v3967 = vld [vmem:[%s3543 + $0x64] sm:$0xf]
      %v3968 = vld [vmem:[%s3543 + $0x68] sm:$0x1]
      %v3969 = vld [vmem:[%s3543 + $0x6c] sm:$0xf]
      %v3970 = vld [vmem:[%s3543 + $0x70] sm:$0xf]
      %v3971 = vld [vmem:[%s3543 + $0x74] sm:$0x1]
      %v3972 = vld [vmem:[%s3543 + $0x78] sm:$0xf]
      %v3973 = vld [vmem:[%s3543 + $0x7c] sm:$0xf]
      %v3974 = vld [vmem:[%s3543 + $0x80] sm:$0x1]
      %v3975 = vld [vmem:[%s3543 + $0x84] sm:$0xf]
      %v3976 = vld [vmem:[%s3543 + $0x88] sm:$0xf]
      %v3977 = vld [vmem:[%s3543 + $0x8c] sm:$0x1]
      %v3978 = vld [vmem:[%s3543 + $0x90] sm:$0xf]
      %v3979 = vld [vmem:[%s3543 + $0x94] sm:$0xf]
      %v3980 = vld [vmem:[%s3543 + $0x98] sm:$0x1]
      %v3981 = vld [vmem:[%s3543 + $0x9c] sm:$0xf]
      %v3982 = vld [vmem:[%s3543 + $0xa0] sm:$0xf]
      %v3983 = vld [vmem:[%s3543 + $0xa4] sm:$0x1]
      %v3984 = vld [vmem:[%s3543 + $0xa8] sm:$0xf]
      %v3985 = vld [vmem:[%s3543 + $0xac] sm:$0xf]
      %v3986 = vld [vmem:[%s3543 + $0xb0] sm:$0x1]
      %v3987 = vld [vmem:[%s3543 + $0xb4] sm:$0xf]
      %v3988 = vld [vmem:[%s3543 + $0xb8] sm:$0xf]
      %v3989 = vld [vmem:[%s3543 + $0xbc] sm:$0x1]
      %v3990 = vld [vmem:[%s3543 + $0xc0] sm:$0xf]
      %v3991 = vld [vmem:[%s3543 + $0xc4] sm:$0xf]
      %v3992 = vld [vmem:[%s3543 + $0xc8] sm:$0x1]
      %v3993 = vld [vmem:[%s3543 + $0xcc] sm:$0xf]
      %v3994 = vld [vmem:[%s3543 + $0xd0] sm:$0xf]
      %v3995 = vld [vmem:[%s3543 + $0xd4] sm:$0x1]
      %v3997 = vshrl.u32 %v3942, 16
      %v3999 = vrot.slane %v3997, 4
      %v4000 = vshll.u32 %v3942, 16
      %v4002 = vrot.slane %v4000, 5
      %v4003 = vor.u32 %v3999, %v4002
      %v4004 = vrot.slane %v4003, 4
      %v4006 = vshll.u32 %v3943, 16
      %v4008 = vrot.slane %v4006, 5
      %v4009 = vsel %vm1985, %v4004, %v4008
      %v4010 = vshrl.u32 %v3943, 16
      %v4012 = vrot.slane %v4010, 4
      %v4013 = vor.u32 %v4012, %v4008
      %v4014 = vrot.slane %v4013, 4
      %v4016 = vshll.u32 %v3944, 16
      %v4018 = vrot.slane %v4016, 5
      %v4019 = vsel %vm1985, %v4014, %v4018
      %v4021 = vshrl.u32 %v3945, 16
      %v4023 = vrot.slane %v4021, 4
      %v4024 = vshll.u32 %v3945, 16
      %v4026 = vrot.slane %v4024, 5
      %v4027 = vor.u32 %v4023, %v4026
      %v4028 = vrot.slane %v4027, 4
      %v4030 = vshll.u32 %v3946, 16
      %v4032 = vrot.slane %v4030, 5
      %v4033 = vsel %vm1985, %v4028, %v4032
      %v4034 = vshrl.u32 %v3946, 16
      %v4036 = vrot.slane %v4034, 4
      %v4037 = vor.u32 %v4036, %v4032
      %v4038 = vrot.slane %v4037, 4
      %v4040 = vshll.u32 %v3947, 16
      %v4042 = vrot.slane %v4040, 5
      %v4043 = vsel %vm1985, %v4038, %v4042
      %v4045 = vshrl.u32 %v3948, 16
      %v4047 = vrot.slane %v4045, 4
      %v4048 = vshll.u32 %v3948, 16
      %v4050 = vrot.slane %v4048, 5
      %v4051 = vor.u32 %v4047, %v4050
      %v4052 = vrot.slane %v4051, 4
      %v4054 = vshll.u32 %v3949, 16
      %v4056 = vrot.slane %v4054, 5
      %v4057 = vsel %vm1985, %v4052, %v4056
      %v4058 = vshrl.u32 %v3949, 16
      %v4060 = vrot.slane %v4058, 4
      %v4061 = vor.u32 %v4060, %v4056
      %v4062 = vrot.slane %v4061, 4
      %v4064 = vshll.u32 %v3950, 16
      %v4066 = vrot.slane %v4064, 5
      %v4067 = vsel %vm1985, %v4062, %v4066
      %v4069 = vshrl.u32 %v3951, 16
      %v4071 = vrot.slane %v4069, 4
      %v4072 = vshll.u32 %v3951, 16
      %v4074 = vrot.slane %v4072, 5
      %v4075 = vor.u32 %v4071, %v4074
      %v4076 = vrot.slane %v4075, 4
      %v4078 = vshll.u32 %v3952, 16
      %v4080 = vrot.slane %v4078, 5
      %v4081 = vsel %vm1985, %v4076, %v4080
      %v4082 = vshrl.u32 %v3952, 16
      %v4084 = vrot.slane %v4082, 4
      %v4085 = vor.u32 %v4084, %v4080
      %v4086 = vrot.slane %v4085, 4
      %v4088 = vshll.u32 %v3953, 16
      %v4090 = vrot.slane %v4088, 5
      %v4091 = vsel %vm1985, %v4086, %v4090
      %v4093 = vshrl.u32 %v3954, 16
      %v4095 = vrot.slane %v4093, 4
      %v4096 = vshll.u32 %v3954, 16
      %v4098 = vrot.slane %v4096, 5
      %v4099 = vor.u32 %v4095, %v4098
      %v4100 = vrot.slane %v4099, 4
      %v4102 = vshll.u32 %v3955, 16
      %v4104 = vrot.slane %v4102, 5
      %v4105 = vsel %vm1985, %v4100, %v4104
      %v4106 = vshrl.u32 %v3955, 16
      %v4108 = vrot.slane %v4106, 4
      %v4109 = vor.u32 %v4108, %v4104
      %v4110 = vrot.slane %v4109, 4
      %v4112 = vshll.u32 %v3956, 16
      %v4114 = vrot.slane %v4112, 5
      %v4115 = vsel %vm1985, %v4110, %v4114
      %v4117 = vshrl.u32 %v3957, 16
      %v4119 = vrot.slane %v4117, 4
      %v4120 = vshll.u32 %v3957, 16
      %v4122 = vrot.slane %v4120, 5
      %v4123 = vor.u32 %v4119, %v4122
      %v4124 = vrot.slane %v4123, 4
      %v4126 = vshll.u32 %v3958, 16
      %v4128 = vrot.slane %v4126, 5
      %v4129 = vsel %vm1985, %v4124, %v4128
      %v4130 = vshrl.u32 %v3958, 16
      %v4132 = vrot.slane %v4130, 4
      %v4133 = vor.u32 %v4132, %v4128
      %v4134 = vrot.slane %v4133, 4
      %v4136 = vshll.u32 %v3959, 16
      %v4138 = vrot.slane %v4136, 5
      %v4139 = vsel %vm1985, %v4134, %v4138
      %v4141 = vshrl.u32 %v3960, 16
      %v4143 = vrot.slane %v4141, 4
      %v4144 = vshll.u32 %v3960, 16
      %v4146 = vrot.slane %v4144, 5
      %v4147 = vor.u32 %v4143, %v4146
      %v4148 = vrot.slane %v4147, 4
      %v4150 = vshll.u32 %v3961, 16
      %v4152 = vrot.slane %v4150, 5
      %v4153 = vsel %vm1985, %v4148, %v4152
      %v4154 = vshrl.u32 %v3961, 16
      %v4156 = vrot.slane %v4154, 4
      %v4157 = vor.u32 %v4156, %v4152
      %v4158 = vrot.slane %v4157, 4
      %v4160 = vshll.u32 %v3962, 16
      %v4162 = vrot.slane %v4160, 5
      %v4163 = vsel %vm1985, %v4158, %v4162
      %v4165 = vshrl.u32 %v3963, 16
      %v4167 = vrot.slane %v4165, 4
      %v4168 = vshll.u32 %v3963, 16
      %v4170 = vrot.slane %v4168, 5
      %v4171 = vor.u32 %v4167, %v4170
      %v4172 = vrot.slane %v4171, 4
      %v4174 = vshll.u32 %v3964, 16
      %v4176 = vrot.slane %v4174, 5
      %v4177 = vsel %vm1985, %v4172, %v4176
      %v4178 = vshrl.u32 %v3964, 16
      %v4180 = vrot.slane %v4178, 4
      %v4181 = vor.u32 %v4180, %v4176
      %v4182 = vrot.slane %v4181, 4
      %v4184 = vshll.u32 %v3965, 16
      %v4186 = vrot.slane %v4184, 5
      %v4187 = vsel %vm1985, %v4182, %v4186
      %v4189 = vshrl.u32 %v3966, 16
      %v4191 = vrot.slane %v4189, 4
      %v4192 = vshll.u32 %v3966, 16
      %v4194 = vrot.slane %v4192, 5
      %v4195 = vor.u32 %v4191, %v4194
      %v4196 = vrot.slane %v4195, 4
      %v4198 = vshll.u32 %v3967, 16
      %v4200 = vrot.slane %v4198, 5
      %v4201 = vsel %vm1985, %v4196, %v4200
      %v4202 = vshrl.u32 %v3967, 16
      %v4204 = vrot.slane %v4202, 4
      %v4205 = vor.u32 %v4204, %v4200
      %v4206 = vrot.slane %v4205, 4
      %v4208 = vshll.u32 %v3968, 16
      %v4210 = vrot.slane %v4208, 5
      %v4211 = vsel %vm1985, %v4206, %v4210
      %v4213 = vshrl.u32 %v3969, 16
      %v4215 = vrot.slane %v4213, 4
      %v4216 = vshll.u32 %v3969, 16
      %v4218 = vrot.slane %v4216, 5
      %v4219 = vor.u32 %v4215, %v4218
      %v4220 = vrot.slane %v4219, 4
      %v4222 = vshll.u32 %v3970, 16
      %v4224 = vrot.slane %v4222, 5
      %v4225 = vsel %vm1985, %v4220, %v4224
      %v4226 = vshrl.u32 %v3970, 16
      %v4228 = vrot.slane %v4226, 4
      %v4229 = vor.u32 %v4228, %v4224
      %v4230 = vrot.slane %v4229, 4
      %v4232 = vshll.u32 %v3971, 16
      %v4234 = vrot.slane %v4232, 5
      %v4235 = vsel %vm1985, %v4230, %v4234
      %v4237 = vshrl.u32 %v3972, 16
      %v4239 = vrot.slane %v4237, 4
      %v4240 = vshll.u32 %v3972, 16
      %v4242 = vrot.slane %v4240, 5
      %v4243 = vor.u32 %v4239, %v4242
      %v4244 = vrot.slane %v4243, 4
      %v4246 = vshll.u32 %v3973, 16
      %v4248 = vrot.slane %v4246, 5
      %v4249 = vsel %vm1985, %v4244, %v4248
      %v4250 = vshrl.u32 %v3973, 16
      %v4252 = vrot.slane %v4250, 4
      %v4253 = vor.u32 %v4252, %v4248
      %v4254 = vrot.slane %v4253, 4
      %v4256 = vshll.u32 %v3974, 16
      %v4258 = vrot.slane %v4256, 5
      %v4259 = vsel %vm1985, %v4254, %v4258
      %v4261 = vshrl.u32 %v3975, 16
      %v4263 = vrot.slane %v4261, 4
      %v4264 = vshll.u32 %v3975, 16
      %v4266 = vrot.slane %v4264, 5
      %v4267 = vor.u32 %v4263, %v4266
      %v4268 = vrot.slane %v4267, 4
      %v4270 = vshll.u32 %v3976, 16
      %v4272 = vrot.slane %v4270, 5
      %v4273 = vsel %vm1985, %v4268, %v4272
      %v4274 = vshrl.u32 %v3976, 16
      %v4276 = vrot.slane %v4274, 4
      %v4277 = vor.u32 %v4276, %v4272
      %v4278 = vrot.slane %v4277, 4
      %v4280 = vshll.u32 %v3977, 16
      %v4282 = vrot.slane %v4280, 5
      %v4283 = vsel %vm1985, %v4278, %v4282
      %v4285 = vshrl.u32 %v3978, 16
      %v4287 = vrot.slane %v4285, 4
      %v4288 = vshll.u32 %v3978, 16
      %v4290 = vrot.slane %v4288, 5
      %v4291 = vor.u32 %v4287, %v4290
      %v4292 = vrot.slane %v4291, 4
      %v4294 = vshll.u32 %v3979, 16
      %v4296 = vrot.slane %v4294, 5
      %v4297 = vsel %vm1985, %v4292, %v4296
      %v4298 = vshrl.u32 %v3979, 16
      %v4300 = vrot.slane %v4298, 4
      %v4301 = vor.u32 %v4300, %v4296
      %v4302 = vrot.slane %v4301, 4
      %v4304 = vshll.u32 %v3980, 16
      %v4306 = vrot.slane %v4304, 5
      %v4307 = vsel %vm1985, %v4302, %v4306
      %v4309 = vshrl.u32 %v3981, 16
      %v4311 = vrot.slane %v4309, 4
      %v4312 = vshll.u32 %v3981, 16
      %v4314 = vrot.slane %v4312, 5
      %v4315 = vor.u32 %v4311, %v4314
      %v4316 = vrot.slane %v4315, 4
      %v4318 = vshll.u32 %v3982, 16
      %v4320 = vrot.slane %v4318, 5
      %v4321 = vsel %vm1985, %v4316, %v4320
      %v4322 = vshrl.u32 %v3982, 16
      %v4324 = vrot.slane %v4322, 4
      %v4325 = vor.u32 %v4324, %v4320
      %v4326 = vrot.slane %v4325, 4
      %v4328 = vshll.u32 %v3983, 16
      %v4330 = vrot.slane %v4328, 5
      %v4331 = vsel %vm1985, %v4326, %v4330
      %v4333 = vshrl.u32 %v3984, 16
      %v4335 = vrot.slane %v4333, 4
      %v4336 = vshll.u32 %v3984, 16
      %v4338 = vrot.slane %v4336, 5
      %v4339 = vor.u32 %v4335, %v4338
      %v4340 = vrot.slane %v4339, 4
      %v4342 = vshll.u32 %v3985, 16
      %v4344 = vrot.slane %v4342, 5
      %v4345 = vsel %vm1985, %v4340, %v4344
      %v4346 = vshrl.u32 %v3985, 16
      %v4348 = vrot.slane %v4346, 4
      %v4349 = vor.u32 %v4348, %v4344
      %v4350 = vrot.slane %v4349, 4
      %v4352 = vshll.u32 %v3986, 16
      %v4354 = vrot.slane %v4352, 5
      %v4355 = vsel %vm1985, %v4350, %v4354
      %v4357 = vshrl.u32 %v3987, 16
      %v4359 = vrot.slane %v4357, 4
      %v4360 = vshll.u32 %v3987, 16
      %v4362 = vrot.slane %v4360, 5
      %v4363 = vor.u32 %v4359, %v4362
      %v4364 = vrot.slane %v4363, 4
      %v4366 = vshll.u32 %v3988, 16
      %v4368 = vrot.slane %v4366, 5
      %v4369 = vsel %vm1985, %v4364, %v4368
      %v4370 = vshrl.u32 %v3988, 16
      %v4372 = vrot.slane %v4370, 4
      %v4373 = vor.u32 %v4372, %v4368
      %v4374 = vrot.slane %v4373, 4
      %v4376 = vshll.u32 %v3989, 16
      %v4378 = vrot.slane %v4376, 5
      %v4379 = vsel %vm1985, %v4374, %v4378
      %v4381 = vshrl.u32 %v3990, 16
      %v4383 = vrot.slane %v4381, 4
      %v4384 = vshll.u32 %v3990, 16
      %v4386 = vrot.slane %v4384, 5
      %v4387 = vor.u32 %v4383, %v4386
      %v4388 = vrot.slane %v4387, 4
      %v4390 = vshll.u32 %v3991, 16
      %v4392 = vrot.slane %v4390, 5
      %v4393 = vsel %vm1985, %v4388, %v4392
      %v4394 = vshrl.u32 %v3991, 16
      %v4396 = vrot.slane %v4394, 4
      %v4397 = vor.u32 %v4396, %v4392
      %v4398 = vrot.slane %v4397, 4
      %v4400 = vshll.u32 %v3992, 16
      %v4402 = vrot.slane %v4400, 5
      %v4403 = vsel %vm1985, %v4398, %v4402
      %v4405 = vshrl.u32 %v3993, 16
      %v4407 = vrot.slane %v4405, 4
      %v4408 = vshll.u32 %v3993, 16
      %v4410 = vrot.slane %v4408, 5
      %v4411 = vor.u32 %v4407, %v4410
      %v4412 = vrot.slane %v4411, 4
      %v4414 = vshll.u32 %v3994, 16
      %v4416 = vrot.slane %v4414, 5
      %v4417 = vsel %vm1985, %v4412, %v4416
      %v4418 = vshrl.u32 %v3994, 16
      %v4420 = vrot.slane %v4418, 4
      %v4421 = vor.u32 %v4420, %v4416
      %v4422 = vrot.slane %v4421, 4
      %v4424 = vshll.u32 %v3995, 16
      %v4426 = vrot.slane %v4424, 5
      %v4427 = vsel %vm1985, %v4422, %v4426
      %s4428 = scalar_lea.vmem %s2, 16
      %v4429 = vld [vmem:[%s4428] sm:$0xf]
      %v4430 = vunpack.c.l.b16 %v4009
      %v4431 = vunpack.c.l.b16 %v4019
      %v4432 = vunpack.c.l.b16 %v4033
      %v4433 = vunpack.c.l.b16 %v4043
      %v4434 = vunpack.c.l.b16 %v4057
      %v4435 = vunpack.c.l.b16 %v4067
      %v4436 = vunpack.c.l.b16 %v4081
      %v4437 = vunpack.c.l.b16 %v4091
      %v4438 = vunpack.c.l.b16 %v4105
      %v4439 = vunpack.c.l.b16 %v4115
      %v4440 = vunpack.c.l.b16 %v4129
      %v4441 = vunpack.c.l.b16 %v4139
      %v4442 = vunpack.c.l.b16 %v4153
      %v4443 = vunpack.c.l.b16 %v4163
      %v4444 = vunpack.c.l.b16 %v4177
      %v4445 = vunpack.c.l.b16 %v4187
      %v4446 = vunpack.c.l.b16 %v4201
      %v4447 = vunpack.c.l.b16 %v4211
      %v4448 = vunpack.c.l.b16 %v4225
      %v4449 = vunpack.c.l.b16 %v4235
      %v4450 = vunpack.c.l.b16 %v4249
      %v4451 = vunpack.c.l.b16 %v4259
      %v4452 = vunpack.c.l.b16 %v4273
      %v4453 = vunpack.c.l.b16 %v4283
      %v4454 = vunpack.c.l.b16 %v4297
      %v4455 = vunpack.c.l.b16 %v4307
      %v4456 = vunpack.c.l.b16 %v4321
      %v4457 = vunpack.c.l.b16 %v4331
      %v4458 = vunpack.c.l.b16 %v4345
      %v4459 = vunpack.c.l.b16 %v4355
      %v4460 = vunpack.c.l.b16 %v4369
      %v4461 = vunpack.c.l.b16 %v4379
      %v4462 = vunpack.c.l.b16 %v4393
      %v4463 = vunpack.c.l.b16 %v4403
      %v4464 = vunpack.c.l.b16 %v4417
      %v4465 = vunpack.c.l.b16 %v4427
      %v4466 = vpack.c.b16 %v4431, %v4430
      %v4467 = vpack.c.b16 %v4433, %v4432
      %v4468 = vpack.c.b16 %v4435, %v4434
      %v4469 = vpack.c.b16 %v4437, %v4436
      %v4470 = vpack.c.b16 %v4439, %v4438
      %v4471 = vpack.c.b16 %v4441, %v4440
      %v4472 = vpack.c.b16 %v4443, %v4442
      %v4473 = vpack.c.b16 %v4445, %v4444
      %v4474 = vpack.c.b16 %v4447, %v4446
      %v4475 = vpack.c.b16 %v4449, %v4448
      %v4476 = vpack.c.b16 %v4451, %v4450
      %v4477 = vpack.c.b16 %v4453, %v4452
      %v4478 = vpack.c.b16 %v4455, %v4454
      %v4479 = vpack.c.b16 %v4457, %v4456
      %v4480 = vpack.c.b16 %v4459, %v4458
      %v4481 = vpack.c.b16 %v4461, %v4460
      %v4482 = vpack.c.b16 %v4463, %v4462
      %v4483 = vpack.c.b16 %v4465, %v4464
      %v4485 = vsel %vm2474, %v4466, 0
      %v4488 = vsel %vm2474, %v4467, 0
      %v4491 = vsel %vm2474, %v4468, 0
      %v4494 = vsel %vm2474, %v4469, 0
      %v4497 = vsel %vm2474, %v4470, 0
      %v4500 = vsel %vm2474, %v4471, 0
      %v4503 = vsel %vm2474, %v4472, 0
      %v4506 = vsel %vm2474, %v4473, 0
      %v4509 = vsel %vm2474, %v4474, 0
      %v4512 = vsel %vm2474, %v4475, 0
      %v4515 = vsel %vm2474, %v4476, 0
      %v4518 = vsel %vm2474, %v4477, 0
      %v4521 = vsel %vm2474, %v4478, 0
      %v4524 = vsel %vm2474, %v4479, 0
      %v4527 = vsel %vm2474, %v4480, 0
      %v4530 = vsel %vm2474, %v4481, 0
      %v4533 = vsel %vm2474, %v4482, 0
      %v4536 = vsel %vm2474, %v4483, 0
      %v4539 = vsel %vm2529, %v4429, 0
      %4541 = vmatprep.subr.bf16.mxu0 0
      %4542 = vmatpush1.bf16.msra.mxu0 0
      %4543 = vmatprep.subr.bf16.mxu0 0
      %4544 = vmatpush1.bf16.msra.mxu0 0
      %4545 = vmatprep.subr.bf16.mxu0 0
      %4546 = vmatpush1.bf16.msra.mxu0 0
      %4547 = vmatprep.subr.bf16.mxu0 0
      %4548 = vmatpush1.bf16.msra.mxu0 0
      %4549 = vmatprep.subr.bf16.mxu0 0
      %4550 = vmatpush1.bf16.msra.mxu0 0
      %4551 = vmatprep.subr.bf16.mxu0 0
      %4552 = vmatpush1.bf16.msra.mxu0 0
      %4553 = vmatprep.subr.bf16.mxu0 0
      %4554 = vmatpush1.bf16.msra.mxu0 0
      %4555 = vmatprep.subr.bf16.mxu0 0
      %4556 = vmatpush1.bf16.msra.mxu0 %v4539
      %4557 = vmatprep.subr.bf16.mxu0 0
      %4558 = vmatpush2.bf16.msra.mxu0 0
      %4559 = vmatprep.subr.bf16.mxu0 0
      %4560 = vmatpush2.bf16.msra.mxu0 0
      %4561 = vmatprep.subr.bf16.mxu0 0
      %4562 = vmatpush2.bf16.msra.mxu0 0
      %4563 = vmatprep.subr.bf16.mxu0 0
      %4564 = vmatpush2.bf16.msra.mxu0 0
      %4565 = vmatprep.subr.bf16.mxu0 0
      %4566 = vmatpush2.bf16.msra.mxu0 0
      %4567 = vmatprep.subr.bf16.mxu0 0
      %4568 = vmatpush2.bf16.msra.mxu0 0
      %4569 = vmatprep.subr.bf16.mxu0 0
      %4570 = vmatpush2.bf16.msra.mxu0 0
      %4571 = vmatprep.subr.bf16.mxu0 0
      %4572 = vmatpush2.bf16.msra.mxu0 0
      %4573 = vmatprep.mubr.bf16.mxu0 0
      %4574 = vmatmul.mubr.bf16.gmra.mxu0 %v4485
      %v4575 = vpop.f32.mrf.mxu0
      %v4576 = vadd.f32 0.0, %v4575
      %v4577 = vpop.f32.mrf.mxu0
      %v4578 = vpop.f32.mrf.mxu0
      %v4579 = vadd.f32 0.0, %v4578
      %v4580 = vpop.f32.mrf.mxu0
      %4581 = vmatprep.mubr.bf16.mxu0 0
      %4582 = vmatmul.mubr.bf16.gmra.mxu0 %v4488
      %v4583 = vpop.f32.mrf.mxu0
      %v4584 = vadd.f32 0.0, %v4583
      %v4585 = vpop.f32.mrf.mxu0
      %v4586 = vpop.f32.mrf.mxu0
      %v4587 = vadd.f32 0.0, %v4586
      %v4588 = vpop.f32.mrf.mxu0
      %4589 = vmatprep.mubr.bf16.mxu0 0
      %4590 = vmatmul.mubr.bf16.gmra.mxu0 %v4491
      %v4591 = vpop.f32.mrf.mxu0
      %v4592 = vadd.f32 0.0, %v4591
      %v4593 = vpop.f32.mrf.mxu0
      %v4594 = vpop.f32.mrf.mxu0
      %v4595 = vadd.f32 0.0, %v4594
      %v4596 = vpop.f32.mrf.mxu0
      %4597 = vmatprep.mubr.bf16.mxu0 0
      %4598 = vmatmul.mubr.bf16.gmra.mxu0 %v4494
      %v4599 = vpop.f32.mrf.mxu0
      %v4600 = vadd.f32 0.0, %v4599
      %v4601 = vpop.f32.mrf.mxu0
      %v4602 = vpop.f32.mrf.mxu0
      %v4603 = vadd.f32 0.0, %v4602
      %v4604 = vpop.f32.mrf.mxu0
      %4605 = vmatprep.mubr.bf16.mxu0 0
      %4606 = vmatmul.mubr.bf16.gmra.mxu0 %v4497
      %v4607 = vpop.f32.mrf.mxu0
      %v4608 = vadd.f32 0.0, %v4607
      %v4609 = vpop.f32.mrf.mxu0
      %v4610 = vpop.f32.mrf.mxu0
      %v4611 = vadd.f32 0.0, %v4610
      %v4612 = vpop.f32.mrf.mxu0
      %4613 = vmatprep.mubr.bf16.mxu0 0
      %4614 = vmatmul.mubr.bf16.gmra.mxu0 %v4500
      %v4615 = vpop.f32.mrf.mxu0
      %v4616 = vadd.f32 0.0, %v4615
      %v4617 = vpop.f32.mrf.mxu0
      %v4618 = vpop.f32.mrf.mxu0
      %v4619 = vadd.f32 0.0, %v4618
      %v4620 = vpop.f32.mrf.mxu0
      %4621 = vmatprep.mubr.bf16.mxu0 0
      %4622 = vmatmul.mubr.bf16.gmra.mxu0 %v4503
      %v4623 = vpop.f32.mrf.mxu0
      %v4624 = vadd.f32 0.0, %v4623
      %v4625 = vpop.f32.mrf.mxu0
      %v4626 = vpop.f32.mrf.mxu0
      %v4627 = vadd.f32 0.0, %v4626
      %v4628 = vpop.f32.mrf.mxu0
      %4629 = vmatprep.mubr.bf16.mxu0 0
      %4630 = vmatmul.mubr.bf16.gmra.mxu0 %v4506
      %v4631 = vpop.f32.mrf.mxu0
      %v4632 = vadd.f32 0.0, %v4631
      %v4633 = vpop.f32.mrf.mxu0
      %v4634 = vpop.f32.mrf.mxu0
      %v4635 = vadd.f32 0.0, %v4634
      %v4636 = vpop.f32.mrf.mxu0
      %4637 = vmatprep.mubr.bf16.mxu0 0
      %4638 = vmatmul.mubr.bf16.gmra.mxu0 %v4509
      %v4639 = vpop.f32.mrf.mxu0
      %v4640 = vadd.f32 0.0, %v4639
      %v4641 = vpop.f32.mrf.mxu0
      %v4642 = vpop.f32.mrf.mxu0
      %v4643 = vadd.f32 0.0, %v4642
      %v4644 = vpop.f32.mrf.mxu0
      %4645 = vmatprep.mubr.bf16.mxu0 0
      %4646 = vmatmul.mubr.bf16.gmra.mxu0 %v4512
      %v4647 = vpop.f32.mrf.mxu0
      %v4648 = vadd.f32 0.0, %v4647
      %v4649 = vpop.f32.mrf.mxu0
      %v4650 = vpop.f32.mrf.mxu0
      %v4651 = vadd.f32 0.0, %v4650
      %v4652 = vpop.f32.mrf.mxu0
      %4653 = vmatprep.mubr.bf16.mxu0 0
      %4654 = vmatmul.mubr.bf16.gmra.mxu0 %v4515
      %v4655 = vpop.f32.mrf.mxu0
      %v4656 = vadd.f32 0.0, %v4655
      %v4657 = vpop.f32.mrf.mxu0
      %v4658 = vpop.f32.mrf.mxu0
      %v4659 = vadd.f32 0.0, %v4658
      %v4660 = vpop.f32.mrf.mxu0
      %4661 = vmatprep.mubr.bf16.mxu0 0
      %4662 = vmatmul.mubr.bf16.gmra.mxu0 %v4518
      %v4663 = vpop.f32.mrf.mxu0
      %v4664 = vadd.f32 0.0, %v4663
      %v4665 = vpop.f32.mrf.mxu0
      %v4666 = vpop.f32.mrf.mxu0
      %v4667 = vadd.f32 0.0, %v4666
      %v4668 = vpop.f32.mrf.mxu0
      %4669 = vmatprep.mubr.bf16.mxu0 0
      %4670 = vmatmul.mubr.bf16.gmra.mxu0 %v4521
      %v4671 = vpop.f32.mrf.mxu0
      %v4672 = vadd.f32 0.0, %v4671
      %v4673 = vpop.f32.mrf.mxu0
      %v4674 = vpop.f32.mrf.mxu0
      %v4675 = vadd.f32 0.0, %v4674
      %v4676 = vpop.f32.mrf.mxu0
      %4677 = vmatprep.mubr.bf16.mxu0 0
      %4678 = vmatmul.mubr.bf16.gmra.mxu0 %v4524
      %v4679 = vpop.f32.mrf.mxu0
      %v4680 = vadd.f32 0.0, %v4679
      %v4681 = vpop.f32.mrf.mxu0
      %v4682 = vpop.f32.mrf.mxu0
      %v4683 = vadd.f32 0.0, %v4682
      %v4684 = vpop.f32.mrf.mxu0
      %4685 = vmatprep.mubr.bf16.mxu0 0
      %4686 = vmatmul.mubr.bf16.gmra.mxu0 %v4527
      %v4687 = vpop.f32.mrf.mxu0
      %v4688 = vadd.f32 0.0, %v4687
      %v4689 = vpop.f32.mrf.mxu0
      %v4690 = vpop.f32.mrf.mxu0
      %v4691 = vadd.f32 0.0, %v4690
      %v4692 = vpop.f32.mrf.mxu0
      %4693 = vmatprep.mubr.bf16.mxu0 0
      %4694 = vmatmul.mubr.bf16.gmra.mxu0 %v4530
      %v4695 = vpop.f32.mrf.mxu0
      %v4696 = vadd.f32 0.0, %v4695
      %v4697 = vpop.f32.mrf.mxu0
      %v4698 = vpop.f32.mrf.mxu0
      %v4699 = vadd.f32 0.0, %v4698
      %v4700 = vpop.f32.mrf.mxu0
      %4701 = vmatprep.mubr.bf16.mxu0 0
      %4702 = vmatmul.mubr.bf16.gmra.mxu0 %v4533
      %v4703 = vpop.f32.mrf.mxu0
      %v4704 = vadd.f32 0.0, %v4703
      %v4705 = vpop.f32.mrf.mxu0
      %v4706 = vpop.f32.mrf.mxu0
      %v4707 = vadd.f32 0.0, %v4706
      %v4708 = vpop.f32.mrf.mxu0
      %4709 = vmatprep.mubr.bf16.mxu0 0
      %4710 = vmatmul.mubr.bf16.gmra.mxu0 %v4536
      %v4711 = vpop.f32.mrf.mxu0
      %v4712 = vadd.f32 0.0, %v4711
      %v4713 = vpop.f32.mrf.mxu0
      %v4714 = vpop.f32.mrf.mxu0
      %v4715 = vadd.f32 0.0, %v4714
      %v4716 = vpop.f32.mrf.mxu0
      %4717 = vdwg.mxu0
      %v4718 = vadd.f32 %v3906, %v4576
      %v4719 = vadd.f32 %v3907, %v4579
      %v4720 = vadd.f32 %v3908, %v4584
      %v4721 = vadd.f32 %v3909, %v4587
      %v4722 = vadd.f32 %v3910, %v4592
      %v4723 = vadd.f32 %v3911, %v4595
      %v4724 = vadd.f32 %v3912, %v4600
      %v4725 = vadd.f32 %v3913, %v4603
      %v4726 = vadd.f32 %v3914, %v4608
      %v4727 = vadd.f32 %v3915, %v4611
      %v4728 = vadd.f32 %v3916, %v4616
      %v4729 = vadd.f32 %v3917, %v4619
      %v4730 = vadd.f32 %v3918, %v4624
      %v4731 = vadd.f32 %v3919, %v4627
      %v4732 = vadd.f32 %v3920, %v4632
      %v4733 = vadd.f32 %v3921, %v4635
      %v4734 = vadd.f32 %v3922, %v4640
      %v4735 = vadd.f32 %v3923, %v4643
      %v4736 = vadd.f32 %v3924, %v4648
      %v4737 = vadd.f32 %v3925, %v4651
      %v4738 = vadd.f32 %v3926, %v4656
      %v4739 = vadd.f32 %v3927, %v4659
      %v4740 = vadd.f32 %v3928, %v4664
      %v4741 = vadd.f32 %v3929, %v4667
      %v4742 = vadd.f32 %v3930, %v4672
      %v4743 = vadd.f32 %v3931, %v4675
      %v4744 = vadd.f32 %v3932, %v4680
      %v4745 = vadd.f32 %v3933, %v4683
      %v4746 = vadd.f32 %v3934, %v4688
      %v4747 = vadd.f32 %v3935, %v4691
      %v4748 = vadd.f32 %v3936, %v4696
      %v4749 = vadd.f32 %v3937, %v4699
      %v4750 = vadd.f32 %v3938, %v4704
      %v4751 = vadd.f32 %v3939, %v4707
      %v4752 = vadd.f32 %v3940, %v4712
      %v4753 = vadd.f32 %v3941, %v4715
      %v4754 = vld [vmem:[%s3543] sm:$0xe]
      %v4755 = vld [vmem:[%s3543 + $0xc] sm:$0xe]
      %v4756 = vld [vmem:[%s3543 + $0x18] sm:$0xe]
      %v4757 = vld [vmem:[%s3543 + $0x24] sm:$0xe]
      %v4758 = vld [vmem:[%s3543 + $0x30] sm:$0xe]
      %v4759 = vld [vmem:[%s3543 + $0x3c] sm:$0xe]
      %v4760 = vld [vmem:[%s3543 + $0x48] sm:$0xe]
      %v4761 = vld [vmem:[%s3543 + $0x54] sm:$0xe]
      %v4762 = vld [vmem:[%s3543 + $0x60] sm:$0xe]
      %v4763 = vld [vmem:[%s3543 + $0x6c] sm:$0xe]
      %v4764 = vld [vmem:[%s3543 + $0x78] sm:$0xe]
      %v4765 = vld [vmem:[%s3543 + $0x84] sm:$0xe]
      %v4766 = vld [vmem:[%s3543 + $0x90] sm:$0xe]
      %v4767 = vld [vmem:[%s3543 + $0x9c] sm:$0xe]
      %v4768 = vld [vmem:[%s3543 + $0xa8] sm:$0xe]
      %v4769 = vld [vmem:[%s3543 + $0xb4] sm:$0xe]
      %v4770 = vld [vmem:[%s3543 + $0xc0] sm:$0xe]
      %v4771 = vld [vmem:[%s3543 + $0xcc] sm:$0xe]
      %v4826 = vrot.slane %v4754, 5
      %v4827 = vrot.slane %v4826, 4
      %v4828 = vrot.slane %v3943, 5
      %v4829 = vsel %vm3090, %v4827, %v4828
      %v4830 = vrot.slane %v4828, 4
      %v4831 = vrot.slane %v3944, 5
      %v4832 = vsel %vm3090, %v4830, %v4831
      %v4833 = vrot.slane %v4755, 5
      %v4834 = vrot.slane %v4833, 4
      %v4835 = vrot.slane %v3946, 5
      %v4836 = vsel %vm3090, %v4834, %v4835
      %v4837 = vrot.slane %v4835, 4
      %v4838 = vrot.slane %v3947, 5
      %v4839 = vsel %vm3090, %v4837, %v4838
      %v4840 = vrot.slane %v4756, 5
      %v4841 = vrot.slane %v4840, 4
      %v4842 = vrot.slane %v3949, 5
      %v4843 = vsel %vm3090, %v4841, %v4842
      %v4844 = vrot.slane %v4842, 4
      %v4845 = vrot.slane %v3950, 5
      %v4846 = vsel %vm3090, %v4844, %v4845
      %v4847 = vrot.slane %v4757, 5
      %v4848 = vrot.slane %v4847, 4
      %v4849 = vrot.slane %v3952, 5
      %v4850 = vsel %vm3090, %v4848, %v4849
      %v4851 = vrot.slane %v4849, 4
      %v4852 = vrot.slane %v3953, 5
      %v4853 = vsel %vm3090, %v4851, %v4852
      %v4854 = vrot.slane %v4758, 5
      %v4855 = vrot.slane %v4854, 4
      %v4856 = vrot.slane %v3955, 5
      %v4857 = vsel %vm3090, %v4855, %v4856
      %v4858 = vrot.slane %v4856, 4
      %v4859 = vrot.slane %v3956, 5
      %v4860 = vsel %vm3090, %v4858, %v4859
      %v4861 = vrot.slane %v4759, 5
      %v4862 = vrot.slane %v4861, 4
      %v4863 = vrot.slane %v3958, 5
      %v4864 = vsel %vm3090, %v4862, %v4863
      %v4865 = vrot.slane %v4863, 4
      %v4866 = vrot.slane %v3959, 5
      %v4867 = vsel %vm3090, %v4865, %v4866
      %v4868 = vrot.slane %v4760, 5
      %v4869 = vrot.slane %v4868, 4
      %v4870 = vrot.slane %v3961, 5
      %v4871 = vsel %vm3090, %v4869, %v4870
      %v4872 = vrot.slane %v4870, 4
      %v4873 = vrot.slane %v3962, 5
      %v4874 = vsel %vm3090, %v4872, %v4873
      %v4875 = vrot.slane %v4761, 5
      %v4876 = vrot.slane %v4875, 4
      %v4877 = vrot.slane %v3964, 5
      %v4878 = vsel %vm3090, %v4876, %v4877
      %v4879 = vrot.slane %v4877, 4
      %v4880 = vrot.slane %v3965, 5
      %v4881 = vsel %vm3090, %v4879, %v4880
      %v4882 = vrot.slane %v4762, 5
      %v4883 = vrot.slane %v4882, 4
      %v4884 = vrot.slane %v3967, 5
      %v4885 = vsel %vm3090, %v4883, %v4884
      %v4886 = vrot.slane %v4884, 4
      %v4887 = vrot.slane %v3968, 5
      %v4888 = vsel %vm3090, %v4886, %v4887
      %v4889 = vrot.slane %v4763, 5
      %v4890 = vrot.slane %v4889, 4
      %v4891 = vrot.slane %v3970, 5
      %v4892 = vsel %vm3090, %v4890, %v4891
      %v4893 = vrot.slane %v4891, 4
      %v4894 = vrot.slane %v3971, 5
      %v4895 = vsel %vm3090, %v4893, %v4894
      %v4896 = vrot.slane %v4764, 5
      %v4897 = vrot.slane %v4896, 4
      %v4898 = vrot.slane %v3973, 5
      %v4899 = vsel %vm3090, %v4897, %v4898
      %v4900 = vrot.slane %v4898, 4
      %v4901 = vrot.slane %v3974, 5
      %v4902 = vsel %vm3090, %v4900, %v4901
      %v4903 = vrot.slane %v4765, 5
      %v4904 = vrot.slane %v4903, 4
      %v4905 = vrot.slane %v3976, 5
      %v4906 = vsel %vm3090, %v4904, %v4905
      %v4907 = vrot.slane %v4905, 4
      %v4908 = vrot.slane %v3977, 5
      %v4909 = vsel %vm3090, %v4907, %v4908
      %v4910 = vrot.slane %v4766, 5
      %v4911 = vrot.slane %v4910, 4
      %v4912 = vrot.slane %v3979, 5
      %v4913 = vsel %vm3090, %v4911, %v4912
      %v4914 = vrot.slane %v4912, 4
      %v4915 = vrot.slane %v3980, 5
      %v4916 = vsel %vm3090, %v4914, %v4915
      %v4917 = vrot.slane %v4767, 5
      %v4918 = vrot.slane %v4917, 4
      %v4919 = vrot.slane %v3982, 5
      %v4920 = vsel %vm3090, %v4918, %v4919
      %v4921 = vrot.slane %v4919, 4
      %v4922 = vrot.slane %v3983, 5
      %v4923 = vsel %vm3090, %v4921, %v4922
      %v4924 = vrot.slane %v4768, 5
      %v4925 = vrot.slane %v4924, 4
      %v4926 = vrot.slane %v3985, 5
      %v4927 = vsel %vm3090, %v4925, %v4926
      %v4928 = vrot.slane %v4926, 4
      %v4929 = vrot.slane %v3986, 5
      %v4930 = vsel %vm3090, %v4928, %v4929
      %v4931 = vrot.slane %v4769, 5
      %v4932 = vrot.slane %v4931, 4
      %v4933 = vrot.slane %v3988, 5
      %v4934 = vsel %vm3090, %v4932, %v4933
      %v4935 = vrot.slane %v4933, 4
      %v4936 = vrot.slane %v3989, 5
      %v4937 = vsel %vm3090, %v4935, %v4936
      %v4938 = vrot.slane %v4770, 5
      %v4939 = vrot.slane %v4938, 4
      %v4940 = vrot.slane %v3991, 5
      %v4941 = vsel %vm3090, %v4939, %v4940
      %v4942 = vrot.slane %v4940, 4
      %v4943 = vrot.slane %v3992, 5
      %v4944 = vsel %vm3090, %v4942, %v4943
      %v4945 = vrot.slane %v4771, 5
      %v4946 = vrot.slane %v4945, 4
      %v4947 = vrot.slane %v3994, 5
      %v4948 = vsel %vm3090, %v4946, %v4947
      %v4949 = vrot.slane %v4947, 4
      %v4950 = vrot.slane %v3995, 5
      %v4951 = vsel %vm3090, %v4949, %v4950
      %s4952 = scalar_lea.vmem %s2, 20
      %v4953 = vld [vmem:[%s4952] sm:$0xf]
      %v4954 = vunpack.c.l.b16 %v4829
      %v4955 = vunpack.c.l.b16 %v4832
      %v4956 = vunpack.c.l.b16 %v4836
      %v4957 = vunpack.c.l.b16 %v4839
      %v4958 = vunpack.c.l.b16 %v4843
      %v4959 = vunpack.c.l.b16 %v4846
      %v4960 = vunpack.c.l.b16 %v4850
      %v4961 = vunpack.c.l.b16 %v4853
      %v4962 = vunpack.c.l.b16 %v4857
      %v4963 = vunpack.c.l.b16 %v4860
      %v4964 = vunpack.c.l.b16 %v4864
      %v4965 = vunpack.c.l.b16 %v4867
      %v4966 = vunpack.c.l.b16 %v4871
      %v4967 = vunpack.c.l.b16 %v4874
      %v4968 = vunpack.c.l.b16 %v4878
      %v4969 = vunpack.c.l.b16 %v4881
      %v4970 = vunpack.c.l.b16 %v4885
      %v4971 = vunpack.c.l.b16 %v4888
      %v4972 = vunpack.c.l.b16 %v4892
      %v4973 = vunpack.c.l.b16 %v4895
      %v4974 = vunpack.c.l.b16 %v4899
      %v4975 = vunpack.c.l.b16 %v4902
      %v4976 = vunpack.c.l.b16 %v4906
      %v4977 = vunpack.c.l.b16 %v4909
      %v4978 = vunpack.c.l.b16 %v4913
      %v4979 = vunpack.c.l.b16 %v4916
      %v4980 = vunpack.c.l.b16 %v4920
      %v4981 = vunpack.c.l.b16 %v4923
      %v4982 = vunpack.c.l.b16 %v4927
      %v4983 = vunpack.c.l.b16 %v4930
      %v4984 = vunpack.c.l.b16 %v4934
      %v4985 = vunpack.c.l.b16 %v4937
      %v4986 = vunpack.c.l.b16 %v4941
      %v4987 = vunpack.c.l.b16 %v4944
      %v4988 = vunpack.c.l.b16 %v4948
      %v4989 = vunpack.c.l.b16 %v4951
      %v4990 = vpack.c.b16 %v4955, %v4954
      %v4991 = vpack.c.b16 %v4957, %v4956
      %v4992 = vpack.c.b16 %v4959, %v4958
      %v4993 = vpack.c.b16 %v4961, %v4960
      %v4994 = vpack.c.b16 %v4963, %v4962
      %v4995 = vpack.c.b16 %v4965, %v4964
      %v4996 = vpack.c.b16 %v4967, %v4966
      %v4997 = vpack.c.b16 %v4969, %v4968
      %v4998 = vpack.c.b16 %v4971, %v4970
      %v4999 = vpack.c.b16 %v4973, %v4972
      %v5000 = vpack.c.b16 %v4975, %v4974
      %v5001 = vpack.c.b16 %v4977, %v4976
      %v5002 = vpack.c.b16 %v4979, %v4978
      %v5003 = vpack.c.b16 %v4981, %v4980
      %v5004 = vpack.c.b16 %v4983, %v4982
      %v5005 = vpack.c.b16 %v4985, %v4984
      %v5006 = vpack.c.b16 %v4987, %v4986
      %v5007 = vpack.c.b16 %v4989, %v4988
      %v5009 = vsel %vm2474, %v4990, 0
      %v5012 = vsel %vm2474, %v4991, 0
      %v5015 = vsel %vm2474, %v4992, 0
      %v5018 = vsel %vm2474, %v4993, 0
      %v5021 = vsel %vm2474, %v4994, 0
      %v5024 = vsel %vm2474, %v4995, 0
      %v5027 = vsel %vm2474, %v4996, 0
      %v5030 = vsel %vm2474, %v4997, 0
      %v5033 = vsel %vm2474, %v4998, 0
      %v5036 = vsel %vm2474, %v4999, 0
      %v5039 = vsel %vm2474, %v5000, 0
      %v5042 = vsel %vm2474, %v5001, 0
      %v5045 = vsel %vm2474, %v5002, 0
      %v5048 = vsel %vm2474, %v5003, 0
      %v5051 = vsel %vm2474, %v5004, 0
      %v5054 = vsel %vm2474, %v5005, 0
      %v5057 = vsel %vm2474, %v5006, 0
      %v5060 = vsel %vm2474, %v5007, 0
      %v5063 = vsel %vm2529, %v4953, 0
      %5065 = vmatprep.subr.bf16.mxu0 0
      %5066 = vmatpush1.bf16.msra.mxu0 0
      %5067 = vmatprep.subr.bf16.mxu0 0
      %5068 = vmatpush1.bf16.msra.mxu0 0
      %5069 = vmatprep.subr.bf16.mxu0 0
      %5070 = vmatpush1.bf16.msra.mxu0 0
      %5071 = vmatprep.subr.bf16.mxu0 0
      %5072 = vmatpush1.bf16.msra.mxu0 0
      %5073 = vmatprep.subr.bf16.mxu0 0
      %5074 = vmatpush1.bf16.msra.mxu0 0
      %5075 = vmatprep.subr.bf16.mxu0 0
      %5076 = vmatpush1.bf16.msra.mxu0 0
      %5077 = vmatprep.subr.bf16.mxu0 0
      %5078 = vmatpush1.bf16.msra.mxu0 0
      %5079 = vmatprep.subr.bf16.mxu0 0
      %5080 = vmatpush1.bf16.msra.mxu0 %v5063
      %5081 = vmatprep.subr.bf16.mxu0 0
      %5082 = vmatpush2.bf16.msra.mxu0 0
      %5083 = vmatprep.subr.bf16.mxu0 0
      %5084 = vmatpush2.bf16.msra.mxu0 0
      %5085 = vmatprep.subr.bf16.mxu0 0
      %5086 = vmatpush2.bf16.msra.mxu0 0
      %5087 = vmatprep.subr.bf16.mxu0 0
      %5088 = vmatpush2.bf16.msra.mxu0 0
      %5089 = vmatprep.subr.bf16.mxu0 0
      %5090 = vmatpush2.bf16.msra.mxu0 0
      %5091 = vmatprep.subr.bf16.mxu0 0
      %5092 = vmatpush2.bf16.msra.mxu0 0
      %5093 = vmatprep.subr.bf16.mxu0 0
      %5094 = vmatpush2.bf16.msra.mxu0 0
      %5095 = vmatprep.subr.bf16.mxu0 0
      %5096 = vmatpush2.bf16.msra.mxu0 0
      %5097 = vmatprep.mubr.bf16.mxu0 0
      %5098 = vmatmul.mubr.bf16.gmra.mxu0 %v5009
      %v5099 = vpop.f32.mrf.mxu0
      %v5100 = vadd.f32 0.0, %v5099
      %v5101 = vpop.f32.mrf.mxu0
      %v5102 = vpop.f32.mrf.mxu0
      %v5103 = vadd.f32 0.0, %v5102
      %v5104 = vpop.f32.mrf.mxu0
      %5105 = vmatprep.mubr.bf16.mxu0 0
      %5106 = vmatmul.mubr.bf16.gmra.mxu0 %v5012
      %v5107 = vpop.f32.mrf.mxu0
      %v5108 = vadd.f32 0.0, %v5107
      %v5109 = vpop.f32.mrf.mxu0
      %v5110 = vpop.f32.mrf.mxu0
      %v5111 = vadd.f32 0.0, %v5110
      %v5112 = vpop.f32.mrf.mxu0
      %5113 = vmatprep.mubr.bf16.mxu0 0
      %5114 = vmatmul.mubr.bf16.gmra.mxu0 %v5015
      %v5115 = vpop.f32.mrf.mxu0
      %v5116 = vadd.f32 0.0, %v5115
      %v5117 = vpop.f32.mrf.mxu0
      %v5118 = vpop.f32.mrf.mxu0
      %v5119 = vadd.f32 0.0, %v5118
      %v5120 = vpop.f32.mrf.mxu0
      %5121 = vmatprep.mubr.bf16.mxu0 0
      %5122 = vmatmul.mubr.bf16.gmra.mxu0 %v5018
      %v5123 = vpop.f32.mrf.mxu0
      %v5124 = vadd.f32 0.0, %v5123
      %v5125 = vpop.f32.mrf.mxu0
      %v5126 = vpop.f32.mrf.mxu0
      %v5127 = vadd.f32 0.0, %v5126
      %v5128 = vpop.f32.mrf.mxu0
      %5129 = vmatprep.mubr.bf16.mxu0 0
      %5130 = vmatmul.mubr.bf16.gmra.mxu0 %v5021
      %v5131 = vpop.f32.mrf.mxu0
      %v5132 = vadd.f32 0.0, %v5131
      %v5133 = vpop.f32.mrf.mxu0
      %v5134 = vpop.f32.mrf.mxu0
      %v5135 = vadd.f32 0.0, %v5134
      %v5136 = vpop.f32.mrf.mxu0
      %5137 = vmatprep.mubr.bf16.mxu0 0
      %5138 = vmatmul.mubr.bf16.gmra.mxu0 %v5024
      %v5139 = vpop.f32.mrf.mxu0
      %v5140 = vadd.f32 0.0, %v5139
      %v5141 = vpop.f32.mrf.mxu0
      %v5142 = vpop.f32.mrf.mxu0
      %v5143 = vadd.f32 0.0, %v5142
      %v5144 = vpop.f32.mrf.mxu0
      %5145 = vmatprep.mubr.bf16.mxu0 0
      %5146 = vmatmul.mubr.bf16.gmra.mxu0 %v5027
      %v5147 = vpop.f32.mrf.mxu0
      %v5148 = vadd.f32 0.0, %v5147
      %v5149 = vpop.f32.mrf.mxu0
      %v5150 = vpop.f32.mrf.mxu0
      %v5151 = vadd.f32 0.0, %v5150
      %v5152 = vpop.f32.mrf.mxu0
      %5153 = vmatprep.mubr.bf16.mxu0 0
      %5154 = vmatmul.mubr.bf16.gmra.mxu0 %v5030
      %v5155 = vpop.f32.mrf.mxu0
      %v5156 = vadd.f32 0.0, %v5155
      %v5157 = vpop.f32.mrf.mxu0
      %v5158 = vpop.f32.mrf.mxu0
      %v5159 = vadd.f32 0.0, %v5158
      %v5160 = vpop.f32.mrf.mxu0
      %5161 = vmatprep.mubr.bf16.mxu0 0
      %5162 = vmatmul.mubr.bf16.gmra.mxu0 %v5033
      %v5163 = vpop.f32.mrf.mxu0
      %v5164 = vadd.f32 0.0, %v5163
      %v5165 = vpop.f32.mrf.mxu0
      %v5166 = vpop.f32.mrf.mxu0
      %v5167 = vadd.f32 0.0, %v5166
      %v5168 = vpop.f32.mrf.mxu0
      %5169 = vmatprep.mubr.bf16.mxu0 0
      %5170 = vmatmul.mubr.bf16.gmra.mxu0 %v5036
      %v5171 = vpop.f32.mrf.mxu0
      %v5172 = vadd.f32 0.0, %v5171
      %v5173 = vpop.f32.mrf.mxu0
      %v5174 = vpop.f32.mrf.mxu0
      %v5175 = vadd.f32 0.0, %v5174
      %v5176 = vpop.f32.mrf.mxu0
      %5177 = vmatprep.mubr.bf16.mxu0 0
      %5178 = vmatmul.mubr.bf16.gmra.mxu0 %v5039
      %v5179 = vpop.f32.mrf.mxu0
      %v5180 = vadd.f32 0.0, %v5179
      %v5181 = vpop.f32.mrf.mxu0
      %v5182 = vpop.f32.mrf.mxu0
      %v5183 = vadd.f32 0.0, %v5182
      %v5184 = vpop.f32.mrf.mxu0
      %5185 = vmatprep.mubr.bf16.mxu0 0
      %5186 = vmatmul.mubr.bf16.gmra.mxu0 %v5042
      %v5187 = vpop.f32.mrf.mxu0
      %v5188 = vadd.f32 0.0, %v5187
      %v5189 = vpop.f32.mrf.mxu0
      %v5190 = vpop.f32.mrf.mxu0
      %v5191 = vadd.f32 0.0, %v5190
      %v5192 = vpop.f32.mrf.mxu0
      %5193 = vmatprep.mubr.bf16.mxu0 0
      %5194 = vmatmul.mubr.bf16.gmra.mxu0 %v5045
      %v5195 = vpop.f32.mrf.mxu0
      %v5196 = vadd.f32 0.0, %v5195
      %v5197 = vpop.f32.mrf.mxu0
      %v5198 = vpop.f32.mrf.mxu0
      %v5199 = vadd.f32 0.0, %v5198
      %v5200 = vpop.f32.mrf.mxu0
      %5201 = vmatprep.mubr.bf16.mxu0 0
      %5202 = vmatmul.mubr.bf16.gmra.mxu0 %v5048
      %v5203 = vpop.f32.mrf.mxu0
      %v5204 = vadd.f32 0.0, %v5203
      %v5205 = vpop.f32.mrf.mxu0
      %v5206 = vpop.f32.mrf.mxu0
      %v5207 = vadd.f32 0.0, %v5206
      %v5208 = vpop.f32.mrf.mxu0
      %5209 = vmatprep.mubr.bf16.mxu0 0
      %5210 = vmatmul.mubr.bf16.gmra.mxu0 %v5051
      %v5211 = vpop.f32.mrf.mxu0
      %v5212 = vadd.f32 0.0, %v5211
      %v5213 = vpop.f32.mrf.mxu0
      %v5214 = vpop.f32.mrf.mxu0
      %v5215 = vadd.f32 0.0, %v5214
      %v5216 = vpop.f32.mrf.mxu0
      %5217 = vmatprep.mubr.bf16.mxu0 0
      %5218 = vmatmul.mubr.bf16.gmra.mxu0 %v5054
      %v5219 = vpop.f32.mrf.mxu0
      %v5220 = vadd.f32 0.0, %v5219
      %v5221 = vpop.f32.mrf.mxu0
      %v5222 = vpop.f32.mrf.mxu0
      %v5223 = vadd.f32 0.0, %v5222
      %v5224 = vpop.f32.mrf.mxu0
      %5225 = vmatprep.mubr.bf16.mxu0 0
      %5226 = vmatmul.mubr.bf16.gmra.mxu0 %v5057
      %v5227 = vpop.f32.mrf.mxu0
      %v5228 = vadd.f32 0.0, %v5227
      %v5229 = vpop.f32.mrf.mxu0
      %v5230 = vpop.f32.mrf.mxu0
      %v5231 = vadd.f32 0.0, %v5230
      %v5232 = vpop.f32.mrf.mxu0
      %5233 = vmatprep.mubr.bf16.mxu0 0
      %5234 = vmatmul.mubr.bf16.gmra.mxu0 %v5060
      %v5235 = vpop.f32.mrf.mxu0
      %v5236 = vadd.f32 0.0, %v5235
      %v5237 = vpop.f32.mrf.mxu0
      %v5238 = vpop.f32.mrf.mxu0
      %v5239 = vadd.f32 0.0, %v5238
      %v5240 = vpop.f32.mrf.mxu0
      %5241 = vdwg.mxu0
      %v5242 = vadd.f32 %v4718, %v5100
      %v5243 = vadd.f32 %v4719, %v5103
      %v5244 = vadd.f32 %v4720, %v5108
      %v5245 = vadd.f32 %v4721, %v5111
      %v5246 = vadd.f32 %v4722, %v5116
      %v5247 = vadd.f32 %v4723, %v5119
      %v5248 = vadd.f32 %v4724, %v5124
      %v5249 = vadd.f32 %v4725, %v5127
      %v5250 = vadd.f32 %v4726, %v5132
      %v5251 = vadd.f32 %v4727, %v5135
      %v5252 = vadd.f32 %v4728, %v5140
      %v5253 = vadd.f32 %v4729, %v5143
      %v5254 = vadd.f32 %v4730, %v5148
      %v5255 = vadd.f32 %v4731, %v5151
      %v5256 = vadd.f32 %v4732, %v5156
      %v5257 = vadd.f32 %v4733, %v5159
      %v5258 = vadd.f32 %v4734, %v5164
      %v5259 = vadd.f32 %v4735, %v5167
      %v5260 = vadd.f32 %v4736, %v5172
      %v5261 = vadd.f32 %v4737, %v5175
      %v5262 = vadd.f32 %v4738, %v5180
      %v5263 = vadd.f32 %v4739, %v5183
      %v5264 = vadd.f32 %v4740, %v5188
      %v5265 = vadd.f32 %v4741, %v5191
      %v5266 = vadd.f32 %v4742, %v5196
      %v5267 = vadd.f32 %v4743, %v5199
      %v5268 = vadd.f32 %v4744, %v5204
      %v5269 = vadd.f32 %v4745, %v5207
      %v5270 = vadd.f32 %v4746, %v5212
      %v5271 = vadd.f32 %v4747, %v5215
      %v5272 = vadd.f32 %v4748, %v5220
      %v5273 = vadd.f32 %v4749, %v5223
      %v5274 = vadd.f32 %v4750, %v5228
      %v5275 = vadd.f32 %v4751, %v5231
      %v5276 = vadd.f32 %v4752, %v5236
      %v5277 = vadd.f32 %v4753, %v5239
      %v5278 = vld [vmem:[%s944] sm:$0xf]
      %v5279 = vld [vmem:[%s944 + $0x4] sm:$0xf]
      %v5280 = vld [vmem:[%s944 + $0xc] sm:$0xf]
      %v5281 = vld [vmem:[%s944 + $0x10] sm:$0xf]
      %v5282 = vld [vmem:[%s944 + $0x18] sm:$0xf]
      %v5283 = vld [vmem:[%s944 + $0x1c] sm:$0xf]
      %v5284 = vld [vmem:[%s944 + $0x24] sm:$0xf]
      %v5285 = vld [vmem:[%s944 + $0x28] sm:$0xf]
      %v5286 = vld [vmem:[%s944 + $0x30] sm:$0xf]
      %v5287 = vld [vmem:[%s944 + $0x34] sm:$0xf]
      %v5288 = vld [vmem:[%s944 + $0x3c] sm:$0xf]
      %v5289 = vld [vmem:[%s944 + $0x40] sm:$0xf]
      %v5290 = vld [vmem:[%s944 + $0x48] sm:$0xf]
      %v5291 = vld [vmem:[%s944 + $0x4c] sm:$0xf]
      %v5292 = vld [vmem:[%s944 + $0x54] sm:$0xf]
      %v5293 = vld [vmem:[%s944 + $0x58] sm:$0xf]
      %v5294 = vld [vmem:[%s944 + $0x60] sm:$0xf]
      %v5295 = vld [vmem:[%s944 + $0x64] sm:$0xf]
      %v5296 = vld [vmem:[%s944 + $0x6c] sm:$0xf]
      %v5297 = vld [vmem:[%s944 + $0x70] sm:$0xf]
      %v5298 = vld [vmem:[%s944 + $0x78] sm:$0xf]
      %v5299 = vld [vmem:[%s944 + $0x7c] sm:$0xf]
      %v5300 = vld [vmem:[%s944 + $0x84] sm:$0xf]
      %v5301 = vld [vmem:[%s944 + $0x88] sm:$0xf]
      %v5302 = vld [vmem:[%s944 + $0x90] sm:$0xf]
      %v5303 = vld [vmem:[%s944 + $0x94] sm:$0xf]
      %v5304 = vld [vmem:[%s944 + $0x9c] sm:$0xf]
      %v5305 = vld [vmem:[%s944 + $0xa0] sm:$0xf]
      %v5306 = vld [vmem:[%s944 + $0xa8] sm:$0xf]
      %v5307 = vld [vmem:[%s944 + $0xac] sm:$0xf]
      %v5308 = vld [vmem:[%s944 + $0xb4] sm:$0xf]
      %v5309 = vld [vmem:[%s944 + $0xb8] sm:$0xf]
      %v5310 = vld [vmem:[%s944 + $0xc0] sm:$0xf]
      %v5311 = vld [vmem:[%s944 + $0xc4] sm:$0xf]
      %v5312 = vld [vmem:[%s944 + $0xcc] sm:$0xf]
      %v5313 = vld [vmem:[%s944 + $0xd0] sm:$0xf]
      %s5314 = scalar_lea.vmem %s2, 24
      %v5315 = vld [vmem:[%s5314] sm:$0xf]
      %v5352 = vunpack.c.l.b16 %v5278
      %v5353 = vunpack.c.l.b16 %v5279
      %v5354 = vunpack.c.l.b16 %v5280
      %v5355 = vunpack.c.l.b16 %v5281
      %v5356 = vunpack.c.l.b16 %v5282
      %v5357 = vunpack.c.l.b16 %v5283
      %v5358 = vunpack.c.l.b16 %v5284
      %v5359 = vunpack.c.l.b16 %v5285
      %v5360 = vunpack.c.l.b16 %v5286
      %v5361 = vunpack.c.l.b16 %v5287
      %v5362 = vunpack.c.l.b16 %v5288
      %v5363 = vunpack.c.l.b16 %v5289
      %v5364 = vunpack.c.l.b16 %v5290
      %v5365 = vunpack.c.l.b16 %v5291
      %v5366 = vunpack.c.l.b16 %v5292
      %v5367 = vunpack.c.l.b16 %v5293
      %v5368 = vunpack.c.l.b16 %v5294
      %v5369 = vunpack.c.l.b16 %v5295
      %v5370 = vunpack.c.l.b16 %v5296
      %v5371 = vunpack.c.l.b16 %v5297
      %v5372 = vunpack.c.l.b16 %v5298
      %v5373 = vunpack.c.l.b16 %v5299
      %v5374 = vunpack.c.l.b16 %v5300
      %v5375 = vunpack.c.l.b16 %v5301
      %v5376 = vunpack.c.l.b16 %v5302
      %v5377 = vunpack.c.l.b16 %v5303
      %v5378 = vunpack.c.l.b16 %v5304
      %v5379 = vunpack.c.l.b16 %v5305
      %v5380 = vunpack.c.l.b16 %v5306
      %v5381 = vunpack.c.l.b16 %v5307
      %v5382 = vunpack.c.l.b16 %v5308
      %v5383 = vunpack.c.l.b16 %v5309
      %v5384 = vunpack.c.l.b16 %v5310
      %v5385 = vunpack.c.l.b16 %v5311
      %v5386 = vunpack.c.l.b16 %v5312
      %v5387 = vunpack.c.l.b16 %v5313
      %v5388 = vpack.c.b16 %v5353, %v5352
      %v5389 = vpack.c.b16 %v5355, %v5354
      %v5390 = vpack.c.b16 %v5357, %v5356
      %v5391 = vpack.c.b16 %v5359, %v5358
      %v5392 = vpack.c.b16 %v5361, %v5360
      %v5393 = vpack.c.b16 %v5363, %v5362
      %v5394 = vpack.c.b16 %v5365, %v5364
      %v5395 = vpack.c.b16 %v5367, %v5366
      %v5396 = vpack.c.b16 %v5369, %v5368
      %v5397 = vpack.c.b16 %v5371, %v5370
      %v5398 = vpack.c.b16 %v5373, %v5372
      %v5399 = vpack.c.b16 %v5375, %v5374
      %v5400 = vpack.c.b16 %v5377, %v5376
      %v5401 = vpack.c.b16 %v5379, %v5378
      %v5402 = vpack.c.b16 %v5381, %v5380
      %v5403 = vpack.c.b16 %v5383, %v5382
      %v5404 = vpack.c.b16 %v5385, %v5384
      %v5405 = vpack.c.b16 %v5387, %v5386
      %v5407 = vsel %vm2474, %v5388, 0
      %v5410 = vsel %vm2474, %v5389, 0
      %v5413 = vsel %vm2474, %v5390, 0
      %v5416 = vsel %vm2474, %v5391, 0
      %v5419 = vsel %vm2474, %v5392, 0
      %v5422 = vsel %vm2474, %v5393, 0
      %v5425 = vsel %vm2474, %v5394, 0
      %v5428 = vsel %vm2474, %v5395, 0
      %v5431 = vsel %vm2474, %v5396, 0
      %v5434 = vsel %vm2474, %v5397, 0
      %v5437 = vsel %vm2474, %v5398, 0
      %v5440 = vsel %vm2474, %v5399, 0
      %v5443 = vsel %vm2474, %v5400, 0
      %v5446 = vsel %vm2474, %v5401, 0
      %v5449 = vsel %vm2474, %v5402, 0
      %v5452 = vsel %vm2474, %v5403, 0
      %v5455 = vsel %vm2474, %v5404, 0
      %v5458 = vsel %vm2474, %v5405, 0
      %v5461 = vsel %vm2529, %v5315, 0
      %5463 = vmatprep.subr.bf16.mxu0 0
      %5464 = vmatpush1.bf16.msra.mxu0 0
      %5465 = vmatprep.subr.bf16.mxu0 0
      %5466 = vmatpush1.bf16.msra.mxu0 0
      %5467 = vmatprep.subr.bf16.mxu0 0
      %5468 = vmatpush1.bf16.msra.mxu0 0
      %5469 = vmatprep.subr.bf16.mxu0 0
      %5470 = vmatpush1.bf16.msra.mxu0 0
      %5471 = vmatprep.subr.bf16.mxu0 0
      %5472 = vmatpush1.bf16.msra.mxu0 0
      %5473 = vmatprep.subr.bf16.mxu0 0
      %5474 = vmatpush1.bf16.msra.mxu0 0
      %5475 = vmatprep.subr.bf16.mxu0 0
      %5476 = vmatpush1.bf16.msra.mxu0 0
      %5477 = vmatprep.subr.bf16.mxu0 0
      %5478 = vmatpush1.bf16.msra.mxu0 %v5461
      %5479 = vmatprep.subr.bf16.mxu0 0
      %5480 = vmatpush2.bf16.msra.mxu0 0
      %5481 = vmatprep.subr.bf16.mxu0 0
      %5482 = vmatpush2.bf16.msra.mxu0 0
      %5483 = vmatprep.subr.bf16.mxu0 0
      %5484 = vmatpush2.bf16.msra.mxu0 0
      %5485 = vmatprep.subr.bf16.mxu0 0
      %5486 = vmatpush2.bf16.msra.mxu0 0
      %5487 = vmatprep.subr.bf16.mxu0 0
      %5488 = vmatpush2.bf16.msra.mxu0 0
      %5489 = vmatprep.subr.bf16.mxu0 0
      %5490 = vmatpush2.bf16.msra.mxu0 0
      %5491 = vmatprep.subr.bf16.mxu0 0
      %5492 = vmatpush2.bf16.msra.mxu0 0
      %5493 = vmatprep.subr.bf16.mxu0 0
      %5494 = vmatpush2.bf16.msra.mxu0 0
      %5495 = vmatprep.mubr.bf16.mxu0 0
      %5496 = vmatmul.mubr.bf16.gmra.mxu0 %v5407
      %v5497 = vpop.f32.mrf.mxu0
      %v5498 = vadd.f32 0.0, %v5497
      %v5499 = vpop.f32.mrf.mxu0
      %v5500 = vpop.f32.mrf.mxu0
      %v5501 = vadd.f32 0.0, %v5500
      %v5502 = vpop.f32.mrf.mxu0
      %5503 = vmatprep.mubr.bf16.mxu0 0
      %5504 = vmatmul.mubr.bf16.gmra.mxu0 %v5410
      %v5505 = vpop.f32.mrf.mxu0
      %v5506 = vadd.f32 0.0, %v5505
      %v5507 = vpop.f32.mrf.mxu0
      %v5508 = vpop.f32.mrf.mxu0
      %v5509 = vadd.f32 0.0, %v5508
      %v5510 = vpop.f32.mrf.mxu0
      %5511 = vmatprep.mubr.bf16.mxu0 0
      %5512 = vmatmul.mubr.bf16.gmra.mxu0 %v5413
      %v5513 = vpop.f32.mrf.mxu0
      %v5514 = vadd.f32 0.0, %v5513
      %v5515 = vpop.f32.mrf.mxu0
      %v5516 = vpop.f32.mrf.mxu0
      %v5517 = vadd.f32 0.0, %v5516
      %v5518 = vpop.f32.mrf.mxu0
      %5519 = vmatprep.mubr.bf16.mxu0 0
      %5520 = vmatmul.mubr.bf16.gmra.mxu0 %v5416
      %v5521 = vpop.f32.mrf.mxu0
      %v5522 = vadd.f32 0.0, %v5521
      %v5523 = vpop.f32.mrf.mxu0
      %v5524 = vpop.f32.mrf.mxu0
      %v5525 = vadd.f32 0.0, %v5524
      %v5526 = vpop.f32.mrf.mxu0
      %5527 = vmatprep.mubr.bf16.mxu0 0
      %5528 = vmatmul.mubr.bf16.gmra.mxu0 %v5419
      %v5529 = vpop.f32.mrf.mxu0
      %v5530 = vadd.f32 0.0, %v5529
      %v5531 = vpop.f32.mrf.mxu0
      %v5532 = vpop.f32.mrf.mxu0
      %v5533 = vadd.f32 0.0, %v5532
      %v5534 = vpop.f32.mrf.mxu0
      %5535 = vmatprep.mubr.bf16.mxu0 0
      %5536 = vmatmul.mubr.bf16.gmra.mxu0 %v5422
      %v5537 = vpop.f32.mrf.mxu0
      %v5538 = vadd.f32 0.0, %v5537
      %v5539 = vpop.f32.mrf.mxu0
      %v5540 = vpop.f32.mrf.mxu0
      %v5541 = vadd.f32 0.0, %v5540
      %v5542 = vpop.f32.mrf.mxu0
      %5543 = vmatprep.mubr.bf16.mxu0 0
      %5544 = vmatmul.mubr.bf16.gmra.mxu0 %v5425
      %v5545 = vpop.f32.mrf.mxu0
      %v5546 = vadd.f32 0.0, %v5545
      %v5547 = vpop.f32.mrf.mxu0
      %v5548 = vpop.f32.mrf.mxu0
      %v5549 = vadd.f32 0.0, %v5548
      %v5550 = vpop.f32.mrf.mxu0
      %5551 = vmatprep.mubr.bf16.mxu0 0
      %5552 = vmatmul.mubr.bf16.gmra.mxu0 %v5428
      %v5553 = vpop.f32.mrf.mxu0
      %v5554 = vadd.f32 0.0, %v5553
      %v5555 = vpop.f32.mrf.mxu0
      %v5556 = vpop.f32.mrf.mxu0
      %v5557 = vadd.f32 0.0, %v5556
      %v5558 = vpop.f32.mrf.mxu0
      %5559 = vmatprep.mubr.bf16.mxu0 0
      %5560 = vmatmul.mubr.bf16.gmra.mxu0 %v5431
      %v5561 = vpop.f32.mrf.mxu0
      %v5562 = vadd.f32 0.0, %v5561
      %v5563 = vpop.f32.mrf.mxu0
      %v5564 = vpop.f32.mrf.mxu0
      %v5565 = vadd.f32 0.0, %v5564
      %v5566 = vpop.f32.mrf.mxu0
      %5567 = vmatprep.mubr.bf16.mxu0 0
      %5568 = vmatmul.mubr.bf16.gmra.mxu0 %v5434
      %v5569 = vpop.f32.mrf.mxu0
      %v5570 = vadd.f32 0.0, %v5569
      %v5571 = vpop.f32.mrf.mxu0
      %v5572 = vpop.f32.mrf.mxu0
      %v5573 = vadd.f32 0.0, %v5572
      %v5574 = vpop.f32.mrf.mxu0
      %5575 = vmatprep.mubr.bf16.mxu0 0
      %5576 = vmatmul.mubr.bf16.gmra.mxu0 %v5437
      %v5577 = vpop.f32.mrf.mxu0
      %v5578 = vadd.f32 0.0, %v5577
      %v5579 = vpop.f32.mrf.mxu0
      %v5580 = vpop.f32.mrf.mxu0
      %v5581 = vadd.f32 0.0, %v5580
      %v5582 = vpop.f32.mrf.mxu0
      %5583 = vmatprep.mubr.bf16.mxu0 0
      %5584 = vmatmul.mubr.bf16.gmra.mxu0 %v5440
      %v5585 = vpop.f32.mrf.mxu0
      %v5586 = vadd.f32 0.0, %v5585
      %v5587 = vpop.f32.mrf.mxu0
      %v5588 = vpop.f32.mrf.mxu0
      %v5589 = vadd.f32 0.0, %v5588
      %v5590 = vpop.f32.mrf.mxu0
      %5591 = vmatprep.mubr.bf16.mxu0 0
      %5592 = vmatmul.mubr.bf16.gmra.mxu0 %v5443
      %v5593 = vpop.f32.mrf.mxu0
      %v5594 = vadd.f32 0.0, %v5593
      %v5595 = vpop.f32.mrf.mxu0
      %v5596 = vpop.f32.mrf.mxu0
      %v5597 = vadd.f32 0.0, %v5596
      %v5598 = vpop.f32.mrf.mxu0
      %5599 = vmatprep.mubr.bf16.mxu0 0
      %5600 = vmatmul.mubr.bf16.gmra.mxu0 %v5446
      %v5601 = vpop.f32.mrf.mxu0
      %v5602 = vadd.f32 0.0, %v5601
      %v5603 = vpop.f32.mrf.mxu0
      %v5604 = vpop.f32.mrf.mxu0
      %v5605 = vadd.f32 0.0, %v5604
      %v5606 = vpop.f32.mrf.mxu0
      %5607 = vmatprep.mubr.bf16.mxu0 0
      %5608 = vmatmul.mubr.bf16.gmra.mxu0 %v5449
      %v5609 = vpop.f32.mrf.mxu0
      %v5610 = vadd.f32 0.0, %v5609
      %v5611 = vpop.f32.mrf.mxu0
      %v5612 = vpop.f32.mrf.mxu0
      %v5613 = vadd.f32 0.0, %v5612
      %v5614 = vpop.f32.mrf.mxu0
      %5615 = vmatprep.mubr.bf16.mxu0 0
      %5616 = vmatmul.mubr.bf16.gmra.mxu0 %v5452
      %v5617 = vpop.f32.mrf.mxu0
      %v5618 = vadd.f32 0.0, %v5617
      %v5619 = vpop.f32.mrf.mxu0
      %v5620 = vpop.f32.mrf.mxu0
      %v5621 = vadd.f32 0.0, %v5620
      %v5622 = vpop.f32.mrf.mxu0
      %5623 = vmatprep.mubr.bf16.mxu0 0
      %5624 = vmatmul.mubr.bf16.gmra.mxu0 %v5455
      %v5625 = vpop.f32.mrf.mxu0
      %v5626 = vadd.f32 0.0, %v5625
      %v5627 = vpop.f32.mrf.mxu0
      %v5628 = vpop.f32.mrf.mxu0
      %v5629 = vadd.f32 0.0, %v5628
      %v5630 = vpop.f32.mrf.mxu0
      %5631 = vmatprep.mubr.bf16.mxu0 0
      %5632 = vmatmul.mubr.bf16.gmra.mxu0 %v5458
      %v5633 = vpop.f32.mrf.mxu0
      %v5634 = vadd.f32 0.0, %v5633
      %v5635 = vpop.f32.mrf.mxu0
      %v5636 = vpop.f32.mrf.mxu0
      %v5637 = vadd.f32 0.0, %v5636
      %v5638 = vpop.f32.mrf.mxu0
      %5639 = vdwg.mxu0
      %v5640 = vadd.f32 %v5242, %v5498
      %v5641 = vadd.f32 %v5243, %v5501
      %v5642 = vadd.f32 %v5244, %v5506
      %v5643 = vadd.f32 %v5245, %v5509
      %v5644 = vadd.f32 %v5246, %v5514
      %v5645 = vadd.f32 %v5247, %v5517
      %v5646 = vadd.f32 %v5248, %v5522
      %v5647 = vadd.f32 %v5249, %v5525
      %v5648 = vadd.f32 %v5250, %v5530
      %v5649 = vadd.f32 %v5251, %v5533
      %v5650 = vadd.f32 %v5252, %v5538
      %v5651 = vadd.f32 %v5253, %v5541
      %v5652 = vadd.f32 %v5254, %v5546
      %v5653 = vadd.f32 %v5255, %v5549
      %v5654 = vadd.f32 %v5256, %v5554
      %v5655 = vadd.f32 %v5257, %v5557
      %v5656 = vadd.f32 %v5258, %v5562
      %v5657 = vadd.f32 %v5259, %v5565
      %v5658 = vadd.f32 %v5260, %v5570
      %v5659 = vadd.f32 %v5261, %v5573
      %v5660 = vadd.f32 %v5262, %v5578
      %v5661 = vadd.f32 %v5263, %v5581
      %v5662 = vadd.f32 %v5264, %v5586
      %v5663 = vadd.f32 %v5265, %v5589
      %v5664 = vadd.f32 %v5266, %v5594
      %v5665 = vadd.f32 %v5267, %v5597
      %v5666 = vadd.f32 %v5268, %v5602
      %v5667 = vadd.f32 %v5269, %v5605
      %v5668 = vadd.f32 %v5270, %v5610
      %v5669 = vadd.f32 %v5271, %v5613
      %v5670 = vadd.f32 %v5272, %v5618
      %v5671 = vadd.f32 %v5273, %v5621
      %v5672 = vadd.f32 %v5274, %v5626
      %v5673 = vadd.f32 %v5275, %v5629
      %v5674 = vadd.f32 %v5276, %v5634
      %v5675 = vadd.f32 %v5277, %v5637
      %v5676 = vld [vmem:[%s944] sm:$0xf]
      %v5677 = vld [vmem:[%s944 + $0x4] sm:$0xf]
      %v5678 = vld [vmem:[%s944 + $0x8] sm:$0x1]
      %v5679 = vld [vmem:[%s944 + $0xc] sm:$0xf]
      %v5680 = vld [vmem:[%s944 + $0x10] sm:$0xf]
      %v5681 = vld [vmem:[%s944 + $0x14] sm:$0x1]
      %v5682 = vld [vmem:[%s944 + $0x18] sm:$0xf]
      %v5683 = vld [vmem:[%s944 + $0x1c] sm:$0xf]
      %v5684 = vld [vmem:[%s944 + $0x20] sm:$0x1]
      %v5685 = vld [vmem:[%s944 + $0x24] sm:$0xf]
      %v5686 = vld [vmem:[%s944 + $0x28] sm:$0xf]
      %v5687 = vld [vmem:[%s944 + $0x2c] sm:$0x1]
      %v5688 = vld [vmem:[%s944 + $0x30] sm:$0xf]
      %v5689 = vld [vmem:[%s944 + $0x34] sm:$0xf]
      %v5690 = vld [vmem:[%s944 + $0x38] sm:$0x1]
      %v5691 = vld [vmem:[%s944 + $0x3c] sm:$0xf]
      %v5692 = vld [vmem:[%s944 + $0x40] sm:$0xf]
      %v5693 = vld [vmem:[%s944 + $0x44] sm:$0x1]
      %v5694 = vld [vmem:[%s944 + $0x48] sm:$0xf]
      %v5695 = vld [vmem:[%s944 + $0x4c] sm:$0xf]
      %v5696 = vld [vmem:[%s944 + $0x50] sm:$0x1]
      %v5697 = vld [vmem:[%s944 + $0x54] sm:$0xf]
      %v5698 = vld [vmem:[%s944 + $0x58] sm:$0xf]
      %v5699 = vld [vmem:[%s944 + $0x5c] sm:$0x1]
      %v5700 = vld [vmem:[%s944 + $0x60] sm:$0xf]
      %v5701 = vld [vmem:[%s944 + $0x64] sm:$0xf]
      %v5702 = vld [vmem:[%s944 + $0x68] sm:$0x1]
      %v5703 = vld [vmem:[%s944 + $0x6c] sm:$0xf]
      %v5704 = vld [vmem:[%s944 + $0x70] sm:$0xf]
      %v5705 = vld [vmem:[%s944 + $0x74] sm:$0x1]
      %v5706 = vld [vmem:[%s944 + $0x78] sm:$0xf]
      %v5707 = vld [vmem:[%s944 + $0x7c] sm:$0xf]
      %v5708 = vld [vmem:[%s944 + $0x80] sm:$0x1]
      %v5709 = vld [vmem:[%s944 + $0x84] sm:$0xf]
      %v5710 = vld [vmem:[%s944 + $0x88] sm:$0xf]
      %v5711 = vld [vmem:[%s944 + $0x8c] sm:$0x1]
      %v5712 = vld [vmem:[%s944 + $0x90] sm:$0xf]
      %v5713 = vld [vmem:[%s944 + $0x94] sm:$0xf]
      %v5714 = vld [vmem:[%s944 + $0x98] sm:$0x1]
      %v5715 = vld [vmem:[%s944 + $0x9c] sm:$0xf]
      %v5716 = vld [vmem:[%s944 + $0xa0] sm:$0xf]
      %v5717 = vld [vmem:[%s944 + $0xa4] sm:$0x1]
      %v5718 = vld [vmem:[%s944 + $0xa8] sm:$0xf]
      %v5719 = vld [vmem:[%s944 + $0xac] sm:$0xf]
      %v5720 = vld [vmem:[%s944 + $0xb0] sm:$0x1]
      %v5721 = vld [vmem:[%s944 + $0xb4] sm:$0xf]
      %v5722 = vld [vmem:[%s944 + $0xb8] sm:$0xf]
      %v5723 = vld [vmem:[%s944 + $0xbc] sm:$0x1]
      %v5724 = vld [vmem:[%s944 + $0xc0] sm:$0xf]
      %v5725 = vld [vmem:[%s944 + $0xc4] sm:$0xf]
      %v5726 = vld [vmem:[%s944 + $0xc8] sm:$0x1]
      %v5727 = vld [vmem:[%s944 + $0xcc] sm:$0xf]
      %v5728 = vld [vmem:[%s944 + $0xd0] sm:$0xf]
      %v5729 = vld [vmem:[%s944 + $0xd4] sm:$0x1]
      %v5731 = vshrl.u32 %v5676, 16
      %v5733 = vrot.slane %v5731, 4
      %v5734 = vshll.u32 %v5676, 16
      %v5736 = vrot.slane %v5734, 5
      %v5737 = vor.u32 %v5733, %v5736
      %v5738 = vrot.slane %v5737, 4
      %v5740 = vshll.u32 %v5677, 16
      %v5742 = vrot.slane %v5740, 5
      %v5743 = vsel %vm1985, %v5738, %v5742
      %v5744 = vshrl.u32 %v5677, 16
      %v5746 = vrot.slane %v5744, 4
      %v5747 = vor.u32 %v5746, %v5742
      %v5748 = vrot.slane %v5747, 4
      %v5750 = vshll.u32 %v5678, 16
      %v5752 = vrot.slane %v5750, 5
      %v5753 = vsel %vm1985, %v5748, %v5752
      %v5755 = vshrl.u32 %v5679, 16
      %v5757 = vrot.slane %v5755, 4
      %v5758 = vshll.u32 %v5679, 16
      %v5760 = vrot.slane %v5758, 5
      %v5761 = vor.u32 %v5757, %v5760
      %v5762 = vrot.slane %v5761, 4
      %v5764 = vshll.u32 %v5680, 16
      %v5766 = vrot.slane %v5764, 5
      %v5767 = vsel %vm1985, %v5762, %v5766
      %v5768 = vshrl.u32 %v5680, 16
      %v5770 = vrot.slane %v5768, 4
      %v5771 = vor.u32 %v5770, %v5766
      %v5772 = vrot.slane %v5771, 4
      %v5774 = vshll.u32 %v5681, 16
      %v5776 = vrot.slane %v5774, 5
      %v5777 = vsel %vm1985, %v5772, %v5776
      %v5779 = vshrl.u32 %v5682, 16
      %v5781 = vrot.slane %v5779, 4
      %v5782 = vshll.u32 %v5682, 16
      %v5784 = vrot.slane %v5782, 5
      %v5785 = vor.u32 %v5781, %v5784
      %v5786 = vrot.slane %v5785, 4
      %v5788 = vshll.u32 %v5683, 16
      %v5790 = vrot.slane %v5788, 5
      %v5791 = vsel %vm1985, %v5786, %v5790
      %v5792 = vshrl.u32 %v5683, 16
      %v5794 = vrot.slane %v5792, 4
      %v5795 = vor.u32 %v5794, %v5790
      %v5796 = vrot.slane %v5795, 4
      %v5798 = vshll.u32 %v5684, 16
      %v5800 = vrot.slane %v5798, 5
      %v5801 = vsel %vm1985, %v5796, %v5800
      %v5803 = vshrl.u32 %v5685, 16
      %v5805 = vrot.slane %v5803, 4
      %v5806 = vshll.u32 %v5685, 16
      %v5808 = vrot.slane %v5806, 5
      %v5809 = vor.u32 %v5805, %v5808
      %v5810 = vrot.slane %v5809, 4
      %v5812 = vshll.u32 %v5686, 16
      %v5814 = vrot.slane %v5812, 5
      %v5815 = vsel %vm1985, %v5810, %v5814
      %v5816 = vshrl.u32 %v5686, 16
      %v5818 = vrot.slane %v5816, 4
      %v5819 = vor.u32 %v5818, %v5814
      %v5820 = vrot.slane %v5819, 4
      %v5822 = vshll.u32 %v5687, 16
      %v5824 = vrot.slane %v5822, 5
      %v5825 = vsel %vm1985, %v5820, %v5824
      %v5827 = vshrl.u32 %v5688, 16
      %v5829 = vrot.slane %v5827, 4
      %v5830 = vshll.u32 %v5688, 16
      %v5832 = vrot.slane %v5830, 5
      %v5833 = vor.u32 %v5829, %v5832
      %v5834 = vrot.slane %v5833, 4
      %v5836 = vshll.u32 %v5689, 16
      %v5838 = vrot.slane %v5836, 5
      %v5839 = vsel %vm1985, %v5834, %v5838
      %v5840 = vshrl.u32 %v5689, 16
      %v5842 = vrot.slane %v5840, 4
      %v5843 = vor.u32 %v5842, %v5838
      %v5844 = vrot.slane %v5843, 4
      %v5846 = vshll.u32 %v5690, 16
      %v5848 = vrot.slane %v5846, 5
      %v5849 = vsel %vm1985, %v5844, %v5848
      %v5851 = vshrl.u32 %v5691, 16
      %v5853 = vrot.slane %v5851, 4
      %v5854 = vshll.u32 %v5691, 16
      %v5856 = vrot.slane %v5854, 5
      %v5857 = vor.u32 %v5853, %v5856
      %v5858 = vrot.slane %v5857, 4
      %v5860 = vshll.u32 %v5692, 16
      %v5862 = vrot.slane %v5860, 5
      %v5863 = vsel %vm1985, %v5858, %v5862
      %v5864 = vshrl.u32 %v5692, 16
      %v5866 = vrot.slane %v5864, 4
      %v5867 = vor.u32 %v5866, %v5862
      %v5868 = vrot.slane %v5867, 4
      %v5870 = vshll.u32 %v5693, 16
      %v5872 = vrot.slane %v5870, 5
      %v5873 = vsel %vm1985, %v5868, %v5872
      %v5875 = vshrl.u32 %v5694, 16
      %v5877 = vrot.slane %v5875, 4
      %v5878 = vshll.u32 %v5694, 16
      %v5880 = vrot.slane %v5878, 5
      %v5881 = vor.u32 %v5877, %v5880
      %v5882 = vrot.slane %v5881, 4
      %v5884 = vshll.u32 %v5695, 16
      %v5886 = vrot.slane %v5884, 5
      %v5887 = vsel %vm1985, %v5882, %v5886
      %v5888 = vshrl.u32 %v5695, 16
      %v5890 = vrot.slane %v5888, 4
      %v5891 = vor.u32 %v5890, %v5886
      %v5892 = vrot.slane %v5891, 4
      %v5894 = vshll.u32 %v5696, 16
      %v5896 = vrot.slane %v5894, 5
      %v5897 = vsel %vm1985, %v5892, %v5896
      %v5899 = vshrl.u32 %v5697, 16
      %v5901 = vrot.slane %v5899, 4
      %v5902 = vshll.u32 %v5697, 16
      %v5904 = vrot.slane %v5902, 5
      %v5905 = vor.u32 %v5901, %v5904
      %v5906 = vrot.slane %v5905, 4
      %v5908 = vshll.u32 %v5698, 16
      %v5910 = vrot.slane %v5908, 5
      %v5911 = vsel %vm1985, %v5906, %v5910
      %v5912 = vshrl.u32 %v5698, 16
      %v5914 = vrot.slane %v5912, 4
      %v5915 = vor.u32 %v5914, %v5910
      %v5916 = vrot.slane %v5915, 4
      %v5918 = vshll.u32 %v5699, 16
      %v5920 = vrot.slane %v5918, 5
      %v5921 = vsel %vm1985, %v5916, %v5920
      %v5923 = vshrl.u32 %v5700, 16
      %v5925 = vrot.slane %v5923, 4
      %v5926 = vshll.u32 %v5700, 16
      %v5928 = vrot.slane %v5926, 5
      %v5929 = vor.u32 %v5925, %v5928
      %v5930 = vrot.slane %v5929, 4
      %v5932 = vshll.u32 %v5701, 16
      %v5934 = vrot.slane %v5932, 5
      %v5935 = vsel %vm1985, %v5930, %v5934
      %v5936 = vshrl.u32 %v5701, 16
      %v5938 = vrot.slane %v5936, 4
      %v5939 = vor.u32 %v5938, %v5934
      %v5940 = vrot.slane %v5939, 4
      %v5942 = vshll.u32 %v5702, 16
      %v5944 = vrot.slane %v5942, 5
      %v5945 = vsel %vm1985, %v5940, %v5944
      %v5947 = vshrl.u32 %v5703, 16
      %v5949 = vrot.slane %v5947, 4
      %v5950 = vshll.u32 %v5703, 16
      %v5952 = vrot.slane %v5950, 5
      %v5953 = vor.u32 %v5949, %v5952
      %v5954 = vrot.slane %v5953, 4
      %v5956 = vshll.u32 %v5704, 16
      %v5958 = vrot.slane %v5956, 5
      %v5959 = vsel %vm1985, %v5954, %v5958
      %v5960 = vshrl.u32 %v5704, 16
      %v5962 = vrot.slane %v5960, 4
      %v5963 = vor.u32 %v5962, %v5958
      %v5964 = vrot.slane %v5963, 4
      %v5966 = vshll.u32 %v5705, 16
      %v5968 = vrot.slane %v5966, 5
      %v5969 = vsel %vm1985, %v5964, %v5968
      %v5971 = vshrl.u32 %v5706, 16
      %v5973 = vrot.slane %v5971, 4
      %v5974 = vshll.u32 %v5706, 16
      %v5976 = vrot.slane %v5974, 5
      %v5977 = vor.u32 %v5973, %v5976
      %v5978 = vrot.slane %v5977, 4
      %v5980 = vshll.u32 %v5707, 16
      %v5982 = vrot.slane %v5980, 5
      %v5983 = vsel %vm1985, %v5978, %v5982
      %v5984 = vshrl.u32 %v5707, 16
      %v5986 = vrot.slane %v5984, 4
      %v5987 = vor.u32 %v5986, %v5982
      %v5988 = vrot.slane %v5987, 4
      %v5990 = vshll.u32 %v5708, 16
      %v5992 = vrot.slane %v5990, 5
      %v5993 = vsel %vm1985, %v5988, %v5992
      %v5995 = vshrl.u32 %v5709, 16
      %v5997 = vrot.slane %v5995, 4
      %v5998 = vshll.u32 %v5709, 16
      %v6000 = vrot.slane %v5998, 5
      %v6001 = vor.u32 %v5997, %v6000
      %v6002 = vrot.slane %v6001, 4
      %v6004 = vshll.u32 %v5710, 16
      %v6006 = vrot.slane %v6004, 5
      %v6007 = vsel %vm1985, %v6002, %v6006
      %v6008 = vshrl.u32 %v5710, 16
      %v6010 = vrot.slane %v6008, 4
      %v6011 = vor.u32 %v6010, %v6006
      %v6012 = vrot.slane %v6011, 4
      %v6014 = vshll.u32 %v5711, 16
      %v6016 = vrot.slane %v6014, 5
      %v6017 = vsel %vm1985, %v6012, %v6016
      %v6019 = vshrl.u32 %v5712, 16
      %v6021 = vrot.slane %v6019, 4
      %v6022 = vshll.u32 %v5712, 16
      %v6024 = vrot.slane %v6022, 5
      %v6025 = vor.u32 %v6021, %v6024
      %v6026 = vrot.slane %v6025, 4
      %v6028 = vshll.u32 %v5713, 16
      %v6030 = vrot.slane %v6028, 5
      %v6031 = vsel %vm1985, %v6026, %v6030
      %v6032 = vshrl.u32 %v5713, 16
      %v6034 = vrot.slane %v6032, 4
      %v6035 = vor.u32 %v6034, %v6030
      %v6036 = vrot.slane %v6035, 4
      %v6038 = vshll.u32 %v5714, 16
      %v6040 = vrot.slane %v6038, 5
      %v6041 = vsel %vm1985, %v6036, %v6040
      %v6043 = vshrl.u32 %v5715, 16
      %v6045 = vrot.slane %v6043, 4
      %v6046 = vshll.u32 %v5715, 16
      %v6048 = vrot.slane %v6046, 5
      %v6049 = vor.u32 %v6045, %v6048
      %v6050 = vrot.slane %v6049, 4
      %v6052 = vshll.u32 %v5716, 16
      %v6054 = vrot.slane %v6052, 5
      %v6055 = vsel %vm1985, %v6050, %v6054
      %v6056 = vshrl.u32 %v5716, 16
      %v6058 = vrot.slane %v6056, 4
      %v6059 = vor.u32 %v6058, %v6054
      %v6060 = vrot.slane %v6059, 4
      %v6062 = vshll.u32 %v5717, 16
      %v6064 = vrot.slane %v6062, 5
      %v6065 = vsel %vm1985, %v6060, %v6064
      %v6067 = vshrl.u32 %v5718, 16
      %v6069 = vrot.slane %v6067, 4
      %v6070 = vshll.u32 %v5718, 16
      %v6072 = vrot.slane %v6070, 5
      %v6073 = vor.u32 %v6069, %v6072
      %v6074 = vrot.slane %v6073, 4
      %v6076 = vshll.u32 %v5719, 16
      %v6078 = vrot.slane %v6076, 5
      %v6079 = vsel %vm1985, %v6074, %v6078
      %v6080 = vshrl.u32 %v5719, 16
      %v6082 = vrot.slane %v6080, 4
      %v6083 = vor.u32 %v6082, %v6078
      %v6084 = vrot.slane %v6083, 4
      %v6086 = vshll.u32 %v5720, 16
      %v6088 = vrot.slane %v6086, 5
      %v6089 = vsel %vm1985, %v6084, %v6088
      %v6091 = vshrl.u32 %v5721, 16
      %v6093 = vrot.slane %v6091, 4
      %v6094 = vshll.u32 %v5721, 16
      %v6096 = vrot.slane %v6094, 5
      %v6097 = vor.u32 %v6093, %v6096
      %v6098 = vrot.slane %v6097, 4
      %v6100 = vshll.u32 %v5722, 16
      %v6102 = vrot.slane %v6100, 5
      %v6103 = vsel %vm1985, %v6098, %v6102
      %v6104 = vshrl.u32 %v5722, 16
      %v6106 = vrot.slane %v6104, 4
      %v6107 = vor.u32 %v6106, %v6102
      %v6108 = vrot.slane %v6107, 4
      %v6110 = vshll.u32 %v5723, 16
      %v6112 = vrot.slane %v6110, 5
      %v6113 = vsel %vm1985, %v6108, %v6112
      %v6115 = vshrl.u32 %v5724, 16
      %v6117 = vrot.slane %v6115, 4
      %v6118 = vshll.u32 %v5724, 16
      %v6120 = vrot.slane %v6118, 5
      %v6121 = vor.u32 %v6117, %v6120
      %v6122 = vrot.slane %v6121, 4
      %v6124 = vshll.u32 %v5725, 16
      %v6126 = vrot.slane %v6124, 5
      %v6127 = vsel %vm1985, %v6122, %v6126
      %v6128 = vshrl.u32 %v5725, 16
      %v6130 = vrot.slane %v6128, 4
      %v6131 = vor.u32 %v6130, %v6126
      %v6132 = vrot.slane %v6131, 4
      %v6134 = vshll.u32 %v5726, 16
      %v6136 = vrot.slane %v6134, 5
      %v6137 = vsel %vm1985, %v6132, %v6136
      %v6139 = vshrl.u32 %v5727, 16
      %v6141 = vrot.slane %v6139, 4
      %v6142 = vshll.u32 %v5727, 16
      %v6144 = vrot.slane %v6142, 5
      %v6145 = vor.u32 %v6141, %v6144
      %v6146 = vrot.slane %v6145, 4
      %v6148 = vshll.u32 %v5728, 16
      %v6150 = vrot.slane %v6148, 5
      %v6151 = vsel %vm1985, %v6146, %v6150
      %v6152 = vshrl.u32 %v5728, 16
      %v6154 = vrot.slane %v6152, 4
      %v6155 = vor.u32 %v6154, %v6150
      %v6156 = vrot.slane %v6155, 4
      %v6158 = vshll.u32 %v5729, 16
      %v6160 = vrot.slane %v6158, 5
      %v6161 = vsel %vm1985, %v6156, %v6160
      %s6162 = scalar_lea.vmem %s2, 28
      %v6163 = vld [vmem:[%s6162] sm:$0xf]
      %v6164 = vunpack.c.l.b16 %v5743
      %v6165 = vunpack.c.l.b16 %v5753
      %v6166 = vunpack.c.l.b16 %v5767
      %v6167 = vunpack.c.l.b16 %v5777
      %v6168 = vunpack.c.l.b16 %v5791
      %v6169 = vunpack.c.l.b16 %v5801
      %v6170 = vunpack.c.l.b16 %v5815
      %v6171 = vunpack.c.l.b16 %v5825
      %v6172 = vunpack.c.l.b16 %v5839
      %v6173 = vunpack.c.l.b16 %v5849
      %v6174 = vunpack.c.l.b16 %v5863
      %v6175 = vunpack.c.l.b16 %v5873
      %v6176 = vunpack.c.l.b16 %v5887
      %v6177 = vunpack.c.l.b16 %v5897
      %v6178 = vunpack.c.l.b16 %v5911
      %v6179 = vunpack.c.l.b16 %v5921
      %v6180 = vunpack.c.l.b16 %v5935
      %v6181 = vunpack.c.l.b16 %v5945
      %v6182 = vunpack.c.l.b16 %v5959
      %v6183 = vunpack.c.l.b16 %v5969
      %v6184 = vunpack.c.l.b16 %v5983
      %v6185 = vunpack.c.l.b16 %v5993
      %v6186 = vunpack.c.l.b16 %v6007
      %v6187 = vunpack.c.l.b16 %v6017
      %v6188 = vunpack.c.l.b16 %v6031
      %v6189 = vunpack.c.l.b16 %v6041
      %v6190 = vunpack.c.l.b16 %v6055
      %v6191 = vunpack.c.l.b16 %v6065
      %v6192 = vunpack.c.l.b16 %v6079
      %v6193 = vunpack.c.l.b16 %v6089
      %v6194 = vunpack.c.l.b16 %v6103
      %v6195 = vunpack.c.l.b16 %v6113
      %v6196 = vunpack.c.l.b16 %v6127
      %v6197 = vunpack.c.l.b16 %v6137
      %v6198 = vunpack.c.l.b16 %v6151
      %v6199 = vunpack.c.l.b16 %v6161
      %v6200 = vpack.c.b16 %v6165, %v6164
      %v6201 = vpack.c.b16 %v6167, %v6166
      %v6202 = vpack.c.b16 %v6169, %v6168
      %v6203 = vpack.c.b16 %v6171, %v6170
      %v6204 = vpack.c.b16 %v6173, %v6172
      %v6205 = vpack.c.b16 %v6175, %v6174
      %v6206 = vpack.c.b16 %v6177, %v6176
      %v6207 = vpack.c.b16 %v6179, %v6178
      %v6208 = vpack.c.b16 %v6181, %v6180
      %v6209 = vpack.c.b16 %v6183, %v6182
      %v6210 = vpack.c.b16 %v6185, %v6184
      %v6211 = vpack.c.b16 %v6187, %v6186
      %v6212 = vpack.c.b16 %v6189, %v6188
      %v6213 = vpack.c.b16 %v6191, %v6190
      %v6214 = vpack.c.b16 %v6193, %v6192
      %v6215 = vpack.c.b16 %v6195, %v6194
      %v6216 = vpack.c.b16 %v6197, %v6196
      %v6217 = vpack.c.b16 %v6199, %v6198
      %v6219 = vsel %vm2474, %v6200, 0
      %v6222 = vsel %vm2474, %v6201, 0
      %v6225 = vsel %vm2474, %v6202, 0
      %v6228 = vsel %vm2474, %v6203, 0
      %v6231 = vsel %vm2474, %v6204, 0
      %v6234 = vsel %vm2474, %v6205, 0
      %v6237 = vsel %vm2474, %v6206, 0
      %v6240 = vsel %vm2474, %v6207, 0
      %v6243 = vsel %vm2474, %v6208, 0
      %v6246 = vsel %vm2474, %v6209, 0
      %v6249 = vsel %vm2474, %v6210, 0
      %v6252 = vsel %vm2474, %v6211, 0
      %v6255 = vsel %vm2474, %v6212, 0
      %v6258 = vsel %vm2474, %v6213, 0
      %v6261 = vsel %vm2474, %v6214, 0
      %v6264 = vsel %vm2474, %v6215, 0
      %v6267 = vsel %vm2474, %v6216, 0
      %v6270 = vsel %vm2474, %v6217, 0
      %v6273 = vsel %vm2529, %v6163, 0
      %6275 = vmatprep.subr.bf16.mxu0 0
      %6276 = vmatpush1.bf16.msra.mxu0 0
      %6277 = vmatprep.subr.bf16.mxu0 0
      %6278 = vmatpush1.bf16.msra.mxu0 0
      %6279 = vmatprep.subr.bf16.mxu0 0
      %6280 = vmatpush1.bf16.msra.mxu0 0
      %6281 = vmatprep.subr.bf16.mxu0 0
      %6282 = vmatpush1.bf16.msra.mxu0 0
      %6283 = vmatprep.subr.bf16.mxu0 0
      %6284 = vmatpush1.bf16.msra.mxu0 0
      %6285 = vmatprep.subr.bf16.mxu0 0
      %6286 = vmatpush1.bf16.msra.mxu0 0
      %6287 = vmatprep.subr.bf16.mxu0 0
      %6288 = vmatpush1.bf16.msra.mxu0 0
      %6289 = vmatprep.subr.bf16.mxu0 0
      %6290 = vmatpush1.bf16.msra.mxu0 %v6273
      %6291 = vmatprep.subr.bf16.mxu0 0
      %6292 = vmatpush2.bf16.msra.mxu0 0
      %6293 = vmatprep.subr.bf16.mxu0 0
      %6294 = vmatpush2.bf16.msra.mxu0 0
      %6295 = vmatprep.subr.bf16.mxu0 0
      %6296 = vmatpush2.bf16.msra.mxu0 0
      %6297 = vmatprep.subr.bf16.mxu0 0
      %6298 = vmatpush2.bf16.msra.mxu0 0
      %6299 = vmatprep.subr.bf16.mxu0 0
      %6300 = vmatpush2.bf16.msra.mxu0 0
      %6301 = vmatprep.subr.bf16.mxu0 0
      %6302 = vmatpush2.bf16.msra.mxu0 0
      %6303 = vmatprep.subr.bf16.mxu0 0
      %6304 = vmatpush2.bf16.msra.mxu0 0
      %6305 = vmatprep.subr.bf16.mxu0 0
      %6306 = vmatpush2.bf16.msra.mxu0 0
      %6307 = vmatprep.mubr.bf16.mxu0 0
      %6308 = vmatmul.mubr.bf16.gmra.mxu0 %v6219
      %v6309 = vpop.f32.mrf.mxu0
      %v6310 = vadd.f32 0.0, %v6309
      %v6311 = vpop.f32.mrf.mxu0
      %v6312 = vpop.f32.mrf.mxu0
      %v6313 = vadd.f32 0.0, %v6312
      %v6314 = vpop.f32.mrf.mxu0
      %6315 = vmatprep.mubr.bf16.mxu0 0
      %6316 = vmatmul.mubr.bf16.gmra.mxu0 %v6222
      %v6317 = vpop.f32.mrf.mxu0
      %v6318 = vadd.f32 0.0, %v6317
      %v6319 = vpop.f32.mrf.mxu0
      %v6320 = vpop.f32.mrf.mxu0
      %v6321 = vadd.f32 0.0, %v6320
      %v6322 = vpop.f32.mrf.mxu0
      %6323 = vmatprep.mubr.bf16.mxu0 0
      %6324 = vmatmul.mubr.bf16.gmra.mxu0 %v6225
      %v6325 = vpop.f32.mrf.mxu0
      %v6326 = vadd.f32 0.0, %v6325
      %v6327 = vpop.f32.mrf.mxu0
      %v6328 = vpop.f32.mrf.mxu0
      %v6329 = vadd.f32 0.0, %v6328
      %v6330 = vpop.f32.mrf.mxu0
      %6331 = vmatprep.mubr.bf16.mxu0 0
      %6332 = vmatmul.mubr.bf16.gmra.mxu0 %v6228
      %v6333 = vpop.f32.mrf.mxu0
      %v6334 = vadd.f32 0.0, %v6333
      %v6335 = vpop.f32.mrf.mxu0
      %v6336 = vpop.f32.mrf.mxu0
      %v6337 = vadd.f32 0.0, %v6336
      %v6338 = vpop.f32.mrf.mxu0
      %6339 = vmatprep.mubr.bf16.mxu0 0
      %6340 = vmatmul.mubr.bf16.gmra.mxu0 %v6231
      %v6341 = vpop.f32.mrf.mxu0
      %v6342 = vadd.f32 0.0, %v6341
      %v6343 = vpop.f32.mrf.mxu0
      %v6344 = vpop.f32.mrf.mxu0
      %v6345 = vadd.f32 0.0, %v6344
      %v6346 = vpop.f32.mrf.mxu0
      %6347 = vmatprep.mubr.bf16.mxu0 0
      %6348 = vmatmul.mubr.bf16.gmra.mxu0 %v6234
      %v6349 = vpop.f32.mrf.mxu0
      %v6350 = vadd.f32 0.0, %v6349
      %v6351 = vpop.f32.mrf.mxu0
      %v6352 = vpop.f32.mrf.mxu0
      %v6353 = vadd.f32 0.0, %v6352
      %v6354 = vpop.f32.mrf.mxu0
      %6355 = vmatprep.mubr.bf16.mxu0 0
      %6356 = vmatmul.mubr.bf16.gmra.mxu0 %v6237
      %v6357 = vpop.f32.mrf.mxu0
      %v6358 = vadd.f32 0.0, %v6357
      %v6359 = vpop.f32.mrf.mxu0
      %v6360 = vpop.f32.mrf.mxu0
      %v6361 = vadd.f32 0.0, %v6360
      %v6362 = vpop.f32.mrf.mxu0
      %6363 = vmatprep.mubr.bf16.mxu0 0
      %6364 = vmatmul.mubr.bf16.gmra.mxu0 %v6240
      %v6365 = vpop.f32.mrf.mxu0
      %v6366 = vadd.f32 0.0, %v6365
      %v6367 = vpop.f32.mrf.mxu0
      %v6368 = vpop.f32.mrf.mxu0
      %v6369 = vadd.f32 0.0, %v6368
      %v6370 = vpop.f32.mrf.mxu0
      %6371 = vmatprep.mubr.bf16.mxu0 0
      %6372 = vmatmul.mubr.bf16.gmra.mxu0 %v6243
      %v6373 = vpop.f32.mrf.mxu0
      %v6374 = vadd.f32 0.0, %v6373
      %v6375 = vpop.f32.mrf.mxu0
      %v6376 = vpop.f32.mrf.mxu0
      %v6377 = vadd.f32 0.0, %v6376
      %v6378 = vpop.f32.mrf.mxu0
      %6379 = vmatprep.mubr.bf16.mxu0 0
      %6380 = vmatmul.mubr.bf16.gmra.mxu0 %v6246
      %v6381 = vpop.f32.mrf.mxu0
      %v6382 = vadd.f32 0.0, %v6381
      %v6383 = vpop.f32.mrf.mxu0
      %v6384 = vpop.f32.mrf.mxu0
      %v6385 = vadd.f32 0.0, %v6384
      %v6386 = vpop.f32.mrf.mxu0
      %6387 = vmatprep.mubr.bf16.mxu0 0
      %6388 = vmatmul.mubr.bf16.gmra.mxu0 %v6249
      %v6389 = vpop.f32.mrf.mxu0
      %v6390 = vadd.f32 0.0, %v6389
      %v6391 = vpop.f32.mrf.mxu0
      %v6392 = vpop.f32.mrf.mxu0
      %v6393 = vadd.f32 0.0, %v6392
      %v6394 = vpop.f32.mrf.mxu0
      %6395 = vmatprep.mubr.bf16.mxu0 0
      %6396 = vmatmul.mubr.bf16.gmra.mxu0 %v6252
      %v6397 = vpop.f32.mrf.mxu0
      %v6398 = vadd.f32 0.0, %v6397
      %v6399 = vpop.f32.mrf.mxu0
      %v6400 = vpop.f32.mrf.mxu0
      %v6401 = vadd.f32 0.0, %v6400
      %v6402 = vpop.f32.mrf.mxu0
      %6403 = vmatprep.mubr.bf16.mxu0 0
      %6404 = vmatmul.mubr.bf16.gmra.mxu0 %v6255
      %v6405 = vpop.f32.mrf.mxu0
      %v6406 = vadd.f32 0.0, %v6405
      %v6407 = vpop.f32.mrf.mxu0
      %v6408 = vpop.f32.mrf.mxu0
      %v6409 = vadd.f32 0.0, %v6408
      %v6410 = vpop.f32.mrf.mxu0
      %6411 = vmatprep.mubr.bf16.mxu0 0
      %6412 = vmatmul.mubr.bf16.gmra.mxu0 %v6258
      %v6413 = vpop.f32.mrf.mxu0
      %v6414 = vadd.f32 0.0, %v6413
      %v6415 = vpop.f32.mrf.mxu0
      %v6416 = vpop.f32.mrf.mxu0
      %v6417 = vadd.f32 0.0, %v6416
      %v6418 = vpop.f32.mrf.mxu0
      %6419 = vmatprep.mubr.bf16.mxu0 0
      %6420 = vmatmul.mubr.bf16.gmra.mxu0 %v6261
      %v6421 = vpop.f32.mrf.mxu0
      %v6422 = vadd.f32 0.0, %v6421
      %v6423 = vpop.f32.mrf.mxu0
      %v6424 = vpop.f32.mrf.mxu0
      %v6425 = vadd.f32 0.0, %v6424
      %v6426 = vpop.f32.mrf.mxu0
      %6427 = vmatprep.mubr.bf16.mxu0 0
      %6428 = vmatmul.mubr.bf16.gmra.mxu0 %v6264
      %v6429 = vpop.f32.mrf.mxu0
      %v6430 = vadd.f32 0.0, %v6429
      %v6431 = vpop.f32.mrf.mxu0
      %v6432 = vpop.f32.mrf.mxu0
      %v6433 = vadd.f32 0.0, %v6432
      %v6434 = vpop.f32.mrf.mxu0
      %6435 = vmatprep.mubr.bf16.mxu0 0
      %6436 = vmatmul.mubr.bf16.gmra.mxu0 %v6267
      %v6437 = vpop.f32.mrf.mxu0
      %v6438 = vadd.f32 0.0, %v6437
      %v6439 = vpop.f32.mrf.mxu0
      %v6440 = vpop.f32.mrf.mxu0
      %v6441 = vadd.f32 0.0, %v6440
      %v6442 = vpop.f32.mrf.mxu0
      %6443 = vmatprep.mubr.bf16.mxu0 0
      %6444 = vmatmul.mubr.bf16.gmra.mxu0 %v6270
      %v6445 = vpop.f32.mrf.mxu0
      %v6446 = vadd.f32 0.0, %v6445
      %v6447 = vpop.f32.mrf.mxu0
      %v6448 = vpop.f32.mrf.mxu0
      %v6449 = vadd.f32 0.0, %v6448
      %v6450 = vpop.f32.mrf.mxu0
      %6451 = vdwg.mxu0
      %v6452 = vadd.f32 %v5640, %v6310
      %v6453 = vadd.f32 %v5641, %v6313
      %v6454 = vadd.f32 %v5642, %v6318
      %v6455 = vadd.f32 %v5643, %v6321
      %v6456 = vadd.f32 %v5644, %v6326
      %v6457 = vadd.f32 %v5645, %v6329
      %v6458 = vadd.f32 %v5646, %v6334
      %v6459 = vadd.f32 %v5647, %v6337
      %v6460 = vadd.f32 %v5648, %v6342
      %v6461 = vadd.f32 %v5649, %v6345
      %v6462 = vadd.f32 %v5650, %v6350
      %v6463 = vadd.f32 %v5651, %v6353
      %v6464 = vadd.f32 %v5652, %v6358
      %v6465 = vadd.f32 %v5653, %v6361
      %v6466 = vadd.f32 %v5654, %v6366
      %v6467 = vadd.f32 %v5655, %v6369
      %v6468 = vadd.f32 %v5656, %v6374
      %v6469 = vadd.f32 %v5657, %v6377
      %v6470 = vadd.f32 %v5658, %v6382
      %v6471 = vadd.f32 %v5659, %v6385
      %v6472 = vadd.f32 %v5660, %v6390
      %v6473 = vadd.f32 %v5661, %v6393
      %v6474 = vadd.f32 %v5662, %v6398
      %v6475 = vadd.f32 %v5663, %v6401
      %v6476 = vadd.f32 %v5664, %v6406
      %v6477 = vadd.f32 %v5665, %v6409
      %v6478 = vadd.f32 %v5666, %v6414
      %v6479 = vadd.f32 %v5667, %v6417
      %v6480 = vadd.f32 %v5668, %v6422
      %v6481 = vadd.f32 %v5669, %v6425
      %v6482 = vadd.f32 %v5670, %v6430
      %v6483 = vadd.f32 %v5671, %v6433
      %v6484 = vadd.f32 %v5672, %v6438
      %v6485 = vadd.f32 %v5673, %v6441
      %v6486 = vadd.f32 %v5674, %v6446
      %v6487 = vadd.f32 %v5675, %v6449
      %v6488 = vld [vmem:[%s944] sm:$0xe]
      %v6489 = vld [vmem:[%s944 + $0xc] sm:$0xe]
      %v6490 = vld [vmem:[%s944 + $0x18] sm:$0xe]
      %v6491 = vld [vmem:[%s944 + $0x24] sm:$0xe]
      %v6492 = vld [vmem:[%s944 + $0x30] sm:$0xe]
      %v6493 = vld [vmem:[%s944 + $0x3c] sm:$0xe]
      %v6494 = vld [vmem:[%s944 + $0x48] sm:$0xe]
      %v6495 = vld [vmem:[%s944 + $0x54] sm:$0xe]
      %v6496 = vld [vmem:[%s944 + $0x60] sm:$0xe]
      %v6497 = vld [vmem:[%s944 + $0x6c] sm:$0xe]
      %v6498 = vld [vmem:[%s944 + $0x78] sm:$0xe]
      %v6499 = vld [vmem:[%s944 + $0x84] sm:$0xe]
      %v6500 = vld [vmem:[%s944 + $0x90] sm:$0xe]
      %v6501 = vld [vmem:[%s944 + $0x9c] sm:$0xe]
      %v6502 = vld [vmem:[%s944 + $0xa8] sm:$0xe]
      %v6503 = vld [vmem:[%s944 + $0xb4] sm:$0xe]
      %v6504 = vld [vmem:[%s944 + $0xc0] sm:$0xe]
      %v6505 = vld [vmem:[%s944 + $0xcc] sm:$0xe]
      %v6560 = vrot.slane %v6488, 5
      %v6561 = vrot.slane %v6560, 4
      %v6562 = vrot.slane %v5677, 5
      %v6563 = vsel %vm3090, %v6561, %v6562
      %v6564 = vrot.slane %v6562, 4
      %v6565 = vrot.slane %v5678, 5
      %v6566 = vsel %vm3090, %v6564, %v6565
      %v6567 = vrot.slane %v6489, 5
      %v6568 = vrot.slane %v6567, 4
      %v6569 = vrot.slane %v5680, 5
      %v6570 = vsel %vm3090, %v6568, %v6569
      %v6571 = vrot.slane %v6569, 4
      %v6572 = vrot.slane %v5681, 5
      %v6573 = vsel %vm3090, %v6571, %v6572
      %v6574 = vrot.slane %v6490, 5
      %v6575 = vrot.slane %v6574, 4
      %v6576 = vrot.slane %v5683, 5
      %v6577 = vsel %vm3090, %v6575, %v6576
      %v6578 = vrot.slane %v6576, 4
      %v6579 = vrot.slane %v5684, 5
      %v6580 = vsel %vm3090, %v6578, %v6579
      %v6581 = vrot.slane %v6491, 5
      %v6582 = vrot.slane %v6581, 4
      %v6583 = vrot.slane %v5686, 5
      %v6584 = vsel %vm3090, %v6582, %v6583
      %v6585 = vrot.slane %v6583, 4
      %v6586 = vrot.slane %v5687, 5
      %v6587 = vsel %vm3090, %v6585, %v6586
      %v6588 = vrot.slane %v6492, 5
      %v6589 = vrot.slane %v6588, 4
      %v6590 = vrot.slane %v5689, 5
      %v6591 = vsel %vm3090, %v6589, %v6590
      %v6592 = vrot.slane %v6590, 4
      %v6593 = vrot.slane %v5690, 5
      %v6594 = vsel %vm3090, %v6592, %v6593
      %v6595 = vrot.slane %v6493, 5
      %v6596 = vrot.slane %v6595, 4
      %v6597 = vrot.slane %v5692, 5
      %v6598 = vsel %vm3090, %v6596, %v6597
      %v6599 = vrot.slane %v6597, 4
      %v6600 = vrot.slane %v5693, 5
      %v6601 = vsel %vm3090, %v6599, %v6600
      %v6602 = vrot.slane %v6494, 5
      %v6603 = vrot.slane %v6602, 4
      %v6604 = vrot.slane %v5695, 5
      %v6605 = vsel %vm3090, %v6603, %v6604
      %v6606 = vrot.slane %v6604, 4
      %v6607 = vrot.slane %v5696, 5
      %v6608 = vsel %vm3090, %v6606, %v6607
      %v6609 = vrot.slane %v6495, 5
      %v6610 = vrot.slane %v6609, 4
      %v6611 = vrot.slane %v5698, 5
      %v6612 = vsel %vm3090, %v6610, %v6611
      %v6613 = vrot.slane %v6611, 4
      %v6614 = vrot.slane %v5699, 5
      %v6615 = vsel %vm3090, %v6613, %v6614
      %v6616 = vrot.slane %v6496, 5
      %v6617 = vrot.slane %v6616, 4
      %v6618 = vrot.slane %v5701, 5
      %v6619 = vsel %vm3090, %v6617, %v6618
      %v6620 = vrot.slane %v6618, 4
      %v6621 = vrot.slane %v5702, 5
      %v6622 = vsel %vm3090, %v6620, %v6621
      %v6623 = vrot.slane %v6497, 5
      %v6624 = vrot.slane %v6623, 4
      %v6625 = vrot.slane %v5704, 5
      %v6626 = vsel %vm3090, %v6624, %v6625
      %v6627 = vrot.slane %v6625, 4
      %v6628 = vrot.slane %v5705, 5
      %v6629 = vsel %vm3090, %v6627, %v6628
      %v6630 = vrot.slane %v6498, 5
      %v6631 = vrot.slane %v6630, 4
      %v6632 = vrot.slane %v5707, 5
      %v6633 = vsel %vm3090, %v6631, %v6632
      %v6634 = vrot.slane %v6632, 4
      %v6635 = vrot.slane %v5708, 5
      %v6636 = vsel %vm3090, %v6634, %v6635
      %v6637 = vrot.slane %v6499, 5
      %v6638 = vrot.slane %v6637, 4
      %v6639 = vrot.slane %v5710, 5
      %v6640 = vsel %vm3090, %v6638, %v6639
      %v6641 = vrot.slane %v6639, 4
      %v6642 = vrot.slane %v5711, 5
      %v6643 = vsel %vm3090, %v6641, %v6642
      %v6644 = vrot.slane %v6500, 5
      %v6645 = vrot.slane %v6644, 4
      %v6646 = vrot.slane %v5713, 5
      %v6647 = vsel %vm3090, %v6645, %v6646
      %v6648 = vrot.slane %v6646, 4
      %v6649 = vrot.slane %v5714, 5
      %v6650 = vsel %vm3090, %v6648, %v6649
      %v6651 = vrot.slane %v6501, 5
      %v6652 = vrot.slane %v6651, 4
      %v6653 = vrot.slane %v5716, 5
      %v6654 = vsel %vm3090, %v6652, %v6653
      %v6655 = vrot.slane %v6653, 4
      %v6656 = vrot.slane %v5717, 5
      %v6657 = vsel %vm3090, %v6655, %v6656
      %v6658 = vrot.slane %v6502, 5
      %v6659 = vrot.slane %v6658, 4
      %v6660 = vrot.slane %v5719, 5
      %v6661 = vsel %vm3090, %v6659, %v6660
      %v6662 = vrot.slane %v6660, 4
      %v6663 = vrot.slane %v5720, 5
      %v6664 = vsel %vm3090, %v6662, %v6663
      %v6665 = vrot.slane %v6503, 5
      %v6666 = vrot.slane %v6665, 4
      %v6667 = vrot.slane %v5722, 5
      %v6668 = vsel %vm3090, %v6666, %v6667
      %v6669 = vrot.slane %v6667, 4
      %v6670 = vrot.slane %v5723, 5
      %v6671 = vsel %vm3090, %v6669, %v6670
      %v6672 = vrot.slane %v6504, 5
      %v6673 = vrot.slane %v6672, 4
      %v6674 = vrot.slane %v5725, 5
      %v6675 = vsel %vm3090, %v6673, %v6674
      %v6676 = vrot.slane %v6674, 4
      %v6677 = vrot.slane %v5726, 5
      %v6678 = vsel %vm3090, %v6676, %v6677
      %v6679 = vrot.slane %v6505, 5
      %v6680 = vrot.slane %v6679, 4
      %v6681 = vrot.slane %v5728, 5
      %v6682 = vsel %vm3090, %v6680, %v6681
      %v6683 = vrot.slane %v6681, 4
      %v6684 = vrot.slane %v5729, 5
      %v6685 = vsel %vm3090, %v6683, %v6684
      %s6686 = scalar_lea.vmem %s2, 32
      %v6687 = vld [vmem:[%s6686] sm:$0xf]
      %v6688 = vunpack.c.l.b16 %v6563
      %v6689 = vunpack.c.l.b16 %v6566
      %v6690 = vunpack.c.l.b16 %v6570
      %v6691 = vunpack.c.l.b16 %v6573
      %v6692 = vunpack.c.l.b16 %v6577
      %v6693 = vunpack.c.l.b16 %v6580
      %v6694 = vunpack.c.l.b16 %v6584
      %v6695 = vunpack.c.l.b16 %v6587
      %v6696 = vunpack.c.l.b16 %v6591
      %v6697 = vunpack.c.l.b16 %v6594
      %v6698 = vunpack.c.l.b16 %v6598
      %v6699 = vunpack.c.l.b16 %v6601
      %v6700 = vunpack.c.l.b16 %v6605
      %v6701 = vunpack.c.l.b16 %v6608
      %v6702 = vunpack.c.l.b16 %v6612
      %v6703 = vunpack.c.l.b16 %v6615
      %v6704 = vunpack.c.l.b16 %v6619
      %v6705 = vunpack.c.l.b16 %v6622
      %v6706 = vunpack.c.l.b16 %v6626
      %v6707 = vunpack.c.l.b16 %v6629
      %v6708 = vunpack.c.l.b16 %v6633
      %v6709 = vunpack.c.l.b16 %v6636
      %v6710 = vunpack.c.l.b16 %v6640
      %v6711 = vunpack.c.l.b16 %v6643
      %v6712 = vunpack.c.l.b16 %v6647
      %v6713 = vunpack.c.l.b16 %v6650
      %v6714 = vunpack.c.l.b16 %v6654
      %v6715 = vunpack.c.l.b16 %v6657
      %v6716 = vunpack.c.l.b16 %v6661
      %v6717 = vunpack.c.l.b16 %v6664
      %v6718 = vunpack.c.l.b16 %v6668
      %v6719 = vunpack.c.l.b16 %v6671
      %v6720 = vunpack.c.l.b16 %v6675
      %v6721 = vunpack.c.l.b16 %v6678
      %v6722 = vunpack.c.l.b16 %v6682
      %v6723 = vunpack.c.l.b16 %v6685
      %v6724 = vpack.c.b16 %v6689, %v6688
      %v6725 = vpack.c.b16 %v6691, %v6690
      %v6726 = vpack.c.b16 %v6693, %v6692
      %v6727 = vpack.c.b16 %v6695, %v6694
      %v6728 = vpack.c.b16 %v6697, %v6696
      %v6729 = vpack.c.b16 %v6699, %v6698
      %v6730 = vpack.c.b16 %v6701, %v6700
      %v6731 = vpack.c.b16 %v6703, %v6702
      %v6732 = vpack.c.b16 %v6705, %v6704
      %v6733 = vpack.c.b16 %v6707, %v6706
      %v6734 = vpack.c.b16 %v6709, %v6708
      %v6735 = vpack.c.b16 %v6711, %v6710
      %v6736 = vpack.c.b16 %v6713, %v6712
      %v6737 = vpack.c.b16 %v6715, %v6714
      %v6738 = vpack.c.b16 %v6717, %v6716
      %v6739 = vpack.c.b16 %v6719, %v6718
      %v6740 = vpack.c.b16 %v6721, %v6720
      %v6741 = vpack.c.b16 %v6723, %v6722
      %v6743 = vsel %vm2474, %v6724, 0
      %v6746 = vsel %vm2474, %v6725, 0
      %v6749 = vsel %vm2474, %v6726, 0
      %v6752 = vsel %vm2474, %v6727, 0
      %v6755 = vsel %vm2474, %v6728, 0
      %v6758 = vsel %vm2474, %v6729, 0
      %v6761 = vsel %vm2474, %v6730, 0
      %v6764 = vsel %vm2474, %v6731, 0
      %v6767 = vsel %vm2474, %v6732, 0
      %v6770 = vsel %vm2474, %v6733, 0
      %v6773 = vsel %vm2474, %v6734, 0
      %v6776 = vsel %vm2474, %v6735, 0
      %v6779 = vsel %vm2474, %v6736, 0
      %v6782 = vsel %vm2474, %v6737, 0
      %v6785 = vsel %vm2474, %v6738, 0
      %v6788 = vsel %vm2474, %v6739, 0
      %v6791 = vsel %vm2474, %v6740, 0
      %v6794 = vsel %vm2474, %v6741, 0
      %v6797 = vsel %vm2529, %v6687, 0
      %6799 = vmatprep.subr.bf16.mxu0 0
      %6800 = vmatpush1.bf16.msra.mxu0 0
      %6801 = vmatprep.subr.bf16.mxu0 0
      %6802 = vmatpush1.bf16.msra.mxu0 0
      %6803 = vmatprep.subr.bf16.mxu0 0
      %6804 = vmatpush1.bf16.msra.mxu0 0
      %6805 = vmatprep.subr.bf16.mxu0 0
      %6806 = vmatpush1.bf16.msra.mxu0 0
      %6807 = vmatprep.subr.bf16.mxu0 0
      %6808 = vmatpush1.bf16.msra.mxu0 0
      %6809 = vmatprep.subr.bf16.mxu0 0
      %6810 = vmatpush1.bf16.msra.mxu0 0
      %6811 = vmatprep.subr.bf16.mxu0 0
      %6812 = vmatpush1.bf16.msra.mxu0 0
      %6813 = vmatprep.subr.bf16.mxu0 0
      %6814 = vmatpush1.bf16.msra.mxu0 %v6797
      %6815 = vmatprep.subr.bf16.mxu0 0
      %6816 = vmatpush2.bf16.msra.mxu0 0
      %6817 = vmatprep.subr.bf16.mxu0 0
      %6818 = vmatpush2.bf16.msra.mxu0 0
      %6819 = vmatprep.subr.bf16.mxu0 0
      %6820 = vmatpush2.bf16.msra.mxu0 0
      %6821 = vmatprep.subr.bf16.mxu0 0
      %6822 = vmatpush2.bf16.msra.mxu0 0
      %6823 = vmatprep.subr.bf16.mxu0 0
      %6824 = vmatpush2.bf16.msra.mxu0 0
      %6825 = vmatprep.subr.bf16.mxu0 0
      %6826 = vmatpush2.bf16.msra.mxu0 0
      %6827 = vmatprep.subr.bf16.mxu0 0
      %6828 = vmatpush2.bf16.msra.mxu0 0
      %6829 = vmatprep.subr.bf16.mxu0 0
      %6830 = vmatpush2.bf16.msra.mxu0 0
      %6831 = vmatprep.mubr.bf16.mxu0 0
      %6832 = vmatmul.mubr.bf16.gmra.mxu0 %v6743
      %v6833 = vpop.f32.mrf.mxu0
      %v6834 = vadd.f32 0.0, %v6833
      %v6835 = vpop.f32.mrf.mxu0
      %v6836 = vpop.f32.mrf.mxu0
      %v6837 = vadd.f32 0.0, %v6836
      %v6838 = vpop.f32.mrf.mxu0
      %6839 = vmatprep.mubr.bf16.mxu0 0
      %6840 = vmatmul.mubr.bf16.gmra.mxu0 %v6746
      %v6841 = vpop.f32.mrf.mxu0
      %v6842 = vadd.f32 0.0, %v6841
      %v6843 = vpop.f32.mrf.mxu0
      %v6844 = vpop.f32.mrf.mxu0
      %v6845 = vadd.f32 0.0, %v6844
      %v6846 = vpop.f32.mrf.mxu0
      %6847 = vmatprep.mubr.bf16.mxu0 0
      %6848 = vmatmul.mubr.bf16.gmra.mxu0 %v6749
      %v6849 = vpop.f32.mrf.mxu0
      %v6850 = vadd.f32 0.0, %v6849
      %v6851 = vpop.f32.mrf.mxu0
      %v6852 = vpop.f32.mrf.mxu0
      %v6853 = vadd.f32 0.0, %v6852
      %v6854 = vpop.f32.mrf.mxu0
      %6855 = vmatprep.mubr.bf16.mxu0 0
      %6856 = vmatmul.mubr.bf16.gmra.mxu0 %v6752
      %v6857 = vpop.f32.mrf.mxu0
      %v6858 = vadd.f32 0.0, %v6857
      %v6859 = vpop.f32.mrf.mxu0
      %v6860 = vpop.f32.mrf.mxu0
      %v6861 = vadd.f32 0.0, %v6860
      %v6862 = vpop.f32.mrf.mxu0
      %6863 = vmatprep.mubr.bf16.mxu0 0
      %6864 = vmatmul.mubr.bf16.gmra.mxu0 %v6755
      %v6865 = vpop.f32.mrf.mxu0
      %v6866 = vadd.f32 0.0, %v6865
      %v6867 = vpop.f32.mrf.mxu0
      %v6868 = vpop.f32.mrf.mxu0
      %v6869 = vadd.f32 0.0, %v6868
      %v6870 = vpop.f32.mrf.mxu0
      %6871 = vmatprep.mubr.bf16.mxu0 0
      %6872 = vmatmul.mubr.bf16.gmra.mxu0 %v6758
      %v6873 = vpop.f32.mrf.mxu0
      %v6874 = vadd.f32 0.0, %v6873
      %v6875 = vpop.f32.mrf.mxu0
      %v6876 = vpop.f32.mrf.mxu0
      %v6877 = vadd.f32 0.0, %v6876
      %v6878 = vpop.f32.mrf.mxu0
      %6879 = vmatprep.mubr.bf16.mxu0 0
      %6880 = vmatmul.mubr.bf16.gmra.mxu0 %v6761
      %v6881 = vpop.f32.mrf.mxu0
      %v6882 = vadd.f32 0.0, %v6881
      %v6883 = vpop.f32.mrf.mxu0
      %v6884 = vpop.f32.mrf.mxu0
      %v6885 = vadd.f32 0.0, %v6884
      %v6886 = vpop.f32.mrf.mxu0
      %6887 = vmatprep.mubr.bf16.mxu0 0
      %6888 = vmatmul.mubr.bf16.gmra.mxu0 %v6764
      %v6889 = vpop.f32.mrf.mxu0
      %v6890 = vadd.f32 0.0, %v6889
      %v6891 = vpop.f32.mrf.mxu0
      %v6892 = vpop.f32.mrf.mxu0
      %v6893 = vadd.f32 0.0, %v6892
      %v6894 = vpop.f32.mrf.mxu0
      %6895 = vmatprep.mubr.bf16.mxu0 0
      %6896 = vmatmul.mubr.bf16.gmra.mxu0 %v6767
      %v6897 = vpop.f32.mrf.mxu0
      %v6898 = vadd.f32 0.0, %v6897
      %v6899 = vpop.f32.mrf.mxu0
      %v6900 = vpop.f32.mrf.mxu0
      %v6901 = vadd.f32 0.0, %v6900
      %v6902 = vpop.f32.mrf.mxu0
      %6903 = vmatprep.mubr.bf16.mxu0 0
      %6904 = vmatmul.mubr.bf16.gmra.mxu0 %v6770
      %v6905 = vpop.f32.mrf.mxu0
      %v6906 = vadd.f32 0.0, %v6905
      %v6907 = vpop.f32.mrf.mxu0
      %v6908 = vpop.f32.mrf.mxu0
      %v6909 = vadd.f32 0.0, %v6908
      %v6910 = vpop.f32.mrf.mxu0
      %6911 = vmatprep.mubr.bf16.mxu0 0
      %6912 = vmatmul.mubr.bf16.gmra.mxu0 %v6773
      %v6913 = vpop.f32.mrf.mxu0
      %v6914 = vadd.f32 0.0, %v6913
      %v6915 = vpop.f32.mrf.mxu0
      %v6916 = vpop.f32.mrf.mxu0
      %v6917 = vadd.f32 0.0, %v6916
      %v6918 = vpop.f32.mrf.mxu0
      %6919 = vmatprep.mubr.bf16.mxu0 0
      %6920 = vmatmul.mubr.bf16.gmra.mxu0 %v6776
      %v6921 = vpop.f32.mrf.mxu0
      %v6922 = vadd.f32 0.0, %v6921
      %v6923 = vpop.f32.mrf.mxu0
      %v6924 = vpop.f32.mrf.mxu0
      %v6925 = vadd.f32 0.0, %v6924
      %v6926 = vpop.f32.mrf.mxu0
      %6927 = vmatprep.mubr.bf16.mxu0 0
      %6928 = vmatmul.mubr.bf16.gmra.mxu0 %v6779
      %v6929 = vpop.f32.mrf.mxu0
      %v6930 = vadd.f32 0.0, %v6929
      %v6931 = vpop.f32.mrf.mxu0
      %v6932 = vpop.f32.mrf.mxu0
      %v6933 = vadd.f32 0.0, %v6932
      %v6934 = vpop.f32.mrf.mxu0
      %6935 = vmatprep.mubr.bf16.mxu0 0
      %6936 = vmatmul.mubr.bf16.gmra.mxu0 %v6782
      %v6937 = vpop.f32.mrf.mxu0
      %v6938 = vadd.f32 0.0, %v6937
      %v6939 = vpop.f32.mrf.mxu0
      %v6940 = vpop.f32.mrf.mxu0
      %v6941 = vadd.f32 0.0, %v6940
      %v6942 = vpop.f32.mrf.mxu0
      %6943 = vmatprep.mubr.bf16.mxu0 0
      %6944 = vmatmul.mubr.bf16.gmra.mxu0 %v6785
      %v6945 = vpop.f32.mrf.mxu0
      %v6946 = vadd.f32 0.0, %v6945
      %v6947 = vpop.f32.mrf.mxu0
      %v6948 = vpop.f32.mrf.mxu0
      %v6949 = vadd.f32 0.0, %v6948
      %v6950 = vpop.f32.mrf.mxu0
      %6951 = vmatprep.mubr.bf16.mxu0 0
      %6952 = vmatmul.mubr.bf16.gmra.mxu0 %v6788
      %v6953 = vpop.f32.mrf.mxu0
      %v6954 = vadd.f32 0.0, %v6953
      %v6955 = vpop.f32.mrf.mxu0
      %v6956 = vpop.f32.mrf.mxu0
      %v6957 = vadd.f32 0.0, %v6956
      %v6958 = vpop.f32.mrf.mxu0
      %6959 = vmatprep.mubr.bf16.mxu0 0
      %6960 = vmatmul.mubr.bf16.gmra.mxu0 %v6791
      %v6961 = vpop.f32.mrf.mxu0
      %v6962 = vadd.f32 0.0, %v6961
      %v6963 = vpop.f32.mrf.mxu0
      %v6964 = vpop.f32.mrf.mxu0
      %v6965 = vadd.f32 0.0, %v6964
      %v6966 = vpop.f32.mrf.mxu0
      %6967 = vmatprep.mubr.bf16.mxu0 0
      %6968 = vmatmul.mubr.bf16.gmra.mxu0 %v6794
      %v6969 = vpop.f32.mrf.mxu0
      %v6970 = vadd.f32 0.0, %v6969
      %v6971 = vpop.f32.mrf.mxu0
      %v6972 = vpop.f32.mrf.mxu0
      %v6973 = vadd.f32 0.0, %v6972
      %v6974 = vpop.f32.mrf.mxu0
      %6975 = vdwg.mxu0
      %v6976 = vadd.f32 %v6452, %v6834
      %v6977 = vadd.f32 %v6453, %v6837
      %v6978 = vadd.f32 %v6454, %v6842
      %v6979 = vadd.f32 %v6455, %v6845
      %v6980 = vadd.f32 %v6456, %v6850
      %v6981 = vadd.f32 %v6457, %v6853
      %v6982 = vadd.f32 %v6458, %v6858
      %v6983 = vadd.f32 %v6459, %v6861
      %v6984 = vadd.f32 %v6460, %v6866
      %v6985 = vadd.f32 %v6461, %v6869
      %v6986 = vadd.f32 %v6462, %v6874
      %v6987 = vadd.f32 %v6463, %v6877
      %v6988 = vadd.f32 %v6464, %v6882
      %v6989 = vadd.f32 %v6465, %v6885
      %v6990 = vadd.f32 %v6466, %v6890
      %v6991 = vadd.f32 %v6467, %v6893
      %v6992 = vadd.f32 %v6468, %v6898
      %v6993 = vadd.f32 %v6469, %v6901
      %v6994 = vadd.f32 %v6470, %v6906
      %v6995 = vadd.f32 %v6471, %v6909
      %v6996 = vadd.f32 %v6472, %v6914
      %v6997 = vadd.f32 %v6473, %v6917
      %v6998 = vadd.f32 %v6474, %v6922
      %v6999 = vadd.f32 %v6475, %v6925
      %v7000 = vadd.f32 %v6476, %v6930
      %v7001 = vadd.f32 %v6477, %v6933
      %v7002 = vadd.f32 %v6478, %v6938
      %v7003 = vadd.f32 %v6479, %v6941
      %v7004 = vadd.f32 %v6480, %v6946
      %v7005 = vadd.f32 %v6481, %v6949
      %v7006 = vadd.f32 %v6482, %v6954
      %v7007 = vadd.f32 %v6483, %v6957
      %v7008 = vadd.f32 %v6484, %v6962
      %v7009 = vadd.f32 %v6485, %v6965
      %v7010 = vadd.f32 %v6486, %v6970
      %v7011 = vadd.f32 %v6487, %v6973
      %v7012 = vld [vmem:[%s3] sm:$0x1]
      %v7014 = vlaneseq
      %v7015 = vshrl.u32 %v7014, 7
      %v7016 = vsub.s32 0, %v7015
      %v7017 = vrot.slane %v7012, %v7016
      %v7019 = vmul.f32 %v6976, %v7017
      %v7020 = vmul.f32 %v6977, %v7017
      %v7021 = vmul.f32 %v6978, %v7017
      %v7022 = vmul.f32 %v6979, %v7017
      %v7023 = vmul.f32 %v6980, %v7017
      %v7024 = vmul.f32 %v6981, %v7017
      %v7025 = vmul.f32 %v6982, %v7017
      %v7026 = vmul.f32 %v6983, %v7017
      %v7027 = vmul.f32 %v6984, %v7017
      %v7028 = vmul.f32 %v6985, %v7017
      %v7029 = vmul.f32 %v6986, %v7017
      %v7030 = vmul.f32 %v6987, %v7017
      %v7031 = vmul.f32 %v6988, %v7017
      %v7032 = vmul.f32 %v6989, %v7017
      %v7033 = vmul.f32 %v6990, %v7017
      %v7034 = vmul.f32 %v6991, %v7017
      %v7035 = vmul.f32 %v6992, %v7017
      %v7036 = vmul.f32 %v6993, %v7017
      %v7037 = vmul.f32 %v6994, %v7017
      %v7038 = vmul.f32 %v6995, %v7017
      %v7039 = vmul.f32 %v6996, %v7017
      %v7040 = vmul.f32 %v6997, %v7017
      %v7041 = vmul.f32 %v6998, %v7017
      %v7042 = vmul.f32 %v6999, %v7017
      %v7043 = vmul.f32 %v7000, %v7017
      %v7044 = vmul.f32 %v7001, %v7017
      %v7045 = vmul.f32 %v7002, %v7017
      %v7046 = vmul.f32 %v7003, %v7017
      %v7047 = vmul.f32 %v7004, %v7017
      %v7048 = vmul.f32 %v7005, %v7017
      %v7049 = vmul.f32 %v7006, %v7017
      %v7050 = vmul.f32 %v7007, %v7017
      %v7051 = vmul.f32 %v7008, %v7017
      %v7052 = vmul.f32 %v7009, %v7017
      %v7053 = vmul.f32 %v7010, %v7017
      %v7054 = vmul.f32 %v7011, %v7017
      %v7055 = vld [vmem:[%s4] sm:$0x1]
      %v7057 = vlaneseq
      %v7058 = vshrl.u32 %v7057, 7
      %v7059 = vsub.s32 0, %v7058
      %v7060 = vrot.slane %v7055, %v7059
      %v7062 = vadd.f32 %v7019, %v7060
      %v7063 = vadd.f32 %v7020, %v7060
      %v7064 = vadd.f32 %v7021, %v7060
      %v7065 = vadd.f32 %v7022, %v7060
      %v7066 = vadd.f32 %v7023, %v7060
      %v7067 = vadd.f32 %v7024, %v7060
      %v7068 = vadd.f32 %v7025, %v7060
      %v7069 = vadd.f32 %v7026, %v7060
      %v7070 = vadd.f32 %v7027, %v7060
      %v7071 = vadd.f32 %v7028, %v7060
      %v7072 = vadd.f32 %v7029, %v7060
      %v7073 = vadd.f32 %v7030, %v7060
      %v7074 = vadd.f32 %v7031, %v7060
      %v7075 = vadd.f32 %v7032, %v7060
      %v7076 = vadd.f32 %v7033, %v7060
      %v7077 = vadd.f32 %v7034, %v7060
      %v7078 = vadd.f32 %v7035, %v7060
      %v7079 = vadd.f32 %v7036, %v7060
      %v7080 = vadd.f32 %v7037, %v7060
      %v7081 = vadd.f32 %v7038, %v7060
      %v7082 = vadd.f32 %v7039, %v7060
      %v7083 = vadd.f32 %v7040, %v7060
      %v7084 = vadd.f32 %v7041, %v7060
      %v7085 = vadd.f32 %v7042, %v7060
      %v7086 = vadd.f32 %v7043, %v7060
      %v7087 = vadd.f32 %v7044, %v7060
      %v7088 = vadd.f32 %v7045, %v7060
      %v7089 = vadd.f32 %v7046, %v7060
      %v7090 = vadd.f32 %v7047, %v7060
      %v7091 = vadd.f32 %v7048, %v7060
      %v7092 = vadd.f32 %v7049, %v7060
      %v7093 = vadd.f32 %v7050, %v7060
      %v7094 = vadd.f32 %v7051, %v7060
      %v7095 = vadd.f32 %v7052, %v7060
      %v7096 = vadd.f32 %v7053, %v7060
      %v7097 = vadd.f32 %v7054, %v7060
      %v7098 = vmax.f32 %v7062, 0.0
      %v7099 = vmax.f32 %v7063, 0.0
      %v7100 = vmax.f32 %v7064, 0.0
      %v7101 = vmax.f32 %v7065, 0.0
      %v7102 = vmax.f32 %v7066, 0.0
      %v7103 = vmax.f32 %v7067, 0.0
      %v7104 = vmax.f32 %v7068, 0.0
      %v7105 = vmax.f32 %v7069, 0.0
      %v7106 = vmax.f32 %v7070, 0.0
      %v7107 = vmax.f32 %v7071, 0.0
      %v7108 = vmax.f32 %v7072, 0.0
      %v7109 = vmax.f32 %v7073, 0.0
      %v7110 = vmax.f32 %v7074, 0.0
      %v7111 = vmax.f32 %v7075, 0.0
      %v7112 = vmax.f32 %v7076, 0.0
      %v7113 = vmax.f32 %v7077, 0.0
      %v7114 = vmax.f32 %v7078, 0.0
      %v7115 = vmax.f32 %v7079, 0.0
      %v7116 = vmax.f32 %v7080, 0.0
      %v7117 = vmax.f32 %v7081, 0.0
      %v7118 = vmax.f32 %v7082, 0.0
      %v7119 = vmax.f32 %v7083, 0.0
      %v7120 = vmax.f32 %v7084, 0.0
      %v7121 = vmax.f32 %v7085, 0.0
      %v7122 = vmax.f32 %v7086, 0.0
      %v7123 = vmax.f32 %v7087, 0.0
      %v7124 = vmax.f32 %v7088, 0.0
      %v7125 = vmax.f32 %v7089, 0.0
      %v7126 = vmax.f32 %v7090, 0.0
      %v7127 = vmax.f32 %v7091, 0.0
      %v7128 = vmax.f32 %v7092, 0.0
      %v7129 = vmax.f32 %v7093, 0.0
      %v7130 = vmax.f32 %v7094, 0.0
      %v7131 = vmax.f32 %v7095, 0.0
      %v7132 = vmax.f32 %v7096, 0.0
      %v7133 = vmax.f32 %v7097, 0.0
      %v7134 = vpack.c.bf16 %v7099, %v7098
      %v7135 = vpack.c.bf16 %v7101, %v7100
      %v7136 = vpack.c.bf16 %v7103, %v7102
      %v7137 = vpack.c.bf16 %v7105, %v7104
      %v7138 = vpack.c.bf16 %v7107, %v7106
      %v7139 = vpack.c.bf16 %v7109, %v7108
      %v7140 = vpack.c.bf16 %v7111, %v7110
      %v7141 = vpack.c.bf16 %v7113, %v7112
      %v7142 = vpack.c.bf16 %v7115, %v7114
      %v7143 = vpack.c.bf16 %v7117, %v7116
      %v7144 = vpack.c.bf16 %v7119, %v7118
      %v7145 = vpack.c.bf16 %v7121, %v7120
      %v7146 = vpack.c.bf16 %v7123, %v7122
      %v7147 = vpack.c.bf16 %v7125, %v7124
      %v7148 = vpack.c.bf16 %v7127, %v7126
      %v7149 = vpack.c.bf16 %v7129, %v7128
      %v7150 = vpack.c.bf16 %v7131, %v7130
      %v7151 = vpack.c.bf16 %v7133, %v7132
      %v7170 = vunpack.c.l.b16 %v7134
      %v7171 = vunpack.c.h.b16 %v7134
      %v7172 = vunpack.c.l.b16 %v7135
      %v7173 = vunpack.c.h.b16 %v7135
      %v7174 = vunpack.c.l.b16 %v7136
      %v7175 = vunpack.c.h.b16 %v7136
      %v7176 = vunpack.c.l.b16 %v7137
      %v7177 = vunpack.c.h.b16 %v7137
      %v7178 = vunpack.c.l.b16 %v7138
      %v7179 = vunpack.c.h.b16 %v7138
      %v7180 = vunpack.c.l.b16 %v7139
      %v7181 = vunpack.c.h.b16 %v7139
      %v7182 = vunpack.c.l.b16 %v7140
      %v7183 = vunpack.c.h.b16 %v7140
      %v7184 = vunpack.c.l.b16 %v7141
      %v7185 = vunpack.c.h.b16 %v7141
      %v7186 = vunpack.c.l.b16 %v7142
      %v7187 = vunpack.c.h.b16 %v7142
      %v7188 = vunpack.c.l.b16 %v7143
      %v7189 = vunpack.c.h.b16 %v7143
      %v7190 = vunpack.c.l.b16 %v7144
      %v7191 = vunpack.c.h.b16 %v7144
      %v7192 = vunpack.c.l.b16 %v7145
      %v7193 = vunpack.c.h.b16 %v7145
      %v7194 = vunpack.c.l.b16 %v7146
      %v7195 = vunpack.c.h.b16 %v7146
      %v7196 = vunpack.c.l.b16 %v7147
      %v7197 = vunpack.c.h.b16 %v7147
      %v7198 = vunpack.c.l.b16 %v7148
      %v7199 = vunpack.c.h.b16 %v7148
      %v7200 = vunpack.c.l.b16 %v7149
      %v7201 = vunpack.c.h.b16 %v7149
      %v7202 = vunpack.c.l.b16 %v7150
      %v7203 = vunpack.c.h.b16 %v7150
      %v7204 = vunpack.c.l.b16 %v7151
      %v7205 = vunpack.c.h.b16 %v7151
      %v7206 = vpack.c.b16 %v7170, %v7170
      %v7207 = vpack.c.b16 %v7171, %v7171
      %v7208 = vpack.c.b16 %v7172, %v7172
      %v7209 = vpack.c.b16 %v7173, %v7173
      %v7210 = vpack.c.b16 %v7174, %v7174
      %v7211 = vpack.c.b16 %v7175, %v7175
      %v7212 = vpack.c.b16 %v7176, %v7176
      %v7213 = vpack.c.b16 %v7177, %v7177
      %v7214 = vpack.c.b16 %v7178, %v7178
      %v7215 = vpack.c.b16 %v7179, %v7179
      %v7216 = vpack.c.b16 %v7180, %v7180
      %v7217 = vpack.c.b16 %v7181, %v7181
      %v7218 = vpack.c.b16 %v7182, %v7182
      %v7219 = vpack.c.b16 %v7183, %v7183
      %v7220 = vpack.c.b16 %v7184, %v7184
      %v7221 = vpack.c.b16 %v7185, %v7185
      %v7222 = vpack.c.b16 %v7186, %v7186
      %v7223 = vpack.c.b16 %v7187, %v7187
      %v7224 = vpack.c.b16 %v7188, %v7188
      %v7225 = vpack.c.b16 %v7189, %v7189
      %v7226 = vpack.c.b16 %v7190, %v7190
      %v7227 = vpack.c.b16 %v7191, %v7191
      %v7228 = vpack.c.b16 %v7192, %v7192
      %v7229 = vpack.c.b16 %v7193, %v7193
      %v7230 = vpack.c.b16 %v7194, %v7194
      %v7231 = vpack.c.b16 %v7195, %v7195
      %v7232 = vpack.c.b16 %v7196, %v7196
      %v7233 = vpack.c.b16 %v7197, %v7197
      %v7234 = vpack.c.b16 %v7198, %v7198
      %v7235 = vpack.c.b16 %v7199, %v7199
      %v7236 = vpack.c.b16 %v7200, %v7200
      %v7237 = vpack.c.b16 %v7201, %v7201
      %v7238 = vpack.c.b16 %v7202, %v7202
      %v7239 = vpack.c.b16 %v7203, %v7203
      %v7240 = vpack.c.b16 %v7204, %v7204
      %v7241 = vpack.c.b16 %v7205, %v7205
      %v7243 = vshrl.u32 %v7206, 16
      %v7245 = vrot.slane %v7243, 7
      %v7246 = vshll.u32 %v7206, 16
      %v7248 = vor.u32 %v7245, %v7246
      %v7249 = vrot.slane %v7245, 4
      %v7251 = vshrl.u32 %v7207, 16
      %v7253 = vrot.slane %v7251, 7
      %v7254 = vshll.u32 %v7207, 16
      %v7256 = vor.u32 %v7253, %v7254
      %v7257 = vsel %vm623, %v7249, %v7256
      %v7258 = vrot.slane %v7253, 4
      %v7260 = vshrl.u32 %v7208, 16
      %v7262 = vrot.slane %v7260, 7
      %v7263 = vshll.u32 %v7208, 16
      %v7265 = vor.u32 %v7262, %v7263
      %v7266 = vrot.slane %v7262, 4
      %v7268 = vshrl.u32 %v7209, 16
      %v7270 = vrot.slane %v7268, 7
      %v7271 = vshll.u32 %v7209, 16
      %v7273 = vor.u32 %v7270, %v7271
      %v7274 = vsel %vm623, %v7266, %v7273
      %v7275 = vrot.slane %v7270, 4
      %v7277 = vshrl.u32 %v7210, 16
      %v7279 = vrot.slane %v7277, 7
      %v7280 = vshll.u32 %v7210, 16
      %v7282 = vor.u32 %v7279, %v7280
      %v7283 = vrot.slane %v7279, 4
      %v7285 = vshrl.u32 %v7211, 16
      %v7287 = vrot.slane %v7285, 7
      %v7288 = vshll.u32 %v7211, 16
      %v7290 = vor.u32 %v7287, %v7288
      %v7291 = vsel %vm623, %v7283, %v7290
      %v7292 = vrot.slane %v7287, 4
      %v7294 = vshrl.u32 %v7212, 16
      %v7296 = vrot.slane %v7294, 7
      %v7297 = vshll.u32 %v7212, 16
      %v7299 = vor.u32 %v7296, %v7297
      %v7300 = vrot.slane %v7296, 4
      %v7302 = vshrl.u32 %v7213, 16
      %v7304 = vrot.slane %v7302, 7
      %v7305 = vshll.u32 %v7213, 16
      %v7307 = vor.u32 %v7304, %v7305
      %v7308 = vsel %vm623, %v7300, %v7307
      %v7309 = vrot.slane %v7304, 4
      %v7311 = vshrl.u32 %v7214, 16
      %v7313 = vrot.slane %v7311, 7
      %v7314 = vshll.u32 %v7214, 16
      %v7316 = vor.u32 %v7313, %v7314
      %v7317 = vrot.slane %v7313, 4
      %v7319 = vshrl.u32 %v7215, 16
      %v7321 = vrot.slane %v7319, 7
      %v7322 = vshll.u32 %v7215, 16
      %v7324 = vor.u32 %v7321, %v7322
      %v7325 = vsel %vm623, %v7317, %v7324
      %v7326 = vrot.slane %v7321, 4
      %v7328 = vshrl.u32 %v7216, 16
      %v7330 = vrot.slane %v7328, 7
      %v7331 = vshll.u32 %v7216, 16
      %v7333 = vor.u32 %v7330, %v7331
      %v7334 = vrot.slane %v7330, 4
      %v7336 = vshrl.u32 %v7217, 16
      %v7338 = vrot.slane %v7336, 7
      %v7339 = vshll.u32 %v7217, 16
      %v7341 = vor.u32 %v7338, %v7339
      %v7342 = vsel %vm623, %v7334, %v7341
      %v7343 = vrot.slane %v7338, 4
      %v7345 = vshrl.u32 %v7218, 16
      %v7347 = vrot.slane %v7345, 7
      %v7348 = vshll.u32 %v7218, 16
      %v7350 = vor.u32 %v7347, %v7348
      %v7351 = vrot.slane %v7347, 4
      %v7353 = vshrl.u32 %v7219, 16
      %v7355 = vrot.slane %v7353, 7
      %v7356 = vshll.u32 %v7219, 16
      %v7358 = vor.u32 %v7355, %v7356
      %v7359 = vsel %vm623, %v7351, %v7358
      %v7360 = vrot.slane %v7355, 4
      %v7362 = vshrl.u32 %v7220, 16
      %v7364 = vrot.slane %v7362, 7
      %v7365 = vshll.u32 %v7220, 16
      %v7367 = vor.u32 %v7364, %v7365
      %v7368 = vrot.slane %v7364, 4
      %v7370 = vshrl.u32 %v7221, 16
      %v7372 = vrot.slane %v7370, 7
      %v7373 = vshll.u32 %v7221, 16
      %v7375 = vor.u32 %v7372, %v7373
      %v7376 = vsel %vm623, %v7368, %v7375
      %v7377 = vrot.slane %v7372, 4
      %v7379 = vshrl.u32 %v7222, 16
      %v7381 = vrot.slane %v7379, 7
      %v7382 = vshll.u32 %v7222, 16
      %v7384 = vor.u32 %v7381, %v7382
      %v7385 = vrot.slane %v7381, 4
      %v7387 = vshrl.u32 %v7223, 16
      %v7389 = vrot.slane %v7387, 7
      %v7390 = vshll.u32 %v7223, 16
      %v7392 = vor.u32 %v7389, %v7390
      %v7393 = vsel %vm623, %v7385, %v7392
      %v7394 = vrot.slane %v7389, 4
      %v7396 = vshrl.u32 %v7224, 16
      %v7398 = vrot.slane %v7396, 7
      %v7399 = vshll.u32 %v7224, 16
      %v7401 = vor.u32 %v7398, %v7399
      %v7402 = vrot.slane %v7398, 4
      %v7404 = vshrl.u32 %v7225, 16
      %v7406 = vrot.slane %v7404, 7
      %v7407 = vshll.u32 %v7225, 16
      %v7409 = vor.u32 %v7406, %v7407
      %v7410 = vsel %vm623, %v7402, %v7409
      %v7411 = vrot.slane %v7406, 4
      %v7413 = vshrl.u32 %v7226, 16
      %v7415 = vrot.slane %v7413, 7
      %v7416 = vshll.u32 %v7226, 16
      %v7418 = vor.u32 %v7415, %v7416
      %v7419 = vrot.slane %v7415, 4
      %v7421 = vshrl.u32 %v7227, 16
      %v7423 = vrot.slane %v7421, 7
      %v7424 = vshll.u32 %v7227, 16
      %v7426 = vor.u32 %v7423, %v7424
      %v7427 = vsel %vm623, %v7419, %v7426
      %v7428 = vrot.slane %v7423, 4
      %v7430 = vshrl.u32 %v7228, 16
      %v7432 = vrot.slane %v7430, 7
      %v7433 = vshll.u32 %v7228, 16
      %v7435 = vor.u32 %v7432, %v7433
      %v7436 = vrot.slane %v7432, 4
      %v7438 = vshrl.u32 %v7229, 16
      %v7440 = vrot.slane %v7438, 7
      %v7441 = vshll.u32 %v7229, 16
      %v7443 = vor.u32 %v7440, %v7441
      %v7444 = vsel %vm623, %v7436, %v7443
      %v7445 = vrot.slane %v7440, 4
      %v7447 = vshrl.u32 %v7230, 16
      %v7449 = vrot.slane %v7447, 7
      %v7450 = vshll.u32 %v7230, 16
      %v7452 = vor.u32 %v7449, %v7450
      %v7453 = vrot.slane %v7449, 4
      %v7455 = vshrl.u32 %v7231, 16
      %v7457 = vrot.slane %v7455, 7
      %v7458 = vshll.u32 %v7231, 16
      %v7460 = vor.u32 %v7457, %v7458
      %v7461 = vsel %vm623, %v7453, %v7460
      %v7462 = vrot.slane %v7457, 4
      %v7464 = vshrl.u32 %v7232, 16
      %v7466 = vrot.slane %v7464, 7
      %v7467 = vshll.u32 %v7232, 16
      %v7469 = vor.u32 %v7466, %v7467
      %v7470 = vrot.slane %v7466, 4
      %v7472 = vshrl.u32 %v7233, 16
      %v7474 = vrot.slane %v7472, 7
      %v7475 = vshll.u32 %v7233, 16
      %v7477 = vor.u32 %v7474, %v7475
      %v7478 = vsel %vm623, %v7470, %v7477
      %v7479 = vrot.slane %v7474, 4
      %v7481 = vshrl.u32 %v7234, 16
      %v7483 = vrot.slane %v7481, 7
      %v7484 = vshll.u32 %v7234, 16
      %v7486 = vor.u32 %v7483, %v7484
      %v7487 = vrot.slane %v7483, 4
      %v7489 = vshrl.u32 %v7235, 16
      %v7491 = vrot.slane %v7489, 7
      %v7492 = vshll.u32 %v7235, 16
      %v7494 = vor.u32 %v7491, %v7492
      %v7495 = vsel %vm623, %v7487, %v7494
      %v7496 = vrot.slane %v7491, 4
      %v7498 = vshrl.u32 %v7236, 16
      %v7500 = vrot.slane %v7498, 7
      %v7501 = vshll.u32 %v7236, 16
      %v7503 = vor.u32 %v7500, %v7501
      %v7504 = vrot.slane %v7500, 4
      %v7506 = vshrl.u32 %v7237, 16
      %v7508 = vrot.slane %v7506, 7
      %v7509 = vshll.u32 %v7237, 16
      %v7511 = vor.u32 %v7508, %v7509
      %v7512 = vsel %vm623, %v7504, %v7511
      %v7513 = vrot.slane %v7508, 4
      %v7515 = vshrl.u32 %v7238, 16
      %v7517 = vrot.slane %v7515, 7
      %v7518 = vshll.u32 %v7238, 16
      %v7520 = vor.u32 %v7517, %v7518
      %v7521 = vrot.slane %v7517, 4
      %v7523 = vshrl.u32 %v7239, 16
      %v7525 = vrot.slane %v7523, 7
      %v7526 = vshll.u32 %v7239, 16
      %v7528 = vor.u32 %v7525, %v7526
      %v7529 = vsel %vm623, %v7521, %v7528
      %v7530 = vrot.slane %v7525, 4
      %v7532 = vshrl.u32 %v7240, 16
      %v7534 = vrot.slane %v7532, 7
      %v7535 = vshll.u32 %v7240, 16
      %v7537 = vor.u32 %v7534, %v7535
      %v7538 = vrot.slane %v7534, 4
      %v7540 = vshrl.u32 %v7241, 16
      %v7542 = vrot.slane %v7540, 7
      %v7543 = vshll.u32 %v7241, 16
      %v7545 = vor.u32 %v7542, %v7543
      %v7546 = vsel %vm623, %v7538, %v7545
      %v7547 = vrot.slane %v7542, 4
      %v7602 = vld [vmem:[#allocation3] sm:$0xf]
      %v7603 = vsel %vm946, %v7248, %v7602
      %7604 = vst [vmem:[#allocation3] sm:$0xf] %v7603
      %7605 = vst.msk [vmem:[#allocation3 + $0x4] sm:$0xf] %vm950, %v7257
      %v7606 = vld [vmem:[#allocation3 + $0x8] sm:$0x1]
      %v7607 = vsel %vm477, %v7258, %v7606
      %7608 = vst [vmem:[#allocation3 + $0x8] sm:$0x1] %v7607
      %v7609 = vld [vmem:[#allocation3 + $0xc] sm:$0xf]
      %v7610 = vsel %vm946, %v7265, %v7609
      %7611 = vst [vmem:[#allocation3 + $0xc] sm:$0xf] %v7610
      %7612 = vst.msk [vmem:[#allocation3 + $0x10] sm:$0xf] %vm950, %v7274
      %v7613 = vld [vmem:[#allocation3 + $0x14] sm:$0x1]
      %v7614 = vsel %vm477, %v7275, %v7613
      %7615 = vst [vmem:[#allocation3 + $0x14] sm:$0x1] %v7614
      %v7616 = vld [vmem:[#allocation3 + $0x18] sm:$0xf]
      %v7617 = vsel %vm946, %v7282, %v7616
      %7618 = vst [vmem:[#allocation3 + $0x18] sm:$0xf] %v7617
      %7619 = vst.msk [vmem:[#allocation3 + $0x1c] sm:$0xf] %vm950, %v7291
      %v7620 = vld [vmem:[#allocation3 + $0x20] sm:$0x1]
      %v7621 = vsel %vm477, %v7292, %v7620
      %7622 = vst [vmem:[#allocation3 + $0x20] sm:$0x1] %v7621
      %v7623 = vld [vmem:[#allocation3 + $0x24] sm:$0xf]
      %v7624 = vsel %vm946, %v7299, %v7623
      %7625 = vst [vmem:[#allocation3 + $0x24] sm:$0xf] %v7624
      %7626 = vst.msk [vmem:[#allocation3 + $0x28] sm:$0xf] %vm950, %v7308
      %v7627 = vld [vmem:[#allocation3 + $0x2c] sm:$0x1]
      %v7628 = vsel %vm477, %v7309, %v7627
      %7629 = vst [vmem:[#allocation3 + $0x2c] sm:$0x1] %v7628
      %v7630 = vld [vmem:[#allocation3 + $0x30] sm:$0xf]
      %v7631 = vsel %vm946, %v7316, %v7630
      %7632 = vst [vmem:[#allocation3 + $0x30] sm:$0xf] %v7631
      %7633 = vst.msk [vmem:[#allocation3 + $0x34] sm:$0xf] %vm950, %v7325
      %v7634 = vld [vmem:[#allocation3 + $0x38] sm:$0x1]
      %v7635 = vsel %vm477, %v7326, %v7634
      %7636 = vst [vmem:[#allocation3 + $0x38] sm:$0x1] %v7635
      %v7637 = vld [vmem:[#allocation3 + $0x3c] sm:$0xf]
      %v7638 = vsel %vm946, %v7333, %v7637
      %7639 = vst [vmem:[#allocation3 + $0x3c] sm:$0xf] %v7638
      %7640 = vst.msk [vmem:[#allocation3 + $0x40] sm:$0xf] %vm950, %v7342
      %v7641 = vld [vmem:[#allocation3 + $0x44] sm:$0x1]
      %v7642 = vsel %vm477, %v7343, %v7641
      %7643 = vst [vmem:[#allocation3 + $0x44] sm:$0x1] %v7642
      %v7644 = vld [vmem:[#allocation3 + $0x48] sm:$0xf]
      %v7645 = vsel %vm946, %v7350, %v7644
      %7646 = vst [vmem:[#allocation3 + $0x48] sm:$0xf] %v7645
      %7647 = vst.msk [vmem:[#allocation3 + $0x4c] sm:$0xf] %vm950, %v7359
      %v7648 = vld [vmem:[#allocation3 + $0x50] sm:$0x1]
      %v7649 = vsel %vm477, %v7360, %v7648
      %7650 = vst [vmem:[#allocation3 + $0x50] sm:$0x1] %v7649
      %v7651 = vld [vmem:[#allocation3 + $0x54] sm:$0xf]
      %v7652 = vsel %vm946, %v7367, %v7651
      %7653 = vst [vmem:[#allocation3 + $0x54] sm:$0xf] %v7652
      %7654 = vst.msk [vmem:[#allocation3 + $0x58] sm:$0xf] %vm950, %v7376
      %v7655 = vld [vmem:[#allocation3 + $0x5c] sm:$0x1]
      %v7656 = vsel %vm477, %v7377, %v7655
      %7657 = vst [vmem:[#allocation3 + $0x5c] sm:$0x1] %v7656
      %v7658 = vld [vmem:[#allocation3 + $0x60] sm:$0xf]
      %v7659 = vsel %vm946, %v7384, %v7658
      %7660 = vst [vmem:[#allocation3 + $0x60] sm:$0xf] %v7659
      %7661 = vst.msk [vmem:[#allocation3 + $0x64] sm:$0xf] %vm950, %v7393
      %v7662 = vld [vmem:[#allocation3 + $0x68] sm:$0x1]
      %v7663 = vsel %vm477, %v7394, %v7662
      %7664 = vst [vmem:[#allocation3 + $0x68] sm:$0x1] %v7663
      %v7665 = vld [vmem:[#allocation3 + $0x6c] sm:$0xf]
      %v7666 = vsel %vm946, %v7401, %v7665
      %7667 = vst [vmem:[#allocation3 + $0x6c] sm:$0xf] %v7666
      %7668 = vst.msk [vmem:[#allocation3 + $0x70] sm:$0xf] %vm950, %v7410
      %v7669 = vld [vmem:[#allocation3 + $0x74] sm:$0x1]
      %v7670 = vsel %vm477, %v7411, %v7669
      %7671 = vst [vmem:[#allocation3 + $0x74] sm:$0x1] %v7670
      %v7672 = vld [vmem:[#allocation3 + $0x78] sm:$0xf]
      %v7673 = vsel %vm946, %v7418, %v7672
      %7674 = vst [vmem:[#allocation3 + $0x78] sm:$0xf] %v7673
      %7675 = vst.msk [vmem:[#allocation3 + $0x7c] sm:$0xf] %vm950, %v7427
      %v7676 = vld [vmem:[#allocation3 + $0x80] sm:$0x1]
      %v7677 = vsel %vm477, %v7428, %v7676
      %7678 = vst [vmem:[#allocation3 + $0x80] sm:$0x1] %v7677
      %v7679 = vld [vmem:[#allocation3 + $0x84] sm:$0xf]
      %v7680 = vsel %vm946, %v7435, %v7679
      %7681 = vst [vmem:[#allocation3 + $0x84] sm:$0xf] %v7680
      %7682 = vst.msk [vmem:[#allocation3 + $0x88] sm:$0xf] %vm950, %v7444
      %v7683 = vld [vmem:[#allocation3 + $0x8c] sm:$0x1]
      %v7684 = vsel %vm477, %v7445, %v7683
      %7685 = vst [vmem:[#allocation3 + $0x8c] sm:$0x1] %v7684
      %v7686 = vld [vmem:[#allocation3 + $0x90] sm:$0xf]
      %v7687 = vsel %vm946, %v7452, %v7686
      %7688 = vst [vmem:[#allocation3 + $0x90] sm:$0xf] %v7687
      %7689 = vst.msk [vmem:[#allocation3 + $0x94] sm:$0xf] %vm950, %v7461
      %v7690 = vld [vmem:[#allocation3 + $0x98] sm:$0x1]
      %v7691 = vsel %vm477, %v7462, %v7690
      %7692 = vst [vmem:[#allocation3 + $0x98] sm:$0x1] %v7691
      %v7693 = vld [vmem:[#allocation3 + $0x9c] sm:$0xf]
      %v7694 = vsel %vm946, %v7469, %v7693
      %7695 = vst [vmem:[#allocation3 + $0x9c] sm:$0xf] %v7694
      %7696 = vst.msk [vmem:[#allocation3 + $0xa0] sm:$0xf] %vm950, %v7478
      %v7697 = vld [vmem:[#allocation3 + $0xa4] sm:$0x1]
      %v7698 = vsel %vm477, %v7479, %v7697
      %7699 = vst [vmem:[#allocation3 + $0xa4] sm:$0x1] %v7698
      %v7700 = vld [vmem:[#allocation3 + $0xa8] sm:$0xf]
      %v7701 = vsel %vm946, %v7486, %v7700
      %7702 = vst [vmem:[#allocation3 + $0xa8] sm:$0xf] %v7701
      %7703 = vst.msk [vmem:[#allocation3 + $0xac] sm:$0xf] %vm950, %v7495
      %v7704 = vld [vmem:[#allocation3 + $0xb0] sm:$0x1]
      %v7705 = vsel %vm477, %v7496, %v7704
      %7706 = vst [vmem:[#allocation3 + $0xb0] sm:$0x1] %v7705
      %v7707 = vld [vmem:[#allocation3 + $0xb4] sm:$0xf]
      %v7708 = vsel %vm946, %v7503, %v7707
      %7709 = vst [vmem:[#allocation3 + $0xb4] sm:$0xf] %v7708
      %7710 = vst.msk [vmem:[#allocation3 + $0xb8] sm:$0xf] %vm950, %v7512
      %v7711 = vld [vmem:[#allocation3 + $0xbc] sm:$0x1]
      %v7712 = vsel %vm477, %v7513, %v7711
      %7713 = vst [vmem:[#allocation3 + $0xbc] sm:$0x1] %v7712
      %v7714 = vld [vmem:[#allocation3 + $0xc0] sm:$0xf]
      %v7715 = vsel %vm946, %v7520, %v7714
      %7716 = vst [vmem:[#allocation3 + $0xc0] sm:$0xf] %v7715
      %7717 = vst.msk [vmem:[#allocation3 + $0xc4] sm:$0xf] %vm950, %v7529
      %v7718 = vld [vmem:[#allocation3 + $0xc8] sm:$0x1]
      %v7719 = vsel %vm477, %v7530, %v7718
      %7720 = vst [vmem:[#allocation3 + $0xc8] sm:$0x1] %v7719
      %v7721 = vld [vmem:[#allocation3 + $0xcc] sm:$0xf]
      %v7722 = vsel %vm946, %v7537, %v7721
      %7723 = vst [vmem:[#allocation3 + $0xcc] sm:$0xf] %v7722
      %7724 = vst.msk [vmem:[#allocation3 + $0xd0] sm:$0xf] %vm950, %v7546
      %v7725 = vld [vmem:[#allocation3 + $0xd4] sm:$0x1]
      %v7726 = vsel %vm477, %v7547, %v7725
      %7727 = vst [vmem:[#allocation3 + $0xd4] sm:$0x1] %v7726
      // Predicated region
      $region69: #{up_forward.1} parent=51 // pred_check
        %p7728 = pneg %p1765
      $region70: #{up_forward.1} parent=51 // pred_check_branch
        %7730 = sbr.rel (%p7728) target = $region72
      $region71: #{up_forward.1} parent=51 // pred_region
        %7731 = vst.msk [vmem:[#allocation3] sm:$0xf] %vm950, 0
        %7732 = vst.msk [vmem:[#allocation3 + $0x4] sm:$0xf] %vm950, 0
        %vm7733 = vcmask 24576
        %7734 = vst.msk [vmem:[#allocation3 + $0x8] sm:$0x1] %vm7733, 0
        %s7735 = scalar_lea.vmem [#allocation3], 204
        %7736 = vst.msk [vmem:[%s7735] sm:$0xf] %vm950, 0
        %7737 = vst.msk [vmem:[%s7735 + $0x4] sm:$0xf] %vm950, 0
        %7738 = vst.msk [vmem:[%s7735 + $0x8] sm:$0x1] %vm7733, 0
      $region72: #{up_forward.1} parent=51 // pred_fallthru
        _
      %v7739 = vld [vmem:[#allocation3] sm:$0xf]
      %v7740 = vld [vmem:[#allocation3 + $0x4] sm:$0xf]
      %v7741 = vld [vmem:[#allocation3 + $0xc] sm:$0xf]
      %v7742 = vld [vmem:[#allocation3 + $0x10] sm:$0xf]
      %v7743 = vld [vmem:[#allocation3 + $0x18] sm:$0xf]
      %v7744 = vld [vmem:[#allocation3 + $0x1c] sm:$0xf]
      %v7745 = vld [vmem:[#allocation3 + $0x24] sm:$0xf]
      %v7746 = vld [vmem:[#allocation3 + $0x28] sm:$0xf]
      %v7747 = vld [vmem:[#allocation3 + $0x30] sm:$0xf]
      %v7748 = vld [vmem:[#allocation3 + $0x34] sm:$0xf]
      %v7749 = vld [vmem:[#allocation3 + $0x3c] sm:$0xf]
      %v7750 = vld [vmem:[#allocation3 + $0x40] sm:$0xf]
      %v7751 = vld [vmem:[#allocation3 + $0x48] sm:$0xf]
      %v7752 = vld [vmem:[#allocation3 + $0x4c] sm:$0xf]
      %v7753 = vld [vmem:[#allocation3 + $0x54] sm:$0xf]
      %v7754 = vld [vmem:[#allocation3 + $0x58] sm:$0xf]
      %v7755 = vld [vmem:[#allocation3 + $0x60] sm:$0xf]
      %v7756 = vld [vmem:[#allocation3 + $0x64] sm:$0xf]
      %v7757 = vld [vmem:[#allocation3 + $0x6c] sm:$0xf]
      %v7758 = vld [vmem:[#allocation3 + $0x70] sm:$0xf]
      %v7759 = vld [vmem:[#allocation3 + $0x78] sm:$0xf]
      %v7760 = vld [vmem:[#allocation3 + $0x7c] sm:$0xf]
      %v7761 = vld [vmem:[#allocation3 + $0x84] sm:$0xf]
      %v7762 = vld [vmem:[#allocation3 + $0x88] sm:$0xf]
      %v7763 = vld [vmem:[#allocation3 + $0x90] sm:$0xf]
      %v7764 = vld [vmem:[#allocation3 + $0x94] sm:$0xf]
      %v7765 = vld [vmem:[#allocation3 + $0x9c] sm:$0xf]
      %v7766 = vld [vmem:[#allocation3 + $0xa0] sm:$0xf]
      %v7767 = vld [vmem:[#allocation3 + $0xa8] sm:$0xf]
      %v7768 = vld [vmem:[#allocation3 + $0xac] sm:$0xf]
      %v7769 = vld [vmem:[#allocation3 + $0xb4] sm:$0xf]
      %v7770 = vld [vmem:[#allocation3 + $0xb8] sm:$0xf]
      %v7771 = vld [vmem:[%s5] sm:$0x3]
      %v7772 = vld [vmem:[#allocation3 + $0x8] sm:$0x1]
      %v7773 = vld [vmem:[#allocation3 + $0x14] sm:$0x1]
      %v7774 = vld [vmem:[#allocation3 + $0x20] sm:$0x1]
      %v7775 = vld [vmem:[#allocation3 + $0x2c] sm:$0x1]
      %v7776 = vld [vmem:[#allocation3 + $0x38] sm:$0x1]
      %v7777 = vld [vmem:[#allocation3 + $0x44] sm:$0x1]
      %v7778 = vld [vmem:[#allocation3 + $0x50] sm:$0x1]
      %v7779 = vld [vmem:[#allocation3 + $0x5c] sm:$0x1]
      %v7780 = vld [vmem:[#allocation3 + $0x68] sm:$0x1]
      %v7781 = vld [vmem:[#allocation3 + $0x74] sm:$0x1]
      %v7782 = vld [vmem:[#allocation3 + $0x80] sm:$0x1]
      %v7783 = vld [vmem:[#allocation3 + $0x8c] sm:$0x1]
      %v7784 = vld [vmem:[#allocation3 + $0x98] sm:$0x1]
      %v7785 = vld [vmem:[#allocation3 + $0xa4] sm:$0x1]
      %v7786 = vld [vmem:[#allocation3 + $0xb0] sm:$0x1]
      %v7787 = vld [vmem:[#allocation3 + $0xbc] sm:$0x1]
      %v7789 = vshrl.u32 %v7739, 16
      %v7791 = vrot.slane %v7789, 4
      %v7792 = vshll.u32 %v7739, 16
      %v7794 = vrot.slane %v7792, 5
      %v7795 = vor.u32 %v7791, %v7794
      %v7796 = vrot.slane %v7795, 4
      %v7798 = vshll.u32 %v7740, 16
      %v7800 = vrot.slane %v7798, 5
      %v7801 = vsel %vm1985, %v7796, %v7800
      %v7802 = vshrl.u32 %v7740, 16
      %v7804 = vrot.slane %v7802, 4
      %v7805 = vor.u32 %v7804, %v7800
      %v7806 = vrot.slane %v7805, 4
      %v7808 = vshll.u32 %v7772, 16
      %v7810 = vrot.slane %v7808, 5
      %v7811 = vsel %vm1985, %v7806, %v7810
      %v7813 = vshrl.u32 %v7741, 16
      %v7815 = vrot.slane %v7813, 4
      %v7816 = vshll.u32 %v7741, 16
      %v7818 = vrot.slane %v7816, 5
      %v7819 = vor.u32 %v7815, %v7818
      %v7820 = vrot.slane %v7819, 4
      %v7822 = vshll.u32 %v7742, 16
      %v7824 = vrot.slane %v7822, 5
      %v7825 = vsel %vm1985, %v7820, %v7824
      %v7826 = vshrl.u32 %v7742, 16
      %v7828 = vrot.slane %v7826, 4
      %v7829 = vor.u32 %v7828, %v7824
      %v7830 = vrot.slane %v7829, 4
      %v7832 = vshll.u32 %v7773, 16
      %v7834 = vrot.slane %v7832, 5
      %v7835 = vsel %vm1985, %v7830, %v7834
      %v7837 = vshrl.u32 %v7743, 16
      %v7839 = vrot.slane %v7837, 4
      %v7840 = vshll.u32 %v7743, 16
      %v7842 = vrot.slane %v7840, 5
      %v7843 = vor.u32 %v7839, %v7842
      %v7844 = vrot.slane %v7843, 4
      %v7846 = vshll.u32 %v7744, 16
      %v7848 = vrot.slane %v7846, 5
      %v7849 = vsel %vm1985, %v7844, %v7848
      %v7850 = vshrl.u32 %v7744, 16
      %v7852 = vrot.slane %v7850, 4
      %v7853 = vor.u32 %v7852, %v7848
      %v7854 = vrot.slane %v7853, 4
      %v7856 = vshll.u32 %v7774, 16
      %v7858 = vrot.slane %v7856, 5
      %v7859 = vsel %vm1985, %v7854, %v7858
      %v7861 = vshrl.u32 %v7745, 16
      %v7863 = vrot.slane %v7861, 4
      %v7864 = vshll.u32 %v7745, 16
      %v7866 = vrot.slane %v7864, 5
      %v7867 = vor.u32 %v7863, %v7866
      %v7868 = vrot.slane %v7867, 4
      %v7870 = vshll.u32 %v7746, 16
      %v7872 = vrot.slane %v7870, 5
      %v7873 = vsel %vm1985, %v7868, %v7872
      %v7874 = vshrl.u32 %v7746, 16
      %v7876 = vrot.slane %v7874, 4
      %v7877 = vor.u32 %v7876, %v7872
      %v7878 = vrot.slane %v7877, 4
      %v7880 = vshll.u32 %v7775, 16
      %v7882 = vrot.slane %v7880, 5
      %v7883 = vsel %vm1985, %v7878, %v7882
      %v7885 = vshrl.u32 %v7747, 16
      %v7887 = vrot.slane %v7885, 4
      %v7888 = vshll.u32 %v7747, 16
      %v7890 = vrot.slane %v7888, 5
      %v7891 = vor.u32 %v7887, %v7890
      %v7892 = vrot.slane %v7891, 4
      %v7894 = vshll.u32 %v7748, 16
      %v7896 = vrot.slane %v7894, 5
      %v7897 = vsel %vm1985, %v7892, %v7896
      %v7898 = vshrl.u32 %v7748, 16
      %v7900 = vrot.slane %v7898, 4
      %v7901 = vor.u32 %v7900, %v7896
      %v7902 = vrot.slane %v7901, 4
      %v7904 = vshll.u32 %v7776, 16
      %v7906 = vrot.slane %v7904, 5
      %v7907 = vsel %vm1985, %v7902, %v7906
      %v7909 = vshrl.u32 %v7749, 16
      %v7911 = vrot.slane %v7909, 4
      %v7912 = vshll.u32 %v7749, 16
      %v7914 = vrot.slane %v7912, 5
      %v7915 = vor.u32 %v7911, %v7914
      %v7916 = vrot.slane %v7915, 4
      %v7918 = vshll.u32 %v7750, 16
      %v7920 = vrot.slane %v7918, 5
      %v7921 = vsel %vm1985, %v7916, %v7920
      %v7922 = vshrl.u32 %v7750, 16
      %v7924 = vrot.slane %v7922, 4
      %v7925 = vor.u32 %v7924, %v7920
      %v7926 = vrot.slane %v7925, 4
      %v7928 = vshll.u32 %v7777, 16
      %v7930 = vrot.slane %v7928, 5
      %v7931 = vsel %vm1985, %v7926, %v7930
      %v7933 = vshrl.u32 %v7751, 16
      %v7935 = vrot.slane %v7933, 4
      %v7936 = vshll.u32 %v7751, 16
      %v7938 = vrot.slane %v7936, 5
      %v7939 = vor.u32 %v7935, %v7938
      %v7940 = vrot.slane %v7939, 4
      %v7942 = vshll.u32 %v7752, 16
      %v7944 = vrot.slane %v7942, 5
      %v7945 = vsel %vm1985, %v7940, %v7944
      %v7946 = vshrl.u32 %v7752, 16
      %v7948 = vrot.slane %v7946, 4
      %v7949 = vor.u32 %v7948, %v7944
      %v7950 = vrot.slane %v7949, 4
      %v7952 = vshll.u32 %v7778, 16
      %v7954 = vrot.slane %v7952, 5
      %v7955 = vsel %vm1985, %v7950, %v7954
      %v7957 = vshrl.u32 %v7753, 16
      %v7959 = vrot.slane %v7957, 4
      %v7960 = vshll.u32 %v7753, 16
      %v7962 = vrot.slane %v7960, 5
      %v7963 = vor.u32 %v7959, %v7962
      %v7964 = vrot.slane %v7963, 4
      %v7966 = vshll.u32 %v7754, 16
      %v7968 = vrot.slane %v7966, 5
      %v7969 = vsel %vm1985, %v7964, %v7968
      %v7970 = vshrl.u32 %v7754, 16
      %v7972 = vrot.slane %v7970, 4
      %v7973 = vor.u32 %v7972, %v7968
      %v7974 = vrot.slane %v7973, 4
      %v7976 = vshll.u32 %v7779, 16
      %v7978 = vrot.slane %v7976, 5
      %v7979 = vsel %vm1985, %v7974, %v7978
      %v7981 = vshrl.u32 %v7755, 16
      %v7983 = vrot.slane %v7981, 4
      %v7984 = vshll.u32 %v7755, 16
      %v7986 = vrot.slane %v7984, 5
      %v7987 = vor.u32 %v7983, %v7986
      %v7988 = vrot.slane %v7987, 4
      %v7990 = vshll.u32 %v7756, 16
      %v7992 = vrot.slane %v7990, 5
      %v7993 = vsel %vm1985, %v7988, %v7992
      %v7994 = vshrl.u32 %v7756, 16
      %v7996 = vrot.slane %v7994, 4
      %v7997 = vor.u32 %v7996, %v7992
      %v7998 = vrot.slane %v7997, 4
      %v8000 = vshll.u32 %v7780, 16
      %v8002 = vrot.slane %v8000, 5
      %v8003 = vsel %vm1985, %v7998, %v8002
      %v8005 = vshrl.u32 %v7757, 16
      %v8007 = vrot.slane %v8005, 4
      %v8008 = vshll.u32 %v7757, 16
      %v8010 = vrot.slane %v8008, 5
      %v8011 = vor.u32 %v8007, %v8010
      %v8012 = vrot.slane %v8011, 4
      %v8014 = vshll.u32 %v7758, 16
      %v8016 = vrot.slane %v8014, 5
      %v8017 = vsel %vm1985, %v8012, %v8016
      %v8018 = vshrl.u32 %v7758, 16
      %v8020 = vrot.slane %v8018, 4
      %v8021 = vor.u32 %v8020, %v8016
      %v8022 = vrot.slane %v8021, 4
      %v8024 = vshll.u32 %v7781, 16
      %v8026 = vrot.slane %v8024, 5
      %v8027 = vsel %vm1985, %v8022, %v8026
      %v8029 = vshrl.u32 %v7759, 16
      %v8031 = vrot.slane %v8029, 4
      %v8032 = vshll.u32 %v7759, 16
      %v8034 = vrot.slane %v8032, 5
      %v8035 = vor.u32 %v8031, %v8034
      %v8036 = vrot.slane %v8035, 4
      %v8038 = vshll.u32 %v7760, 16
      %v8040 = vrot.slane %v8038, 5
      %v8041 = vsel %vm1985, %v8036, %v8040
      %v8042 = vshrl.u32 %v7760, 16
      %v8044 = vrot.slane %v8042, 4
      %v8045 = vor.u32 %v8044, %v8040
      %v8046 = vrot.slane %v8045, 4
      %v8048 = vshll.u32 %v7782, 16
      %v8050 = vrot.slane %v8048, 5
      %v8051 = vsel %vm1985, %v8046, %v8050
      %v8053 = vshrl.u32 %v7761, 16
      %v8055 = vrot.slane %v8053, 4
      %v8056 = vshll.u32 %v7761, 16
      %v8058 = vrot.slane %v8056, 5
      %v8059 = vor.u32 %v8055, %v8058
      %v8060 = vrot.slane %v8059, 4
      %v8062 = vshll.u32 %v7762, 16
      %v8064 = vrot.slane %v8062, 5
      %v8065 = vsel %vm1985, %v8060, %v8064
      %v8066 = vshrl.u32 %v7762, 16
      %v8068 = vrot.slane %v8066, 4
      %v8069 = vor.u32 %v8068, %v8064
      %v8070 = vrot.slane %v8069, 4
      %v8072 = vshll.u32 %v7783, 16
      %v8074 = vrot.slane %v8072, 5
      %v8075 = vsel %vm1985, %v8070, %v8074
      %v8077 = vshrl.u32 %v7763, 16
      %v8079 = vrot.slane %v8077, 4
      %v8080 = vshll.u32 %v7763, 16
      %v8082 = vrot.slane %v8080, 5
      %v8083 = vor.u32 %v8079, %v8082
      %v8084 = vrot.slane %v8083, 4
      %v8086 = vshll.u32 %v7764, 16
      %v8088 = vrot.slane %v8086, 5
      %v8089 = vsel %vm1985, %v8084, %v8088
      %v8090 = vshrl.u32 %v7764, 16
      %v8092 = vrot.slane %v8090, 4
      %v8093 = vor.u32 %v8092, %v8088
      %v8094 = vrot.slane %v8093, 4
      %v8096 = vshll.u32 %v7784, 16
      %v8098 = vrot.slane %v8096, 5
      %v8099 = vsel %vm1985, %v8094, %v8098
      %v8101 = vshrl.u32 %v7765, 16
      %v8103 = vrot.slane %v8101, 4
      %v8104 = vshll.u32 %v7765, 16
      %v8106 = vrot.slane %v8104, 5
      %v8107 = vor.u32 %v8103, %v8106
      %v8108 = vrot.slane %v8107, 4
      %v8110 = vshll.u32 %v7766, 16
      %v8112 = vrot.slane %v8110, 5
      %v8113 = vsel %vm1985, %v8108, %v8112
      %v8114 = vshrl.u32 %v7766, 16
      %v8116 = vrot.slane %v8114, 4
      %v8117 = vor.u32 %v8116, %v8112
      %v8118 = vrot.slane %v8117, 4
      %v8120 = vshll.u32 %v7785, 16
      %v8122 = vrot.slane %v8120, 5
      %v8123 = vsel %vm1985, %v8118, %v8122
      %v8125 = vshrl.u32 %v7767, 16
      %v8127 = vrot.slane %v8125, 4
      %v8128 = vshll.u32 %v7767, 16
      %v8130 = vrot.slane %v8128, 5
      %v8131 = vor.u32 %v8127, %v8130
      %v8132 = vrot.slane %v8131, 4
      %v8134 = vshll.u32 %v7768, 16
      %v8136 = vrot.slane %v8134, 5
      %v8137 = vsel %vm1985, %v8132, %v8136
      %v8138 = vshrl.u32 %v7768, 16
      %v8140 = vrot.slane %v8138, 4
      %v8141 = vor.u32 %v8140, %v8136
      %v8142 = vrot.slane %v8141, 4
      %v8144 = vshll.u32 %v7786, 16
      %v8146 = vrot.slane %v8144, 5
      %v8147 = vsel %vm1985, %v8142, %v8146
      %v8149 = vshrl.u32 %v7769, 16
      %v8151 = vrot.slane %v8149, 4
      %v8152 = vshll.u32 %v7769, 16
      %v8154 = vrot.slane %v8152, 5
      %v8155 = vor.u32 %v8151, %v8154
      %v8156 = vrot.slane %v8155, 4
      %v8158 = vshll.u32 %v7770, 16
      %v8160 = vrot.slane %v8158, 5
      %v8161 = vsel %vm1985, %v8156, %v8160
      %v8162 = vshrl.u32 %v7770, 16
      %v8164 = vrot.slane %v8162, 4
      %v8165 = vor.u32 %v8164, %v8160
      %v8166 = vrot.slane %v8165, 4
      %v8168 = vshll.u32 %v7787, 16
      %v8170 = vrot.slane %v8168, 5
      %v8171 = vsel %vm1985, %v8166, %v8170
      %s8172 = scalar_lea.vmem %s5, 2
      %v8173 = vld [vmem:[%s8172] sm:$0x3]
      %v8174 = vunpack.c.l.b16 %v7801
      %v8175 = vunpack.c.l.b16 %v7811
      %v8176 = vunpack.c.l.b16 %v7825
      %v8177 = vunpack.c.l.b16 %v7835
      %v8178 = vunpack.c.l.b16 %v7849
      %v8179 = vunpack.c.l.b16 %v7859
      %v8180 = vunpack.c.l.b16 %v7873
      %v8181 = vunpack.c.l.b16 %v7883
      %v8182 = vunpack.c.l.b16 %v7897
      %v8183 = vunpack.c.l.b16 %v7907
      %v8184 = vunpack.c.l.b16 %v7921
      %v8185 = vunpack.c.l.b16 %v7931
      %v8186 = vunpack.c.l.b16 %v7945
      %v8187 = vunpack.c.l.b16 %v7955
      %v8188 = vunpack.c.l.b16 %v7969
      %v8189 = vunpack.c.l.b16 %v7979
      %v8190 = vunpack.c.l.b16 %v7993
      %v8191 = vunpack.c.l.b16 %v8003
      %v8192 = vunpack.c.l.b16 %v8017
      %v8193 = vunpack.c.l.b16 %v8027
      %v8194 = vunpack.c.l.b16 %v8041
      %v8195 = vunpack.c.l.b16 %v8051
      %v8196 = vunpack.c.l.b16 %v8065
      %v8197 = vunpack.c.l.b16 %v8075
      %v8198 = vunpack.c.l.b16 %v8089
      %v8199 = vunpack.c.l.b16 %v8099
      %v8200 = vunpack.c.l.b16 %v8113
      %v8201 = vunpack.c.l.b16 %v8123
      %v8202 = vunpack.c.l.b16 %v8137
      %v8203 = vunpack.c.l.b16 %v8147
      %v8204 = vunpack.c.l.b16 %v8161
      %v8205 = vunpack.c.l.b16 %v8171
      %v8206 = vpack.c.b16 %v8175, %v8174
      %v8207 = vpack.c.b16 %v8177, %v8176
      %v8208 = vpack.c.b16 %v8179, %v8178
      %v8209 = vpack.c.b16 %v8181, %v8180
      %v8210 = vpack.c.b16 %v8183, %v8182
      %v8211 = vpack.c.b16 %v8185, %v8184
      %v8212 = vpack.c.b16 %v8187, %v8186
      %v8213 = vpack.c.b16 %v8189, %v8188
      %v8214 = vpack.c.b16 %v8191, %v8190
      %v8215 = vpack.c.b16 %v8193, %v8192
      %v8216 = vpack.c.b16 %v8195, %v8194
      %v8217 = vpack.c.b16 %v8197, %v8196
      %v8218 = vpack.c.b16 %v8199, %v8198
      %v8219 = vpack.c.b16 %v8201, %v8200
      %v8220 = vpack.c.b16 %v8203, %v8202
      %v8221 = vpack.c.b16 %v8205, %v8204
      %vm8222 = vcmask 31744
      %v8224 = vsel %vm8222, %v8173, 0
      %v8227 = vsel %vm8222, %v8206, 0
      %v8230 = vsel %vm8222, %v8207, 0
      %v8233 = vsel %vm8222, %v8208, 0
      %v8236 = vsel %vm8222, %v8209, 0
      %v8239 = vsel %vm8222, %v8210, 0
      %v8242 = vsel %vm8222, %v8211, 0
      %v8245 = vsel %vm8222, %v8212, 0
      %v8248 = vsel %vm8222, %v8213, 0
      %v8251 = vsel %vm8222, %v8214, 0
      %v8254 = vsel %vm8222, %v8215, 0
      %v8257 = vsel %vm8222, %v8216, 0
      %v8260 = vsel %vm8222, %v8217, 0
      %v8263 = vsel %vm8222, %v8218, 0
      %v8266 = vsel %vm8222, %v8219, 0
      %v8269 = vsel %vm8222, %v8220, 0
      %v8272 = vsel %vm8222, %v8221, 0
      %8274 = vmatprep.subr.bf16.mxu0 0
      %8275 = vmatpush1.bf16.xpose.msra.mxu0 %v8248
      %8276 = vmatprep.subr.bf16.mxu0 0
      %8277 = vmatpush1.bf16.xpose.msra.mxu0 %v8245
      %8278 = vmatprep.subr.bf16.mxu0 0
      %8279 = vmatpush1.bf16.xpose.msra.mxu0 %v8242
      %8280 = vmatprep.subr.bf16.mxu0 0
      %8281 = vmatpush1.bf16.xpose.msra.mxu0 %v8239
      %8282 = vmatprep.subr.bf16.mxu0 0
      %8283 = vmatpush1.bf16.xpose.msra.mxu0 %v8236
      %8284 = vmatprep.subr.bf16.mxu0 0
      %8285 = vmatpush1.bf16.xpose.msra.mxu0 %v8233
      %8286 = vmatprep.subr.bf16.mxu0 0
      %8287 = vmatpush1.bf16.xpose.msra.mxu0 %v8230
      %8288 = vmatprep.subr.bf16.mxu0 0
      %8289 = vmatpush1.bf16.xpose.msra.mxu0 %v8227
      %8290 = vmatprep.subr.bf16.mxu0 0
      %8291 = vmatpush2.bf16.xpose.msra.mxu0 %v8272
      %8292 = vmatprep.subr.bf16.mxu0 0
      %8293 = vmatpush2.bf16.xpose.msra.mxu0 %v8269
      %8294 = vmatprep.subr.bf16.mxu0 0
      %8295 = vmatpush2.bf16.xpose.msra.mxu0 %v8266
      %8296 = vmatprep.subr.bf16.mxu0 0
      %8297 = vmatpush2.bf16.xpose.msra.mxu0 %v8263
      %8298 = vmatprep.subr.bf16.mxu0 0
      %8299 = vmatpush2.bf16.xpose.msra.mxu0 %v8260
      %8300 = vmatprep.subr.bf16.mxu0 0
      %8301 = vmatpush2.bf16.xpose.msra.mxu0 %v8257
      %8302 = vmatprep.subr.bf16.mxu0 0
      %8303 = vmatpush2.bf16.xpose.msra.mxu0 %v8254
      %8304 = vmatprep.subr.bf16.mxu0 0
      %8305 = vmatpush2.bf16.xpose.msra.mxu0 %v8251
      %8306 = vmatprep.mubr.bf16.mxu0 0
      %8307 = vmatmul.mubr.bf16.gmra.mxu0 %v8224
      %v8308 = vpop.f32.mrf.mxu0
      %v8309 = vadd.f32 0.0, %v8308
      %v8310 = vpop.f32.mrf.mxu0
      %v8311 = vadd.f32 0.0, %v8310
      %v8312 = vpop.f32.mrf.mxu0
      %v8313 = vpop.f32.mrf.mxu0
      %8314 = vdwg.mxu0
      %v8347 = vunpack.c.l.b16 %v7739
      %v8348 = vunpack.c.l.b16 %v7740
      %v8349 = vunpack.c.l.b16 %v7741
      %v8350 = vunpack.c.l.b16 %v7742
      %v8351 = vunpack.c.l.b16 %v7743
      %v8352 = vunpack.c.l.b16 %v7744
      %v8353 = vunpack.c.l.b16 %v7745
      %v8354 = vunpack.c.l.b16 %v7746
      %v8355 = vunpack.c.l.b16 %v7747
      %v8356 = vunpack.c.l.b16 %v7748
      %v8357 = vunpack.c.l.b16 %v7749
      %v8358 = vunpack.c.l.b16 %v7750
      %v8359 = vunpack.c.l.b16 %v7751
      %v8360 = vunpack.c.l.b16 %v7752
      %v8361 = vunpack.c.l.b16 %v7753
      %v8362 = vunpack.c.l.b16 %v7754
      %v8363 = vunpack.c.l.b16 %v7755
      %v8364 = vunpack.c.l.b16 %v7756
      %v8365 = vunpack.c.l.b16 %v7757
      %v8366 = vunpack.c.l.b16 %v7758
      %v8367 = vunpack.c.l.b16 %v7759
      %v8368 = vunpack.c.l.b16 %v7760
      %v8369 = vunpack.c.l.b16 %v7761
      %v8370 = vunpack.c.l.b16 %v7762
      %v8371 = vunpack.c.l.b16 %v7763
      %v8372 = vunpack.c.l.b16 %v7764
      %v8373 = vunpack.c.l.b16 %v7765
      %v8374 = vunpack.c.l.b16 %v7766
      %v8375 = vunpack.c.l.b16 %v7767
      %v8376 = vunpack.c.l.b16 %v7768
      %v8377 = vunpack.c.l.b16 %v7769
      %v8378 = vunpack.c.l.b16 %v7770
      %v8379 = vpack.c.b16 %v8348, %v8347
      %v8380 = vpack.c.b16 %v8350, %v8349
      %v8381 = vpack.c.b16 %v8352, %v8351
      %v8382 = vpack.c.b16 %v8354, %v8353
      %v8383 = vpack.c.b16 %v8356, %v8355
      %v8384 = vpack.c.b16 %v8358, %v8357
      %v8385 = vpack.c.b16 %v8360, %v8359
      %v8386 = vpack.c.b16 %v8362, %v8361
      %v8387 = vpack.c.b16 %v8364, %v8363
      %v8388 = vpack.c.b16 %v8366, %v8365
      %v8389 = vpack.c.b16 %v8368, %v8367
      %v8390 = vpack.c.b16 %v8370, %v8369
      %v8391 = vpack.c.b16 %v8372, %v8371
      %v8392 = vpack.c.b16 %v8374, %v8373
      %v8393 = vpack.c.b16 %v8376, %v8375
      %v8394 = vpack.c.b16 %v8378, %v8377
      %v8396 = vsel %vm8222, %v7771, 0
      %v8399 = vsel %vm8222, %v8379, 0
      %v8402 = vsel %vm8222, %v8380, 0
      %v8405 = vsel %vm8222, %v8381, 0
      %v8408 = vsel %vm8222, %v8382, 0
      %v8411 = vsel %vm8222, %v8383, 0
      %v8414 = vsel %vm8222, %v8384, 0
      %v8417 = vsel %vm8222, %v8385, 0
      %v8420 = vsel %vm8222, %v8386, 0
      %v8423 = vsel %vm8222, %v8387, 0
      %v8426 = vsel %vm8222, %v8388, 0
      %v8429 = vsel %vm8222, %v8389, 0
      %v8432 = vsel %vm8222, %v8390, 0
      %v8435 = vsel %vm8222, %v8391, 0
      %v8438 = vsel %vm8222, %v8392, 0
      %v8441 = vsel %vm8222, %v8393, 0
      %v8444 = vsel %vm8222, %v8394, 0
      %8446 = vmatprep.subr.bf16.mxu0 0
      %8447 = vmatpush1.bf16.xpose.msra.mxu0 %v8420
      %8448 = vmatprep.subr.bf16.mxu0 0
      %8449 = vmatpush1.bf16.xpose.msra.mxu0 %v8417
      %8450 = vmatprep.subr.bf16.mxu0 0
      %8451 = vmatpush1.bf16.xpose.msra.mxu0 %v8414
      %8452 = vmatprep.subr.bf16.mxu0 0
      %8453 = vmatpush1.bf16.xpose.msra.mxu0 %v8411
      %8454 = vmatprep.subr.bf16.mxu0 0
      %8455 = vmatpush1.bf16.xpose.msra.mxu0 %v8408
      %8456 = vmatprep.subr.bf16.mxu0 0
      %8457 = vmatpush1.bf16.xpose.msra.mxu0 %v8405
      %8458 = vmatprep.subr.bf16.mxu0 0
      %8459 = vmatpush1.bf16.xpose.msra.mxu0 %v8402
      %8460 = vmatprep.subr.bf16.mxu0 0
      %8461 = vmatpush1.bf16.xpose.msra.mxu0 %v8399
      %8462 = vmatprep.subr.bf16.mxu0 0
      %8463 = vmatpush2.bf16.xpose.msra.mxu0 %v8444
      %8464 = vmatprep.subr.bf16.mxu0 0
      %8465 = vmatpush2.bf16.xpose.msra.mxu0 %v8441
      %8466 = vmatprep.subr.bf16.mxu0 0
      %8467 = vmatpush2.bf16.xpose.msra.mxu0 %v8438
      %8468 = vmatprep.subr.bf16.mxu0 0
      %8469 = vmatpush2.bf16.xpose.msra.mxu0 %v8435
      %8470 = vmatprep.subr.bf16.mxu0 0
      %8471 = vmatpush2.bf16.xpose.msra.mxu0 %v8432
      %8472 = vmatprep.subr.bf16.mxu0 0
      %8473 = vmatpush2.bf16.xpose.msra.mxu0 %v8429
      %8474 = vmatprep.subr.bf16.mxu0 0
      %8475 = vmatpush2.bf16.xpose.msra.mxu0 %v8426
      %8476 = vmatprep.subr.bf16.mxu0 0
      %8477 = vmatpush2.bf16.xpose.msra.mxu0 %v8423
      %8478 = vmatprep.mubr.bf16.mxu0 0
      %8479 = vmatmul.mubr.bf16.gmra.mxu0 %v8396
      %v8480 = vpop.f32.mrf.mxu0
      %v8481 = vadd.f32 %v8309, %v8480
      %v8482 = vpop.f32.mrf.mxu0
      %v8483 = vadd.f32 %v8311, %v8482
      %v8484 = vpop.f32.mrf.mxu0
      %v8485 = vpop.f32.mrf.mxu0
      %8486 = vdwg.mxu0
      %v8487 = vld [vmem:[#allocation3] sm:$0xe]
      %v8488 = vld [vmem:[#allocation3 + $0xc] sm:$0xe]
      %v8489 = vld [vmem:[#allocation3 + $0x18] sm:$0xe]
      %v8490 = vld [vmem:[#allocation3 + $0x24] sm:$0xe]
      %v8491 = vld [vmem:[#allocation3 + $0x30] sm:$0xe]
      %v8492 = vld [vmem:[#allocation3 + $0x3c] sm:$0xe]
      %v8493 = vld [vmem:[#allocation3 + $0x48] sm:$0xe]
      %v8494 = vld [vmem:[#allocation3 + $0x54] sm:$0xe]
      %v8495 = vld [vmem:[#allocation3 + $0x60] sm:$0xe]
      %v8496 = vld [vmem:[#allocation3 + $0x6c] sm:$0xe]
      %v8497 = vld [vmem:[#allocation3 + $0x78] sm:$0xe]
      %v8498 = vld [vmem:[#allocation3 + $0x84] sm:$0xe]
      %v8499 = vld [vmem:[#allocation3 + $0x90] sm:$0xe]
      %v8500 = vld [vmem:[#allocation3 + $0x9c] sm:$0xe]
      %v8501 = vld [vmem:[#allocation3 + $0xa8] sm:$0xe]
      %v8502 = vld [vmem:[#allocation3 + $0xb4] sm:$0xe]
      %v8535 = vrot.slane %v8487, 5
      %v8536 = vrot.slane %v8535, 4
      %v8537 = vrot.slane %v7740, 5
      %v8538 = vsel %vm3090, %v8536, %v8537
      %v8539 = vrot.slane %v8537, 4
      %v8540 = vrot.slane %v7772, 5
      %v8541 = vsel %vm3090, %v8539, %v8540
      %v8542 = vrot.slane %v8488, 5
      %v8543 = vrot.slane %v8542, 4
      %v8544 = vrot.slane %v7742, 5
      %v8545 = vsel %vm3090, %v8543, %v8544
      %v8546 = vrot.slane %v8544, 4
      %v8547 = vrot.slane %v7773, 5
      %v8548 = vsel %vm3090, %v8546, %v8547
      %v8549 = vrot.slane %v8489, 5
      %v8550 = vrot.slane %v8549, 4
      %v8551 = vrot.slane %v7744, 5
      %v8552 = vsel %vm3090, %v8550, %v8551
      %v8553 = vrot.slane %v8551, 4
      %v8554 = vrot.slane %v7774, 5
      %v8555 = vsel %vm3090, %v8553, %v8554
      %v8556 = vrot.slane %v8490, 5
      %v8557 = vrot.slane %v8556, 4
      %v8558 = vrot.slane %v7746, 5
      %v8559 = vsel %vm3090, %v8557, %v8558
      %v8560 = vrot.slane %v8558, 4
      %v8561 = vrot.slane %v7775, 5
      %v8562 = vsel %vm3090, %v8560, %v8561
      %v8563 = vrot.slane %v8491, 5
      %v8564 = vrot.slane %v8563, 4
      %v8565 = vrot.slane %v7748, 5
      %v8566 = vsel %vm3090, %v8564, %v8565
      %v8567 = vrot.slane %v8565, 4
      %v8568 = vrot.slane %v7776, 5
      %v8569 = vsel %vm3090, %v8567, %v8568
      %v8570 = vrot.slane %v8492, 5
      %v8571 = vrot.slane %v8570, 4
      %v8572 = vrot.slane %v7750, 5
      %v8573 = vsel %vm3090, %v8571, %v8572
      %v8574 = vrot.slane %v8572, 4
      %v8575 = vrot.slane %v7777, 5
      %v8576 = vsel %vm3090, %v8574, %v8575
      %v8577 = vrot.slane %v8493, 5
      %v8578 = vrot.slane %v8577, 4
      %v8579 = vrot.slane %v7752, 5
      %v8580 = vsel %vm3090, %v8578, %v8579
      %v8581 = vrot.slane %v8579, 4
      %v8582 = vrot.slane %v7778, 5
      %v8583 = vsel %vm3090, %v8581, %v8582
      %v8584 = vrot.slane %v8494, 5
      %v8585 = vrot.slane %v8584, 4
      %v8586 = vrot.slane %v7754, 5
      %v8587 = vsel %vm3090, %v8585, %v8586
      %v8588 = vrot.slane %v8586, 4
      %v8589 = vrot.slane %v7779, 5
      %v8590 = vsel %vm3090, %v8588, %v8589
      %v8591 = vrot.slane %v8495, 5
      %v8592 = vrot.slane %v8591, 4
      %v8593 = vrot.slane %v7756, 5
      %v8594 = vsel %vm3090, %v8592, %v8593
      %v8595 = vrot.slane %v8593, 4
      %v8596 = vrot.slane %v7780, 5
      %v8597 = vsel %vm3090, %v8595, %v8596
      %v8598 = vrot.slane %v8496, 5
      %v8599 = vrot.slane %v8598, 4
      %v8600 = vrot.slane %v7758, 5
      %v8601 = vsel %vm3090, %v8599, %v8600
      %v8602 = vrot.slane %v8600, 4
      %v8603 = vrot.slane %v7781, 5
      %v8604 = vsel %vm3090, %v8602, %v8603
      %v8605 = vrot.slane %v8497, 5
      %v8606 = vrot.slane %v8605, 4
      %v8607 = vrot.slane %v7760, 5
      %v8608 = vsel %vm3090, %v8606, %v8607
      %v8609 = vrot.slane %v8607, 4
      %v8610 = vrot.slane %v7782, 5
      %v8611 = vsel %vm3090, %v8609, %v8610
      %v8612 = vrot.slane %v8498, 5
      %v8613 = vrot.slane %v8612, 4
      %v8614 = vrot.slane %v7762, 5
      %v8615 = vsel %vm3090, %v8613, %v8614
      %v8616 = vrot.slane %v8614, 4
      %v8617 = vrot.slane %v7783, 5
      %v8618 = vsel %vm3090, %v8616, %v8617
      %v8619 = vrot.slane %v8499, 5
      %v8620 = vrot.slane %v8619, 4
      %v8621 = vrot.slane %v7764, 5
      %v8622 = vsel %vm3090, %v8620, %v8621
      %v8623 = vrot.slane %v8621, 4
      %v8624 = vrot.slane %v7784, 5
      %v8625 = vsel %vm3090, %v8623, %v8624
      %v8626 = vrot.slane %v8500, 5
      %v8627 = vrot.slane %v8626, 4
      %v8628 = vrot.slane %v7766, 5
      %v8629 = vsel %vm3090, %v8627, %v8628
      %v8630 = vrot.slane %v8628, 4
      %v8631 = vrot.slane %v7785, 5
      %v8632 = vsel %vm3090, %v8630, %v8631
      %v8633 = vrot.slane %v8501, 5
      %v8634 = vrot.slane %v8633, 4
      %v8635 = vrot.slane %v7768, 5
      %v8636 = vsel %vm3090, %v8634, %v8635
      %v8637 = vrot.slane %v8635, 4
      %v8638 = vrot.slane %v7786, 5
      %v8639 = vsel %vm3090, %v8637, %v8638
      %v8640 = vrot.slane %v8502, 5
      %v8641 = vrot.slane %v8640, 4
      %v8642 = vrot.slane %v7770, 5
      %v8643 = vsel %vm3090, %v8641, %v8642
      %v8644 = vrot.slane %v8642, 4
      %v8645 = vrot.slane %v7787, 5
      %v8646 = vsel %vm3090, %v8644, %v8645
      %s8647 = scalar_lea.vmem %s5, 4
      %v8648 = vld [vmem:[%s8647] sm:$0x3]
      %v8649 = vunpack.c.l.b16 %v8538
      %v8650 = vunpack.c.l.b16 %v8541
      %v8651 = vunpack.c.l.b16 %v8545
      %v8652 = vunpack.c.l.b16 %v8548
      %v8653 = vunpack.c.l.b16 %v8552
      %v8654 = vunpack.c.l.b16 %v8555
      %v8655 = vunpack.c.l.b16 %v8559
      %v8656 = vunpack.c.l.b16 %v8562
      %v8657 = vunpack.c.l.b16 %v8566
      %v8658 = vunpack.c.l.b16 %v8569
      %v8659 = vunpack.c.l.b16 %v8573
      %v8660 = vunpack.c.l.b16 %v8576
      %v8661 = vunpack.c.l.b16 %v8580
      %v8662 = vunpack.c.l.b16 %v8583
      %v8663 = vunpack.c.l.b16 %v8587
      %v8664 = vunpack.c.l.b16 %v8590
      %v8665 = vunpack.c.l.b16 %v8594
      %v8666 = vunpack.c.l.b16 %v8597
      %v8667 = vunpack.c.l.b16 %v8601
      %v8668 = vunpack.c.l.b16 %v8604
      %v8669 = vunpack.c.l.b16 %v8608
      %v8670 = vunpack.c.l.b16 %v8611
      %v8671 = vunpack.c.l.b16 %v8615
      %v8672 = vunpack.c.l.b16 %v8618
      %v8673 = vunpack.c.l.b16 %v8622
      %v8674 = vunpack.c.l.b16 %v8625
      %v8675 = vunpack.c.l.b16 %v8629
      %v8676 = vunpack.c.l.b16 %v8632
      %v8677 = vunpack.c.l.b16 %v8636
      %v8678 = vunpack.c.l.b16 %v8639
      %v8679 = vunpack.c.l.b16 %v8643
      %v8680 = vunpack.c.l.b16 %v8646
      %v8681 = vpack.c.b16 %v8650, %v8649
      %v8682 = vpack.c.b16 %v8652, %v8651
      %v8683 = vpack.c.b16 %v8654, %v8653
      %v8684 = vpack.c.b16 %v8656, %v8655
      %v8685 = vpack.c.b16 %v8658, %v8657
      %v8686 = vpack.c.b16 %v8660, %v8659
      %v8687 = vpack.c.b16 %v8662, %v8661
      %v8688 = vpack.c.b16 %v8664, %v8663
      %v8689 = vpack.c.b16 %v8666, %v8665
      %v8690 = vpack.c.b16 %v8668, %v8667
      %v8691 = vpack.c.b16 %v8670, %v8669
      %v8692 = vpack.c.b16 %v8672, %v8671
      %v8693 = vpack.c.b16 %v8674, %v8673
      %v8694 = vpack.c.b16 %v8676, %v8675
      %v8695 = vpack.c.b16 %v8678, %v8677
      %v8696 = vpack.c.b16 %v8680, %v8679
      %v8698 = vsel %vm8222, %v8648, 0
      %v8701 = vsel %vm8222, %v8681, 0
      %v8704 = vsel %vm8222, %v8682, 0
      %v8707 = vsel %vm8222, %v8683, 0
      %v8710 = vsel %vm8222, %v8684, 0
      %v8713 = vsel %vm8222, %v8685, 0
      %v8716 = vsel %vm8222, %v8686, 0
      %v8719 = vsel %vm8222, %v8687, 0
      %v8722 = vsel %vm8222, %v8688, 0
      %v8725 = vsel %vm8222, %v8689, 0
      %v8728 = vsel %vm8222, %v8690, 0
      %v8731 = vsel %vm8222, %v8691, 0
      %v8734 = vsel %vm8222, %v8692, 0
      %v8737 = vsel %vm8222, %v8693, 0
      %v8740 = vsel %vm8222, %v8694, 0
      %v8743 = vsel %vm8222, %v8695, 0
      %v8746 = vsel %vm8222, %v8696, 0
      %8748 = vmatprep.subr.bf16.mxu0 0
      %8749 = vmatpush1.bf16.xpose.msra.mxu0 %v8722
      %8750 = vmatprep.subr.bf16.mxu0 0
      %8751 = vmatpush1.bf16.xpose.msra.mxu0 %v8719
      %8752 = vmatprep.subr.bf16.mxu0 0
      %8753 = vmatpush1.bf16.xpose.msra.mxu0 %v8716
      %8754 = vmatprep.subr.bf16.mxu0 0
      %8755 = vmatpush1.bf16.xpose.msra.mxu0 %v8713
      %8756 = vmatprep.subr.bf16.mxu0 0
      %8757 = vmatpush1.bf16.xpose.msra.mxu0 %v8710
      %8758 = vmatprep.subr.bf16.mxu0 0
      %8759 = vmatpush1.bf16.xpose.msra.mxu0 %v8707
      %8760 = vmatprep.subr.bf16.mxu0 0
      %8761 = vmatpush1.bf16.xpose.msra.mxu0 %v8704
      %8762 = vmatprep.subr.bf16.mxu0 0
      %8763 = vmatpush1.bf16.xpose.msra.mxu0 %v8701
      %8764 = vmatprep.subr.bf16.mxu0 0
      %8765 = vmatpush2.bf16.xpose.msra.mxu0 %v8746
      %8766 = vmatprep.subr.bf16.mxu0 0
      %8767 = vmatpush2.bf16.xpose.msra.mxu0 %v8743
      %8768 = vmatprep.subr.bf16.mxu0 0
      %8769 = vmatpush2.bf16.xpose.msra.mxu0 %v8740
      %8770 = vmatprep.subr.bf16.mxu0 0
      %8771 = vmatpush2.bf16.xpose.msra.mxu0 %v8737
      %8772 = vmatprep.subr.bf16.mxu0 0
      %8773 = vmatpush2.bf16.xpose.msra.mxu0 %v8734
      %8774 = vmatprep.subr.bf16.mxu0 0
      %8775 = vmatpush2.bf16.xpose.msra.mxu0 %v8731
      %8776 = vmatprep.subr.bf16.mxu0 0
      %8777 = vmatpush2.bf16.xpose.msra.mxu0 %v8728
      %8778 = vmatprep.subr.bf16.mxu0 0
      %8779 = vmatpush2.bf16.xpose.msra.mxu0 %v8725
      %8780 = vmatprep.mubr.bf16.mxu0 0
      %8781 = vmatmul.mubr.bf16.gmra.mxu0 %v8698
      %v8782 = vpop.f32.mrf.mxu0
      %v8783 = vadd.f32 0.0, %v8782
      %v8784 = vpop.f32.mrf.mxu0
      %v8785 = vadd.f32 0.0, %v8784
      %v8786 = vpop.f32.mrf.mxu0
      %v8787 = vpop.f32.mrf.mxu0
      %8788 = vdwg.mxu0
      %v8789 = vadd.f32 %v8481, %v8783
      %v8790 = vadd.f32 %v8483, %v8785
      %s8791 = scalar_lea.vmem [#allocation3], 12
      %v8792 = vld [vmem:[%s8791] sm:$0xf]
      %v8793 = vld [vmem:[%s8791 + $0x4] sm:$0xf]
      %v8794 = vld [vmem:[%s8791 + $0xc] sm:$0xf]
      %v8795 = vld [vmem:[%s8791 + $0x10] sm:$0xf]
      %v8796 = vld [vmem:[%s8791 + $0x18] sm:$0xf]
      %v8797 = vld [vmem:[%s8791 + $0x1c] sm:$0xf]
      %v8798 = vld [vmem:[%s8791 + $0x24] sm:$0xf]
      %v8799 = vld [vmem:[%s8791 + $0x28] sm:$0xf]
      %v8800 = vld [vmem:[%s8791 + $0x30] sm:$0xf]
      %v8801 = vld [vmem:[%s8791 + $0x34] sm:$0xf]
      %v8802 = vld [vmem:[%s8791 + $0x3c] sm:$0xf]
      %v8803 = vld [vmem:[%s8791 + $0x40] sm:$0xf]
      %v8804 = vld [vmem:[%s8791 + $0x48] sm:$0xf]
      %v8805 = vld [vmem:[%s8791 + $0x4c] sm:$0xf]
      %v8806 = vld [vmem:[%s8791 + $0x54] sm:$0xf]
      %v8807 = vld [vmem:[%s8791 + $0x58] sm:$0xf]
      %v8808 = vld [vmem:[%s8791 + $0x60] sm:$0xf]
      %v8809 = vld [vmem:[%s8791 + $0x64] sm:$0xf]
      %v8810 = vld [vmem:[%s8791 + $0x6c] sm:$0xf]
      %v8811 = vld [vmem:[%s8791 + $0x70] sm:$0xf]
      %v8812 = vld [vmem:[%s8791 + $0x78] sm:$0xf]
      %v8813 = vld [vmem:[%s8791 + $0x7c] sm:$0xf]
      %v8814 = vld [vmem:[%s8791 + $0x84] sm:$0xf]
      %v8815 = vld [vmem:[%s8791 + $0x88] sm:$0xf]
      %v8816 = vld [vmem:[%s8791 + $0x90] sm:$0xf]
      %v8817 = vld [vmem:[%s8791 + $0x94] sm:$0xf]
      %v8818 = vld [vmem:[%s8791 + $0x9c] sm:$0xf]
      %v8819 = vld [vmem:[%s8791 + $0xa0] sm:$0xf]
      %v8820 = vld [vmem:[%s8791 + $0xa8] sm:$0xf]
      %v8821 = vld [vmem:[%s8791 + $0xac] sm:$0xf]
      %v8822 = vld [vmem:[%s8791 + $0xb4] sm:$0xf]
      %v8823 = vld [vmem:[%s8791 + $0xb8] sm:$0xf]
      %s8824 = scalar_lea.vmem %s5, 6
      %v8825 = vld [vmem:[%s8824] sm:$0x3]
      %v8858 = vunpack.c.l.b16 %v8792
      %v8859 = vunpack.c.l.b16 %v8793
      %v8860 = vunpack.c.l.b16 %v8794
      %v8861 = vunpack.c.l.b16 %v8795
      %v8862 = vunpack.c.l.b16 %v8796
      %v8863 = vunpack.c.l.b16 %v8797
      %v8864 = vunpack.c.l.b16 %v8798
      %v8865 = vunpack.c.l.b16 %v8799
      %v8866 = vunpack.c.l.b16 %v8800
      %v8867 = vunpack.c.l.b16 %v8801
      %v8868 = vunpack.c.l.b16 %v8802
      %v8869 = vunpack.c.l.b16 %v8803
      %v8870 = vunpack.c.l.b16 %v8804
      %v8871 = vunpack.c.l.b16 %v8805
      %v8872 = vunpack.c.l.b16 %v8806
      %v8873 = vunpack.c.l.b16 %v8807
      %v8874 = vunpack.c.l.b16 %v8808
      %v8875 = vunpack.c.l.b16 %v8809
      %v8876 = vunpack.c.l.b16 %v8810
      %v8877 = vunpack.c.l.b16 %v8811
      %v8878 = vunpack.c.l.b16 %v8812
      %v8879 = vunpack.c.l.b16 %v8813
      %v8880 = vunpack.c.l.b16 %v8814
      %v8881 = vunpack.c.l.b16 %v8815
      %v8882 = vunpack.c.l.b16 %v8816
      %v8883 = vunpack.c.l.b16 %v8817
      %v8884 = vunpack.c.l.b16 %v8818
      %v8885 = vunpack.c.l.b16 %v8819
      %v8886 = vunpack.c.l.b16 %v8820
      %v8887 = vunpack.c.l.b16 %v8821
      %v8888 = vunpack.c.l.b16 %v8822
      %v8889 = vunpack.c.l.b16 %v8823
      %v8890 = vpack.c.b16 %v8859, %v8858
      %v8891 = vpack.c.b16 %v8861, %v8860
      %v8892 = vpack.c.b16 %v8863, %v8862
      %v8893 = vpack.c.b16 %v8865, %v8864
      %v8894 = vpack.c.b16 %v8867, %v8866
      %v8895 = vpack.c.b16 %v8869, %v8868
      %v8896 = vpack.c.b16 %v8871, %v8870
      %v8897 = vpack.c.b16 %v8873, %v8872
      %v8898 = vpack.c.b16 %v8875, %v8874
      %v8899 = vpack.c.b16 %v8877, %v8876
      %v8900 = vpack.c.b16 %v8879, %v8878
      %v8901 = vpack.c.b16 %v8881, %v8880
      %v8902 = vpack.c.b16 %v8883, %v8882
      %v8903 = vpack.c.b16 %v8885, %v8884
      %v8904 = vpack.c.b16 %v8887, %v8886
      %v8905 = vpack.c.b16 %v8889, %v8888
      %v8907 = vsel %vm8222, %v8825, 0
      %v8910 = vsel %vm8222, %v8890, 0
      %v8913 = vsel %vm8222, %v8891, 0
      %v8916 = vsel %vm8222, %v8892, 0
      %v8919 = vsel %vm8222, %v8893, 0
      %v8922 = vsel %vm8222, %v8894, 0
      %v8925 = vsel %vm8222, %v8895, 0
      %v8928 = vsel %vm8222, %v8896, 0
      %v8931 = vsel %vm8222, %v8897, 0
      %v8934 = vsel %vm8222, %v8898, 0
      %v8937 = vsel %vm8222, %v8899, 0
      %v8940 = vsel %vm8222, %v8900, 0
      %v8943 = vsel %vm8222, %v8901, 0
      %v8946 = vsel %vm8222, %v8902, 0
      %v8949 = vsel %vm8222, %v8903, 0
      %v8952 = vsel %vm8222, %v8904, 0
      %v8955 = vsel %vm8222, %v8905, 0
      %8957 = vmatprep.subr.bf16.mxu0 0
      %8958 = vmatpush1.bf16.xpose.msra.mxu0 %v8931
      %8959 = vmatprep.subr.bf16.mxu0 0
      %8960 = vmatpush1.bf16.xpose.msra.mxu0 %v8928
      %8961 = vmatprep.subr.bf16.mxu0 0
      %8962 = vmatpush1.bf16.xpose.msra.mxu0 %v8925
      %8963 = vmatprep.subr.bf16.mxu0 0
      %8964 = vmatpush1.bf16.xpose.msra.mxu0 %v8922
      %8965 = vmatprep.subr.bf16.mxu0 0
      %8966 = vmatpush1.bf16.xpose.msra.mxu0 %v8919
      %8967 = vmatprep.subr.bf16.mxu0 0
      %8968 = vmatpush1.bf16.xpose.msra.mxu0 %v8916
      %8969 = vmatprep.subr.bf16.mxu0 0
      %8970 = vmatpush1.bf16.xpose.msra.mxu0 %v8913
      %8971 = vmatprep.subr.bf16.mxu0 0
      %8972 = vmatpush1.bf16.xpose.msra.mxu0 %v8910
      %8973 = vmatprep.subr.bf16.mxu0 0
      %8974 = vmatpush2.bf16.xpose.msra.mxu0 %v8955
      %8975 = vmatprep.subr.bf16.mxu0 0
      %8976 = vmatpush2.bf16.xpose.msra.mxu0 %v8952
      %8977 = vmatprep.subr.bf16.mxu0 0
      %8978 = vmatpush2.bf16.xpose.msra.mxu0 %v8949
      %8979 = vmatprep.subr.bf16.mxu0 0
      %8980 = vmatpush2.bf16.xpose.msra.mxu0 %v8946
      %8981 = vmatprep.subr.bf16.mxu0 0
      %8982 = vmatpush2.bf16.xpose.msra.mxu0 %v8943
      %8983 = vmatprep.subr.bf16.mxu0 0
      %8984 = vmatpush2.bf16.xpose.msra.mxu0 %v8940
      %8985 = vmatprep.subr.bf16.mxu0 0
      %8986 = vmatpush2.bf16.xpose.msra.mxu0 %v8937
      %8987 = vmatprep.subr.bf16.mxu0 0
      %8988 = vmatpush2.bf16.xpose.msra.mxu0 %v8934
      %8989 = vmatprep.mubr.bf16.mxu0 0
      %8990 = vmatmul.mubr.bf16.gmra.mxu0 %v8907
      %v8991 = vpop.f32.mrf.mxu0
      %v8992 = vadd.f32 0.0, %v8991
      %v8993 = vpop.f32.mrf.mxu0
      %v8994 = vadd.f32 0.0, %v8993
      %v8995 = vpop.f32.mrf.mxu0
      %v8996 = vpop.f32.mrf.mxu0
      %8997 = vdwg.mxu0
      %v8998 = vadd.f32 %v8789, %v8992
      %v8999 = vadd.f32 %v8790, %v8994
      %v9000 = vld [vmem:[%s8791] sm:$0xf]
      %v9001 = vld [vmem:[%s8791 + $0x4] sm:$0xf]
      %v9002 = vld [vmem:[%s8791 + $0x8] sm:$0x1]
      %v9003 = vld [vmem:[%s8791 + $0xc] sm:$0xf]
      %v9004 = vld [vmem:[%s8791 + $0x10] sm:$0xf]
      %v9005 = vld [vmem:[%s8791 + $0x14] sm:$0x1]
      %v9006 = vld [vmem:[%s8791 + $0x18] sm:$0xf]
      %v9007 = vld [vmem:[%s8791 + $0x1c] sm:$0xf]
      %v9008 = vld [vmem:[%s8791 + $0x20] sm:$0x1]
      %v9009 = vld [vmem:[%s8791 + $0x24] sm:$0xf]
      %v9010 = vld [vmem:[%s8791 + $0x28] sm:$0xf]
      %v9011 = vld [vmem:[%s8791 + $0x2c] sm:$0x1]
      %v9012 = vld [vmem:[%s8791 + $0x30] sm:$0xf]
      %v9013 = vld [vmem:[%s8791 + $0x34] sm:$0xf]
      %v9014 = vld [vmem:[%s8791 + $0x38] sm:$0x1]
      %v9015 = vld [vmem:[%s8791 + $0x3c] sm:$0xf]
      %v9016 = vld [vmem:[%s8791 + $0x40] sm:$0xf]
      %v9017 = vld [vmem:[%s8791 + $0x44] sm:$0x1]
      %v9018 = vld [vmem:[%s8791 + $0x48] sm:$0xf]
      %v9019 = vld [vmem:[%s8791 + $0x4c] sm:$0xf]
      %v9020 = vld [vmem:[%s8791 + $0x50] sm:$0x1]
      %v9021 = vld [vmem:[%s8791 + $0x54] sm:$0xf]
      %v9022 = vld [vmem:[%s8791 + $0x58] sm:$0xf]
      %v9023 = vld [vmem:[%s8791 + $0x5c] sm:$0x1]
      %v9024 = vld [vmem:[%s8791 + $0x60] sm:$0xf]
      %v9025 = vld [vmem:[%s8791 + $0x64] sm:$0xf]
      %v9026 = vld [vmem:[%s8791 + $0x68] sm:$0x1]
      %v9027 = vld [vmem:[%s8791 + $0x6c] sm:$0xf]
      %v9028 = vld [vmem:[%s8791 + $0x70] sm:$0xf]
      %v9029 = vld [vmem:[%s8791 + $0x74] sm:$0x1]
      %v9030 = vld [vmem:[%s8791 + $0x78] sm:$0xf]
      %v9031 = vld [vmem:[%s8791 + $0x7c] sm:$0xf]
      %v9032 = vld [vmem:[%s8791 + $0x80] sm:$0x1]
      %v9033 = vld [vmem:[%s8791 + $0x84] sm:$0xf]
      %v9034 = vld [vmem:[%s8791 + $0x88] sm:$0xf]
      %v9035 = vld [vmem:[%s8791 + $0x8c] sm:$0x1]
      %v9036 = vld [vmem:[%s8791 + $0x90] sm:$0xf]
      %v9037 = vld [vmem:[%s8791 + $0x94] sm:$0xf]
      %v9038 = vld [vmem:[%s8791 + $0x98] sm:$0x1]
      %v9039 = vld [vmem:[%s8791 + $0x9c] sm:$0xf]
      %v9040 = vld [vmem:[%s8791 + $0xa0] sm:$0xf]
      %v9041 = vld [vmem:[%s8791 + $0xa4] sm:$0x1]
      %v9042 = vld [vmem:[%s8791 + $0xa8] sm:$0xf]
      %v9043 = vld [vmem:[%s8791 + $0xac] sm:$0xf]
      %v9044 = vld [vmem:[%s8791 + $0xb0] sm:$0x1]
      %v9045 = vld [vmem:[%s8791 + $0xb4] sm:$0xf]
      %v9046 = vld [vmem:[%s8791 + $0xb8] sm:$0xf]
      %v9047 = vld [vmem:[%s8791 + $0xbc] sm:$0x1]
      %v9049 = vshrl.u32 %v9000, 16
      %v9051 = vrot.slane %v9049, 4
      %v9052 = vshll.u32 %v9000, 16
      %v9054 = vrot.slane %v9052, 5
      %v9055 = vor.u32 %v9051, %v9054
      %v9056 = vrot.slane %v9055, 4
      %v9058 = vshll.u32 %v9001, 16
      %v9060 = vrot.slane %v9058, 5
      %v9061 = vsel %vm1985, %v9056, %v9060
      %v9062 = vshrl.u32 %v9001, 16
      %v9064 = vrot.slane %v9062, 4
      %v9065 = vor.u32 %v9064, %v9060
      %v9066 = vrot.slane %v9065, 4
      %v9068 = vshll.u32 %v9002, 16
      %v9070 = vrot.slane %v9068, 5
      %v9071 = vsel %vm1985, %v9066, %v9070
      %v9073 = vshrl.u32 %v9003, 16
      %v9075 = vrot.slane %v9073, 4
      %v9076 = vshll.u32 %v9003, 16
      %v9078 = vrot.slane %v9076, 5
      %v9079 = vor.u32 %v9075, %v9078
      %v9080 = vrot.slane %v9079, 4
      %v9082 = vshll.u32 %v9004, 16
      %v9084 = vrot.slane %v9082, 5
      %v9085 = vsel %vm1985, %v9080, %v9084
      %v9086 = vshrl.u32 %v9004, 16
      %v9088 = vrot.slane %v9086, 4
      %v9089 = vor.u32 %v9088, %v9084
      %v9090 = vrot.slane %v9089, 4
      %v9092 = vshll.u32 %v9005, 16
      %v9094 = vrot.slane %v9092, 5
      %v9095 = vsel %vm1985, %v9090, %v9094
      %v9097 = vshrl.u32 %v9006, 16
      %v9099 = vrot.slane %v9097, 4
      %v9100 = vshll.u32 %v9006, 16
      %v9102 = vrot.slane %v9100, 5
      %v9103 = vor.u32 %v9099, %v9102
      %v9104 = vrot.slane %v9103, 4
      %v9106 = vshll.u32 %v9007, 16
      %v9108 = vrot.slane %v9106, 5
      %v9109 = vsel %vm1985, %v9104, %v9108
      %v9110 = vshrl.u32 %v9007, 16
      %v9112 = vrot.slane %v9110, 4
      %v9113 = vor.u32 %v9112, %v9108
      %v9114 = vrot.slane %v9113, 4
      %v9116 = vshll.u32 %v9008, 16
      %v9118 = vrot.slane %v9116, 5
      %v9119 = vsel %vm1985, %v9114, %v9118
      %v9121 = vshrl.u32 %v9009, 16
      %v9123 = vrot.slane %v9121, 4
      %v9124 = vshll.u32 %v9009, 16
      %v9126 = vrot.slane %v9124, 5
      %v9127 = vor.u32 %v9123, %v9126
      %v9128 = vrot.slane %v9127, 4
      %v9130 = vshll.u32 %v9010, 16
      %v9132 = vrot.slane %v9130, 5
      %v9133 = vsel %vm1985, %v9128, %v9132
      %v9134 = vshrl.u32 %v9010, 16
      %v9136 = vrot.slane %v9134, 4
      %v9137 = vor.u32 %v9136, %v9132
      %v9138 = vrot.slane %v9137, 4
      %v9140 = vshll.u32 %v9011, 16
      %v9142 = vrot.slane %v9140, 5
      %v9143 = vsel %vm1985, %v9138, %v9142
      %v9145 = vshrl.u32 %v9012, 16
      %v9147 = vrot.slane %v9145, 4
      %v9148 = vshll.u32 %v9012, 16
      %v9150 = vrot.slane %v9148, 5
      %v9151 = vor.u32 %v9147, %v9150
      %v9152 = vrot.slane %v9151, 4
      %v9154 = vshll.u32 %v9013, 16
      %v9156 = vrot.slane %v9154, 5
      %v9157 = vsel %vm1985, %v9152, %v9156
      %v9158 = vshrl.u32 %v9013, 16
      %v9160 = vrot.slane %v9158, 4
      %v9161 = vor.u32 %v9160, %v9156
      %v9162 = vrot.slane %v9161, 4
      %v9164 = vshll.u32 %v9014, 16
      %v9166 = vrot.slane %v9164, 5
      %v9167 = vsel %vm1985, %v9162, %v9166
      %v9169 = vshrl.u32 %v9015, 16
      %v9171 = vrot.slane %v9169, 4
      %v9172 = vshll.u32 %v9015, 16
      %v9174 = vrot.slane %v9172, 5
      %v9175 = vor.u32 %v9171, %v9174
      %v9176 = vrot.slane %v9175, 4
      %v9178 = vshll.u32 %v9016, 16
      %v9180 = vrot.slane %v9178, 5
      %v9181 = vsel %vm1985, %v9176, %v9180
      %v9182 = vshrl.u32 %v9016, 16
      %v9184 = vrot.slane %v9182, 4
      %v9185 = vor.u32 %v9184, %v9180
      %v9186 = vrot.slane %v9185, 4
      %v9188 = vshll.u32 %v9017, 16
      %v9190 = vrot.slane %v9188, 5
      %v9191 = vsel %vm1985, %v9186, %v9190
      %v9193 = vshrl.u32 %v9018, 16
      %v9195 = vrot.slane %v9193, 4
      %v9196 = vshll.u32 %v9018, 16
      %v9198 = vrot.slane %v9196, 5
      %v9199 = vor.u32 %v9195, %v9198
      %v9200 = vrot.slane %v9199, 4
      %v9202 = vshll.u32 %v9019, 16
      %v9204 = vrot.slane %v9202, 5
      %v9205 = vsel %vm1985, %v9200, %v9204
      %v9206 = vshrl.u32 %v9019, 16
      %v9208 = vrot.slane %v9206, 4
      %v9209 = vor.u32 %v9208, %v9204
      %v9210 = vrot.slane %v9209, 4
      %v9212 = vshll.u32 %v9020, 16
      %v9214 = vrot.slane %v9212, 5
      %v9215 = vsel %vm1985, %v9210, %v9214
      %v9217 = vshrl.u32 %v9021, 16
      %v9219 = vrot.slane %v9217, 4
      %v9220 = vshll.u32 %v9021, 16
      %v9222 = vrot.slane %v9220, 5
      %v9223 = vor.u32 %v9219, %v9222
      %v9224 = vrot.slane %v9223, 4
      %v9226 = vshll.u32 %v9022, 16
      %v9228 = vrot.slane %v9226, 5
      %v9229 = vsel %vm1985, %v9224, %v9228
      %v9230 = vshrl.u32 %v9022, 16
      %v9232 = vrot.slane %v9230, 4
      %v9233 = vor.u32 %v9232, %v9228
      %v9234 = vrot.slane %v9233, 4
      %v9236 = vshll.u32 %v9023, 16
      %v9238 = vrot.slane %v9236, 5
      %v9239 = vsel %vm1985, %v9234, %v9238
      %v9241 = vshrl.u32 %v9024, 16
      %v9243 = vrot.slane %v9241, 4
      %v9244 = vshll.u32 %v9024, 16
      %v9246 = vrot.slane %v9244, 5
      %v9247 = vor.u32 %v9243, %v9246
      %v9248 = vrot.slane %v9247, 4
      %v9250 = vshll.u32 %v9025, 16
      %v9252 = vrot.slane %v9250, 5
      %v9253 = vsel %vm1985, %v9248, %v9252
      %v9254 = vshrl.u32 %v9025, 16
      %v9256 = vrot.slane %v9254, 4
      %v9257 = vor.u32 %v9256, %v9252
      %v9258 = vrot.slane %v9257, 4
      %v9260 = vshll.u32 %v9026, 16
      %v9262 = vrot.slane %v9260, 5
      %v9263 = vsel %vm1985, %v9258, %v9262
      %v9265 = vshrl.u32 %v9027, 16
      %v9267 = vrot.slane %v9265, 4
      %v9268 = vshll.u32 %v9027, 16
      %v9270 = vrot.slane %v9268, 5
      %v9271 = vor.u32 %v9267, %v9270
      %v9272 = vrot.slane %v9271, 4
      %v9274 = vshll.u32 %v9028, 16
      %v9276 = vrot.slane %v9274, 5
      %v9277 = vsel %vm1985, %v9272, %v9276
      %v9278 = vshrl.u32 %v9028, 16
      %v9280 = vrot.slane %v9278, 4
      %v9281 = vor.u32 %v9280, %v9276
      %v9282 = vrot.slane %v9281, 4
      %v9284 = vshll.u32 %v9029, 16
      %v9286 = vrot.slane %v9284, 5
      %v9287 = vsel %vm1985, %v9282, %v9286
      %v9289 = vshrl.u32 %v9030, 16
      %v9291 = vrot.slane %v9289, 4
      %v9292 = vshll.u32 %v9030, 16
      %v9294 = vrot.slane %v9292, 5
      %v9295 = vor.u32 %v9291, %v9294
      %v9296 = vrot.slane %v9295, 4
      %v9298 = vshll.u32 %v9031, 16
      %v9300 = vrot.slane %v9298, 5
      %v9301 = vsel %vm1985, %v9296, %v9300
      %v9302 = vshrl.u32 %v9031, 16
      %v9304 = vrot.slane %v9302, 4
      %v9305 = vor.u32 %v9304, %v9300
      %v9306 = vrot.slane %v9305, 4
      %v9308 = vshll.u32 %v9032, 16
      %v9310 = vrot.slane %v9308, 5
      %v9311 = vsel %vm1985, %v9306, %v9310
      %v9313 = vshrl.u32 %v9033, 16
      %v9315 = vrot.slane %v9313, 4
      %v9316 = vshll.u32 %v9033, 16
      %v9318 = vrot.slane %v9316, 5
      %v9319 = vor.u32 %v9315, %v9318
      %v9320 = vrot.slane %v9319, 4
      %v9322 = vshll.u32 %v9034, 16
      %v9324 = vrot.slane %v9322, 5
      %v9325 = vsel %vm1985, %v9320, %v9324
      %v9326 = vshrl.u32 %v9034, 16
      %v9328 = vrot.slane %v9326, 4
      %v9329 = vor.u32 %v9328, %v9324
      %v9330 = vrot.slane %v9329, 4
      %v9332 = vshll.u32 %v9035, 16
      %v9334 = vrot.slane %v9332, 5
      %v9335 = vsel %vm1985, %v9330, %v9334
      %v9337 = vshrl.u32 %v9036, 16
      %v9339 = vrot.slane %v9337, 4
      %v9340 = vshll.u32 %v9036, 16
      %v9342 = vrot.slane %v9340, 5
      %v9343 = vor.u32 %v9339, %v9342
      %v9344 = vrot.slane %v9343, 4
      %v9346 = vshll.u32 %v9037, 16
      %v9348 = vrot.slane %v9346, 5
      %v9349 = vsel %vm1985, %v9344, %v9348
      %v9350 = vshrl.u32 %v9037, 16
      %v9352 = vrot.slane %v9350, 4
      %v9353 = vor.u32 %v9352, %v9348
      %v9354 = vrot.slane %v9353, 4
      %v9356 = vshll.u32 %v9038, 16
      %v9358 = vrot.slane %v9356, 5
      %v9359 = vsel %vm1985, %v9354, %v9358
      %v9361 = vshrl.u32 %v9039, 16
      %v9363 = vrot.slane %v9361, 4
      %v9364 = vshll.u32 %v9039, 16
      %v9366 = vrot.slane %v9364, 5
      %v9367 = vor.u32 %v9363, %v9366
      %v9368 = vrot.slane %v9367, 4
      %v9370 = vshll.u32 %v9040, 16
      %v9372 = vrot.slane %v9370, 5
      %v9373 = vsel %vm1985, %v9368, %v9372
      %v9374 = vshrl.u32 %v9040, 16
      %v9376 = vrot.slane %v9374, 4
      %v9377 = vor.u32 %v9376, %v9372
      %v9378 = vrot.slane %v9377, 4
      %v9380 = vshll.u32 %v9041, 16
      %v9382 = vrot.slane %v9380, 5
      %v9383 = vsel %vm1985, %v9378, %v9382
      %v9385 = vshrl.u32 %v9042, 16
      %v9387 = vrot.slane %v9385, 4
      %v9388 = vshll.u32 %v9042, 16
      %v9390 = vrot.slane %v9388, 5
      %v9391 = vor.u32 %v9387, %v9390
      %v9392 = vrot.slane %v9391, 4
      %v9394 = vshll.u32 %v9043, 16
      %v9396 = vrot.slane %v9394, 5
      %v9397 = vsel %vm1985, %v9392, %v9396
      %v9398 = vshrl.u32 %v9043, 16
      %v9400 = vrot.slane %v9398, 4
      %v9401 = vor.u32 %v9400, %v9396
      %v9402 = vrot.slane %v9401, 4
      %v9404 = vshll.u32 %v9044, 16
      %v9406 = vrot.slane %v9404, 5
      %v9407 = vsel %vm1985, %v9402, %v9406
      %v9409 = vshrl.u32 %v9045, 16
      %v9411 = vrot.slane %v9409, 4
      %v9412 = vshll.u32 %v9045, 16
      %v9414 = vrot.slane %v9412, 5
      %v9415 = vor.u32 %v9411, %v9414
      %v9416 = vrot.slane %v9415, 4
      %v9418 = vshll.u32 %v9046, 16
      %v9420 = vrot.slane %v9418, 5
      %v9421 = vsel %vm1985, %v9416, %v9420
      %v9422 = vshrl.u32 %v9046, 16
      %v9424 = vrot.slane %v9422, 4
      %v9425 = vor.u32 %v9424, %v9420
      %v9426 = vrot.slane %v9425, 4
      %v9428 = vshll.u32 %v9047, 16
      %v9430 = vrot.slane %v9428, 5
      %v9431 = vsel %vm1985, %v9426, %v9430
      %s9432 = scalar_lea.vmem %s5, 8
      %v9433 = vld [vmem:[%s9432] sm:$0x3]
      %v9434 = vunpack.c.l.b16 %v9061
      %v9435 = vunpack.c.l.b16 %v9071
      %v9436 = vunpack.c.l.b16 %v9085
      %v9437 = vunpack.c.l.b16 %v9095
      %v9438 = vunpack.c.l.b16 %v9109
      %v9439 = vunpack.c.l.b16 %v9119
      %v9440 = vunpack.c.l.b16 %v9133
      %v9441 = vunpack.c.l.b16 %v9143
      %v9442 = vunpack.c.l.b16 %v9157
      %v9443 = vunpack.c.l.b16 %v9167
      %v9444 = vunpack.c.l.b16 %v9181
      %v9445 = vunpack.c.l.b16 %v9191
      %v9446 = vunpack.c.l.b16 %v9205
      %v9447 = vunpack.c.l.b16 %v9215
      %v9448 = vunpack.c.l.b16 %v9229
      %v9449 = vunpack.c.l.b16 %v9239
      %v9450 = vunpack.c.l.b16 %v9253
      %v9451 = vunpack.c.l.b16 %v9263
      %v9452 = vunpack.c.l.b16 %v9277
      %v9453 = vunpack.c.l.b16 %v9287
      %v9454 = vunpack.c.l.b16 %v9301
      %v9455 = vunpack.c.l.b16 %v9311
      %v9456 = vunpack.c.l.b16 %v9325
      %v9457 = vunpack.c.l.b16 %v9335
      %v9458 = vunpack.c.l.b16 %v9349
      %v9459 = vunpack.c.l.b16 %v9359
      %v9460 = vunpack.c.l.b16 %v9373
      %v9461 = vunpack.c.l.b16 %v9383
      %v9462 = vunpack.c.l.b16 %v9397
      %v9463 = vunpack.c.l.b16 %v9407
      %v9464 = vunpack.c.l.b16 %v9421
      %v9465 = vunpack.c.l.b16 %v9431
      %v9466 = vpack.c.b16 %v9435, %v9434
      %v9467 = vpack.c.b16 %v9437, %v9436
      %v9468 = vpack.c.b16 %v9439, %v9438
      %v9469 = vpack.c.b16 %v9441, %v9440
      %v9470 = vpack.c.b16 %v9443, %v9442
      %v9471 = vpack.c.b16 %v9445, %v9444
      %v9472 = vpack.c.b16 %v9447, %v9446
      %v9473 = vpack.c.b16 %v9449, %v9448
      %v9474 = vpack.c.b16 %v9451, %v9450
      %v9475 = vpack.c.b16 %v9453, %v9452
      %v9476 = vpack.c.b16 %v9455, %v9454
      %v9477 = vpack.c.b16 %v9457, %v9456
      %v9478 = vpack.c.b16 %v9459, %v9458
      %v9479 = vpack.c.b16 %v9461, %v9460
      %v9480 = vpack.c.b16 %v9463, %v9462
      %v9481 = vpack.c.b16 %v9465, %v9464
      %v9483 = vsel %vm8222, %v9433, 0
      %v9486 = vsel %vm8222, %v9466, 0
      %v9489 = vsel %vm8222, %v9467, 0
      %v9492 = vsel %vm8222, %v9468, 0
      %v9495 = vsel %vm8222, %v9469, 0
      %v9498 = vsel %vm8222, %v9470, 0
      %v9501 = vsel %vm8222, %v9471, 0
      %v9504 = vsel %vm8222, %v9472, 0
      %v9507 = vsel %vm8222, %v9473, 0
      %v9510 = vsel %vm8222, %v9474, 0
      %v9513 = vsel %vm8222, %v9475, 0
      %v9516 = vsel %vm8222, %v9476, 0
      %v9519 = vsel %vm8222, %v9477, 0
      %v9522 = vsel %vm8222, %v9478, 0
      %v9525 = vsel %vm8222, %v9479, 0
      %v9528 = vsel %vm8222, %v9480, 0
      %v9531 = vsel %vm8222, %v9481, 0
      %9533 = vmatprep.subr.bf16.mxu0 0
      %9534 = vmatpush1.bf16.xpose.msra.mxu0 %v9507
      %9535 = vmatprep.subr.bf16.mxu0 0
      %9536 = vmatpush1.bf16.xpose.msra.mxu0 %v9504
      %9537 = vmatprep.subr.bf16.mxu0 0
      %9538 = vmatpush1.bf16.xpose.msra.mxu0 %v9501
      %9539 = vmatprep.subr.bf16.mxu0 0
      %9540 = vmatpush1.bf16.xpose.msra.mxu0 %v9498
      %9541 = vmatprep.subr.bf16.mxu0 0
      %9542 = vmatpush1.bf16.xpose.msra.mxu0 %v9495
      %9543 = vmatprep.subr.bf16.mxu0 0
      %9544 = vmatpush1.bf16.xpose.msra.mxu0 %v9492
      %9545 = vmatprep.subr.bf16.mxu0 0
      %9546 = vmatpush1.bf16.xpose.msra.mxu0 %v9489
      %9547 = vmatprep.subr.bf16.mxu0 0
      %9548 = vmatpush1.bf16.xpose.msra.mxu0 %v9486
      %9549 = vmatprep.subr.bf16.mxu0 0
      %9550 = vmatpush2.bf16.xpose.msra.mxu0 %v9531
      %9551 = vmatprep.subr.bf16.mxu0 0
      %9552 = vmatpush2.bf16.xpose.msra.mxu0 %v9528
      %9553 = vmatprep.subr.bf16.mxu0 0
      %9554 = vmatpush2.bf16.xpose.msra.mxu0 %v9525
      %9555 = vmatprep.subr.bf16.mxu0 0
      %9556 = vmatpush2.bf16.xpose.msra.mxu0 %v9522
      %9557 = vmatprep.subr.bf16.mxu0 0
      %9558 = vmatpush2.bf16.xpose.msra.mxu0 %v9519
      %9559 = vmatprep.subr.bf16.mxu0 0
      %9560 = vmatpush2.bf16.xpose.msra.mxu0 %v9516
      %9561 = vmatprep.subr.bf16.mxu0 0
      %9562 = vmatpush2.bf16.xpose.msra.mxu0 %v9513
      %9563 = vmatprep.subr.bf16.mxu0 0
      %9564 = vmatpush2.bf16.xpose.msra.mxu0 %v9510
      %9565 = vmatprep.mubr.bf16.mxu0 0
      %9566 = vmatmul.mubr.bf16.gmra.mxu0 %v9483
      %v9567 = vpop.f32.mrf.mxu0
      %v9568 = vadd.f32 0.0, %v9567
      %v9569 = vpop.f32.mrf.mxu0
      %v9570 = vadd.f32 0.0, %v9569
      %v9571 = vpop.f32.mrf.mxu0
      %v9572 = vpop.f32.mrf.mxu0
      %9573 = vdwg.mxu0
      %v9574 = vadd.f32 %v8998, %v9568
      %v9575 = vadd.f32 %v8999, %v9570
      %v9576 = vld [vmem:[%s8791] sm:$0xe]
      %v9577 = vld [vmem:[%s8791 + $0xc] sm:$0xe]
      %v9578 = vld [vmem:[%s8791 + $0x18] sm:$0xe]
      %v9579 = vld [vmem:[%s8791 + $0x24] sm:$0xe]
      %v9580 = vld [vmem:[%s8791 + $0x30] sm:$0xe]
      %v9581 = vld [vmem:[%s8791 + $0x3c] sm:$0xe]
      %v9582 = vld [vmem:[%s8791 + $0x48] sm:$0xe]
      %v9583 = vld [vmem:[%s8791 + $0x54] sm:$0xe]
      %v9584 = vld [vmem:[%s8791 + $0x60] sm:$0xe]
      %v9585 = vld [vmem:[%s8791 + $0x6c] sm:$0xe]
      %v9586 = vld [vmem:[%s8791 + $0x78] sm:$0xe]
      %v9587 = vld [vmem:[%s8791 + $0x84] sm:$0xe]
      %v9588 = vld [vmem:[%s8791 + $0x90] sm:$0xe]
      %v9589 = vld [vmem:[%s8791 + $0x9c] sm:$0xe]
      %v9590 = vld [vmem:[%s8791 + $0xa8] sm:$0xe]
      %v9591 = vld [vmem:[%s8791 + $0xb4] sm:$0xe]
      %v9640 = vrot.slane %v9576, 5
      %v9641 = vrot.slane %v9640, 4
      %v9642 = vrot.slane %v9001, 5
      %v9643 = vsel %vm3090, %v9641, %v9642
      %v9644 = vrot.slane %v9642, 4
      %v9645 = vrot.slane %v9002, 5
      %v9646 = vsel %vm3090, %v9644, %v9645
      %v9647 = vrot.slane %v9577, 5
      %v9648 = vrot.slane %v9647, 4
      %v9649 = vrot.slane %v9004, 5
      %v9650 = vsel %vm3090, %v9648, %v9649
      %v9651 = vrot.slane %v9649, 4
      %v9652 = vrot.slane %v9005, 5
      %v9653 = vsel %vm3090, %v9651, %v9652
      %v9654 = vrot.slane %v9578, 5
      %v9655 = vrot.slane %v9654, 4
      %v9656 = vrot.slane %v9007, 5
      %v9657 = vsel %vm3090, %v9655, %v9656
      %v9658 = vrot.slane %v9656, 4
      %v9659 = vrot.slane %v9008, 5
      %v9660 = vsel %vm3090, %v9658, %v9659
      %v9661 = vrot.slane %v9579, 5
      %v9662 = vrot.slane %v9661, 4
      %v9663 = vrot.slane %v9010, 5
      %v9664 = vsel %vm3090, %v9662, %v9663
      %v9665 = vrot.slane %v9663, 4
      %v9666 = vrot.slane %v9011, 5
      %v9667 = vsel %vm3090, %v9665, %v9666
      %v9668 = vrot.slane %v9580, 5
      %v9669 = vrot.slane %v9668, 4
      %v9670 = vrot.slane %v9013, 5
      %v9671 = vsel %vm3090, %v9669, %v9670
      %v9672 = vrot.slane %v9670, 4
      %v9673 = vrot.slane %v9014, 5
      %v9674 = vsel %vm3090, %v9672, %v9673
      %v9675 = vrot.slane %v9581, 5
      %v9676 = vrot.slane %v9675, 4
      %v9677 = vrot.slane %v9016, 5
      %v9678 = vsel %vm3090, %v9676, %v9677
      %v9679 = vrot.slane %v9677, 4
      %v9680 = vrot.slane %v9017, 5
      %v9681 = vsel %vm3090, %v9679, %v9680
      %v9682 = vrot.slane %v9582, 5
      %v9683 = vrot.slane %v9682, 4
      %v9684 = vrot.slane %v9019, 5
      %v9685 = vsel %vm3090, %v9683, %v9684
      %v9686 = vrot.slane %v9684, 4
      %v9687 = vrot.slane %v9020, 5
      %v9688 = vsel %vm3090, %v9686, %v9687
      %v9689 = vrot.slane %v9583, 5
      %v9690 = vrot.slane %v9689, 4
      %v9691 = vrot.slane %v9022, 5
      %v9692 = vsel %vm3090, %v9690, %v9691
      %v9693 = vrot.slane %v9691, 4
      %v9694 = vrot.slane %v9023, 5
      %v9695 = vsel %vm3090, %v9693, %v9694
      %v9696 = vrot.slane %v9584, 5
      %v9697 = vrot.slane %v9696, 4
      %v9698 = vrot.slane %v9025, 5
      %v9699 = vsel %vm3090, %v9697, %v9698
      %v9700 = vrot.slane %v9698, 4
      %v9701 = vrot.slane %v9026, 5
      %v9702 = vsel %vm3090, %v9700, %v9701
      %v9703 = vrot.slane %v9585, 5
      %v9704 = vrot.slane %v9703, 4
      %v9705 = vrot.slane %v9028, 5
      %v9706 = vsel %vm3090, %v9704, %v9705
      %v9707 = vrot.slane %v9705, 4
      %v9708 = vrot.slane %v9029, 5
      %v9709 = vsel %vm3090, %v9707, %v9708
      %v9710 = vrot.slane %v9586, 5
      %v9711 = vrot.slane %v9710, 4
      %v9712 = vrot.slane %v9031, 5
      %v9713 = vsel %vm3090, %v9711, %v9712
      %v9714 = vrot.slane %v9712, 4
      %v9715 = vrot.slane %v9032, 5
      %v9716 = vsel %vm3090, %v9714, %v9715
      %v9717 = vrot.slane %v9587, 5
      %v9718 = vrot.slane %v9717, 4
      %v9719 = vrot.slane %v9034, 5
      %v9720 = vsel %vm3090, %v9718, %v9719
      %v9721 = vrot.slane %v9719, 4
      %v9722 = vrot.slane %v9035, 5
      %v9723 = vsel %vm3090, %v9721, %v9722
      %v9724 = vrot.slane %v9588, 5
      %v9725 = vrot.slane %v9724, 4
      %v9726 = vrot.slane %v9037, 5
      %v9727 = vsel %vm3090, %v9725, %v9726
      %v9728 = vrot.slane %v9726, 4
      %v9729 = vrot.slane %v9038, 5
      %v9730 = vsel %vm3090, %v9728, %v9729
      %v9731 = vrot.slane %v9589, 5
      %v9732 = vrot.slane %v9731, 4
      %v9733 = vrot.slane %v9040, 5
      %v9734 = vsel %vm3090, %v9732, %v9733
      %v9735 = vrot.slane %v9733, 4
      %v9736 = vrot.slane %v9041, 5
      %v9737 = vsel %vm3090, %v9735, %v9736
      %v9738 = vrot.slane %v9590, 5
      %v9739 = vrot.slane %v9738, 4
      %v9740 = vrot.slane %v9043, 5
      %v9741 = vsel %vm3090, %v9739, %v9740
      %v9742 = vrot.slane %v9740, 4
      %v9743 = vrot.slane %v9044, 5
      %v9744 = vsel %vm3090, %v9742, %v9743
      %v9745 = vrot.slane %v9591, 5
      %v9746 = vrot.slane %v9745, 4
      %v9747 = vrot.slane %v9046, 5
      %v9748 = vsel %vm3090, %v9746, %v9747
      %v9749 = vrot.slane %v9747, 4
      %v9750 = vrot.slane %v9047, 5
      %v9751 = vsel %vm3090, %v9749, %v9750
      %s9752 = scalar_lea.vmem %s5, 10
      %v9753 = vld [vmem:[%s9752] sm:$0x3]
      %v9754 = vunpack.c.l.b16 %v9643
      %v9755 = vunpack.c.l.b16 %v9646
      %v9756 = vunpack.c.l.b16 %v9650
      %v9757 = vunpack.c.l.b16 %v9653
      %v9758 = vunpack.c.l.b16 %v9657
      %v9759 = vunpack.c.l.b16 %v9660
      %v9760 = vunpack.c.l.b16 %v9664
      %v9761 = vunpack.c.l.b16 %v9667
      %v9762 = vunpack.c.l.b16 %v9671
      %v9763 = vunpack.c.l.b16 %v9674
      %v9764 = vunpack.c.l.b16 %v9678
      %v9765 = vunpack.c.l.b16 %v9681
      %v9766 = vunpack.c.l.b16 %v9685
      %v9767 = vunpack.c.l.b16 %v9688
      %v9768 = vunpack.c.l.b16 %v9692
      %v9769 = vunpack.c.l.b16 %v9695
      %v9770 = vunpack.c.l.b16 %v9699
      %v9771 = vunpack.c.l.b16 %v9702
      %v9772 = vunpack.c.l.b16 %v9706
      %v9773 = vunpack.c.l.b16 %v9709
      %v9774 = vunpack.c.l.b16 %v9713
      %v9775 = vunpack.c.l.b16 %v9716
      %v9776 = vunpack.c.l.b16 %v9720
      %v9777 = vunpack.c.l.b16 %v9723
      %v9778 = vunpack.c.l.b16 %v9727
      %v9779 = vunpack.c.l.b16 %v9730
      %v9780 = vunpack.c.l.b16 %v9734
      %v9781 = vunpack.c.l.b16 %v9737
      %v9782 = vunpack.c.l.b16 %v9741
      %v9783 = vunpack.c.l.b16 %v9744
      %v9784 = vunpack.c.l.b16 %v9748
      %v9785 = vunpack.c.l.b16 %v9751
      %v9786 = vpack.c.b16 %v9755, %v9754
      %v9787 = vpack.c.b16 %v9757, %v9756
      %v9788 = vpack.c.b16 %v9759, %v9758
      %v9789 = vpack.c.b16 %v9761, %v9760
      %v9790 = vpack.c.b16 %v9763, %v9762
      %v9791 = vpack.c.b16 %v9765, %v9764
      %v9792 = vpack.c.b16 %v9767, %v9766
      %v9793 = vpack.c.b16 %v9769, %v9768
      %v9794 = vpack.c.b16 %v9771, %v9770
      %v9795 = vpack.c.b16 %v9773, %v9772
      %v9796 = vpack.c.b16 %v9775, %v9774
      %v9797 = vpack.c.b16 %v9777, %v9776
      %v9798 = vpack.c.b16 %v9779, %v9778
      %v9799 = vpack.c.b16 %v9781, %v9780
      %v9800 = vpack.c.b16 %v9783, %v9782
      %v9801 = vpack.c.b16 %v9785, %v9784
      %v9803 = vsel %vm8222, %v9753, 0
      %v9806 = vsel %vm8222, %v9786, 0
      %v9809 = vsel %vm8222, %v9787, 0
      %v9812 = vsel %vm8222, %v9788, 0
      %v9815 = vsel %vm8222, %v9789, 0
      %v9818 = vsel %vm8222, %v9790, 0
      %v9821 = vsel %vm8222, %v9791, 0
      %v9824 = vsel %vm8222, %v9792, 0
      %v9827 = vsel %vm8222, %v9793, 0
      %v9830 = vsel %vm8222, %v9794, 0
      %v9833 = vsel %vm8222, %v9795, 0
      %v9836 = vsel %vm8222, %v9796, 0
      %v9839 = vsel %vm8222, %v9797, 0
      %v9842 = vsel %vm8222, %v9798, 0
      %v9845 = vsel %vm8222, %v9799, 0
      %v9848 = vsel %vm8222, %v9800, 0
      %v9851 = vsel %vm8222, %v9801, 0
      %9853 = vmatprep.subr.bf16.mxu0 0
      %9854 = vmatpush1.bf16.xpose.msra.mxu0 %v9827
      %9855 = vmatprep.subr.bf16.mxu0 0
      %9856 = vmatpush1.bf16.xpose.msra.mxu0 %v9824
      %9857 = vmatprep.subr.bf16.mxu0 0
      %9858 = vmatpush1.bf16.xpose.msra.mxu0 %v9821
      %9859 = vmatprep.subr.bf16.mxu0 0
      %9860 = vmatpush1.bf16.xpose.msra.mxu0 %v9818
      %9861 = vmatprep.subr.bf16.mxu0 0
      %9862 = vmatpush1.bf16.xpose.msra.mxu0 %v9815
      %9863 = vmatprep.subr.bf16.mxu0 0
      %9864 = vmatpush1.bf16.xpose.msra.mxu0 %v9812
      %9865 = vmatprep.subr.bf16.mxu0 0
      %9866 = vmatpush1.bf16.xpose.msra.mxu0 %v9809
      %9867 = vmatprep.subr.bf16.mxu0 0
      %9868 = vmatpush1.bf16.xpose.msra.mxu0 %v9806
      %9869 = vmatprep.subr.bf16.mxu0 0
      %9870 = vmatpush2.bf16.xpose.msra.mxu0 %v9851
      %9871 = vmatprep.subr.bf16.mxu0 0
      %9872 = vmatpush2.bf16.xpose.msra.mxu0 %v9848
      %9873 = vmatprep.subr.bf16.mxu0 0
      %9874 = vmatpush2.bf16.xpose.msra.mxu0 %v9845
      %9875 = vmatprep.subr.bf16.mxu0 0
      %9876 = vmatpush2.bf16.xpose.msra.mxu0 %v9842
      %9877 = vmatprep.subr.bf16.mxu0 0
      %9878 = vmatpush2.bf16.xpose.msra.mxu0 %v9839
      %9879 = vmatprep.subr.bf16.mxu0 0
      %9880 = vmatpush2.bf16.xpose.msra.mxu0 %v9836
      %9881 = vmatprep.subr.bf16.mxu0 0
      %9882 = vmatpush2.bf16.xpose.msra.mxu0 %v9833
      %9883 = vmatprep.subr.bf16.mxu0 0
      %9884 = vmatpush2.bf16.xpose.msra.mxu0 %v9830
      %9885 = vmatprep.mubr.bf16.mxu0 0
      %9886 = vmatmul.mubr.bf16.gmra.mxu0 %v9803
      %v9887 = vpop.f32.mrf.mxu0
      %v9888 = vadd.f32 0.0, %v9887
      %v9889 = vpop.f32.mrf.mxu0
      %v9890 = vadd.f32 0.0, %v9889
      %v9891 = vpop.f32.mrf.mxu0
      %v9892 = vpop.f32.mrf.mxu0
      %9893 = vdwg.mxu0
      %v9894 = vadd.f32 %v9574, %v9888
      %v9895 = vadd.f32 %v9575, %v9890
      %s9896 = scalar_lea.vmem [#allocation3], 24
      %v9897 = vld [vmem:[%s9896] sm:$0xf]
      %v9898 = vld [vmem:[%s9896 + $0x4] sm:$0xf]
      %v9899 = vld [vmem:[%s9896 + $0xc] sm:$0xf]
      %v9900 = vld [vmem:[%s9896 + $0x10] sm:$0xf]
      %v9901 = vld [vmem:[%s9896 + $0x18] sm:$0xf]
      %v9902 = vld [vmem:[%s9896 + $0x1c] sm:$0xf]
      %v9903 = vld [vmem:[%s9896 + $0x24] sm:$0xf]
      %v9904 = vld [vmem:[%s9896 + $0x28] sm:$0xf]
      %v9905 = vld [vmem:[%s9896 + $0x30] sm:$0xf]
      %v9906 = vld [vmem:[%s9896 + $0x34] sm:$0xf]
      %v9907 = vld [vmem:[%s9896 + $0x3c] sm:$0xf]
      %v9908 = vld [vmem:[%s9896 + $0x40] sm:$0xf]
      %v9909 = vld [vmem:[%s9896 + $0x48] sm:$0xf]
      %v9910 = vld [vmem:[%s9896 + $0x4c] sm:$0xf]
      %v9911 = vld [vmem:[%s9896 + $0x54] sm:$0xf]
      %v9912 = vld [vmem:[%s9896 + $0x58] sm:$0xf]
      %v9913 = vld [vmem:[%s9896 + $0x60] sm:$0xf]
      %v9914 = vld [vmem:[%s9896 + $0x64] sm:$0xf]
      %v9915 = vld [vmem:[%s9896 + $0x6c] sm:$0xf]
      %v9916 = vld [vmem:[%s9896 + $0x70] sm:$0xf]
      %v9917 = vld [vmem:[%s9896 + $0x78] sm:$0xf]
      %v9918 = vld [vmem:[%s9896 + $0x7c] sm:$0xf]
      %v9919 = vld [vmem:[%s9896 + $0x84] sm:$0xf]
      %v9920 = vld [vmem:[%s9896 + $0x88] sm:$0xf]
      %v9921 = vld [vmem:[%s9896 + $0x90] sm:$0xf]
      %v9922 = vld [vmem:[%s9896 + $0x94] sm:$0xf]
      %v9923 = vld [vmem:[%s9896 + $0x9c] sm:$0xf]
      %v9924 = vld [vmem:[%s9896 + $0xa0] sm:$0xf]
      %v9925 = vld [vmem:[%s9896 + $0xa8] sm:$0xf]
      %v9926 = vld [vmem:[%s9896 + $0xac] sm:$0xf]
      %v9927 = vld [vmem:[%s9896 + $0xb4] sm:$0xf]
      %v9928 = vld [vmem:[%s9896 + $0xb8] sm:$0xf]
      %s9929 = scalar_lea.vmem %s5, 12
      %v9930 = vld [vmem:[%s9929] sm:$0x3]
      %v9963 = vunpack.c.l.b16 %v9897
      %v9964 = vunpack.c.l.b16 %v9898
      %v9965 = vunpack.c.l.b16 %v9899
      %v9966 = vunpack.c.l.b16 %v9900
      %v9967 = vunpack.c.l.b16 %v9901
      %v9968 = vunpack.c.l.b16 %v9902
      %v9969 = vunpack.c.l.b16 %v9903
      %v9970 = vunpack.c.l.b16 %v9904
      %v9971 = vunpack.c.l.b16 %v9905
      %v9972 = vunpack.c.l.b16 %v9906
      %v9973 = vunpack.c.l.b16 %v9907
      %v9974 = vunpack.c.l.b16 %v9908
      %v9975 = vunpack.c.l.b16 %v9909
      %v9976 = vunpack.c.l.b16 %v9910
      %v9977 = vunpack.c.l.b16 %v9911
      %v9978 = vunpack.c.l.b16 %v9912
      %v9979 = vunpack.c.l.b16 %v9913
      %v9980 = vunpack.c.l.b16 %v9914
      %v9981 = vunpack.c.l.b16 %v9915
      %v9982 = vunpack.c.l.b16 %v9916
      %v9983 = vunpack.c.l.b16 %v9917
      %v9984 = vunpack.c.l.b16 %v9918
      %v9985 = vunpack.c.l.b16 %v9919
      %v9986 = vunpack.c.l.b16 %v9920
      %v9987 = vunpack.c.l.b16 %v9921
      %v9988 = vunpack.c.l.b16 %v9922
      %v9989 = vunpack.c.l.b16 %v9923
      %v9990 = vunpack.c.l.b16 %v9924
      %v9991 = vunpack.c.l.b16 %v9925
      %v9992 = vunpack.c.l.b16 %v9926
      %v9993 = vunpack.c.l.b16 %v9927
      %v9994 = vunpack.c.l.b16 %v9928
      %v9995 = vpack.c.b16 %v9964, %v9963
      %v9996 = vpack.c.b16 %v9966, %v9965
      %v9997 = vpack.c.b16 %v9968, %v9967
      %v9998 = vpack.c.b16 %v9970, %v9969
      %v9999 = vpack.c.b16 %v9972, %v9971
      %v10000 = vpack.c.b16 %v9974, %v9973
      %v10001 = vpack.c.b16 %v9976, %v9975
      %v10002 = vpack.c.b16 %v9978, %v9977
      %v10003 = vpack.c.b16 %v9980, %v9979
      %v10004 = vpack.c.b16 %v9982, %v9981
      %v10005 = vpack.c.b16 %v9984, %v9983
      %v10006 = vpack.c.b16 %v9986, %v9985
      %v10007 = vpack.c.b16 %v9988, %v9987
      %v10008 = vpack.c.b16 %v9990, %v9989
      %v10009 = vpack.c.b16 %v9992, %v9991
      %v10010 = vpack.c.b16 %v9994, %v9993
      %v10012 = vsel %vm8222, %v9930, 0
      %v10015 = vsel %vm8222, %v9995, 0
      %v10018 = vsel %vm8222, %v9996, 0
      %v10021 = vsel %vm8222, %v9997, 0
      %v10024 = vsel %vm8222, %v9998, 0
      %v10027 = vsel %vm8222, %v9999, 0
      %v10030 = vsel %vm8222, %v10000, 0
      %v10033 = vsel %vm8222, %v10001, 0
      %v10036 = vsel %vm8222, %v10002, 0
      %v10039 = vsel %vm8222, %v10003, 0
      %v10042 = vsel %vm8222, %v10004, 0
      %v10045 = vsel %vm8222, %v10005, 0
      %v10048 = vsel %vm8222, %v10006, 0
      %v10051 = vsel %vm8222, %v10007, 0
      %v10054 = vsel %vm8222, %v10008, 0
      %v10057 = vsel %vm8222, %v10009, 0
      %v10060 = vsel %vm8222, %v10010, 0
      %10062 = vmatprep.subr.bf16.mxu0 0
      %10063 = vmatpush1.bf16.xpose.msra.mxu0 %v10036
      %10064 = vmatprep.subr.bf16.mxu0 0
      %10065 = vmatpush1.bf16.xpose.msra.mxu0 %v10033
      %10066 = vmatprep.subr.bf16.mxu0 0
      %10067 = vmatpush1.bf16.xpose.msra.mxu0 %v10030
      %10068 = vmatprep.subr.bf16.mxu0 0
      %10069 = vmatpush1.bf16.xpose.msra.mxu0 %v10027
      %10070 = vmatprep.subr.bf16.mxu0 0
      %10071 = vmatpush1.bf16.xpose.msra.mxu0 %v10024
      %10072 = vmatprep.subr.bf16.mxu0 0
      %10073 = vmatpush1.bf16.xpose.msra.mxu0 %v10021
      %10074 = vmatprep.subr.bf16.mxu0 0
      %10075 = vmatpush1.bf16.xpose.msra.mxu0 %v10018
      %10076 = vmatprep.subr.bf16.mxu0 0
      %10077 = vmatpush1.bf16.xpose.msra.mxu0 %v10015
      %10078 = vmatprep.subr.bf16.mxu0 0
      %10079 = vmatpush2.bf16.xpose.msra.mxu0 %v10060
      %10080 = vmatprep.subr.bf16.mxu0 0
      %10081 = vmatpush2.bf16.xpose.msra.mxu0 %v10057
      %10082 = vmatprep.subr.bf16.mxu0 0
      %10083 = vmatpush2.bf16.xpose.msra.mxu0 %v10054
      %10084 = vmatprep.subr.bf16.mxu0 0
      %10085 = vmatpush2.bf16.xpose.msra.mxu0 %v10051
      %10086 = vmatprep.subr.bf16.mxu0 0
      %10087 = vmatpush2.bf16.xpose.msra.mxu0 %v10048
      %10088 = vmatprep.subr.bf16.mxu0 0
      %10089 = vmatpush2.bf16.xpose.msra.mxu0 %v10045
      %10090 = vmatprep.subr.bf16.mxu0 0
      %10091 = vmatpush2.bf16.xpose.msra.mxu0 %v10042
      %10092 = vmatprep.subr.bf16.mxu0 0
      %10093 = vmatpush2.bf16.xpose.msra.mxu0 %v10039
      %10094 = vmatprep.mubr.bf16.mxu0 0
      %10095 = vmatmul.mubr.bf16.gmra.mxu0 %v10012
      %v10096 = vpop.f32.mrf.mxu0
      %v10097 = vadd.f32 0.0, %v10096
      %v10098 = vpop.f32.mrf.mxu0
      %v10099 = vadd.f32 0.0, %v10098
      %v10100 = vpop.f32.mrf.mxu0
      %v10101 = vpop.f32.mrf.mxu0
      %10102 = vdwg.mxu0
      %v10103 = vadd.f32 %v9894, %v10097
      %v10104 = vadd.f32 %v9895, %v10099
      %v10105 = vld [vmem:[%s9896] sm:$0xf]
      %v10106 = vld [vmem:[%s9896 + $0x4] sm:$0xf]
      %v10107 = vld [vmem:[%s9896 + $0x8] sm:$0x1]
      %v10108 = vld [vmem:[%s9896 + $0xc] sm:$0xf]
      %v10109 = vld [vmem:[%s9896 + $0x10] sm:$0xf]
      %v10110 = vld [vmem:[%s9896 + $0x14] sm:$0x1]
      %v10111 = vld [vmem:[%s9896 + $0x18] sm:$0xf]
      %v10112 = vld [vmem:[%s9896 + $0x1c] sm:$0xf]
      %v10113 = vld [vmem:[%s9896 + $0x20] sm:$0x1]
      %v10114 = vld [vmem:[%s9896 + $0x24] sm:$0xf]
      %v10115 = vld [vmem:[%s9896 + $0x28] sm:$0xf]
      %v10116 = vld [vmem:[%s9896 + $0x2c] sm:$0x1]
      %v10117 = vld [vmem:[%s9896 + $0x30] sm:$0xf]
      %v10118 = vld [vmem:[%s9896 + $0x34] sm:$0xf]
      %v10119 = vld [vmem:[%s9896 + $0x38] sm:$0x1]
      %v10120 = vld [vmem:[%s9896 + $0x3c] sm:$0xf]
      %v10121 = vld [vmem:[%s9896 + $0x40] sm:$0xf]
      %v10122 = vld [vmem:[%s9896 + $0x44] sm:$0x1]
      %v10123 = vld [vmem:[%s9896 + $0x48] sm:$0xf]
      %v10124 = vld [vmem:[%s9896 + $0x4c] sm:$0xf]
      %v10125 = vld [vmem:[%s9896 + $0x50] sm:$0x1]
      %v10126 = vld [vmem:[%s9896 + $0x54] sm:$0xf]
      %v10127 = vld [vmem:[%s9896 + $0x58] sm:$0xf]
      %v10128 = vld [vmem:[%s9896 + $0x5c] sm:$0x1]
      %v10129 = vld [vmem:[%s9896 + $0x60] sm:$0xf]
      %v10130 = vld [vmem:[%s9896 + $0x64] sm:$0xf]
      %v10131 = vld [vmem:[%s9896 + $0x68] sm:$0x1]
      %v10132 = vld [vmem:[%s9896 + $0x6c] sm:$0xf]
      %v10133 = vld [vmem:[%s9896 + $0x70] sm:$0xf]
      %v10134 = vld [vmem:[%s9896 + $0x74] sm:$0x1]
      %v10135 = vld [vmem:[%s9896 + $0x78] sm:$0xf]
      %v10136 = vld [vmem:[%s9896 + $0x7c] sm:$0xf]
      %v10137 = vld [vmem:[%s9896 + $0x80] sm:$0x1]
      %v10138 = vld [vmem:[%s9896 + $0x84] sm:$0xf]
      %v10139 = vld [vmem:[%s9896 + $0x88] sm:$0xf]
      %v10140 = vld [vmem:[%s9896 + $0x8c] sm:$0x1]
      %v10141 = vld [vmem:[%s9896 + $0x90] sm:$0xf]
      %v10142 = vld [vmem:[%s9896 + $0x94] sm:$0xf]
      %v10143 = vld [vmem:[%s9896 + $0x98] sm:$0x1]
      %v10144 = vld [vmem:[%s9896 + $0x9c] sm:$0xf]
      %v10145 = vld [vmem:[%s9896 + $0xa0] sm:$0xf]
      %v10146 = vld [vmem:[%s9896 + $0xa4] sm:$0x1]
      %v10147 = vld [vmem:[%s9896 + $0xa8] sm:$0xf]
      %v10148 = vld [vmem:[%s9896 + $0xac] sm:$0xf]
      %v10149 = vld [vmem:[%s9896 + $0xb0] sm:$0x1]
      %v10150 = vld [vmem:[%s9896 + $0xb4] sm:$0xf]
      %v10151 = vld [vmem:[%s9896 + $0xb8] sm:$0xf]
      %v10152 = vld [vmem:[%s9896 + $0xbc] sm:$0x1]
      %v10154 = vshrl.u32 %v10105, 16
      %v10156 = vrot.slane %v10154, 4
      %v10157 = vshll.u32 %v10105, 16
      %v10159 = vrot.slane %v10157, 5
      %v10160 = vor.u32 %v10156, %v10159
      %v10161 = vrot.slane %v10160, 4
      %v10163 = vshll.u32 %v10106, 16
      %v10165 = vrot.slane %v10163, 5
      %v10166 = vsel %vm1985, %v10161, %v10165
      %v10167 = vshrl.u32 %v10106, 16
      %v10169 = vrot.slane %v10167, 4
      %v10170 = vor.u32 %v10169, %v10165
      %v10171 = vrot.slane %v10170, 4
      %v10173 = vshll.u32 %v10107, 16
      %v10175 = vrot.slane %v10173, 5
      %v10176 = vsel %vm1985, %v10171, %v10175
      %v10178 = vshrl.u32 %v10108, 16
      %v10180 = vrot.slane %v10178, 4
      %v10181 = vshll.u32 %v10108, 16
      %v10183 = vrot.slane %v10181, 5
      %v10184 = vor.u32 %v10180, %v10183
      %v10185 = vrot.slane %v10184, 4
      %v10187 = vshll.u32 %v10109, 16
      %v10189 = vrot.slane %v10187, 5
      %v10190 = vsel %vm1985, %v10185, %v10189
      %v10191 = vshrl.u32 %v10109, 16
      %v10193 = vrot.slane %v10191, 4
      %v10194 = vor.u32 %v10193, %v10189
      %v10195 = vrot.slane %v10194, 4
      %v10197 = vshll.u32 %v10110, 16
      %v10199 = vrot.slane %v10197, 5
      %v10200 = vsel %vm1985, %v10195, %v10199
      %v10202 = vshrl.u32 %v10111, 16
      %v10204 = vrot.slane %v10202, 4
      %v10205 = vshll.u32 %v10111, 16
      %v10207 = vrot.slane %v10205, 5
      %v10208 = vor.u32 %v10204, %v10207
      %v10209 = vrot.slane %v10208, 4
      %v10211 = vshll.u32 %v10112, 16
      %v10213 = vrot.slane %v10211, 5
      %v10214 = vsel %vm1985, %v10209, %v10213
      %v10215 = vshrl.u32 %v10112, 16
      %v10217 = vrot.slane %v10215, 4
      %v10218 = vor.u32 %v10217, %v10213
      %v10219 = vrot.slane %v10218, 4
      %v10221 = vshll.u32 %v10113, 16
      %v10223 = vrot.slane %v10221, 5
      %v10224 = vsel %vm1985, %v10219, %v10223
      %v10226 = vshrl.u32 %v10114, 16
      %v10228 = vrot.slane %v10226, 4
      %v10229 = vshll.u32 %v10114, 16
      %v10231 = vrot.slane %v10229, 5
      %v10232 = vor.u32 %v10228, %v10231
      %v10233 = vrot.slane %v10232, 4
      %v10235 = vshll.u32 %v10115, 16
      %v10237 = vrot.slane %v10235, 5
      %v10238 = vsel %vm1985, %v10233, %v10237
      %v10239 = vshrl.u32 %v10115, 16
      %v10241 = vrot.slane %v10239, 4
      %v10242 = vor.u32 %v10241, %v10237
      %v10243 = vrot.slane %v10242, 4
      %v10245 = vshll.u32 %v10116, 16
      %v10247 = vrot.slane %v10245, 5
      %v10248 = vsel %vm1985, %v10243, %v10247
      %v10250 = vshrl.u32 %v10117, 16
      %v10252 = vrot.slane %v10250, 4
      %v10253 = vshll.u32 %v10117, 16
      %v10255 = vrot.slane %v10253, 5
      %v10256 = vor.u32 %v10252, %v10255
      %v10257 = vrot.slane %v10256, 4
      %v10259 = vshll.u32 %v10118, 16
      %v10261 = vrot.slane %v10259, 5
      %v10262 = vsel %vm1985, %v10257, %v10261
      %v10263 = vshrl.u32 %v10118, 16
      %v10265 = vrot.slane %v10263, 4
      %v10266 = vor.u32 %v10265, %v10261
      %v10267 = vrot.slane %v10266, 4
      %v10269 = vshll.u32 %v10119, 16
      %v10271 = vrot.slane %v10269, 5
      %v10272 = vsel %vm1985, %v10267, %v10271
      %v10274 = vshrl.u32 %v10120, 16
      %v10276 = vrot.slane %v10274, 4
      %v10277 = vshll.u32 %v10120, 16
      %v10279 = vrot.slane %v10277, 5
      %v10280 = vor.u32 %v10276, %v10279
      %v10281 = vrot.slane %v10280, 4
      %v10283 = vshll.u32 %v10121, 16
      %v10285 = vrot.slane %v10283, 5
      %v10286 = vsel %vm1985, %v10281, %v10285
      %v10287 = vshrl.u32 %v10121, 16
      %v10289 = vrot.slane %v10287, 4
      %v10290 = vor.u32 %v10289, %v10285
      %v10291 = vrot.slane %v10290, 4
      %v10293 = vshll.u32 %v10122, 16
      %v10295 = vrot.slane %v10293, 5
      %v10296 = vsel %vm1985, %v10291, %v10295
      %v10298 = vshrl.u32 %v10123, 16
      %v10300 = vrot.slane %v10298, 4
      %v10301 = vshll.u32 %v10123, 16
      %v10303 = vrot.slane %v10301, 5
      %v10304 = vor.u32 %v10300, %v10303
      %v10305 = vrot.slane %v10304, 4
      %v10307 = vshll.u32 %v10124, 16
      %v10309 = vrot.slane %v10307, 5
      %v10310 = vsel %vm1985, %v10305, %v10309
      %v10311 = vshrl.u32 %v10124, 16
      %v10313 = vrot.slane %v10311, 4
      %v10314 = vor.u32 %v10313, %v10309
      %v10315 = vrot.slane %v10314, 4
      %v10317 = vshll.u32 %v10125, 16
      %v10319 = vrot.slane %v10317, 5
      %v10320 = vsel %vm1985, %v10315, %v10319
      %v10322 = vshrl.u32 %v10126, 16
      %v10324 = vrot.slane %v10322, 4
      %v10325 = vshll.u32 %v10126, 16
      %v10327 = vrot.slane %v10325, 5
      %v10328 = vor.u32 %v10324, %v10327
      %v10329 = vrot.slane %v10328, 4
      %v10331 = vshll.u32 %v10127, 16
      %v10333 = vrot.slane %v10331, 5
      %v10334 = vsel %vm1985, %v10329, %v10333
      %v10335 = vshrl.u32 %v10127, 16
      %v10337 = vrot.slane %v10335, 4
      %v10338 = vor.u32 %v10337, %v10333
      %v10339 = vrot.slane %v10338, 4
      %v10341 = vshll.u32 %v10128, 16
      %v10343 = vrot.slane %v10341, 5
      %v10344 = vsel %vm1985, %v10339, %v10343
      %v10346 = vshrl.u32 %v10129, 16
      %v10348 = vrot.slane %v10346, 4
      %v10349 = vshll.u32 %v10129, 16
      %v10351 = vrot.slane %v10349, 5
      %v10352 = vor.u32 %v10348, %v10351
      %v10353 = vrot.slane %v10352, 4
      %v10355 = vshll.u32 %v10130, 16
      %v10357 = vrot.slane %v10355, 5
      %v10358 = vsel %vm1985, %v10353, %v10357
      %v10359 = vshrl.u32 %v10130, 16
      %v10361 = vrot.slane %v10359, 4
      %v10362 = vor.u32 %v10361, %v10357
      %v10363 = vrot.slane %v10362, 4
      %v10365 = vshll.u32 %v10131, 16
      %v10367 = vrot.slane %v10365, 5
      %v10368 = vsel %vm1985, %v10363, %v10367
      %v10370 = vshrl.u32 %v10132, 16
      %v10372 = vrot.slane %v10370, 4
      %v10373 = vshll.u32 %v10132, 16
      %v10375 = vrot.slane %v10373, 5
      %v10376 = vor.u32 %v10372, %v10375
      %v10377 = vrot.slane %v10376, 4
      %v10379 = vshll.u32 %v10133, 16
      %v10381 = vrot.slane %v10379, 5
      %v10382 = vsel %vm1985, %v10377, %v10381
      %v10383 = vshrl.u32 %v10133, 16
      %v10385 = vrot.slane %v10383, 4
      %v10386 = vor.u32 %v10385, %v10381
      %v10387 = vrot.slane %v10386, 4
      %v10389 = vshll.u32 %v10134, 16
      %v10391 = vrot.slane %v10389, 5
      %v10392 = vsel %vm1985, %v10387, %v10391
      %v10394 = vshrl.u32 %v10135, 16
      %v10396 = vrot.slane %v10394, 4
      %v10397 = vshll.u32 %v10135, 16
      %v10399 = vrot.slane %v10397, 5
      %v10400 = vor.u32 %v10396, %v10399
      %v10401 = vrot.slane %v10400, 4
      %v10403 = vshll.u32 %v10136, 16
      %v10405 = vrot.slane %v10403, 5
      %v10406 = vsel %vm1985, %v10401, %v10405
      %v10407 = vshrl.u32 %v10136, 16
      %v10409 = vrot.slane %v10407, 4
      %v10410 = vor.u32 %v10409, %v10405
      %v10411 = vrot.slane %v10410, 4
      %v10413 = vshll.u32 %v10137, 16
      %v10415 = vrot.slane %v10413, 5
      %v10416 = vsel %vm1985, %v10411, %v10415
      %v10418 = vshrl.u32 %v10138, 16
      %v10420 = vrot.slane %v10418, 4
      %v10421 = vshll.u32 %v10138, 16
      %v10423 = vrot.slane %v10421, 5
      %v10424 = vor.u32 %v10420, %v10423
      %v10425 = vrot.slane %v10424, 4
      %v10427 = vshll.u32 %v10139, 16
      %v10429 = vrot.slane %v10427, 5
      %v10430 = vsel %vm1985, %v10425, %v10429
      %v10431 = vshrl.u32 %v10139, 16
      %v10433 = vrot.slane %v10431, 4
      %v10434 = vor.u32 %v10433, %v10429
      %v10435 = vrot.slane %v10434, 4
      %v10437 = vshll.u32 %v10140, 16
      %v10439 = vrot.slane %v10437, 5
      %v10440 = vsel %vm1985, %v10435, %v10439
      %v10442 = vshrl.u32 %v10141, 16
      %v10444 = vrot.slane %v10442, 4
      %v10445 = vshll.u32 %v10141, 16
      %v10447 = vrot.slane %v10445, 5
      %v10448 = vor.u32 %v10444, %v10447
      %v10449 = vrot.slane %v10448, 4
      %v10451 = vshll.u32 %v10142, 16
      %v10453 = vrot.slane %v10451, 5
      %v10454 = vsel %vm1985, %v10449, %v10453
      %v10455 = vshrl.u32 %v10142, 16
      %v10457 = vrot.slane %v10455, 4
      %v10458 = vor.u32 %v10457, %v10453
      %v10459 = vrot.slane %v10458, 4
      %v10461 = vshll.u32 %v10143, 16
      %v10463 = vrot.slane %v10461, 5
      %v10464 = vsel %vm1985, %v10459, %v10463
      %v10466 = vshrl.u32 %v10144, 16
      %v10468 = vrot.slane %v10466, 4
      %v10469 = vshll.u32 %v10144, 16
      %v10471 = vrot.slane %v10469, 5
      %v10472 = vor.u32 %v10468, %v10471
      %v10473 = vrot.slane %v10472, 4
      %v10475 = vshll.u32 %v10145, 16
      %v10477 = vrot.slane %v10475, 5
      %v10478 = vsel %vm1985, %v10473, %v10477
      %v10479 = vshrl.u32 %v10145, 16
      %v10481 = vrot.slane %v10479, 4
      %v10482 = vor.u32 %v10481, %v10477
      %v10483 = vrot.slane %v10482, 4
      %v10485 = vshll.u32 %v10146, 16
      %v10487 = vrot.slane %v10485, 5
      %v10488 = vsel %vm1985, %v10483, %v10487
      %v10490 = vshrl.u32 %v10147, 16
      %v10492 = vrot.slane %v10490, 4
      %v10493 = vshll.u32 %v10147, 16
      %v10495 = vrot.slane %v10493, 5
      %v10496 = vor.u32 %v10492, %v10495
      %v10497 = vrot.slane %v10496, 4
      %v10499 = vshll.u32 %v10148, 16
      %v10501 = vrot.slane %v10499, 5
      %v10502 = vsel %vm1985, %v10497, %v10501
      %v10503 = vshrl.u32 %v10148, 16
      %v10505 = vrot.slane %v10503, 4
      %v10506 = vor.u32 %v10505, %v10501
      %v10507 = vrot.slane %v10506, 4
      %v10509 = vshll.u32 %v10149, 16
      %v10511 = vrot.slane %v10509, 5
      %v10512 = vsel %vm1985, %v10507, %v10511
      %v10514 = vshrl.u32 %v10150, 16
      %v10516 = vrot.slane %v10514, 4
      %v10517 = vshll.u32 %v10150, 16
      %v10519 = vrot.slane %v10517, 5
      %v10520 = vor.u32 %v10516, %v10519
      %v10521 = vrot.slane %v10520, 4
      %v10523 = vshll.u32 %v10151, 16
      %v10525 = vrot.slane %v10523, 5
      %v10526 = vsel %vm1985, %v10521, %v10525
      %v10527 = vshrl.u32 %v10151, 16
      %v10529 = vrot.slane %v10527, 4
      %v10530 = vor.u32 %v10529, %v10525
      %v10531 = vrot.slane %v10530, 4
      %v10533 = vshll.u32 %v10152, 16
      %v10535 = vrot.slane %v10533, 5
      %v10536 = vsel %vm1985, %v10531, %v10535
      %s10537 = scalar_lea.vmem %s5, 14
      %v10538 = vld [vmem:[%s10537] sm:$0x3]
      %v10539 = vunpack.c.l.b16 %v10166
      %v10540 = vunpack.c.l.b16 %v10176
      %v10541 = vunpack.c.l.b16 %v10190
      %v10542 = vunpack.c.l.b16 %v10200
      %v10543 = vunpack.c.l.b16 %v10214
      %v10544 = vunpack.c.l.b16 %v10224
      %v10545 = vunpack.c.l.b16 %v10238
      %v10546 = vunpack.c.l.b16 %v10248
      %v10547 = vunpack.c.l.b16 %v10262
      %v10548 = vunpack.c.l.b16 %v10272
      %v10549 = vunpack.c.l.b16 %v10286
      %v10550 = vunpack.c.l.b16 %v10296
      %v10551 = vunpack.c.l.b16 %v10310
      %v10552 = vunpack.c.l.b16 %v10320
      %v10553 = vunpack.c.l.b16 %v10334
      %v10554 = vunpack.c.l.b16 %v10344
      %v10555 = vunpack.c.l.b16 %v10358
      %v10556 = vunpack.c.l.b16 %v10368
      %v10557 = vunpack.c.l.b16 %v10382
      %v10558 = vunpack.c.l.b16 %v10392
      %v10559 = vunpack.c.l.b16 %v10406
      %v10560 = vunpack.c.l.b16 %v10416
      %v10561 = vunpack.c.l.b16 %v10430
      %v10562 = vunpack.c.l.b16 %v10440
      %v10563 = vunpack.c.l.b16 %v10454
      %v10564 = vunpack.c.l.b16 %v10464
      %v10565 = vunpack.c.l.b16 %v10478
      %v10566 = vunpack.c.l.b16 %v10488
      %v10567 = vunpack.c.l.b16 %v10502
      %v10568 = vunpack.c.l.b16 %v10512
      %v10569 = vunpack.c.l.b16 %v10526
      %v10570 = vunpack.c.l.b16 %v10536
      %v10571 = vpack.c.b16 %v10540, %v10539
      %v10572 = vpack.c.b16 %v10542, %v10541
      %v10573 = vpack.c.b16 %v10544, %v10543
      %v10574 = vpack.c.b16 %v10546, %v10545
      %v10575 = vpack.c.b16 %v10548, %v10547
      %v10576 = vpack.c.b16 %v10550, %v10549
      %v10577 = vpack.c.b16 %v10552, %v10551
      %v10578 = vpack.c.b16 %v10554, %v10553
      %v10579 = vpack.c.b16 %v10556, %v10555
      %v10580 = vpack.c.b16 %v10558, %v10557
      %v10581 = vpack.c.b16 %v10560, %v10559
      %v10582 = vpack.c.b16 %v10562, %v10561
      %v10583 = vpack.c.b16 %v10564, %v10563
      %v10584 = vpack.c.b16 %v10566, %v10565
      %v10585 = vpack.c.b16 %v10568, %v10567
      %v10586 = vpack.c.b16 %v10570, %v10569
      %v10588 = vsel %vm8222, %v10538, 0
      %v10591 = vsel %vm8222, %v10571, 0
      %v10594 = vsel %vm8222, %v10572, 0
      %v10597 = vsel %vm8222, %v10573, 0
      %v10600 = vsel %vm8222, %v10574, 0
      %v10603 = vsel %vm8222, %v10575, 0
      %v10606 = vsel %vm8222, %v10576, 0
      %v10609 = vsel %vm8222, %v10577, 0
      %v10612 = vsel %vm8222, %v10578, 0
      %v10615 = vsel %vm8222, %v10579, 0
      %v10618 = vsel %vm8222, %v10580, 0
      %v10621 = vsel %vm8222, %v10581, 0
      %v10624 = vsel %vm8222, %v10582, 0
      %v10627 = vsel %vm8222, %v10583, 0
      %v10630 = vsel %vm8222, %v10584, 0
      %v10633 = vsel %vm8222, %v10585, 0
      %v10636 = vsel %vm8222, %v10586, 0
      %10638 = vmatprep.subr.bf16.mxu0 0
      %10639 = vmatpush1.bf16.xpose.msra.mxu0 %v10612
      %10640 = vmatprep.subr.bf16.mxu0 0
      %10641 = vmatpush1.bf16.xpose.msra.mxu0 %v10609
      %10642 = vmatprep.subr.bf16.mxu0 0
      %10643 = vmatpush1.bf16.xpose.msra.mxu0 %v10606
      %10644 = vmatprep.subr.bf16.mxu0 0
      %10645 = vmatpush1.bf16.xpose.msra.mxu0 %v10603
      %10646 = vmatprep.subr.bf16.mxu0 0
      %10647 = vmatpush1.bf16.xpose.msra.mxu0 %v10600
      %10648 = vmatprep.subr.bf16.mxu0 0
      %10649 = vmatpush1.bf16.xpose.msra.mxu0 %v10597
      %10650 = vmatprep.subr.bf16.mxu0 0
      %10651 = vmatpush1.bf16.xpose.msra.mxu0 %v10594
      %10652 = vmatprep.subr.bf16.mxu0 0
      %10653 = vmatpush1.bf16.xpose.msra.mxu0 %v10591
      %10654 = vmatprep.subr.bf16.mxu0 0
      %10655 = vmatpush2.bf16.xpose.msra.mxu0 %v10636
      %10656 = vmatprep.subr.bf16.mxu0 0
      %10657 = vmatpush2.bf16.xpose.msra.mxu0 %v10633
      %10658 = vmatprep.subr.bf16.mxu0 0
      %10659 = vmatpush2.bf16.xpose.msra.mxu0 %v10630
      %10660 = vmatprep.subr.bf16.mxu0 0
      %10661 = vmatpush2.bf16.xpose.msra.mxu0 %v10627
      %10662 = vmatprep.subr.bf16.mxu0 0
      %10663 = vmatpush2.bf16.xpose.msra.mxu0 %v10624
      %10664 = vmatprep.subr.bf16.mxu0 0
      %10665 = vmatpush2.bf16.xpose.msra.mxu0 %v10621
      %10666 = vmatprep.subr.bf16.mxu0 0
      %10667 = vmatpush2.bf16.xpose.msra.mxu0 %v10618
      %10668 = vmatprep.subr.bf16.mxu0 0
      %10669 = vmatpush2.bf16.xpose.msra.mxu0 %v10615
      %10670 = vmatprep.mubr.bf16.mxu0 0
      %10671 = vmatmul.mubr.bf16.gmra.mxu0 %v10588
      %v10672 = vpop.f32.mrf.mxu0
      %v10673 = vadd.f32 0.0, %v10672
      %v10674 = vpop.f32.mrf.mxu0
      %v10675 = vadd.f32 0.0, %v10674
      %v10676 = vpop.f32.mrf.mxu0
      %v10677 = vpop.f32.mrf.mxu0
      %10678 = vdwg.mxu0
      %v10679 = vadd.f32 %v10103, %v10673
      %v10680 = vadd.f32 %v10104, %v10675
      %v10681 = vld [vmem:[%s9896] sm:$0xe]
      %v10682 = vld [vmem:[%s9896 + $0xc] sm:$0xe]
      %v10683 = vld [vmem:[%s9896 + $0x18] sm:$0xe]
      %v10684 = vld [vmem:[%s9896 + $0x24] sm:$0xe]
      %v10685 = vld [vmem:[%s9896 + $0x30] sm:$0xe]
      %v10686 = vld [vmem:[%s9896 + $0x3c] sm:$0xe]
      %v10687 = vld [vmem:[%s9896 + $0x48] sm:$0xe]
      %v10688 = vld [vmem:[%s9896 + $0x54] sm:$0xe]
      %v10689 = vld [vmem:[%s9896 + $0x60] sm:$0xe]
      %v10690 = vld [vmem:[%s9896 + $0x6c] sm:$0xe]
      %v10691 = vld [vmem:[%s9896 + $0x78] sm:$0xe]
      %v10692 = vld [vmem:[%s9896 + $0x84] sm:$0xe]
      %v10693 = vld [vmem:[%s9896 + $0x90] sm:$0xe]
      %v10694 = vld [vmem:[%s9896 + $0x9c] sm:$0xe]
      %v10695 = vld [vmem:[%s9896 + $0xa8] sm:$0xe]
      %v10696 = vld [vmem:[%s9896 + $0xb4] sm:$0xe]
      %v10745 = vrot.slane %v10681, 5
      %v10746 = vrot.slane %v10745, 4
      %v10747 = vrot.slane %v10106, 5
      %v10748 = vsel %vm3090, %v10746, %v10747
      %v10749 = vrot.slane %v10747, 4
      %v10750 = vrot.slane %v10107, 5
      %v10751 = vsel %vm3090, %v10749, %v10750
      %v10752 = vrot.slane %v10682, 5
      %v10753 = vrot.slane %v10752, 4
      %v10754 = vrot.slane %v10109, 5
      %v10755 = vsel %vm3090, %v10753, %v10754
      %v10756 = vrot.slane %v10754, 4
      %v10757 = vrot.slane %v10110, 5
      %v10758 = vsel %vm3090, %v10756, %v10757
      %v10759 = vrot.slane %v10683, 5
      %v10760 = vrot.slane %v10759, 4
      %v10761 = vrot.slane %v10112, 5
      %v10762 = vsel %vm3090, %v10760, %v10761
      %v10763 = vrot.slane %v10761, 4
      %v10764 = vrot.slane %v10113, 5
      %v10765 = vsel %vm3090, %v10763, %v10764
      %v10766 = vrot.slane %v10684, 5
      %v10767 = vrot.slane %v10766, 4
      %v10768 = vrot.slane %v10115, 5
      %v10769 = vsel %vm3090, %v10767, %v10768
      %v10770 = vrot.slane %v10768, 4
      %v10771 = vrot.slane %v10116, 5
      %v10772 = vsel %vm3090, %v10770, %v10771
      %v10773 = vrot.slane %v10685, 5
      %v10774 = vrot.slane %v10773, 4
      %v10775 = vrot.slane %v10118, 5
      %v10776 = vsel %vm3090, %v10774, %v10775
      %v10777 = vrot.slane %v10775, 4
      %v10778 = vrot.slane %v10119, 5
      %v10779 = vsel %vm3090, %v10777, %v10778
      %v10780 = vrot.slane %v10686, 5
      %v10781 = vrot.slane %v10780, 4
      %v10782 = vrot.slane %v10121, 5
      %v10783 = vsel %vm3090, %v10781, %v10782
      %v10784 = vrot.slane %v10782, 4
      %v10785 = vrot.slane %v10122, 5
      %v10786 = vsel %vm3090, %v10784, %v10785
      %v10787 = vrot.slane %v10687, 5
      %v10788 = vrot.slane %v10787, 4
      %v10789 = vrot.slane %v10124, 5
      %v10790 = vsel %vm3090, %v10788, %v10789
      %v10791 = vrot.slane %v10789, 4
      %v10792 = vrot.slane %v10125, 5
      %v10793 = vsel %vm3090, %v10791, %v10792
      %v10794 = vrot.slane %v10688, 5
      %v10795 = vrot.slane %v10794, 4
      %v10796 = vrot.slane %v10127, 5
      %v10797 = vsel %vm3090, %v10795, %v10796
      %v10798 = vrot.slane %v10796, 4
      %v10799 = vrot.slane %v10128, 5
      %v10800 = vsel %vm3090, %v10798, %v10799
      %v10801 = vrot.slane %v10689, 5
      %v10802 = vrot.slane %v10801, 4
      %v10803 = vrot.slane %v10130, 5
      %v10804 = vsel %vm3090, %v10802, %v10803
      %v10805 = vrot.slane %v10803, 4
      %v10806 = vrot.slane %v10131, 5
      %v10807 = vsel %vm3090, %v10805, %v10806
      %v10808 = vrot.slane %v10690, 5
      %v10809 = vrot.slane %v10808, 4
      %v10810 = vrot.slane %v10133, 5
      %v10811 = vsel %vm3090, %v10809, %v10810
      %v10812 = vrot.slane %v10810, 4
      %v10813 = vrot.slane %v10134, 5
      %v10814 = vsel %vm3090, %v10812, %v10813
      %v10815 = vrot.slane %v10691, 5
      %v10816 = vrot.slane %v10815, 4
      %v10817 = vrot.slane %v10136, 5
      %v10818 = vsel %vm3090, %v10816, %v10817
      %v10819 = vrot.slane %v10817, 4
      %v10820 = vrot.slane %v10137, 5
      %v10821 = vsel %vm3090, %v10819, %v10820
      %v10822 = vrot.slane %v10692, 5
      %v10823 = vrot.slane %v10822, 4
      %v10824 = vrot.slane %v10139, 5
      %v10825 = vsel %vm3090, %v10823, %v10824
      %v10826 = vrot.slane %v10824, 4
      %v10827 = vrot.slane %v10140, 5
      %v10828 = vsel %vm3090, %v10826, %v10827
      %v10829 = vrot.slane %v10693, 5
      %v10830 = vrot.slane %v10829, 4
      %v10831 = vrot.slane %v10142, 5
      %v10832 = vsel %vm3090, %v10830, %v10831
      %v10833 = vrot.slane %v10831, 4
      %v10834 = vrot.slane %v10143, 5
      %v10835 = vsel %vm3090, %v10833, %v10834
      %v10836 = vrot.slane %v10694, 5
      %v10837 = vrot.slane %v10836, 4
      %v10838 = vrot.slane %v10145, 5
      %v10839 = vsel %vm3090, %v10837, %v10838
      %v10840 = vrot.slane %v10838, 4
      %v10841 = vrot.slane %v10146, 5
      %v10842 = vsel %vm3090, %v10840, %v10841
      %v10843 = vrot.slane %v10695, 5
      %v10844 = vrot.slane %v10843, 4
      %v10845 = vrot.slane %v10148, 5
      %v10846 = vsel %vm3090, %v10844, %v10845
      %v10847 = vrot.slane %v10845, 4
      %v10848 = vrot.slane %v10149, 5
      %v10849 = vsel %vm3090, %v10847, %v10848
      %v10850 = vrot.slane %v10696, 5
      %v10851 = vrot.slane %v10850, 4
      %v10852 = vrot.slane %v10151, 5
      %v10853 = vsel %vm3090, %v10851, %v10852
      %v10854 = vrot.slane %v10852, 4
      %v10855 = vrot.slane %v10152, 5
      %v10856 = vsel %vm3090, %v10854, %v10855
      %s10857 = scalar_lea.vmem %s5, 16
      %v10858 = vld [vmem:[%s10857] sm:$0x3]
      %v10859 = vunpack.c.l.b16 %v10748
      %v10860 = vunpack.c.l.b16 %v10751
      %v10861 = vunpack.c.l.b16 %v10755
      %v10862 = vunpack.c.l.b16 %v10758
      %v10863 = vunpack.c.l.b16 %v10762
      %v10864 = vunpack.c.l.b16 %v10765
      %v10865 = vunpack.c.l.b16 %v10769
      %v10866 = vunpack.c.l.b16 %v10772
      %v10867 = vunpack.c.l.b16 %v10776
      %v10868 = vunpack.c.l.b16 %v10779
      %v10869 = vunpack.c.l.b16 %v10783
      %v10870 = vunpack.c.l.b16 %v10786
      %v10871 = vunpack.c.l.b16 %v10790
      %v10872 = vunpack.c.l.b16 %v10793
      %v10873 = vunpack.c.l.b16 %v10797
      %v10874 = vunpack.c.l.b16 %v10800
      %v10875 = vunpack.c.l.b16 %v10804
      %v10876 = vunpack.c.l.b16 %v10807
      %v10877 = vunpack.c.l.b16 %v10811
      %v10878 = vunpack.c.l.b16 %v10814
      %v10879 = vunpack.c.l.b16 %v10818
      %v10880 = vunpack.c.l.b16 %v10821
      %v10881 = vunpack.c.l.b16 %v10825
      %v10882 = vunpack.c.l.b16 %v10828
      %v10883 = vunpack.c.l.b16 %v10832
      %v10884 = vunpack.c.l.b16 %v10835
      %v10885 = vunpack.c.l.b16 %v10839
      %v10886 = vunpack.c.l.b16 %v10842
      %v10887 = vunpack.c.l.b16 %v10846
      %v10888 = vunpack.c.l.b16 %v10849
      %v10889 = vunpack.c.l.b16 %v10853
      %v10890 = vunpack.c.l.b16 %v10856
      %v10891 = vpack.c.b16 %v10860, %v10859
      %v10892 = vpack.c.b16 %v10862, %v10861
      %v10893 = vpack.c.b16 %v10864, %v10863
      %v10894 = vpack.c.b16 %v10866, %v10865
      %v10895 = vpack.c.b16 %v10868, %v10867
      %v10896 = vpack.c.b16 %v10870, %v10869
      %v10897 = vpack.c.b16 %v10872, %v10871
      %v10898 = vpack.c.b16 %v10874, %v10873
      %v10899 = vpack.c.b16 %v10876, %v10875
      %v10900 = vpack.c.b16 %v10878, %v10877
      %v10901 = vpack.c.b16 %v10880, %v10879
      %v10902 = vpack.c.b16 %v10882, %v10881
      %v10903 = vpack.c.b16 %v10884, %v10883
      %v10904 = vpack.c.b16 %v10886, %v10885
      %v10905 = vpack.c.b16 %v10888, %v10887
      %v10906 = vpack.c.b16 %v10890, %v10889
      %v10908 = vsel %vm8222, %v10858, 0
      %v10911 = vsel %vm8222, %v10891, 0
      %v10914 = vsel %vm8222, %v10892, 0
      %v10917 = vsel %vm8222, %v10893, 0
      %v10920 = vsel %vm8222, %v10894, 0
      %v10923 = vsel %vm8222, %v10895, 0
      %v10926 = vsel %vm8222, %v10896, 0
      %v10929 = vsel %vm8222, %v10897, 0
      %v10932 = vsel %vm8222, %v10898, 0
      %v10935 = vsel %vm8222, %v10899, 0
      %v10938 = vsel %vm8222, %v10900, 0
      %v10941 = vsel %vm8222, %v10901, 0
      %v10944 = vsel %vm8222, %v10902, 0
      %v10947 = vsel %vm8222, %v10903, 0
      %v10950 = vsel %vm8222, %v10904, 0
      %v10953 = vsel %vm8222, %v10905, 0
      %v10956 = vsel %vm8222, %v10906, 0
      %10958 = vmatprep.subr.bf16.mxu0 0
      %10959 = vmatpush1.bf16.xpose.msra.mxu0 %v10932
      %10960 = vmatprep.subr.bf16.mxu0 0
      %10961 = vmatpush1.bf16.xpose.msra.mxu0 %v10929
      %10962 = vmatprep.subr.bf16.mxu0 0
      %10963 = vmatpush1.bf16.xpose.msra.mxu0 %v10926
      %10964 = vmatprep.subr.bf16.mxu0 0
      %10965 = vmatpush1.bf16.xpose.msra.mxu0 %v10923
      %10966 = vmatprep.subr.bf16.mxu0 0
      %10967 = vmatpush1.bf16.xpose.msra.mxu0 %v10920
      %10968 = vmatprep.subr.bf16.mxu0 0
      %10969 = vmatpush1.bf16.xpose.msra.mxu0 %v10917
      %10970 = vmatprep.subr.bf16.mxu0 0
      %10971 = vmatpush1.bf16.xpose.msra.mxu0 %v10914
      %10972 = vmatprep.subr.bf16.mxu0 0
      %10973 = vmatpush1.bf16.xpose.msra.mxu0 %v10911
      %10974 = vmatprep.subr.bf16.mxu0 0
      %10975 = vmatpush2.bf16.xpose.msra.mxu0 %v10956
      %10976 = vmatprep.subr.bf16.mxu0 0
      %10977 = vmatpush2.bf16.xpose.msra.mxu0 %v10953
      %10978 = vmatprep.subr.bf16.mxu0 0
      %10979 = vmatpush2.bf16.xpose.msra.mxu0 %v10950
      %10980 = vmatprep.subr.bf16.mxu0 0
      %10981 = vmatpush2.bf16.xpose.msra.mxu0 %v10947
      %10982 = vmatprep.subr.bf16.mxu0 0
      %10983 = vmatpush2.bf16.xpose.msra.mxu0 %v10944
      %10984 = vmatprep.subr.bf16.mxu0 0
      %10985 = vmatpush2.bf16.xpose.msra.mxu0 %v10941
      %10986 = vmatprep.subr.bf16.mxu0 0
      %10987 = vmatpush2.bf16.xpose.msra.mxu0 %v10938
      %10988 = vmatprep.subr.bf16.mxu0 0
      %10989 = vmatpush2.bf16.xpose.msra.mxu0 %v10935
      %10990 = vmatprep.mubr.bf16.mxu0 0
      %10991 = vmatmul.mubr.bf16.gmra.mxu0 %v10908
      %v10992 = vpop.f32.mrf.mxu0
      %v10993 = vadd.f32 0.0, %v10992
      %v10994 = vpop.f32.mrf.mxu0
      %v10995 = vadd.f32 0.0, %v10994
      %v10996 = vpop.f32.mrf.mxu0
      %v10997 = vpop.f32.mrf.mxu0
      %10998 = vdwg.mxu0
      %v10999 = vadd.f32 %v10679, %v10993
      %v11000 = vadd.f32 %v10680, %v10995
      %v11001 = vld [vmem:[%s6] sm:$0xf]
      %11003 = vset.pattern.permute.xlu0 0
      %11004 = vperm.xlu0 %11003, %v11001
      %v11005 = vpop.permute.xlu0 %11004
      %v11007 = vmul.f32 %v10999, %v11005
      %v11008 = vmul.f32 %v11000, %v11005
      %v11009 = vld [vmem:[%s7] sm:$0xf]
      %11011 = vset.pattern.permute.xlu0 0
      %11012 = vperm.xlu0 %11011, %v11009
      %v11013 = vpop.permute.xlu0 %11012
      %v11015 = vadd.f32 %v11007, %v11013
      %v11016 = vadd.f32 %v11008, %v11013
      %v11017 = vmax.f32 %v11015, 0.0
      %v11018 = vmax.f32 %v11016, 0.0
      %v11021 = vcombine.low %v11017, %v11018
      %11023 = vst [vmem:[%s347] sm:$0xff] %v11021
      %s11024 = smul.u32 2, %s24
      %p11025 = scmp.lt.s32.totalorder %s23, 1
      %s11026 = scalar_select %p11025, %s23, 1
      %p11027 = scmp.lt.s32.totalorder %s11024, 1
      %s11028 = scalar_select %p11027, %s11024, 1
      %s11029 = smul.addr %s11026, 2
      %s11030 = sadd.s32 %s11028, %s11029
      %s11031 = smul.addr %s11030, 4
      %s11032 = scalar_lea.vmem %s8, %s11031
      // Predicated region
      $region73: #{up_forward.1} parent=51 // pred_check
        %p11033 = pneg %p229
      $region74: #{up_forward.1} parent=51 // pred_check_branch
        %11035 = sbr.rel (%p11033) target = $region76
      $region75: #{up_forward.1} parent=51 // pred_region
        %s11036 = smul.u32 2, %s24
      $region76: #{up_forward.1} parent=51 // pred_fallthru
        _
    $region52: #{up_forward.1} parent=5 // pred_fallthru
      _
    %p11037 = scmp.le.s32.totalorder 2, %s14
    // Predicated region
    $region77: #{up_forward.1} parent=5 // pred_check
      %p11038 = pneg %p11037
    $region78: #{up_forward.1} parent=5 // pred_check_branch
      %11040 = sbr.rel (%p11038) target = $region80
    $region79: #{up_forward.1} parent=5 // pred_region
      %s11041 = ssub.s32 %s14, 2
      // Predicated region
      $region81: #{up_forward.1} parent=79 // pred_check
        %p11042 = pneg %p235
      $region82: #{up_forward.1} parent=79 // pred_check_branch
        %11044 = sbr.rel (%p11042) target = $region84
      $region83: #{up_forward.1} parent=79 // pred_region
        %s11045 = smul.u32 2, %s26
        %p11046 = scmp.lt.s32.totalorder %s25, 1
        %s11047 = scalar_select %p11046, %s25, 1
        %p11048 = scmp.lt.s32.totalorder %s11045, 1
        %s11049 = scalar_select %p11048, %s11045, 1
        %s11050 = smul.addr %s11047, 2
        %s11051 = sadd.s32 %s11049, %s11050
        %s11052 = smul.addr %s11051, 4
        %s11053 = scalar_lea.vmem %s8, %s11052
      $region84: #{up_forward.1} parent=79 // pred_fallthru
        _
    $region80: #{up_forward.1} parent=5 // pred_fallthru
      _
  $region6: #{up_forward.1} parent=0 // loop_footer
    %s18 = sadd.s32 1, %s14
  $region7: #{up_forward.1} parent=0 // loop_footer_branch
    %13 = sbr.rel target = $region3
  $region8: #{up_forward.1} parent=0 // loop_exit
    _

</llo_original>
